<compile_context>
chip_gen: v5e
topology: v5e:2x2
jax: 0.10.0
libtpu: 0.0.40
codegen_flags: <defaults>
</compile_context>

<pallas_src>
import jax
import jax.numpy as jnp
from jax.experimental import pallas as pl
from jax.experimental.pallas import tpu as pltpu

N_HEAD = 6
N_EMBED = 64 * N_HEAD          # 384
HEAD_SIZE = N_EMBED // N_HEAD  # 64
NEG_BIG = -1e30                # finite "masked" value (robust, exp underflows to 0)


def mha_kernel(x_ref, bias_ref, wqkv_ref, wp_ref, bp_ref, o_ref):
    Bb, T, C = x_ref.shape
    BT = Bb * T

    # ---- fused QKV projection: (BT, C) @ (C, 3C), bf16 in / f32 accumulate ----
    x2d = x_ref[...].reshape(BT, C).astype(jnp.bfloat16)
    qkv = jnp.dot(x2d, wqkv_ref[...], preferred_element_type=jnp.float32)  # (BT, 3C)

    # slices at lane-aligned offsets (0, C, 2C = multiples of 128)
    q = qkv[:, 0 * C:1 * C].reshape(Bb, T, C).astype(jnp.bfloat16)  # scale baked into Wq
    k = qkv[:, 1 * C:2 * C].reshape(Bb, T, C).astype(jnp.bfloat16)
    v = qkv[:, 2 * C:3 * C].reshape(Bb, T, C).astype(jnp.bfloat16)

    # causal additive bias (0 / -1e30), hoisted broadcast (not re-broadcast per head)
    bias = jnp.broadcast_to(bias_ref[...][None, :, :], (Bb, T, T))

    # ---- per-head attention, output projection folded into the loop ----
    acc = jnp.zeros((BT, C), jnp.float32)
    for h in range(N_HEAD):  # static unrolled loop (6 heads)
        lo = h * HEAD_SIZE
        qh = q[:, :, lo:lo + HEAD_SIZE]          # (Bb, T, 64)
        kh = k[:, :, lo:lo + HEAD_SIZE]
        vh = v[:, :, lo:lo + HEAD_SIZE]

        wei = jnp.einsum('bqd,bkd->bqk', qh, kh,
                         preferred_element_type=jnp.float32)        # (Bb, T, T)
        wei = wei + bias
        m = jnp.max(wei, axis=-1, keepdims=True)
        p = jnp.exp(wei - m)
        denom = jnp.sum(p, axis=-1, keepdims=True)
        p = p * pl.reciprocal(denom, approx=True)                    # EUP, off VALU path
        # TODO(synk): dropout on attention weights treated as identity (eval mode).

        ho = jnp.einsum('bqk,bkd->bqd', p.astype(jnp.bfloat16), vh,
                        preferred_element_type=jnp.float32)          # (Bb, T, 64)
        # fold proj: head h contributes rows [lo:lo+64] of Wp (sublane-aligned slice)
        acc = acc + jnp.dot(ho.reshape(BT, HEAD_SIZE).astype(jnp.bfloat16),
                            wp_ref[lo:lo + HEAD_SIZE, :],
                            preferred_element_type=jnp.float32)      # (BT, C)

    out = acc + bp_ref[...]
    # TODO(synk): dropout after the output projection treated as identity (eval mode).
    o_ref[...] = out.reshape(Bb, T, C).astype(o_ref.dtype)


def _vmem_limit_bytes(b_blk, T, C):
    """Rough real-usage estimate, clamped to fit v7x's 64 MiB physical VMEM."""
    bt = b_blk * T
    weights = (C * 3 * C + C * C) * 2 + C * 4 + T * T * 4   # bf16 wqkv+wp, f32 bias+mask
    io_blocks = 2 * bt * C * 4                              # x block + out block (f32)
    scratch = bt * 3 * C * 4 + 2 * b_blk * T * T * 4 + bt * C * 4
    est = 2 * (weights + io_blocks) + scratch               # 2x: double-buffered pipeline
    return int(min(max(2 * est, 16 * 1024 * 1024), 48 * 1024 * 1024))


def multi_head_attention(x, params, *, b_blk=None):
    """x: (B, T, C) float32.  params: dict with wq/wk/wv/wp (C,C) and bp (1,C)."""
    B, T, C = x.shape
    assert C == N_EMBED

    # NOTE: the reference module divides by sqrt(C) (C = n_embed), not sqrt(head_size).
    scale = 1.0 / (C ** 0.5)

    # process several sequences per grid step so the MXU sees >= ~128 rows
    if b_blk is None:
        b_blk = max(1, min(B, 128 // max(T, 1)))
        while B % b_blk:
            b_blk -= 1
    assert B % b_blk == 0

    # host-side weight packing: fused QKV (scale baked into Wq), bf16 matmul operands
    wqkv = jnp.concatenate(
        [params["wq"] * scale, params["wk"], params["wv"]], axis=1
    ).astype(jnp.bfloat16)                                   # (C, 3C)
    wp = params["wp"].astype(jnp.bfloat16)                   # (C, C)
    bp = params["bp"].astype(jnp.float32)                    # (1, C)
    mask_bias = jnp.where(jnp.tril(jnp.ones((T, T), bool)), 0.0, NEG_BIG
                          ).astype(jnp.float32)              # (T, T)

    grid = (B // b_blk,)
    flops = 8 * B * T * C * C + 4 * B * T * T * C
    transcendentals = B * N_HEAD * T * T
    bytes_accessed = (2 * x.size * 4 + wqkv.size * 2 + wp.size * 2
                      + bp.size * 4 + mask_bias.size * 4)

    return pl.pallas_call(
        mha_kernel,
        out_shape=jax.ShapeDtypeStruct((B, T, C), x.dtype),
        grid=grid,
        in_specs=[
            pl.BlockSpec((b_blk, T, C), lambda b: (b, 0, 0)),   # x
            pl.BlockSpec((T, T), lambda b: (0, 0)),             # causal bias (resident)
            pl.BlockSpec((C, 3 * C), lambda b: (0, 0)),          # wqkv
            pl.BlockSpec((C, C), lambda b: (0, 0)),              # wp
            pl.BlockSpec((1, C), lambda b: (0, 0)),              # bp
        ],
        out_specs=pl.BlockSpec((b_blk, T, C), lambda b: (b, 0, 0)),
        compiler_params=pltpu.CompilerParams(
            dimension_semantics=("parallel",),
            vmem_limit_bytes=_vmem_limit_bytes(b_blk, T, C),
        ),
        cost_estimate=pl.CostEstimate(
            flops=flops,
            transcendentals=transcendentals,
            bytes_accessed=bytes_accessed,
        ),
    )(x, mask_bias, wqkv, wp, bp)


def init_params(key):
    ks = jax.random.split(key, 4)
    s = 0.02
    return {
        # per-head (C, 64) projections concatenated along the output axis -> (C, C)
        "wq": s * jax.random.normal(ks[0], (N_EMBED, N_EMBED), jnp.float32),
        "wk": s * jax.random.normal(ks[1], (N_EMBED, N_EMBED), jnp.float32),
        "wv": s * jax.random.normal(ks[2], (N_EMBED, N_EMBED), jnp.float32),
        "wp": s * jax.random.normal(ks[3], (N_EMBED, N_EMBED), jnp.float32),
        "bp": jnp.zeros((1, N_EMBED), jnp.float32),
    }


def reference_mha(x, p):
    """Pure-JAX f32 reference mirroring the PyTorch forward (eval mode)."""
    B, T, C = x.shape
    q = x @ p["wq"]; k = x @ p["wk"]; v = x @ p["wv"]
    mask = jnp.tril(jnp.ones((T, T), bool))
    outs = []
    for h in range(N_HEAD):
        lo, hi = h * HEAD_SIZE, (h + 1) * HEAD_SIZE
        wei = q[..., lo:hi] @ jnp.swapaxes(k[..., lo:hi], -1, -2) / (C ** 0.5)
        wei = jnp.where(mask, wei, -jnp.inf)
        wei = jax.nn.softmax(wei, axis=-1)
        outs.append(wei @ v[..., lo:hi])
    return jnp.concatenate(outs, -1) @ p["wp"] + p["bp"]


if __name__ == "__main__":
    key = jax.random.PRNGKey(0)
    k_param, k_x = jax.random.split(key)
    params = init_params(k_param)

    B, T = 8, 32
    x = jax.random.normal(k_x, (B, T, N_EMBED), jnp.float32)

    out = multi_head_attention(x, params)
    out = jax.block_until_ready(out)

    ref = reference_mha(x, params)
    assert out.shape == (B, T, N_EMBED)
    # bf16 matmul operands (f32 accumulation) -> compare with bf16-appropriate tolerance
    assert jnp.allclose(out, ref, atol=5e-3, rtol=5e-2), (
        f"mismatch vs reference, max abs diff = {jnp.max(jnp.abs(out - ref))}")
    print("KERNEL_OK")
</pallas_src>

<mosaic_0001>
module attributes {stable_mosaic.version = 11 : i64} {
  func.func @mha_kernel(%arg0: i32, %arg1: memref<4x32x384xf32, #tpu.memory_space<vmem>>, %arg2: memref<32x32xf32, #tpu.memory_space<vmem>>, %arg3: memref<384x1152xbf16, #tpu.memory_space<vmem>>, %arg4: memref<384x384xbf16, #tpu.memory_space<vmem>>, %arg5: memref<1x384xf32, #tpu.memory_space<vmem>>, %arg6: memref<4x32x384xf32, #tpu.memory_space<vmem>>) attributes {dimension_semantics = [#tpu.dimension_semantics<parallel>], iteration_bounds = array<i64: 2>, scalar_prefetch = 0 : i64, scratch_operands = 0 : i64, tpu.core_type = #tpu.core_type<tc>, window_params = [{transform_indices = @transform_0, window_bounds = array<i64: 4, 32, 384>}, {pipeline_mode = #tpu.pipeline_mode<synchronous>, transform_indices = @transform_1, window_bounds = array<i64: 32, 32>}, {pipeline_mode = #tpu.pipeline_mode<synchronous>, transform_indices = @transform_2, window_bounds = array<i64: 384, 1152>}, {pipeline_mode = #tpu.pipeline_mode<synchronous>, transform_indices = @transform_3, window_bounds = array<i64: 384, 384>}, {pipeline_mode = #tpu.pipeline_mode<synchronous>, transform_indices = @transform_4, window_bounds = array<i64: 1, 384>}, {transform_indices = @transform_5, window_bounds = array<i64: 4, 32, 384>}]} {
    %c0 = arith.constant 0 : index
    %c0_0 = arith.constant 0 : index
    %c0_1 = arith.constant 0 : index
    %0 = vector.load %arg1[%c0, %c0_0, %c0_1] : memref<4x32x384xf32, #tpu.memory_space<vmem>>, vector<4x32x384xf32>
    %1 = vector.shape_cast %0 : vector<4x32x384xf32> to vector<128x384xf32>
    %2 = arith.truncf %1 : vector<128x384xf32> to vector<128x384xbf16>
    %c0_2 = arith.constant 0 : index
    %c0_3 = arith.constant 0 : index
    %3 = vector.load %arg3[%c0_2, %c0_3] : memref<384x1152xbf16, #tpu.memory_space<vmem>>, vector<384x1152xbf16>
    %cst = arith.constant dense<0.000000e+00> : vector<128x1152xf32>
    %4 = tpu.matmul %2, %3, %cst {dimension_numbers = #tpu.dot_dimension_numbers<[1], [0], [0], [1], [0, 0, 1, 1], [], []>} : vector<128x384xbf16>, vector<384x1152xbf16>, vector<128x1152xf32> -> vector<128x1152xf32>
    %5 = vector.extract_strided_slice %4 {offsets = [0, 0], sizes = [128, 384], strides = [1, 1]} : vector<128x1152xf32> to vector<128x384xf32>
    %6 = vector.shape_cast %5 : vector<128x384xf32> to vector<4x32x384xf32>
    %7 = arith.truncf %6 : vector<4x32x384xf32> to vector<4x32x384xbf16>
    %8 = vector.extract_strided_slice %4 {offsets = [0, 384], sizes = [128, 384], strides = [1, 1]} : vector<128x1152xf32> to vector<128x384xf32>
    %9 = vector.shape_cast %8 : vector<128x384xf32> to vector<4x32x384xf32>
    %10 = arith.truncf %9 : vector<4x32x384xf32> to vector<4x32x384xbf16>
    %11 = vector.extract_strided_slice %4 {offsets = [0, 768], sizes = [128, 384], strides = [1, 1]} : vector<128x1152xf32> to vector<128x384xf32>
    %12 = vector.shape_cast %11 : vector<128x384xf32> to vector<4x32x384xf32>
    %13 = arith.truncf %12 : vector<4x32x384xf32> to vector<4x32x384xbf16>
    %c0_4 = arith.constant 0 : index
    %c0_5 = arith.constant 0 : index
    %14 = vector.load %arg2[%c0_4, %c0_5] : memref<32x32xf32, #tpu.memory_space<vmem>>, vector<32x32xf32>
    %15 = vector.shape_cast %14 : vector<32x32xf32> to vector<1x32x32xf32>
    %16 = vector.shape_cast %15 : vector<1x32x32xf32> to vector<1x32x32xf32>
    %17 = vector.broadcast %16 : vector<1x32x32xf32> to vector<4x32x32xf32>
    %cst_6 = arith.constant 0.000000e+00 : f32
    %18 = vector.broadcast %cst_6 : f32 to vector<128x384xf32>
    %19 = vector.extract_strided_slice %7 {offsets = [0, 0, 0], sizes = [4, 32, 64], strides = [1, 1, 1]} : vector<4x32x384xbf16> to vector<4x32x64xbf16>
    %20 = vector.extract_strided_slice %10 {offsets = [0, 0, 0], sizes = [4, 32, 64], strides = [1, 1, 1]} : vector<4x32x384xbf16> to vector<4x32x64xbf16>
    %21 = vector.extract_strided_slice %13 {offsets = [0, 0, 0], sizes = [4, 32, 64], strides = [1, 1, 1]} : vector<4x32x384xbf16> to vector<4x32x64xbf16>
    "tpu.trace_start"() <{level = 10 : i32, message = "bqd,bkd->bqk"}> : () -> ()
    %cst_7 = arith.constant dense<0.000000e+00> : vector<4x32x32xf32>
    %22 = tpu.matmul %19, %20, %cst_7 {dimension_numbers = #tpu.dot_dimension_numbers<[2], [2], [1], [1], [0, 0, 0, 1, 1, 1], [0], [0]>} : vector<4x32x64xbf16>, vector<4x32x64xbf16>, vector<4x32x32xf32> -> vector<4x32x32xf32>
    "tpu.trace_stop"() : () -> ()
    %23 = arith.addf %22, %17 : vector<4x32x32xf32>
    %cst_8 = arith.constant dense<0xFF800000> : vector<4x32xf32>
    %24 = vector.multi_reduction <maximumf>, %23, %cst_8 [2] : vector<4x32x32xf32> to vector<4x32xf32>
    %25 = vector.shape_cast %24 : vector<4x32xf32> to vector<4x32x1xf32>
    %26 = vector.broadcast %25 : vector<4x32x1xf32> to vector<4x32x32xf32>
    %27 = arith.subf %23, %26 : vector<4x32x32xf32>
    %28 = math.exp %27 : vector<4x32x32xf32>
    %cst_9 = arith.constant dense<0.000000e+00> : vector<4x32xf32>
    %29 = vector.multi_reduction <add>, %28, %cst_9 [2] : vector<4x32x32xf32> to vector<4x32xf32>
    %30 = vector.shape_cast %29 : vector<4x32xf32> to vector<4x32x1xf32>
    %31 = tpu.reciprocal %30 {approx = true} : vector<4x32x1xf32> -> vector<4x32x1xf32>
    %32 = vector.broadcast %31 : vector<4x32x1xf32> to vector<4x32x32xf32>
    %33 = arith.mulf %28, %32 : vector<4x32x32xf32>
    %34 = arith.truncf %33 : vector<4x32x32xf32> to vector<4x32x32xbf16>
    "tpu.trace_start"() <{level = 10 : i32, message = "bqk,bkd->bqd"}> : () -> ()
    %cst_10 = arith.constant dense<0.000000e+00> : vector<4x32x64xf32>
    %35 = tpu.matmul %34, %21, %cst_10 {dimension_numbers = #tpu.dot_dimension_numbers<[2], [1], [1], [2], [0, 0, 0, 1, 1, 2], [0], [0]>} : vector<4x32x32xbf16>, vector<4x32x64xbf16>, vector<4x32x64xf32> -> vector<4x32x64xf32>
    "tpu.trace_stop"() : () -> ()
    %36 = vector.shape_cast %35 : vector<4x32x64xf32> to vector<128x64xf32>
    %37 = arith.truncf %36 : vector<128x64xf32> to vector<128x64xbf16>
    %c0_11 = arith.constant 0 : index
    %c0_12 = arith.constant 0 : index
    %38 = vector.load %arg4[%c0_11, %c0_12] : memref<384x384xbf16, #tpu.memory_space<vmem>>, vector<64x384xbf16>
    %cst_13 = arith.constant dense<0.000000e+00> : vector<128x384xf32>
    %39 = tpu.matmul %37, %38, %cst_13 {dimension_numbers = #tpu.dot_dimension_numbers<[1], [0], [0], [1], [0, 0, 1, 1], [], []>} : vector<128x64xbf16>, vector<64x384xbf16>, vector<128x384xf32> -> vector<128x384xf32>
    %40 = arith.addf %18, %39 : vector<128x384xf32>
    %41 = vector.extract_strided_slice %7 {offsets = [0, 0, 64], sizes = [4, 32, 64], strides = [1, 1, 1]} : vector<4x32x384xbf16> to vector<4x32x64xbf16>
    %42 = vector.extract_strided_slice %10 {offsets = [0, 0, 64], sizes = [4, 32, 64], strides = [1, 1, 1]} : vector<4x32x384xbf16> to vector<4x32x64xbf16>
    %43 = vector.extract_strided_slice %13 {offsets = [0, 0, 64], sizes = [4, 32, 64], strides = [1, 1, 1]} : vector<4x32x384xbf16> to vector<4x32x64xbf16>
    "tpu.trace_start"() <{level = 10 : i32, message = "bqd,bkd->bqk"}> : () -> ()
    %cst_14 = arith.constant dense<0.000000e+00> : vector<4x32x32xf32>
    %44 = tpu.matmul %41, %42, %cst_14 {dimension_numbers = #tpu.dot_dimension_numbers<[2], [2], [1], [1], [0, 0, 0, 1, 1, 1], [0], [0]>} : vector<4x32x64xbf16>, vector<4x32x64xbf16>, vector<4x32x32xf32> -> vector<4x32x32xf32>
    "tpu.trace_stop"() : () -> ()
    %45 = arith.addf %44, %17 : vector<4x32x32xf32>
    %cst_15 = arith.constant dense<0xFF800000> : vector<4x32xf32>
    %46 = vector.multi_reduction <maximumf>, %45, %cst_15 [2] : vector<4x32x32xf32> to vector<4x32xf32>
    %47 = vector.shape_cast %46 : vector<4x32xf32> to vector<4x32x1xf32>
    %48 = vector.broadcast %47 : vector<4x32x1xf32> to vector<4x32x32xf32>
    %49 = arith.subf %45, %48 : vector<4x32x32xf32>
    %50 = math.exp %49 : vector<4x32x32xf32>
    %cst_16 = arith.constant dense<0.000000e+00> : vector<4x32xf32>
    %51 = vector.multi_reduction <add>, %50, %cst_16 [2] : vector<4x32x32xf32> to vector<4x32xf32>
    %52 = vector.shape_cast %51 : vector<4x32xf32> to vector<4x32x1xf32>
    %53 = tpu.reciprocal %52 {approx = true} : vector<4x32x1xf32> -> vector<4x32x1xf32>
    %54 = vector.broadcast %53 : vector<4x32x1xf32> to vector<4x32x32xf32>
    %55 = arith.mulf %50, %54 : vector<4x32x32xf32>
    %56 = arith.truncf %55 : vector<4x32x32xf32> to vector<4x32x32xbf16>
    "tpu.trace_start"() <{level = 10 : i32, message = "bqk,bkd->bqd"}> : () -> ()
    %cst_17 = arith.constant dense<0.000000e+00> : vector<4x32x64xf32>
    %57 = tpu.matmul %56, %43, %cst_17 {dimension_numbers = #tpu.dot_dimension_numbers<[2], [1], [1], [2], [0, 0, 0, 1, 1, 2], [0], [0]>} : vector<4x32x32xbf16>, vector<4x32x64xbf16>, vector<4x32x64xf32> -> vector<4x32x64xf32>
    "tpu.trace_stop"() : () -> ()
    %58 = vector.shape_cast %57 : vector<4x32x64xf32> to vector<128x64xf32>
    %59 = arith.truncf %58 : vector<128x64xf32> to vector<128x64xbf16>
    %c64 = arith.constant 64 : index
    %c0_18 = arith.constant 0 : index
    %60 = vector.load %arg4[%c64, %c0_18] : memref<384x384xbf16, #tpu.memory_space<vmem>>, vector<64x384xbf16>
    %cst_19 = arith.constant dense<0.000000e+00> : vector<128x384xf32>
    %61 = tpu.matmul %59, %60, %cst_19 {dimension_numbers = #tpu.dot_dimension_numbers<[1], [0], [0], [1], [0, 0, 1, 1], [], []>} : vector<128x64xbf16>, vector<64x384xbf16>, vector<128x384xf32> -> vector<128x384xf32>
    %62 = arith.addf %40, %61 : vector<128x384xf32>
    %63 = vector.extract_strided_slice %7 {offsets = [0, 0, 128], sizes = [4, 32, 64], strides = [1, 1, 1]} : vector<4x32x384xbf16> to vector<4x32x64xbf16>
    %64 = vector.extract_strided_slice %10 {offsets = [0, 0, 128], sizes = [4, 32, 64], strides = [1, 1, 1]} : vector<4x32x384xbf16> to vector<4x32x64xbf16>
    %65 = vector.extract_strided_slice %13 {offsets = [0, 0, 128], sizes = [4, 32, 64], strides = [1, 1, 1]} : vector<4x32x384xbf16> to vector<4x32x64xbf16>
    "tpu.trace_start"() <{level = 10 : i32, message = "bqd,bkd->bqk"}> : () -> ()
    %cst_20 = arith.constant dense<0.000000e+00> : vector<4x32x32xf32>
    %66 = tpu.matmul %63, %64, %cst_20 {dimension_numbers = #tpu.dot_dimension_numbers<[2], [2], [1], [1], [0, 0, 0, 1, 1, 1], [0], [0]>} : vector<4x32x64xbf16>, vector<4x32x64xbf16>, vector<4x32x32xf32> -> vector<4x32x32xf32>
    "tpu.trace_stop"() : () -> ()
    %67 = arith.addf %66, %17 : vector<4x32x32xf32>
    %cst_21 = arith.constant dense<0xFF800000> : vector<4x32xf32>
    %68 = vector.multi_reduction <maximumf>, %67, %cst_21 [2] : vector<4x32x32xf32> to vector<4x32xf32>
    %69 = vector.shape_cast %68 : vector<4x32xf32> to vector<4x32x1xf32>
    %70 = vector.broadcast %69 : vector<4x32x1xf32> to vector<4x32x32xf32>
    %71 = arith.subf %67, %70 : vector<4x32x32xf32>
    %72 = math.exp %71 : vector<4x32x32xf32>
    %cst_22 = arith.constant dense<0.000000e+00> : vector<4x32xf32>
    %73 = vector.multi_reduction <add>, %72, %cst_22 [2] : vector<4x32x32xf32> to vector<4x32xf32>
    %74 = vector.shape_cast %73 : vector<4x32xf32> to vector<4x32x1xf32>
    %75 = tpu.reciprocal %74 {approx = true} : vector<4x32x1xf32> -> vector<4x32x1xf32>
    %76 = vector.broadcast %75 : vector<4x32x1xf32> to vector<4x32x32xf32>
    %77 = arith.mulf %72, %76 : vector<4x32x32xf32>
    %78 = arith.truncf %77 : vector<4x32x32xf32> to vector<4x32x32xbf16>
    "tpu.trace_start"() <{level = 10 : i32, message = "bqk,bkd->bqd"}> : () -> ()
    %cst_23 = arith.constant dense<0.000000e+00> : vector<4x32x64xf32>
    %79 = tpu.matmul %78, %65, %cst_23 {dimension_numbers = #tpu.dot_dimension_numbers<[2], [1], [1], [2], [0, 0, 0, 1, 1, 2], [0], [0]>} : vector<4x32x32xbf16>, vector<4x32x64xbf16>, vector<4x32x64xf32> -> vector<4x32x64xf32>
    "tpu.trace_stop"() : () -> ()
    %80 = vector.shape_cast %79 : vector<4x32x64xf32> to vector<128x64xf32>
    %81 = arith.truncf %80 : vector<128x64xf32> to vector<128x64xbf16>
    %c128 = arith.constant 128 : index
    %c0_24 = arith.constant 0 : index
    %82 = vector.load %arg4[%c128, %c0_24] : memref<384x384xbf16, #tpu.memory_space<vmem>>, vector<64x384xbf16>
    %cst_25 = arith.constant dense<0.000000e+00> : vector<128x384xf32>
    %83 = tpu.matmul %81, %82, %cst_25 {dimension_numbers = #tpu.dot_dimension_numbers<[1], [0], [0], [1], [0, 0, 1, 1], [], []>} : vector<128x64xbf16>, vector<64x384xbf16>, vector<128x384xf32> -> vector<128x384xf32>
    %84 = arith.addf %62, %83 : vector<128x384xf32>
    %85 = vector.extract_strided_slice %7 {offsets = [0, 0, 192], sizes = [4, 32, 64], strides = [1, 1, 1]} : vector<4x32x384xbf16> to vector<4x32x64xbf16>
    %86 = vector.extract_strided_slice %10 {offsets = [0, 0, 192], sizes = [4, 32, 64], strides = [1, 1, 1]} : vector<4x32x384xbf16> to vector<4x32x64xbf16>
    %87 = vector.extract_strided_slice %13 {offsets = [0, 0, 192], sizes = [4, 32, 64], strides = [1, 1, 1]} : vector<4x32x384xbf16> to vector<4x32x64xbf16>
    "tpu.trace_start"() <{level = 10 : i32, message = "bqd,bkd->bqk"}> : () -> ()
    %cst_26 = arith.constant dense<0.000000e+00> : vector<4x32x32xf32>
    %88 = tpu.matmul %85, %86, %cst_26 {dimension_numbers = #tpu.dot_dimension_numbers<[2], [2], [1], [1], [0, 0, 0, 1, 1, 1], [0], [0]>} : vector<4x32x64xbf16>, vector<4x32x64xbf16>, vector<4x32x32xf32> -> vector<4x32x32xf32>
    "tpu.trace_stop"() : () -> ()
    %89 = arith.addf %88, %17 : vector<4x32x32xf32>
    %cst_27 = arith.constant dense<0xFF800000> : vector<4x32xf32>
    %90 = vector.multi_reduction <maximumf>, %89, %cst_27 [2] : vector<4x32x32xf32> to vector<4x32xf32>
    %91 = vector.shape_cast %90 : vector<4x32xf32> to vector<4x32x1xf32>
    %92 = vector.broadcast %91 : vector<4x32x1xf32> to vector<4x32x32xf32>
    %93 = arith.subf %89, %92 : vector<4x32x32xf32>
    %94 = math.exp %93 : vector<4x32x32xf32>
    %cst_28 = arith.constant dense<0.000000e+00> : vector<4x32xf32>
    %95 = vector.multi_reduction <add>, %94, %cst_28 [2] : vector<4x32x32xf32> to vector<4x32xf32>
    %96 = vector.shape_cast %95 : vector<4x32xf32> to vector<4x32x1xf32>
    %97 = tpu.reciprocal %96 {approx = true} : vector<4x32x1xf32> -> vector<4x32x1xf32>
    %98 = vector.broadcast %97 : vector<4x32x1xf32> to vector<4x32x32xf32>
    %99 = arith.mulf %94, %98 : vector<4x32x32xf32>
    %100 = arith.truncf %99 : vector<4x32x32xf32> to vector<4x32x32xbf16>
    "tpu.trace_start"() <{level = 10 : i32, message = "bqk,bkd->bqd"}> : () -> ()
    %cst_29 = arith.constant dense<0.000000e+00> : vector<4x32x64xf32>
    %101 = tpu.matmul %100, %87, %cst_29 {dimension_numbers = #tpu.dot_dimension_numbers<[2], [1], [1], [2], [0, 0, 0, 1, 1, 2], [0], [0]>} : vector<4x32x32xbf16>, vector<4x32x64xbf16>, vector<4x32x64xf32> -> vector<4x32x64xf32>
    "tpu.trace_stop"() : () -> ()
    %102 = vector.shape_cast %101 : vector<4x32x64xf32> to vector<128x64xf32>
    %103 = arith.truncf %102 : vector<128x64xf32> to vector<128x64xbf16>
    %c192 = arith.constant 192 : index
    %c0_30 = arith.constant 0 : index
    %104 = vector.load %arg4[%c192, %c0_30] : memref<384x384xbf16, #tpu.memory_space<vmem>>, vector<64x384xbf16>
    %cst_31 = arith.constant dense<0.000000e+00> : vector<128x384xf32>
    %105 = tpu.matmul %103, %104, %cst_31 {dimension_numbers = #tpu.dot_dimension_numbers<[1], [0], [0], [1], [0, 0, 1, 1], [], []>} : vector<128x64xbf16>, vector<64x384xbf16>, vector<128x384xf32> -> vector<128x384xf32>
    %106 = arith.addf %84, %105 : vector<128x384xf32>
    %107 = vector.extract_strided_slice %7 {offsets = [0, 0, 256], sizes = [4, 32, 64], strides = [1, 1, 1]} : vector<4x32x384xbf16> to vector<4x32x64xbf16>
    %108 = vector.extract_strided_slice %10 {offsets = [0, 0, 256], sizes = [4, 32, 64], strides = [1, 1, 1]} : vector<4x32x384xbf16> to vector<4x32x64xbf16>
    %109 = vector.extract_strided_slice %13 {offsets = [0, 0, 256], sizes = [4, 32, 64], strides = [1, 1, 1]} : vector<4x32x384xbf16> to vector<4x32x64xbf16>
    "tpu.trace_start"() <{level = 10 : i32, message = "bqd,bkd->bqk"}> : () -> ()
    %cst_32 = arith.constant dense<0.000000e+00> : vector<4x32x32xf32>
    %110 = tpu.matmul %107, %108, %cst_32 {dimension_numbers = #tpu.dot_dimension_numbers<[2], [2], [1], [1], [0, 0, 0, 1, 1, 1], [0], [0]>} : vector<4x32x64xbf16>, vector<4x32x64xbf16>, vector<4x32x32xf32> -> vector<4x32x32xf32>
    "tpu.trace_stop"() : () -> ()
    %111 = arith.addf %110, %17 : vector<4x32x32xf32>
    %cst_33 = arith.constant dense<0xFF800000> : vector<4x32xf32>
    %112 = vector.multi_reduction <maximumf>, %111, %cst_33 [2] : vector<4x32x32xf32> to vector<4x32xf32>
    %113 = vector.shape_cast %112 : vector<4x32xf32> to vector<4x32x1xf32>
    %114 = vector.broadcast %113 : vector<4x32x1xf32> to vector<4x32x32xf32>
    %115 = arith.subf %111, %114 : vector<4x32x32xf32>
    %116 = math.exp %115 : vector<4x32x32xf32>
    %cst_34 = arith.constant dense<0.000000e+00> : vector<4x32xf32>
    %117 = vector.multi_reduction <add>, %116, %cst_34 [2] : vector<4x32x32xf32> to vector<4x32xf32>
    %118 = vector.shape_cast %117 : vector<4x32xf32> to vector<4x32x1xf32>
    %119 = tpu.reciprocal %118 {approx = true} : vector<4x32x1xf32> -> vector<4x32x1xf32>
    %120 = vector.broadcast %119 : vector<4x32x1xf32> to vector<4x32x32xf32>
    %121 = arith.mulf %116, %120 : vector<4x32x32xf32>
    %122 = arith.truncf %121 : vector<4x32x32xf32> to vector<4x32x32xbf16>
    "tpu.trace_start"() <{level = 10 : i32, message = "bqk,bkd->bqd"}> : () -> ()
    %cst_35 = arith.constant dense<0.000000e+00> : vector<4x32x64xf32>
    %123 = tpu.matmul %122, %109, %cst_35 {dimension_numbers = #tpu.dot_dimension_numbers<[2], [1], [1], [2], [0, 0, 0, 1, 1, 2], [0], [0]>} : vector<4x32x32xbf16>, vector<4x32x64xbf16>, vector<4x32x64xf32> -> vector<4x32x64xf32>
    "tpu.trace_stop"() : () -> ()
    %124 = vector.shape_cast %123 : vector<4x32x64xf32> to vector<128x64xf32>
    %125 = arith.truncf %124 : vector<128x64xf32> to vector<128x64xbf16>
    %c256 = arith.constant 256 : index
    %c0_36 = arith.constant 0 : index
    %126 = vector.load %arg4[%c256, %c0_36] : memref<384x384xbf16, #tpu.memory_space<vmem>>, vector<64x384xbf16>
    %cst_37 = arith.constant dense<0.000000e+00> : vector<128x384xf32>
    %127 = tpu.matmul %125, %126, %cst_37 {dimension_numbers = #tpu.dot_dimension_numbers<[1], [0], [0], [1], [0, 0, 1, 1], [], []>} : vector<128x64xbf16>, vector<64x384xbf16>, vector<128x384xf32> -> vector<128x384xf32>
    %128 = arith.addf %106, %127 : vector<128x384xf32>
    %129 = vector.extract_strided_slice %7 {offsets = [0, 0, 320], sizes = [4, 32, 64], strides = [1, 1, 1]} : vector<4x32x384xbf16> to vector<4x32x64xbf16>
    %130 = vector.extract_strided_slice %10 {offsets = [0, 0, 320], sizes = [4, 32, 64], strides = [1, 1, 1]} : vector<4x32x384xbf16> to vector<4x32x64xbf16>
    %131 = vector.extract_strided_slice %13 {offsets = [0, 0, 320], sizes = [4, 32, 64], strides = [1, 1, 1]} : vector<4x32x384xbf16> to vector<4x32x64xbf16>
    "tpu.trace_start"() <{level = 10 : i32, message = "bqd,bkd->bqk"}> : () -> ()
    %cst_38 = arith.constant dense<0.000000e+00> : vector<4x32x32xf32>
    %132 = tpu.matmul %129, %130, %cst_38 {dimension_numbers = #tpu.dot_dimension_numbers<[2], [2], [1], [1], [0, 0, 0, 1, 1, 1], [0], [0]>} : vector<4x32x64xbf16>, vector<4x32x64xbf16>, vector<4x32x32xf32> -> vector<4x32x32xf32>
    "tpu.trace_stop"() : () -> ()
    %133 = arith.addf %132, %17 : vector<4x32x32xf32>
    %cst_39 = arith.constant dense<0xFF800000> : vector<4x32xf32>
    %134 = vector.multi_reduction <maximumf>, %133, %cst_39 [2] : vector<4x32x32xf32> to vector<4x32xf32>
    %135 = vector.shape_cast %134 : vector<4x32xf32> to vector<4x32x1xf32>
    %136 = vector.broadcast %135 : vector<4x32x1xf32> to vector<4x32x32xf32>
    %137 = arith.subf %133, %136 : vector<4x32x32xf32>
    %138 = math.exp %137 : vector<4x32x32xf32>
    %cst_40 = arith.constant dense<0.000000e+00> : vector<4x32xf32>
    %139 = vector.multi_reduction <add>, %138, %cst_40 [2] : vector<4x32x32xf32> to vector<4x32xf32>
    %140 = vector.shape_cast %139 : vector<4x32xf32> to vector<4x32x1xf32>
    %141 = tpu.reciprocal %140 {approx = true} : vector<4x32x1xf32> -> vector<4x32x1xf32>
    %142 = vector.broadcast %141 : vector<4x32x1xf32> to vector<4x32x32xf32>
    %143 = arith.mulf %138, %142 : vector<4x32x32xf32>
    %144 = arith.truncf %143 : vector<4x32x32xf32> to vector<4x32x32xbf16>
    "tpu.trace_start"() <{level = 10 : i32, message = "bqk,bkd->bqd"}> : () -> ()
    %cst_41 = arith.constant dense<0.000000e+00> : vector<4x32x64xf32>
    %145 = tpu.matmul %144, %131, %cst_41 {dimension_numbers = #tpu.dot_dimension_numbers<[2], [1], [1], [2], [0, 0, 0, 1, 1, 2], [0], [0]>} : vector<4x32x32xbf16>, vector<4x32x64xbf16>, vector<4x32x64xf32> -> vector<4x32x64xf32>
    "tpu.trace_stop"() : () -> ()
    %146 = vector.shape_cast %145 : vector<4x32x64xf32> to vector<128x64xf32>
    %147 = arith.truncf %146 : vector<128x64xf32> to vector<128x64xbf16>
    %c320 = arith.constant 320 : index
    %c0_42 = arith.constant 0 : index
    %148 = vector.load %arg4[%c320, %c0_42] : memref<384x384xbf16, #tpu.memory_space<vmem>>, vector<64x384xbf16>
    %cst_43 = arith.constant dense<0.000000e+00> : vector<128x384xf32>
    %149 = tpu.matmul %147, %148, %cst_43 {dimension_numbers = #tpu.dot_dimension_numbers<[1], [0], [0], [1], [0, 0, 1, 1], [], []>} : vector<128x64xbf16>, vector<64x384xbf16>, vector<128x384xf32> -> vector<128x384xf32>
    %150 = arith.addf %128, %149 : vector<128x384xf32>
    %c0_44 = arith.constant 0 : index
    %c0_45 = arith.constant 0 : index
    %151 = vector.load %arg5[%c0_44, %c0_45] : memref<1x384xf32, #tpu.memory_space<vmem>>, vector<1x384xf32>
    %152 = vector.broadcast %151 : vector<1x384xf32> to vector<128x384xf32>
    %153 = arith.addf %150, %152 : vector<128x384xf32>
    %154 = vector.shape_cast %153 : vector<128x384xf32> to vector<4x32x384xf32>
    %c0_46 = arith.constant 0 : index
    %c0_47 = arith.constant 0 : index
    %c0_48 = arith.constant 0 : index
    %155 = vector.load %arg6[%c0_46, %c0_47, %c0_48] : memref<4x32x384xf32, #tpu.memory_space<vmem>>, vector<4x32x384xf32>
    tpu.vector_store %arg6[%c0_46, %c0_47, %c0_48], %154 {strides = array<i32>} : memref<4x32x384xf32, #tpu.memory_space<vmem>>, vector<4x32x384xf32>,
    return
  }
  func.func @transform_0(%arg0: i32) -> (i32, i32, i32) {
    %c0_i32 = arith.constant 0 : i32
    %c0_i32_0 = arith.constant 0 : i32
    %c0_i32_1 = arith.constant 0 : i32
    return %arg0, %c0_i32, %c0_i32_0 : i32, i32, i32
  }
  func.func @transform_1(%arg0: i32) -> (i32, i32) {
    %c0_i32 = arith.constant 0 : i32
    %c0_i32_0 = arith.constant 0 : i32
    %c0_i32_1 = arith.constant 0 : i32
    return %c0_i32, %c0_i32_0 : i32, i32
  }
  func.func @transform_2(%arg0: i32) -> (i32, i32) {
    %c0_i32 = arith.constant 0 : i32
    %c0_i32_0 = arith.constant 0 : i32
    %c0_i32_1 = arith.constant 0 : i32
    return %c0_i32, %c0_i32_0 : i32, i32
  }
  func.func @transform_3(%arg0: i32) -> (i32, i32) {
    %c0_i32 = arith.constant 0 : i32
    %c0_i32_0 = arith.constant 0 : i32
    %c0_i32_1 = arith.constant 0 : i32
    return %c0_i32, %c0_i32_0 : i32, i32
  }
  func.func @transform_4(%arg0: i32) -> (i32, i32) {
    %c0_i32 = arith.constant 0 : i32
    %c0_i32_0 = arith.constant 0 : i32
    %c0_i32_1 = arith.constant 0 : i32
    return %c0_i32, %c0_i32_0 : i32, i32
  }
  func.func @transform_5(%arg0: i32) -> (i32, i32, i32) {
    %c0_i32 = arith.constant 0 : i32
    %c0_i32_0 = arith.constant 0 : i32
    %c0_i32_1 = arith.constant 0 : i32
    return %arg0, %c0_i32, %c0_i32_0 : i32, i32, i32
  }
}

</mosaic_0001>

<llo_original>
// kernel: tpu_custom_call.1
$region0: #{tpu_custom_call.1}
  #allocation0 [shape = 'u32[]', space=smem, size = 0x4, offset = 0x4, fixed_abs, tag = 'smem constant byte address 0x4 - core index']
  #allocation1 [shape = 'u32[72,128]{1,0:T(1,128)}', space=vmem, size = 0x9000, scoped, tag = 'internal scratch']
  %s0 = inlined_call_operand.hbm [shape: f32[8,32,384], index: 0, kind: input, shape index: {}]
  %s1 = inlined_call_operand.hbm [shape: f32[32,32], index: 1, kind: input, shape index: {}]
  %s2 = inlined_call_operand.hbm [shape: bf16[384,1152], index: 2, kind: input, shape index: {}]
  %s3 = inlined_call_operand.hbm [shape: bf16[384,384], index: 3, kind: input, shape index: {}]
  %s4 = inlined_call_operand.vmem [shape: f32[1,384], index: 4, kind: input, shape index: {}]
  %s5 = inlined_call_operand.hbm [shape: f32[8,32,384], index: 5, kind: output, shape index: {}]
  %s6 = sld [smem:[#allocation0]]
  $region69: #{tpu_custom_call.1} parent=0
    _
  %s8 = ssub.s32 1, %s6
  %s9 = scalar_select 0, %s8, %s6
  $region1: #{tpu_custom_call.1} parent=0
    #allocation2 [shape = 'u8[393216]{0}', space=vmem, size = 0x60000, scoped, tag = 'input window, operand 0']
    #allocation3 [shape = 's32[2]{0}', space=sflag, size = 0x8, scoped, tag = 'scoped memory for tpu_custom_call.1']
    #allocation4 [shape = 's32[2]{0}', space=sflag, size = 0x8, scoped, tag = 'scoped memory for tpu_custom_call.1']
    #allocation5 [shape = 'u8[16384]{0}', space=vmem, size = 0x4000, scoped, tag = 'input window, operand 1, single buffered']
    #allocation6 [shape = 's32[1]{0}', space=sflag, size = 0x4, scoped, tag = 'scoped memory for tpu_custom_call.1']
    #allocation7 [shape = 'u8[884736]{0}', space=vmem, size = 0xd8000, scoped, tag = 'input window, operand 2, single buffered']
    #allocation8 [shape = 'u8[294912]{0}', space=vmem, size = 0x48000, scoped, tag = 'input window, operand 3, single buffered']
    #allocation9 [shape = 's32[1]{0}', space=sflag, size = 0x4, scoped, tag = 'scoped memory for tpu_custom_call.1']
    #allocation10 [shape = 'u8[393216]{0}', space=vmem, size = 0x60000, scoped, tag = 'output window, operand 0']
    %10 = vsyncpa [#allocation3], 0
    %s11 = scalar_lea.sflag [#allocation3], 1
    %12 = vsyncpa %s11, 0
    %13 = vsyncpa [#allocation6], 0
    %14 = vsyncpa [#allocation9], 0
    %15 = vsyncpa [#allocation4], 0
    %s16 = scalar_lea.sflag [#allocation4], 1
    %17 = vsyncpa %s16, 0
    loop: start=0, step=1, limit=4
    $region2: #{tpu_custom_call.1} parent=1 // loop_pre_header
      _
    $region3: #{tpu_custom_call.1} parent=1 // loop_header
      %s19 = sphi 0, %s23
      %p20 = scmp.ge.s32.totalorder %s19, 4
      %s29 = sphi 0, %s31
      %s32 = sphi 0, %s29
      %s33 = sphi 0, %s32
      %s49 = sphi 0, %s33
      %s53 = sphi 0, %s53
      %s55 = sphi 0, %s53
      %s56 = sphi 0, %s55
      %s70 = sphi 0, %s56
      %s74 = sphi 0, %s74
      %s76 = sphi 0, %s74
      %s77 = sphi 0, %s76
      %s91 = sphi 0, %s77
      %s95 = sphi 0, %s95
      %s97 = sphi 0, %s95
      %s98 = sphi 0, %s97
      %s112 = sphi 0, %s98
      %s116 = sphi 0, %s116
      %s118 = sphi 0, %s116
      %s119 = sphi 0, %s118
      %s133 = sphi 0, %s119
      %s139 = sphi 0, %s141
      %s142 = sphi 0, %s139
      %s143 = sphi 0, %s142
      %s159 = sphi 0, %s143
    $region4: #{tpu_custom_call.1} parent=1 // loop_header_branch
      %22 = sbr.rel (%p20) target = $region8
    $region5: #{tpu_custom_call.1} parent=1 // loop_body
      %s24 = ssub.s32 %s19, 1
      %s25 = ssub.s32 %s19, 2
      %s26 = sadd.s32 %s19, 1
      %s27 = ssub.s32 %s19, %s26
      %p28 = scmp.eq.s32.totalorder %s27, 0
      %s30 = sadd.s32 %s29, 1
      %s31 = scalar_select %p28, %s29, %s30
      %p34 = pneg %p28
      %p35 = scmp.eq.s32.totalorder %s19, 1
      %p36 = por %p34, %p35
      %p37 = scmp.ne.s32.totalorder %s29, %s32
      %p38 = scmp.eq.s32.totalorder %s19, 0
      %p39 = por %p37, %p38
      %p40 = scmp.ne.s32.totalorder %s29, %s32
      %p41 = scmp.eq.s32.totalorder %s24, 1
      %p42 = por %p40, %p41
      %p43 = scmp.ne.s32.totalorder %s32, %s33
      %p44 = scmp.eq.s32.totalorder %s24, 0
      %p45 = por %p43, %p44
      %p46 = scmp.ne.s32.totalorder %s32, %s33
      %p47 = scmp.eq.s32.totalorder %s25, 1
      %p48 = por %p46, %p47
      %p50 = scmp.ne.s32.totalorder %s33, %s49
      %p51 = scmp.eq.s32.totalorder %s25, 0
      %p52 = por %p50, %p51
      %s54 = sadd.s32 %s53, 1
      %p57 = scmp.eq.s32.totalorder %s19, 1
      %p58 = scmp.ne.s32.totalorder %s53, %s55
      %p59 = scmp.eq.s32.totalorder %s19, 0
      %p60 = por %p58, %p59
      %p61 = scmp.ne.s32.totalorder %s53, %s55
      %p62 = scmp.eq.s32.totalorder %s24, 1
      %p63 = por %p61, %p62
      %p64 = scmp.ne.s32.totalorder %s55, %s56
      %p65 = scmp.eq.s32.totalorder %s24, 0
      %p66 = por %p64, %p65
      %p67 = scmp.ne.s32.totalorder %s55, %s56
      %p68 = scmp.eq.s32.totalorder %s25, 1
      %p69 = por %p67, %p68
      %p71 = scmp.ne.s32.totalorder %s56, %s70
      %p72 = scmp.eq.s32.totalorder %s25, 0
      %p73 = por %p71, %p72
      %s75 = sadd.s32 %s74, 1
      %p78 = scmp.eq.s32.totalorder %s19, 1
      %p79 = scmp.ne.s32.totalorder %s74, %s76
      %p80 = scmp.eq.s32.totalorder %s19, 0
      %p81 = por %p79, %p80
      %p82 = scmp.ne.s32.totalorder %s74, %s76
      %p83 = scmp.eq.s32.totalorder %s24, 1
      %p84 = por %p82, %p83
      %p85 = scmp.ne.s32.totalorder %s76, %s77
      %p86 = scmp.eq.s32.totalorder %s24, 0
      %p87 = por %p85, %p86
      %p88 = scmp.ne.s32.totalorder %s76, %s77
      %p89 = scmp.eq.s32.totalorder %s25, 1
      %p90 = por %p88, %p89
      %p92 = scmp.ne.s32.totalorder %s77, %s91
      %p93 = scmp.eq.s32.totalorder %s25, 0
      %p94 = por %p92, %p93
      %s96 = sadd.s32 %s95, 1
      %p99 = scmp.eq.s32.totalorder %s19, 1
      %p100 = scmp.ne.s32.totalorder %s95, %s97
      %p101 = scmp.eq.s32.totalorder %s19, 0
      %p102 = por %p100, %p101
      %p103 = scmp.ne.s32.totalorder %s95, %s97
      %p104 = scmp.eq.s32.totalorder %s24, 1
      %p105 = por %p103, %p104
      %p106 = scmp.ne.s32.totalorder %s97, %s98
      %p107 = scmp.eq.s32.totalorder %s24, 0
      %p108 = por %p106, %p107
      %p109 = scmp.ne.s32.totalorder %s97, %s98
      %p110 = scmp.eq.s32.totalorder %s25, 1
      %p111 = por %p109, %p110
      %p113 = scmp.ne.s32.totalorder %s98, %s112
      %p114 = scmp.eq.s32.totalorder %s25, 0
      %p115 = por %p113, %p114
      %s117 = sadd.s32 %s116, 1
      %p120 = scmp.eq.s32.totalorder %s19, 1
      %p121 = scmp.ne.s32.totalorder %s116, %s118
      %p122 = scmp.eq.s32.totalorder %s19, 0
      %p123 = por %p121, %p122
      %p124 = scmp.ne.s32.totalorder %s116, %s118
      %p125 = scmp.eq.s32.totalorder %s24, 1
      %p126 = por %p124, %p125
      %p127 = scmp.ne.s32.totalorder %s118, %s119
      %p128 = scmp.eq.s32.totalorder %s24, 0
      %p129 = por %p127, %p128
      %p130 = scmp.ne.s32.totalorder %s118, %s119
      %p131 = scmp.eq.s32.totalorder %s25, 1
      %p132 = por %p130, %p131
      %p134 = scmp.ne.s32.totalorder %s119, %s133
      %p135 = scmp.eq.s32.totalorder %s25, 0
      %p136 = por %p134, %p135
      %s137 = ssub.s32 %s19, %s26
      %p138 = scmp.eq.s32.totalorder %s137, 0
      %s140 = sadd.s32 %s139, 1
      %s141 = scalar_select %p138, %s139, %s140
      %p144 = pneg %p138
      %p145 = scmp.eq.s32.totalorder %s19, 1
      %p146 = por %p144, %p145
      %p147 = scmp.ne.s32.totalorder %s139, %s142
      %p148 = scmp.eq.s32.totalorder %s19, 0
      %p149 = por %p147, %p148
      %p150 = scmp.ne.s32.totalorder %s139, %s142
      %p151 = scmp.eq.s32.totalorder %s24, 1
      %p152 = por %p150, %p151
      %p153 = scmp.ne.s32.totalorder %s142, %s143
      %p154 = scmp.eq.s32.totalorder %s24, 0
      %p155 = por %p153, %p154
      %p156 = scmp.ne.s32.totalorder %s142, %s143
      %p157 = scmp.eq.s32.totalorder %s25, 1
      %p158 = por %p156, %p157
      %p160 = scmp.ne.s32.totalorder %s143, %s159
      %p161 = scmp.eq.s32.totalorder %s25, 0
      %p162 = por %p160, %p161
      %p163 = scmp.le.s32.totalorder 1, %s19
      %p164 = scmp.lt.s32.totalorder %s19, 3
      %p165 = pnand %p163, %p164
      %p166 = pneg %p165
      // Predicated region
      $region9: #{tpu_custom_call.1} parent=5 // pred_check
        _
      $region10: #{tpu_custom_call.1} parent=5 // pred_check_branch
        %168 = sbr.rel (%p165) target = $region12
      $region11: #{tpu_custom_call.1} parent=5 // pred_region
        %s169 = ssub.s32 %s19, 1
        // Predicated region
        $region13: #{tpu_custom_call.1} parent=11 // pred_check
          %p170 = pneg %p66
        $region14: #{tpu_custom_call.1} parent=11 // pred_check_branch
          %172 = sbr.rel (%p170) target = $region16
        $region15: #{tpu_custom_call.1} parent=11 // pred_region
          %174 = vsyncadd [#allocation6], 0
          %s175 = sshll.u32 %s1, 4
          %s176 = int_to_ptr.hbm [resolvable:$true] %s175
          %s177 = sshll.u32 [#allocation5], 4
          %s178 = int_to_ptr.vmem [resolvable:$true] %s177
          %183 = dma.hbm_to_vmem [thread:$0]  %s176, 512, %s178, [#allocation6], 128, 128, 8
        $region16: #{tpu_custom_call.1} parent=11 // pred_fallthru
          _
        // Predicated region
        $region17: #{tpu_custom_call.1} parent=11 // pred_check
          %p184 = pneg %p87
        $region18: #{tpu_custom_call.1} parent=11 // pred_check_branch
          %186 = sbr.rel (%p184) target = $region20
        $region19: #{tpu_custom_call.1} parent=11 // pred_region
          %188 = vsyncadd [#allocation6], 0
          %s189 = sshll.u32 %s2, 4
          %s190 = int_to_ptr.hbm [resolvable:$true] %s189
          %s191 = sshll.u32 [#allocation7], 4
          %s192 = int_to_ptr.vmem [resolvable:$true] %s191
          %197 = dma.hbm_to_vmem [thread:$0]  %s190, 27648, %s192, [#allocation6], 576, 576, 36
        $region20: #{tpu_custom_call.1} parent=11 // pred_fallthru
          _
        // Predicated region
        $region21: #{tpu_custom_call.1} parent=11 // pred_check
          %p198 = pneg %p108
        $region22: #{tpu_custom_call.1} parent=11 // pred_check_branch
          %200 = sbr.rel (%p198) target = $region24
        $region23: #{tpu_custom_call.1} parent=11 // pred_region
          %202 = vsyncadd [#allocation9], 0
          %s203 = sshll.u32 %s3, 4
          %s204 = int_to_ptr.hbm [resolvable:$true] %s203
          %s205 = sshll.u32 [#allocation8], 4
          %s206 = int_to_ptr.vmem [resolvable:$true] %s205
          %211 = dma.hbm_to_vmem [thread:$0]  %s204, 9216, %s206, [#allocation9], 192, 192, 12
        $region24: #{tpu_custom_call.1} parent=11 // pred_fallthru
          _
        // Predicated region
        $region25: #{tpu_custom_call.1} parent=11 // pred_check
          %p212 = pneg %p129
        $region26: #{tpu_custom_call.1} parent=11 // pred_check_branch
          %214 = sbr.rel (%p212) target = $region28
        $region27: #{tpu_custom_call.1} parent=11 // pred_region
          _
        $region28: #{tpu_custom_call.1} parent=11 // pred_fallthru
          _
      $region12: #{tpu_custom_call.1} parent=5 // pred_fallthru
        _
      %p215 = scmp.lt.s32.totalorder %s19, 2
      // Predicated region
      $region29: #{tpu_custom_call.1} parent=5 // pred_check
        %p216 = pneg %p215
      $region30: #{tpu_custom_call.1} parent=5 // pred_check_branch
        %218 = sbr.rel (%p216) target = $region32
      $region31: #{tpu_custom_call.1} parent=5 // pred_region
        // Predicated region
        $region33: #{tpu_custom_call.1} parent=31 // pred_check
          %p219 = pneg %p39
        $region34: #{tpu_custom_call.1} parent=31 // pred_check_branch
          %221 = sbr.rel (%p219) target = $region36
        $region35: #{tpu_custom_call.1} parent=31 // pred_region
          %s222 = sand.u32 %s29, 1
          %s223 = scalar_lea.sflag [#allocation3], %s222
          %s224 = sand.u32 %s29, 1
          %s225 = smul.addr %s224, 384
          %s226 = scalar_lea.vmem [#allocation2], %s225
          %s227 = smul.u32 4, %s19
          %229 = vsyncadd %s223, 0
          %s230 = smul.addr %s227, 12
          %s231 = smul.addr %s230, 8
          %s232 = scalar_lea.hbm %s0, %s231
          %s233 = sshll.u32 %s232, 4
          %s234 = int_to_ptr.hbm [resolvable:$true] %s233
          %s235 = sshll.u32 %s226, 4
          %s236 = int_to_ptr.vmem [resolvable:$true] %s235
          %241 = dma.hbm_to_vmem [thread:$0]  %s234, 6144, %s236, %s223, 384, 384, 24
        $region36: #{tpu_custom_call.1} parent=31 // pred_fallthru
          _
      $region32: #{tpu_custom_call.1} parent=5 // pred_fallthru
        _
      %p242 = scmp.le.s32.totalorder 1, %s19
      %p243 = scmp.lt.s32.totalorder %s19, 3
      %p244 = pnand %p242, %p243
      %p245 = pneg %p244
      // Predicated region
      $region37: #{tpu_custom_call.1} parent=5 // pred_check
        _
      $region38: #{tpu_custom_call.1} parent=5 // pred_check_branch
        %247 = sbr.rel (%p244) target = $region40
      $region39: #{tpu_custom_call.1} parent=5 // pred_region
        %s248 = ssub.s32 %s19, 1
        %s249 = sand.u32 %s32, 1
        %s250 = scalar_lea.sflag [#allocation3], %s249
        %s251 = sand.u32 %s32, 1
        %s252 = smul.addr %s251, 384
        %s253 = scalar_lea.vmem [#allocation2], %s252
        // Predicated region
        $region41: #{tpu_custom_call.1} parent=39 // pred_check
          %p254 = pneg %p45
        $region42: #{tpu_custom_call.1} parent=39 // pred_check_branch
          %256 = sbr.rel (%p254) target = $region44
        $region43: #{tpu_custom_call.1} parent=39 // pred_region
          %258 = dma.done %s250, 6144
        $region44: #{tpu_custom_call.1} parent=39 // pred_fallthru
          _
        // Predicated region
        $region45: #{tpu_custom_call.1} parent=39 // pred_check
          %p259 = pneg %p66
        $region46: #{tpu_custom_call.1} parent=39 // pred_check_branch
          %261 = sbr.rel (%p259) target = $region48
        $region47: #{tpu_custom_call.1} parent=39 // pred_region
          %263 = dma.done [#allocation6], 512
        $region48: #{tpu_custom_call.1} parent=39 // pred_fallthru
          _
        // Predicated region
        $region49: #{tpu_custom_call.1} parent=39 // pred_check
          %p264 = pneg %p87
        $region50: #{tpu_custom_call.1} parent=39 // pred_check_branch
          %266 = sbr.rel (%p264) target = $region52
        $region51: #{tpu_custom_call.1} parent=39 // pred_region
          %268 = dma.done [#allocation6], 27648
        $region52: #{tpu_custom_call.1} parent=39 // pred_fallthru
          _
        // Predicated region
        $region53: #{tpu_custom_call.1} parent=39 // pred_check
          %p269 = pneg %p108
        $region54: #{tpu_custom_call.1} parent=39 // pred_check_branch
          %271 = sbr.rel (%p269) target = $region56
        $region55: #{tpu_custom_call.1} parent=39 // pred_region
          %273 = dma.done [#allocation9], 9216
        $region56: #{tpu_custom_call.1} parent=39 // pred_fallthru
          _
        %s274 = sand.u32 %s32, 1
        %s275 = scalar_lea.sflag [#allocation3], %s274
        %s276 = sand.u32 %s32, 1
        %s277 = smul.addr %s276, 384
        %s278 = scalar_lea.vmem [#allocation2], %s277
        %p279 = pneg %p45
        %p280 = pneg %p42
        %p281 = pneg %p66
        %p282 = pneg %p63
        %p283 = pneg %p87
        %p284 = pneg %p84
        %p285 = pneg %p108
        %p286 = pneg %p105
        %p287 = pneg %p129
        %p288 = pneg %p126
        %p289 = pneg %p155
        %p290 = pneg %p152
        %s291 = sand.u32 %s142, 1
        %s292 = scalar_lea.sflag [#allocation4], %s291
        %s293 = sand.u32 %s142, 1
        %s294 = smul.addr %s293, 384
        %s295 = scalar_lea.vmem [#allocation10], %s294
        %s296 = smul.u32 4, %s24
        %s297 = smul.u32 4, %s24
        %v299 = vld [vmem:[%s253] sm:$0xff]
        %v300 = vld [vmem:[%s253 + $0x8] sm:$0xff]
        %v301 = vld [vmem:[%s253 + $0x10] sm:$0xff]
        %v302 = vld [vmem:[%s253 + $0x18] sm:$0xff]
        %v303 = vld [vmem:[%s253 + $0x20] sm:$0xff]
        %v304 = vld [vmem:[%s253 + $0x28] sm:$0xff]
        %v305 = vld [vmem:[%s253 + $0x30] sm:$0xff]
        %v306 = vld [vmem:[%s253 + $0x38] sm:$0xff]
        %v307 = vld [vmem:[%s253 + $0x40] sm:$0xff]
        %v308 = vld [vmem:[%s253 + $0x48] sm:$0xff]
        %v309 = vld [vmem:[%s253 + $0x50] sm:$0xff]
        %v310 = vld [vmem:[%s253 + $0x58] sm:$0xff]
        %v311 = vld [vmem:[%s253 + $0x60] sm:$0xff]
        %v312 = vld [vmem:[%s253 + $0x68] sm:$0xff]
        %v313 = vld [vmem:[%s253 + $0x70] sm:$0xff]
        %v314 = vld [vmem:[%s253 + $0x78] sm:$0xff]
        %v315 = vld [vmem:[%s253 + $0x80] sm:$0xff]
        %v316 = vld [vmem:[%s253 + $0x88] sm:$0xff]
        %v317 = vld [vmem:[%s253 + $0x90] sm:$0xff]
        %v318 = vld [vmem:[%s253 + $0x98] sm:$0xff]
        %v319 = vld [vmem:[%s253 + $0xa0] sm:$0xff]
        %v320 = vld [vmem:[%s253 + $0xa8] sm:$0xff]
        %v321 = vld [vmem:[%s253 + $0xb0] sm:$0xff]
        %v322 = vld [vmem:[%s253 + $0xb8] sm:$0xff]
        %v323 = vld [vmem:[%s253 + $0xc0] sm:$0xff]
        %v324 = vld [vmem:[%s253 + $0xc8] sm:$0xff]
        %v325 = vld [vmem:[%s253 + $0xd0] sm:$0xff]
        %v326 = vld [vmem:[%s253 + $0xd8] sm:$0xff]
        %v327 = vld [vmem:[%s253 + $0xe0] sm:$0xff]
        %v328 = vld [vmem:[%s253 + $0xe8] sm:$0xff]
        %v329 = vld [vmem:[%s253 + $0xf0] sm:$0xff]
        %v330 = vld [vmem:[%s253 + $0xf8] sm:$0xff]
        %v331 = vld [vmem:[%s253 + $0x100] sm:$0xff]
        %v332 = vld [vmem:[%s253 + $0x108] sm:$0xff]
        %v333 = vld [vmem:[%s253 + $0x110] sm:$0xff]
        %v334 = vld [vmem:[%s253 + $0x118] sm:$0xff]
        %v335 = vld [vmem:[%s253 + $0x120] sm:$0xff]
        %v336 = vld [vmem:[%s253 + $0x128] sm:$0xff]
        %v337 = vld [vmem:[%s253 + $0x130] sm:$0xff]
        %v338 = vld [vmem:[%s253 + $0x138] sm:$0xff]
        %v339 = vld [vmem:[%s253 + $0x140] sm:$0xff]
        %v340 = vld [vmem:[%s253 + $0x148] sm:$0xff]
        %v341 = vld [vmem:[%s253 + $0x150] sm:$0xff]
        %v342 = vld [vmem:[%s253 + $0x158] sm:$0xff]
        %v343 = vld [vmem:[%s253 + $0x160] sm:$0xff]
        %v344 = vld [vmem:[%s253 + $0x168] sm:$0xff]
        %v345 = vld [vmem:[%s253 + $0x170] sm:$0xff]
        %v346 = vld [vmem:[%s253 + $0x178] sm:$0xff]
        %v347 = vpack.c.bf16 %v302, %v299
        %v348 = vpack.c.bf16 %v303, %v300
        %v349 = vpack.c.bf16 %v304, %v301
        %v350 = vpack.c.bf16 %v308, %v305
        %v351 = vpack.c.bf16 %v309, %v306
        %v352 = vpack.c.bf16 %v310, %v307
        %v353 = vpack.c.bf16 %v314, %v311
        %v354 = vpack.c.bf16 %v315, %v312
        %v355 = vpack.c.bf16 %v316, %v313
        %v356 = vpack.c.bf16 %v320, %v317
        %v357 = vpack.c.bf16 %v321, %v318
        %v358 = vpack.c.bf16 %v322, %v319
        %v359 = vpack.c.bf16 %v326, %v323
        %v360 = vpack.c.bf16 %v327, %v324
        %v361 = vpack.c.bf16 %v328, %v325
        %v362 = vpack.c.bf16 %v332, %v329
        %v363 = vpack.c.bf16 %v333, %v330
        %v364 = vpack.c.bf16 %v334, %v331
        %v365 = vpack.c.bf16 %v338, %v335
        %v366 = vpack.c.bf16 %v339, %v336
        %v367 = vpack.c.bf16 %v340, %v337
        %v368 = vpack.c.bf16 %v344, %v341
        %v369 = vpack.c.bf16 %v345, %v342
        %v370 = vpack.c.bf16 %v346, %v343
        %v371 = vld [vmem:[#allocation7] sm:$0xff]
        %v372 = vld [vmem:[#allocation7 + $0x8] sm:$0xff]
        %v373 = vld [vmem:[#allocation7 + $0x10] sm:$0xff]
        %v374 = vld [vmem:[#allocation7 + $0x18] sm:$0xff]
        %v375 = vld [vmem:[#allocation7 + $0x20] sm:$0xf]
        %v376 = vld [vmem:[#allocation7 + $0x24] sm:$0xff]
        %v377 = vld [vmem:[#allocation7 + $0x2c] sm:$0xff]
        %v378 = vld [vmem:[#allocation7 + $0x34] sm:$0xff]
        %v379 = vld [vmem:[#allocation7 + $0x3c] sm:$0xff]
        %v380 = vld [vmem:[#allocation7 + $0x44] sm:$0xf]
        %v381 = vld [vmem:[#allocation7 + $0x48] sm:$0xff]
        %v382 = vld [vmem:[#allocation7 + $0x50] sm:$0xff]
        %v383 = vld [vmem:[#allocation7 + $0x58] sm:$0xff]
        %v384 = vld [vmem:[#allocation7 + $0x60] sm:$0xff]
        %v385 = vld [vmem:[#allocation7 + $0x68] sm:$0xf]
        %v386 = vld [vmem:[#allocation7 + $0x6c] sm:$0xff]
        %v387 = vld [vmem:[#allocation7 + $0x74] sm:$0xff]
        %v388 = vld [vmem:[#allocation7 + $0x7c] sm:$0xff]
        %v389 = vld [vmem:[#allocation7 + $0x84] sm:$0xff]
        %v390 = vld [vmem:[#allocation7 + $0x8c] sm:$0xf]
        %v391 = vld [vmem:[#allocation7 + $0x90] sm:$0xff]
        %v392 = vld [vmem:[#allocation7 + $0x98] sm:$0xff]
        %v393 = vld [vmem:[#allocation7 + $0xa0] sm:$0xff]
        %v394 = vld [vmem:[#allocation7 + $0xa8] sm:$0xff]
        %v395 = vld [vmem:[#allocation7 + $0xb0] sm:$0xf]
        %v396 = vld [vmem:[#allocation7 + $0xb4] sm:$0xff]
        %v397 = vld [vmem:[#allocation7 + $0xbc] sm:$0xff]
        %v398 = vld [vmem:[#allocation7 + $0xc4] sm:$0xff]
        %v399 = vld [vmem:[#allocation7 + $0xcc] sm:$0xff]
        %v400 = vld [vmem:[#allocation7 + $0xd4] sm:$0xf]
        %v401 = vld [vmem:[#allocation7 + $0xd8] sm:$0xff]
        %v402 = vld [vmem:[#allocation7 + $0xe0] sm:$0xff]
        %v403 = vld [vmem:[#allocation7 + $0xe8] sm:$0xff]
        %v404 = vld [vmem:[#allocation7 + $0xf0] sm:$0xff]
        %v405 = vld [vmem:[#allocation7 + $0xf8] sm:$0xf]
        %v406 = vld [vmem:[#allocation7 + $0xfc] sm:$0xff]
        %v407 = vld [vmem:[#allocation7 + $0x104] sm:$0xff]
        %v408 = vld [vmem:[#allocation7 + $0x10c] sm:$0xff]
        %v409 = vld [vmem:[#allocation7 + $0x114] sm:$0xff]
        %v410 = vld [vmem:[#allocation7 + $0x11c] sm:$0xf]
        %v411 = vld [vmem:[#allocation7 + $0x120] sm:$0xff]
        %v412 = vld [vmem:[#allocation7 + $0x128] sm:$0xff]
        %v413 = vld [vmem:[#allocation7 + $0x130] sm:$0xff]
        %v414 = vld [vmem:[#allocation7 + $0x138] sm:$0xff]
        %v415 = vld [vmem:[#allocation7 + $0x140] sm:$0xf]
        %v416 = vld [vmem:[#allocation7 + $0x144] sm:$0xff]
        %v417 = vld [vmem:[#allocation7 + $0x14c] sm:$0xff]
        %v418 = vld [vmem:[#allocation7 + $0x154] sm:$0xff]
        %v419 = vld [vmem:[#allocation7 + $0x15c] sm:$0xff]
        %v420 = vld [vmem:[#allocation7 + $0x164] sm:$0xf]
        %v421 = vld [vmem:[#allocation7 + $0x168] sm:$0xff]
        %v422 = vld [vmem:[#allocation7 + $0x170] sm:$0xff]
        %v423 = vld [vmem:[#allocation7 + $0x178] sm:$0xff]
        %v424 = vld [vmem:[#allocation7 + $0x180] sm:$0xff]
        %v425 = vld [vmem:[#allocation7 + $0x188] sm:$0xf]
        %v426 = vld [vmem:[#allocation7 + $0x18c] sm:$0xff]
        %v427 = vld [vmem:[#allocation7 + $0x194] sm:$0xff]
        %v428 = vld [vmem:[#allocation7 + $0x19c] sm:$0xff]
        %v429 = vld [vmem:[#allocation7 + $0x1a4] sm:$0xff]
        %v430 = vld [vmem:[#allocation7 + $0x1ac] sm:$0xf]
        %v431 = vld [vmem:[#allocation7 + $0x1b0] sm:$0xff]
        %v432 = vld [vmem:[#allocation7 + $0x1b8] sm:$0xff]
        %v433 = vld [vmem:[#allocation7 + $0x1c0] sm:$0xff]
        %v434 = vld [vmem:[#allocation7 + $0x1c8] sm:$0xff]
        %v435 = vld [vmem:[#allocation7 + $0x1d0] sm:$0xf]
        %v436 = vld [vmem:[#allocation7 + $0x1d4] sm:$0xff]
        %v437 = vld [vmem:[#allocation7 + $0x1dc] sm:$0xff]
        %v438 = vld [vmem:[#allocation7 + $0x1e4] sm:$0xff]
        %v439 = vld [vmem:[#allocation7 + $0x1ec] sm:$0xff]
        %v440 = vld [vmem:[#allocation7 + $0x1f4] sm:$0xf]
        %v441 = vld [vmem:[#allocation7 + $0x1f8] sm:$0xff]
        %v442 = vld [vmem:[#allocation7 + $0x200] sm:$0xff]
        %v443 = vld [vmem:[#allocation7 + $0x208] sm:$0xff]
        %v444 = vld [vmem:[#allocation7 + $0x210] sm:$0xff]
        %v445 = vld [vmem:[#allocation7 + $0x218] sm:$0xf]
        %v446 = vld [vmem:[#allocation7 + $0x21c] sm:$0xff]
        %v447 = vld [vmem:[#allocation7 + $0x224] sm:$0xff]
        %v448 = vld [vmem:[#allocation7 + $0x22c] sm:$0xff]
        %v449 = vld [vmem:[#allocation7 + $0x234] sm:$0xff]
        %v450 = vld [vmem:[#allocation7 + $0x23c] sm:$0xf]
        %v451 = vld [vmem:[#allocation7 + $0x240] sm:$0xff]
        %v452 = vld [vmem:[#allocation7 + $0x248] sm:$0xff]
        %v453 = vld [vmem:[#allocation7 + $0x250] sm:$0xff]
        %v454 = vld [vmem:[#allocation7 + $0x258] sm:$0xff]
        %v455 = vld [vmem:[#allocation7 + $0x260] sm:$0xf]
        %v456 = vld [vmem:[#allocation7 + $0x264] sm:$0xff]
        %v457 = vld [vmem:[#allocation7 + $0x26c] sm:$0xff]
        %v458 = vld [vmem:[#allocation7 + $0x274] sm:$0xff]
        %v459 = vld [vmem:[#allocation7 + $0x27c] sm:$0xff]
        %v460 = vld [vmem:[#allocation7 + $0x284] sm:$0xf]
        %v461 = vld [vmem:[#allocation7 + $0x288] sm:$0xff]
        %v462 = vld [vmem:[#allocation7 + $0x290] sm:$0xff]
        %v463 = vld [vmem:[#allocation7 + $0x298] sm:$0xff]
        %v464 = vld [vmem:[#allocation7 + $0x2a0] sm:$0xff]
        %v465 = vld [vmem:[#allocation7 + $0x2a8] sm:$0xf]
        %v466 = vld [vmem:[#allocation7 + $0x2ac] sm:$0xff]
        %v467 = vld [vmem:[#allocation7 + $0x2b4] sm:$0xff]
        %v468 = vld [vmem:[#allocation7 + $0x2bc] sm:$0xff]
        %v469 = vld [vmem:[#allocation7 + $0x2c4] sm:$0xff]
        %v470 = vld [vmem:[#allocation7 + $0x2cc] sm:$0xf]
        %v471 = vld [vmem:[#allocation7 + $0x2d0] sm:$0xff]
        %v472 = vld [vmem:[#allocation7 + $0x2d8] sm:$0xff]
        %v473 = vld [vmem:[#allocation7 + $0x2e0] sm:$0xff]
        %v474 = vld [vmem:[#allocation7 + $0x2e8] sm:$0xff]
        %v475 = vld [vmem:[#allocation7 + $0x2f0] sm:$0xf]
        %v476 = vld [vmem:[#allocation7 + $0x2f4] sm:$0xff]
        %v477 = vld [vmem:[#allocation7 + $0x2fc] sm:$0xff]
        %v478 = vld [vmem:[#allocation7 + $0x304] sm:$0xff]
        %v479 = vld [vmem:[#allocation7 + $0x30c] sm:$0xff]
        %v480 = vld [vmem:[#allocation7 + $0x314] sm:$0xf]
        %v481 = vld [vmem:[#allocation7 + $0x318] sm:$0xff]
        %v482 = vld [vmem:[#allocation7 + $0x320] sm:$0xff]
        %v483 = vld [vmem:[#allocation7 + $0x328] sm:$0xff]
        %v484 = vld [vmem:[#allocation7 + $0x330] sm:$0xff]
        %v485 = vld [vmem:[#allocation7 + $0x338] sm:$0xf]
        %v486 = vld [vmem:[#allocation7 + $0x33c] sm:$0xff]
        %v487 = vld [vmem:[#allocation7 + $0x344] sm:$0xff]
        %v488 = vld [vmem:[#allocation7 + $0x34c] sm:$0xff]
        %v489 = vld [vmem:[#allocation7 + $0x354] sm:$0xff]
        %v490 = vld [vmem:[#allocation7 + $0x35c] sm:$0xf]
        %v491 = vld [vmem:[#allocation7 + $0x360] sm:$0xff]
        %v492 = vld [vmem:[#allocation7 + $0x368] sm:$0xff]
        %v493 = vld [vmem:[#allocation7 + $0x370] sm:$0xff]
        %v494 = vld [vmem:[#allocation7 + $0x378] sm:$0xff]
        %v495 = vld [vmem:[#allocation7 + $0x380] sm:$0xf]
        %v496 = vld [vmem:[#allocation7 + $0x384] sm:$0xff]
        %v497 = vld [vmem:[#allocation7 + $0x38c] sm:$0xff]
        %v498 = vld [vmem:[#allocation7 + $0x394] sm:$0xff]
        %v499 = vld [vmem:[#allocation7 + $0x39c] sm:$0xff]
        %v500 = vld [vmem:[#allocation7 + $0x3a4] sm:$0xf]
        %v501 = vld [vmem:[#allocation7 + $0x3a8] sm:$0xff]
        %v502 = vld [vmem:[#allocation7 + $0x3b0] sm:$0xff]
        %v503 = vld [vmem:[#allocation7 + $0x3b8] sm:$0xff]
        %v504 = vld [vmem:[#allocation7 + $0x3c0] sm:$0xff]
        %v505 = vld [vmem:[#allocation7 + $0x3c8] sm:$0xf]
        %v506 = vld [vmem:[#allocation7 + $0x3cc] sm:$0xff]
        %v507 = vld [vmem:[#allocation7 + $0x3d4] sm:$0xff]
        %v508 = vld [vmem:[#allocation7 + $0x3dc] sm:$0xff]
        %v509 = vld [vmem:[#allocation7 + $0x3e4] sm:$0xff]
        %v510 = vld [vmem:[#allocation7 + $0x3ec] sm:$0xf]
        %v511 = vld [vmem:[#allocation7 + $0x3f0] sm:$0xff]
        %v512 = vld [vmem:[#allocation7 + $0x3f8] sm:$0xff]
        %v513 = vld [vmem:[#allocation7 + $0x400] sm:$0xff]
        %v514 = vld [vmem:[#allocation7 + $0x408] sm:$0xff]
        %v515 = vld [vmem:[#allocation7 + $0x410] sm:$0xf]
        %v516 = vld [vmem:[#allocation7 + $0x414] sm:$0xff]
        %v517 = vld [vmem:[#allocation7 + $0x41c] sm:$0xff]
        %v518 = vld [vmem:[#allocation7 + $0x424] sm:$0xff]
        %v519 = vld [vmem:[#allocation7 + $0x42c] sm:$0xff]
        %v520 = vld [vmem:[#allocation7 + $0x434] sm:$0xf]
        %v521 = vld [vmem:[#allocation7 + $0x438] sm:$0xff]
        %v522 = vld [vmem:[#allocation7 + $0x440] sm:$0xff]
        %v523 = vld [vmem:[#allocation7 + $0x448] sm:$0xff]
        %v524 = vld [vmem:[#allocation7 + $0x450] sm:$0xff]
        %v525 = vld [vmem:[#allocation7 + $0x458] sm:$0xf]
        %v526 = vld [vmem:[#allocation7 + $0x45c] sm:$0xff]
        %v527 = vld [vmem:[#allocation7 + $0x464] sm:$0xff]
        %v528 = vld [vmem:[#allocation7 + $0x46c] sm:$0xff]
        %v529 = vld [vmem:[#allocation7 + $0x474] sm:$0xff]
        %v530 = vld [vmem:[#allocation7 + $0x47c] sm:$0xf]
        %v531 = vld [vmem:[#allocation7 + $0x480] sm:$0xff]
        %v532 = vld [vmem:[#allocation7 + $0x488] sm:$0xff]
        %v533 = vld [vmem:[#allocation7 + $0x490] sm:$0xff]
        %v534 = vld [vmem:[#allocation7 + $0x498] sm:$0xff]
        %v535 = vld [vmem:[#allocation7 + $0x4a0] sm:$0xf]
        %v536 = vld [vmem:[#allocation7 + $0x4a4] sm:$0xff]
        %v537 = vld [vmem:[#allocation7 + $0x4ac] sm:$0xff]
        %v538 = vld [vmem:[#allocation7 + $0x4b4] sm:$0xff]
        %v539 = vld [vmem:[#allocation7 + $0x4bc] sm:$0xff]
        %v540 = vld [vmem:[#allocation7 + $0x4c4] sm:$0xf]
        %v541 = vld [vmem:[#allocation7 + $0x4c8] sm:$0xff]
        %v542 = vld [vmem:[#allocation7 + $0x4d0] sm:$0xff]
        %v543 = vld [vmem:[#allocation7 + $0x4d8] sm:$0xff]
        %v544 = vld [vmem:[#allocation7 + $0x4e0] sm:$0xff]
        %v545 = vld [vmem:[#allocation7 + $0x4e8] sm:$0xf]
        %v546 = vld [vmem:[#allocation7 + $0x4ec] sm:$0xff]
        %v547 = vld [vmem:[#allocation7 + $0x4f4] sm:$0xff]
        %v548 = vld [vmem:[#allocation7 + $0x4fc] sm:$0xff]
        %v549 = vld [vmem:[#allocation7 + $0x504] sm:$0xff]
        %v550 = vld [vmem:[#allocation7 + $0x50c] sm:$0xf]
        %v551 = vld [vmem:[#allocation7 + $0x510] sm:$0xff]
        %v552 = vld [vmem:[#allocation7 + $0x518] sm:$0xff]
        %v553 = vld [vmem:[#allocation7 + $0x520] sm:$0xff]
        %v554 = vld [vmem:[#allocation7 + $0x528] sm:$0xff]
        %v555 = vld [vmem:[#allocation7 + $0x530] sm:$0xf]
        %v556 = vld [vmem:[#allocation7 + $0x534] sm:$0xff]
        %v557 = vld [vmem:[#allocation7 + $0x53c] sm:$0xff]
        %v558 = vld [vmem:[#allocation7 + $0x544] sm:$0xff]
        %v559 = vld [vmem:[#allocation7 + $0x54c] sm:$0xff]
        %v560 = vld [vmem:[#allocation7 + $0x554] sm:$0xf]
        %v561 = vld [vmem:[#allocation7 + $0x558] sm:$0xff]
        %v562 = vld [vmem:[#allocation7 + $0x560] sm:$0xff]
        %v563 = vld [vmem:[#allocation7 + $0x568] sm:$0xff]
        %v564 = vld [vmem:[#allocation7 + $0x570] sm:$0xff]
        %v565 = vld [vmem:[#allocation7 + $0x578] sm:$0xf]
        %v566 = vld [vmem:[#allocation7 + $0x57c] sm:$0xff]
        %v567 = vld [vmem:[#allocation7 + $0x584] sm:$0xff]
        %v568 = vld [vmem:[#allocation7 + $0x58c] sm:$0xff]
        %v569 = vld [vmem:[#allocation7 + $0x594] sm:$0xff]
        %v570 = vld [vmem:[#allocation7 + $0x59c] sm:$0xf]
        %v571 = vld [vmem:[#allocation7 + $0x5a0] sm:$0xff]
        %v572 = vld [vmem:[#allocation7 + $0x5a8] sm:$0xff]
        %v573 = vld [vmem:[#allocation7 + $0x5b0] sm:$0xff]
        %v574 = vld [vmem:[#allocation7 + $0x5b8] sm:$0xff]
        %v575 = vld [vmem:[#allocation7 + $0x5c0] sm:$0xf]
        %v576 = vld [vmem:[#allocation7 + $0x5c4] sm:$0xff]
        %v577 = vld [vmem:[#allocation7 + $0x5cc] sm:$0xff]
        %v578 = vld [vmem:[#allocation7 + $0x5d4] sm:$0xff]
        %v579 = vld [vmem:[#allocation7 + $0x5dc] sm:$0xff]
        %v580 = vld [vmem:[#allocation7 + $0x5e4] sm:$0xf]
        %v581 = vld [vmem:[#allocation7 + $0x5e8] sm:$0xff]
        %v582 = vld [vmem:[#allocation7 + $0x5f0] sm:$0xff]
        %v583 = vld [vmem:[#allocation7 + $0x5f8] sm:$0xff]
        %v584 = vld [vmem:[#allocation7 + $0x600] sm:$0xff]
        %v585 = vld [vmem:[#allocation7 + $0x608] sm:$0xf]
        %v586 = vld [vmem:[#allocation7 + $0x60c] sm:$0xff]
        %v587 = vld [vmem:[#allocation7 + $0x614] sm:$0xff]
        %v588 = vld [vmem:[#allocation7 + $0x61c] sm:$0xff]
        %v589 = vld [vmem:[#allocation7 + $0x624] sm:$0xff]
        %v590 = vld [vmem:[#allocation7 + $0x62c] sm:$0xf]
        %v591 = vld [vmem:[#allocation7 + $0x630] sm:$0xff]
        %v592 = vld [vmem:[#allocation7 + $0x638] sm:$0xff]
        %v593 = vld [vmem:[#allocation7 + $0x640] sm:$0xff]
        %v594 = vld [vmem:[#allocation7 + $0x648] sm:$0xff]
        %v595 = vld [vmem:[#allocation7 + $0x650] sm:$0xf]
        %v596 = vld [vmem:[#allocation7 + $0x654] sm:$0xff]
        %v597 = vld [vmem:[#allocation7 + $0x65c] sm:$0xff]
        %v598 = vld [vmem:[#allocation7 + $0x664] sm:$0xff]
        %v599 = vld [vmem:[#allocation7 + $0x66c] sm:$0xff]
        %v600 = vld [vmem:[#allocation7 + $0x674] sm:$0xf]
        %v601 = vld [vmem:[#allocation7 + $0x678] sm:$0xff]
        %v602 = vld [vmem:[#allocation7 + $0x680] sm:$0xff]
        %v603 = vld [vmem:[#allocation7 + $0x688] sm:$0xff]
        %v604 = vld [vmem:[#allocation7 + $0x690] sm:$0xff]
        %v605 = vld [vmem:[#allocation7 + $0x698] sm:$0xf]
        %v606 = vld [vmem:[#allocation7 + $0x69c] sm:$0xff]
        %v607 = vld [vmem:[#allocation7 + $0x6a4] sm:$0xff]
        %v608 = vld [vmem:[#allocation7 + $0x6ac] sm:$0xff]
        %v609 = vld [vmem:[#allocation7 + $0x6b4] sm:$0xff]
        %v610 = vld [vmem:[#allocation7 + $0x6bc] sm:$0xf]
        %v851 = vunpack.c.l.b16 %v371
        %v852 = vunpack.c.h.b16 %v371
        %v853 = vunpack.c.l.b16 %v372
        %v854 = vunpack.c.h.b16 %v372
        %v855 = vunpack.c.l.b16 %v373
        %v856 = vunpack.c.h.b16 %v373
        %v857 = vunpack.c.l.b16 %v374
        %v858 = vunpack.c.h.b16 %v374
        %v859 = vunpack.c.l.b16 %v375
        %v860 = vunpack.c.l.b16 %v376
        %v861 = vunpack.c.h.b16 %v376
        %v862 = vunpack.c.l.b16 %v377
        %v863 = vunpack.c.h.b16 %v377
        %v864 = vunpack.c.l.b16 %v378
        %v865 = vunpack.c.h.b16 %v378
        %v866 = vunpack.c.l.b16 %v379
        %v867 = vunpack.c.h.b16 %v379
        %v868 = vunpack.c.l.b16 %v380
        %v869 = vunpack.c.l.b16 %v381
        %v870 = vunpack.c.h.b16 %v381
        %v871 = vunpack.c.l.b16 %v382
        %v872 = vunpack.c.h.b16 %v382
        %v873 = vunpack.c.l.b16 %v383
        %v874 = vunpack.c.h.b16 %v383
        %v875 = vunpack.c.l.b16 %v384
        %v876 = vunpack.c.h.b16 %v384
        %v877 = vunpack.c.l.b16 %v385
        %v878 = vunpack.c.l.b16 %v386
        %v879 = vunpack.c.h.b16 %v386
        %v880 = vunpack.c.l.b16 %v387
        %v881 = vunpack.c.h.b16 %v387
        %v882 = vunpack.c.l.b16 %v388
        %v883 = vunpack.c.h.b16 %v388
        %v884 = vunpack.c.l.b16 %v389
        %v885 = vunpack.c.h.b16 %v389
        %v886 = vunpack.c.l.b16 %v390
        %v887 = vunpack.c.l.b16 %v391
        %v888 = vunpack.c.h.b16 %v391
        %v889 = vunpack.c.l.b16 %v392
        %v890 = vunpack.c.h.b16 %v392
        %v891 = vunpack.c.l.b16 %v393
        %v892 = vunpack.c.h.b16 %v393
        %v893 = vunpack.c.l.b16 %v394
        %v894 = vunpack.c.h.b16 %v394
        %v895 = vunpack.c.l.b16 %v395
        %v896 = vunpack.c.l.b16 %v396
        %v897 = vunpack.c.h.b16 %v396
        %v898 = vunpack.c.l.b16 %v397
        %v899 = vunpack.c.h.b16 %v397
        %v900 = vunpack.c.l.b16 %v398
        %v901 = vunpack.c.h.b16 %v398
        %v902 = vunpack.c.l.b16 %v399
        %v903 = vunpack.c.h.b16 %v399
        %v904 = vunpack.c.l.b16 %v400
        %v905 = vunpack.c.l.b16 %v401
        %v906 = vunpack.c.h.b16 %v401
        %v907 = vunpack.c.l.b16 %v402
        %v908 = vunpack.c.h.b16 %v402
        %v909 = vunpack.c.l.b16 %v403
        %v910 = vunpack.c.h.b16 %v403
        %v911 = vunpack.c.l.b16 %v404
        %v912 = vunpack.c.h.b16 %v404
        %v913 = vunpack.c.l.b16 %v405
        %v914 = vunpack.c.l.b16 %v406
        %v915 = vunpack.c.h.b16 %v406
        %v916 = vunpack.c.l.b16 %v407
        %v917 = vunpack.c.h.b16 %v407
        %v918 = vunpack.c.l.b16 %v408
        %v919 = vunpack.c.h.b16 %v408
        %v920 = vunpack.c.l.b16 %v409
        %v921 = vunpack.c.h.b16 %v409
        %v922 = vunpack.c.l.b16 %v410
        %v923 = vunpack.c.l.b16 %v411
        %v924 = vunpack.c.h.b16 %v411
        %v925 = vunpack.c.l.b16 %v412
        %v926 = vunpack.c.h.b16 %v412
        %v927 = vunpack.c.l.b16 %v413
        %v928 = vunpack.c.h.b16 %v413
        %v929 = vunpack.c.l.b16 %v414
        %v930 = vunpack.c.h.b16 %v414
        %v931 = vunpack.c.l.b16 %v415
        %v932 = vunpack.c.l.b16 %v416
        %v933 = vunpack.c.h.b16 %v416
        %v934 = vunpack.c.l.b16 %v417
        %v935 = vunpack.c.h.b16 %v417
        %v936 = vunpack.c.l.b16 %v418
        %v937 = vunpack.c.h.b16 %v418
        %v938 = vunpack.c.l.b16 %v419
        %v939 = vunpack.c.h.b16 %v419
        %v940 = vunpack.c.l.b16 %v420
        %v941 = vunpack.c.l.b16 %v421
        %v942 = vunpack.c.h.b16 %v421
        %v943 = vunpack.c.l.b16 %v422
        %v944 = vunpack.c.h.b16 %v422
        %v945 = vunpack.c.l.b16 %v423
        %v946 = vunpack.c.h.b16 %v423
        %v947 = vunpack.c.l.b16 %v424
        %v948 = vunpack.c.h.b16 %v424
        %v949 = vunpack.c.l.b16 %v425
        %v950 = vunpack.c.l.b16 %v426
        %v951 = vunpack.c.h.b16 %v426
        %v952 = vunpack.c.l.b16 %v427
        %v953 = vunpack.c.h.b16 %v427
        %v954 = vunpack.c.l.b16 %v428
        %v955 = vunpack.c.h.b16 %v428
        %v956 = vunpack.c.l.b16 %v429
        %v957 = vunpack.c.h.b16 %v429
        %v958 = vunpack.c.l.b16 %v430
        %v959 = vunpack.c.l.b16 %v431
        %v960 = vunpack.c.h.b16 %v431
        %v961 = vunpack.c.l.b16 %v432
        %v962 = vunpack.c.h.b16 %v432
        %v963 = vunpack.c.l.b16 %v433
        %v964 = vunpack.c.h.b16 %v433
        %v965 = vunpack.c.l.b16 %v434
        %v966 = vunpack.c.h.b16 %v434
        %v967 = vunpack.c.l.b16 %v435
        %v968 = vunpack.c.l.b16 %v436
        %v969 = vunpack.c.h.b16 %v436
        %v970 = vunpack.c.l.b16 %v437
        %v971 = vunpack.c.h.b16 %v437
        %v972 = vunpack.c.l.b16 %v438
        %v973 = vunpack.c.h.b16 %v438
        %v974 = vunpack.c.l.b16 %v439
        %v975 = vunpack.c.h.b16 %v439
        %v976 = vunpack.c.l.b16 %v440
        %v977 = vunpack.c.l.b16 %v441
        %v978 = vunpack.c.h.b16 %v441
        %v979 = vunpack.c.l.b16 %v442
        %v980 = vunpack.c.h.b16 %v442
        %v981 = vunpack.c.l.b16 %v443
        %v982 = vunpack.c.h.b16 %v443
        %v983 = vunpack.c.l.b16 %v444
        %v984 = vunpack.c.h.b16 %v444
        %v985 = vunpack.c.l.b16 %v445
        %v986 = vunpack.c.l.b16 %v446
        %v987 = vunpack.c.h.b16 %v446
        %v988 = vunpack.c.l.b16 %v447
        %v989 = vunpack.c.h.b16 %v447
        %v990 = vunpack.c.l.b16 %v448
        %v991 = vunpack.c.h.b16 %v448
        %v992 = vunpack.c.l.b16 %v449
        %v993 = vunpack.c.h.b16 %v449
        %v994 = vunpack.c.l.b16 %v450
        %v995 = vunpack.c.l.b16 %v451
        %v996 = vunpack.c.h.b16 %v451
        %v997 = vunpack.c.l.b16 %v452
        %v998 = vunpack.c.h.b16 %v452
        %v999 = vunpack.c.l.b16 %v453
        %v1000 = vunpack.c.h.b16 %v453
        %v1001 = vunpack.c.l.b16 %v454
        %v1002 = vunpack.c.h.b16 %v454
        %v1003 = vunpack.c.l.b16 %v455
        %v1004 = vunpack.c.l.b16 %v456
        %v1005 = vunpack.c.h.b16 %v456
        %v1006 = vunpack.c.l.b16 %v457
        %v1007 = vunpack.c.h.b16 %v457
        %v1008 = vunpack.c.l.b16 %v458
        %v1009 = vunpack.c.h.b16 %v458
        %v1010 = vunpack.c.l.b16 %v459
        %v1011 = vunpack.c.h.b16 %v459
        %v1012 = vunpack.c.l.b16 %v460
        %v1013 = vunpack.c.l.b16 %v461
        %v1014 = vunpack.c.h.b16 %v461
        %v1015 = vunpack.c.l.b16 %v462
        %v1016 = vunpack.c.h.b16 %v462
        %v1017 = vunpack.c.l.b16 %v463
        %v1018 = vunpack.c.h.b16 %v463
        %v1019 = vunpack.c.l.b16 %v464
        %v1020 = vunpack.c.h.b16 %v464
        %v1021 = vunpack.c.l.b16 %v465
        %v1022 = vunpack.c.l.b16 %v466
        %v1023 = vunpack.c.h.b16 %v466
        %v1024 = vunpack.c.l.b16 %v467
        %v1025 = vunpack.c.h.b16 %v467
        %v1026 = vunpack.c.l.b16 %v468
        %v1027 = vunpack.c.h.b16 %v468
        %v1028 = vunpack.c.l.b16 %v469
        %v1029 = vunpack.c.h.b16 %v469
        %v1030 = vunpack.c.l.b16 %v470
        %v1031 = vunpack.c.l.b16 %v471
        %v1032 = vunpack.c.h.b16 %v471
        %v1033 = vunpack.c.l.b16 %v472
        %v1034 = vunpack.c.h.b16 %v472
        %v1035 = vunpack.c.l.b16 %v473
        %v1036 = vunpack.c.h.b16 %v473
        %v1037 = vunpack.c.l.b16 %v474
        %v1038 = vunpack.c.h.b16 %v474
        %v1039 = vunpack.c.l.b16 %v475
        %v1040 = vunpack.c.l.b16 %v476
        %v1041 = vunpack.c.h.b16 %v476
        %v1042 = vunpack.c.l.b16 %v477
        %v1043 = vunpack.c.h.b16 %v477
        %v1044 = vunpack.c.l.b16 %v478
        %v1045 = vunpack.c.h.b16 %v478
        %v1046 = vunpack.c.l.b16 %v479
        %v1047 = vunpack.c.h.b16 %v479
        %v1048 = vunpack.c.l.b16 %v480
        %v1049 = vunpack.c.l.b16 %v481
        %v1050 = vunpack.c.h.b16 %v481
        %v1051 = vunpack.c.l.b16 %v482
        %v1052 = vunpack.c.h.b16 %v482
        %v1053 = vunpack.c.l.b16 %v483
        %v1054 = vunpack.c.h.b16 %v483
        %v1055 = vunpack.c.l.b16 %v484
        %v1056 = vunpack.c.h.b16 %v484
        %v1057 = vunpack.c.l.b16 %v485
        %v1058 = vunpack.c.l.b16 %v486
        %v1059 = vunpack.c.h.b16 %v486
        %v1060 = vunpack.c.l.b16 %v487
        %v1061 = vunpack.c.h.b16 %v487
        %v1062 = vunpack.c.l.b16 %v488
        %v1063 = vunpack.c.h.b16 %v488
        %v1064 = vunpack.c.l.b16 %v489
        %v1065 = vunpack.c.h.b16 %v489
        %v1066 = vunpack.c.l.b16 %v490
        %v1067 = vunpack.c.l.b16 %v491
        %v1068 = vunpack.c.h.b16 %v491
        %v1069 = vunpack.c.l.b16 %v492
        %v1070 = vunpack.c.h.b16 %v492
        %v1071 = vunpack.c.l.b16 %v493
        %v1072 = vunpack.c.h.b16 %v493
        %v1073 = vunpack.c.l.b16 %v494
        %v1074 = vunpack.c.h.b16 %v494
        %v1075 = vunpack.c.l.b16 %v495
        %v1076 = vunpack.c.l.b16 %v496
        %v1077 = vunpack.c.h.b16 %v496
        %v1078 = vunpack.c.l.b16 %v497
        %v1079 = vunpack.c.h.b16 %v497
        %v1080 = vunpack.c.l.b16 %v498
        %v1081 = vunpack.c.h.b16 %v498
        %v1082 = vunpack.c.l.b16 %v499
        %v1083 = vunpack.c.h.b16 %v499
        %v1084 = vunpack.c.l.b16 %v500
        %v1085 = vunpack.c.l.b16 %v501
        %v1086 = vunpack.c.h.b16 %v501
        %v1087 = vunpack.c.l.b16 %v502
        %v1088 = vunpack.c.h.b16 %v502
        %v1089 = vunpack.c.l.b16 %v503
        %v1090 = vunpack.c.h.b16 %v503
        %v1091 = vunpack.c.l.b16 %v504
        %v1092 = vunpack.c.h.b16 %v504
        %v1093 = vunpack.c.l.b16 %v505
        %v1094 = vunpack.c.l.b16 %v506
        %v1095 = vunpack.c.h.b16 %v506
        %v1096 = vunpack.c.l.b16 %v507
        %v1097 = vunpack.c.h.b16 %v507
        %v1098 = vunpack.c.l.b16 %v508
        %v1099 = vunpack.c.h.b16 %v508
        %v1100 = vunpack.c.l.b16 %v509
        %v1101 = vunpack.c.h.b16 %v509
        %v1102 = vunpack.c.l.b16 %v510
        %v1103 = vunpack.c.l.b16 %v511
        %v1104 = vunpack.c.h.b16 %v511
        %v1105 = vunpack.c.l.b16 %v512
        %v1106 = vunpack.c.h.b16 %v512
        %v1107 = vunpack.c.l.b16 %v513
        %v1108 = vunpack.c.h.b16 %v513
        %v1109 = vunpack.c.l.b16 %v514
        %v1110 = vunpack.c.h.b16 %v514
        %v1111 = vunpack.c.l.b16 %v515
        %v1112 = vunpack.c.l.b16 %v516
        %v1113 = vunpack.c.h.b16 %v516
        %v1114 = vunpack.c.l.b16 %v517
        %v1115 = vunpack.c.h.b16 %v517
        %v1116 = vunpack.c.l.b16 %v518
        %v1117 = vunpack.c.h.b16 %v518
        %v1118 = vunpack.c.l.b16 %v519
        %v1119 = vunpack.c.h.b16 %v519
        %v1120 = vunpack.c.l.b16 %v520
        %v1121 = vunpack.c.l.b16 %v521
        %v1122 = vunpack.c.h.b16 %v521
        %v1123 = vunpack.c.l.b16 %v522
        %v1124 = vunpack.c.h.b16 %v522
        %v1125 = vunpack.c.l.b16 %v523
        %v1126 = vunpack.c.h.b16 %v523
        %v1127 = vunpack.c.l.b16 %v524
        %v1128 = vunpack.c.h.b16 %v524
        %v1129 = vunpack.c.l.b16 %v525
        %v1130 = vunpack.c.l.b16 %v526
        %v1131 = vunpack.c.h.b16 %v526
        %v1132 = vunpack.c.l.b16 %v527
        %v1133 = vunpack.c.h.b16 %v527
        %v1134 = vunpack.c.l.b16 %v528
        %v1135 = vunpack.c.h.b16 %v528
        %v1136 = vunpack.c.l.b16 %v529
        %v1137 = vunpack.c.h.b16 %v529
        %v1138 = vunpack.c.l.b16 %v530
        %v1139 = vunpack.c.l.b16 %v531
        %v1140 = vunpack.c.h.b16 %v531
        %v1141 = vunpack.c.l.b16 %v532
        %v1142 = vunpack.c.h.b16 %v532
        %v1143 = vunpack.c.l.b16 %v533
        %v1144 = vunpack.c.h.b16 %v533
        %v1145 = vunpack.c.l.b16 %v534
        %v1146 = vunpack.c.h.b16 %v534
        %v1147 = vunpack.c.l.b16 %v535
        %v1148 = vunpack.c.l.b16 %v536
        %v1149 = vunpack.c.h.b16 %v536
        %v1150 = vunpack.c.l.b16 %v537
        %v1151 = vunpack.c.h.b16 %v537
        %v1152 = vunpack.c.l.b16 %v538
        %v1153 = vunpack.c.h.b16 %v538
        %v1154 = vunpack.c.l.b16 %v539
        %v1155 = vunpack.c.h.b16 %v539
        %v1156 = vunpack.c.l.b16 %v540
        %v1157 = vunpack.c.l.b16 %v541
        %v1158 = vunpack.c.h.b16 %v541
        %v1159 = vunpack.c.l.b16 %v542
        %v1160 = vunpack.c.h.b16 %v542
        %v1161 = vunpack.c.l.b16 %v543
        %v1162 = vunpack.c.h.b16 %v543
        %v1163 = vunpack.c.l.b16 %v544
        %v1164 = vunpack.c.h.b16 %v544
        %v1165 = vunpack.c.l.b16 %v545
        %v1166 = vunpack.c.l.b16 %v546
        %v1167 = vunpack.c.h.b16 %v546
        %v1168 = vunpack.c.l.b16 %v547
        %v1169 = vunpack.c.h.b16 %v547
        %v1170 = vunpack.c.l.b16 %v548
        %v1171 = vunpack.c.h.b16 %v548
        %v1172 = vunpack.c.l.b16 %v549
        %v1173 = vunpack.c.h.b16 %v549
        %v1174 = vunpack.c.l.b16 %v550
        %v1175 = vunpack.c.l.b16 %v551
        %v1176 = vunpack.c.h.b16 %v551
        %v1177 = vunpack.c.l.b16 %v552
        %v1178 = vunpack.c.h.b16 %v552
        %v1179 = vunpack.c.l.b16 %v553
        %v1180 = vunpack.c.h.b16 %v553
        %v1181 = vunpack.c.l.b16 %v554
        %v1182 = vunpack.c.h.b16 %v554
        %v1183 = vunpack.c.l.b16 %v555
        %v1184 = vunpack.c.l.b16 %v556
        %v1185 = vunpack.c.h.b16 %v556
        %v1186 = vunpack.c.l.b16 %v557
        %v1187 = vunpack.c.h.b16 %v557
        %v1188 = vunpack.c.l.b16 %v558
        %v1189 = vunpack.c.h.b16 %v558
        %v1190 = vunpack.c.l.b16 %v559
        %v1191 = vunpack.c.h.b16 %v559
        %v1192 = vunpack.c.l.b16 %v560
        %v1193 = vunpack.c.l.b16 %v561
        %v1194 = vunpack.c.h.b16 %v561
        %v1195 = vunpack.c.l.b16 %v562
        %v1196 = vunpack.c.h.b16 %v562
        %v1197 = vunpack.c.l.b16 %v563
        %v1198 = vunpack.c.h.b16 %v563
        %v1199 = vunpack.c.l.b16 %v564
        %v1200 = vunpack.c.h.b16 %v564
        %v1201 = vunpack.c.l.b16 %v565
        %v1202 = vunpack.c.l.b16 %v566
        %v1203 = vunpack.c.h.b16 %v566
        %v1204 = vunpack.c.l.b16 %v567
        %v1205 = vunpack.c.h.b16 %v567
        %v1206 = vunpack.c.l.b16 %v568
        %v1207 = vunpack.c.h.b16 %v568
        %v1208 = vunpack.c.l.b16 %v569
        %v1209 = vunpack.c.h.b16 %v569
        %v1210 = vunpack.c.l.b16 %v570
        %v1211 = vunpack.c.l.b16 %v571
        %v1212 = vunpack.c.h.b16 %v571
        %v1213 = vunpack.c.l.b16 %v572
        %v1214 = vunpack.c.h.b16 %v572
        %v1215 = vunpack.c.l.b16 %v573
        %v1216 = vunpack.c.h.b16 %v573
        %v1217 = vunpack.c.l.b16 %v574
        %v1218 = vunpack.c.h.b16 %v574
        %v1219 = vunpack.c.l.b16 %v575
        %v1220 = vunpack.c.l.b16 %v576
        %v1221 = vunpack.c.h.b16 %v576
        %v1222 = vunpack.c.l.b16 %v577
        %v1223 = vunpack.c.h.b16 %v577
        %v1224 = vunpack.c.l.b16 %v578
        %v1225 = vunpack.c.h.b16 %v578
        %v1226 = vunpack.c.l.b16 %v579
        %v1227 = vunpack.c.h.b16 %v579
        %v1228 = vunpack.c.l.b16 %v580
        %v1229 = vunpack.c.l.b16 %v581
        %v1230 = vunpack.c.h.b16 %v581
        %v1231 = vunpack.c.l.b16 %v582
        %v1232 = vunpack.c.h.b16 %v582
        %v1233 = vunpack.c.l.b16 %v583
        %v1234 = vunpack.c.h.b16 %v583
        %v1235 = vunpack.c.l.b16 %v584
        %v1236 = vunpack.c.h.b16 %v584
        %v1237 = vunpack.c.l.b16 %v585
        %v1238 = vunpack.c.l.b16 %v586
        %v1239 = vunpack.c.h.b16 %v586
        %v1240 = vunpack.c.l.b16 %v587
        %v1241 = vunpack.c.h.b16 %v587
        %v1242 = vunpack.c.l.b16 %v588
        %v1243 = vunpack.c.h.b16 %v588
        %v1244 = vunpack.c.l.b16 %v589
        %v1245 = vunpack.c.h.b16 %v589
        %v1246 = vunpack.c.l.b16 %v590
        %v1247 = vunpack.c.l.b16 %v591
        %v1248 = vunpack.c.h.b16 %v591
        %v1249 = vunpack.c.l.b16 %v592
        %v1250 = vunpack.c.h.b16 %v592
        %v1251 = vunpack.c.l.b16 %v593
        %v1252 = vunpack.c.h.b16 %v593
        %v1253 = vunpack.c.l.b16 %v594
        %v1254 = vunpack.c.h.b16 %v594
        %v1255 = vunpack.c.l.b16 %v595
        %v1256 = vunpack.c.l.b16 %v596
        %v1257 = vunpack.c.h.b16 %v596
        %v1258 = vunpack.c.l.b16 %v597
        %v1259 = vunpack.c.h.b16 %v597
        %v1260 = vunpack.c.l.b16 %v598
        %v1261 = vunpack.c.h.b16 %v598
        %v1262 = vunpack.c.l.b16 %v599
        %v1263 = vunpack.c.h.b16 %v599
        %v1264 = vunpack.c.l.b16 %v600
        %v1265 = vunpack.c.l.b16 %v601
        %v1266 = vunpack.c.h.b16 %v601
        %v1267 = vunpack.c.l.b16 %v602
        %v1268 = vunpack.c.h.b16 %v602
        %v1269 = vunpack.c.l.b16 %v603
        %v1270 = vunpack.c.h.b16 %v603
        %v1271 = vunpack.c.l.b16 %v604
        %v1272 = vunpack.c.h.b16 %v604
        %v1273 = vunpack.c.l.b16 %v605
        %v1274 = vunpack.c.l.b16 %v606
        %v1275 = vunpack.c.h.b16 %v606
        %v1276 = vunpack.c.l.b16 %v607
        %v1277 = vunpack.c.h.b16 %v607
        %v1278 = vunpack.c.l.b16 %v608
        %v1279 = vunpack.c.h.b16 %v608
        %v1280 = vunpack.c.l.b16 %v609
        %v1281 = vunpack.c.h.b16 %v609
        %v1282 = vunpack.c.l.b16 %v610
        %v1283 = vpack.c.b16 %v860, %v851
        %v1284 = vpack.c.b16 %v861, %v852
        %v1285 = vpack.c.b16 %v862, %v853
        %v1286 = vpack.c.b16 %v863, %v854
        %v1287 = vpack.c.b16 %v864, %v855
        %v1288 = vpack.c.b16 %v865, %v856
        %v1289 = vpack.c.b16 %v866, %v857
        %v1290 = vpack.c.b16 %v867, %v858
        %v1291 = vpack.c.b16 %v868, %v859
        %v1292 = vpack.c.b16 %v878, %v869
        %v1293 = vpack.c.b16 %v879, %v870
        %v1294 = vpack.c.b16 %v880, %v871
        %v1295 = vpack.c.b16 %v881, %v872
        %v1296 = vpack.c.b16 %v882, %v873
        %v1297 = vpack.c.b16 %v883, %v874
        %v1298 = vpack.c.b16 %v884, %v875
        %v1299 = vpack.c.b16 %v885, %v876
        %v1300 = vpack.c.b16 %v886, %v877
        %v1301 = vpack.c.b16 %v896, %v887
        %v1302 = vpack.c.b16 %v897, %v888
        %v1303 = vpack.c.b16 %v898, %v889
        %v1304 = vpack.c.b16 %v899, %v890
        %v1305 = vpack.c.b16 %v900, %v891
        %v1306 = vpack.c.b16 %v901, %v892
        %v1307 = vpack.c.b16 %v902, %v893
        %v1308 = vpack.c.b16 %v903, %v894
        %v1309 = vpack.c.b16 %v904, %v895
        %v1310 = vpack.c.b16 %v914, %v905
        %v1311 = vpack.c.b16 %v915, %v906
        %v1312 = vpack.c.b16 %v916, %v907
        %v1313 = vpack.c.b16 %v917, %v908
        %v1314 = vpack.c.b16 %v918, %v909
        %v1315 = vpack.c.b16 %v919, %v910
        %v1316 = vpack.c.b16 %v920, %v911
        %v1317 = vpack.c.b16 %v921, %v912
        %v1318 = vpack.c.b16 %v922, %v913
        %v1319 = vpack.c.b16 %v932, %v923
        %v1320 = vpack.c.b16 %v933, %v924
        %v1321 = vpack.c.b16 %v934, %v925
        %v1322 = vpack.c.b16 %v935, %v926
        %v1323 = vpack.c.b16 %v936, %v927
        %v1324 = vpack.c.b16 %v937, %v928
        %v1325 = vpack.c.b16 %v938, %v929
        %v1326 = vpack.c.b16 %v939, %v930
        %v1327 = vpack.c.b16 %v940, %v931
        %v1328 = vpack.c.b16 %v950, %v941
        %v1329 = vpack.c.b16 %v951, %v942
        %v1330 = vpack.c.b16 %v952, %v943
        %v1331 = vpack.c.b16 %v953, %v944
        %v1332 = vpack.c.b16 %v954, %v945
        %v1333 = vpack.c.b16 %v955, %v946
        %v1334 = vpack.c.b16 %v956, %v947
        %v1335 = vpack.c.b16 %v957, %v948
        %v1336 = vpack.c.b16 %v958, %v949
        %v1337 = vpack.c.b16 %v968, %v959
        %v1338 = vpack.c.b16 %v969, %v960
        %v1339 = vpack.c.b16 %v970, %v961
        %v1340 = vpack.c.b16 %v971, %v962
        %v1341 = vpack.c.b16 %v972, %v963
        %v1342 = vpack.c.b16 %v973, %v964
        %v1343 = vpack.c.b16 %v974, %v965
        %v1344 = vpack.c.b16 %v975, %v966
        %v1345 = vpack.c.b16 %v976, %v967
        %v1346 = vpack.c.b16 %v986, %v977
        %v1347 = vpack.c.b16 %v987, %v978
        %v1348 = vpack.c.b16 %v988, %v979
        %v1349 = vpack.c.b16 %v989, %v980
        %v1350 = vpack.c.b16 %v990, %v981
        %v1351 = vpack.c.b16 %v991, %v982
        %v1352 = vpack.c.b16 %v992, %v983
        %v1353 = vpack.c.b16 %v993, %v984
        %v1354 = vpack.c.b16 %v994, %v985
        %v1355 = vpack.c.b16 %v1004, %v995
        %v1356 = vpack.c.b16 %v1005, %v996
        %v1357 = vpack.c.b16 %v1006, %v997
        %v1358 = vpack.c.b16 %v1007, %v998
        %v1359 = vpack.c.b16 %v1008, %v999
        %v1360 = vpack.c.b16 %v1009, %v1000
        %v1361 = vpack.c.b16 %v1010, %v1001
        %v1362 = vpack.c.b16 %v1011, %v1002
        %v1363 = vpack.c.b16 %v1012, %v1003
        %v1364 = vpack.c.b16 %v1022, %v1013
        %v1365 = vpack.c.b16 %v1023, %v1014
        %v1366 = vpack.c.b16 %v1024, %v1015
        %v1367 = vpack.c.b16 %v1025, %v1016
        %v1368 = vpack.c.b16 %v1026, %v1017
        %v1369 = vpack.c.b16 %v1027, %v1018
        %v1370 = vpack.c.b16 %v1028, %v1019
        %v1371 = vpack.c.b16 %v1029, %v1020
        %v1372 = vpack.c.b16 %v1030, %v1021
        %v1373 = vpack.c.b16 %v1040, %v1031
        %v1374 = vpack.c.b16 %v1041, %v1032
        %v1375 = vpack.c.b16 %v1042, %v1033
        %v1376 = vpack.c.b16 %v1043, %v1034
        %v1377 = vpack.c.b16 %v1044, %v1035
        %v1378 = vpack.c.b16 %v1045, %v1036
        %v1379 = vpack.c.b16 %v1046, %v1037
        %v1380 = vpack.c.b16 %v1047, %v1038
        %v1381 = vpack.c.b16 %v1048, %v1039
        %v1382 = vpack.c.b16 %v1058, %v1049
        %v1383 = vpack.c.b16 %v1059, %v1050
        %v1384 = vpack.c.b16 %v1060, %v1051
        %v1385 = vpack.c.b16 %v1061, %v1052
        %v1386 = vpack.c.b16 %v1062, %v1053
        %v1387 = vpack.c.b16 %v1063, %v1054
        %v1388 = vpack.c.b16 %v1064, %v1055
        %v1389 = vpack.c.b16 %v1065, %v1056
        %v1390 = vpack.c.b16 %v1066, %v1057
        %v1391 = vpack.c.b16 %v1076, %v1067
        %v1392 = vpack.c.b16 %v1077, %v1068
        %v1393 = vpack.c.b16 %v1078, %v1069
        %v1394 = vpack.c.b16 %v1079, %v1070
        %v1395 = vpack.c.b16 %v1080, %v1071
        %v1396 = vpack.c.b16 %v1081, %v1072
        %v1397 = vpack.c.b16 %v1082, %v1073
        %v1398 = vpack.c.b16 %v1083, %v1074
        %v1399 = vpack.c.b16 %v1084, %v1075
        %v1400 = vpack.c.b16 %v1094, %v1085
        %v1401 = vpack.c.b16 %v1095, %v1086
        %v1402 = vpack.c.b16 %v1096, %v1087
        %v1403 = vpack.c.b16 %v1097, %v1088
        %v1404 = vpack.c.b16 %v1098, %v1089
        %v1405 = vpack.c.b16 %v1099, %v1090
        %v1406 = vpack.c.b16 %v1100, %v1091
        %v1407 = vpack.c.b16 %v1101, %v1092
        %v1408 = vpack.c.b16 %v1102, %v1093
        %v1409 = vpack.c.b16 %v1112, %v1103
        %v1410 = vpack.c.b16 %v1113, %v1104
        %v1411 = vpack.c.b16 %v1114, %v1105
        %v1412 = vpack.c.b16 %v1115, %v1106
        %v1413 = vpack.c.b16 %v1116, %v1107
        %v1414 = vpack.c.b16 %v1117, %v1108
        %v1415 = vpack.c.b16 %v1118, %v1109
        %v1416 = vpack.c.b16 %v1119, %v1110
        %v1417 = vpack.c.b16 %v1120, %v1111
        %v1418 = vpack.c.b16 %v1130, %v1121
        %v1419 = vpack.c.b16 %v1131, %v1122
        %v1420 = vpack.c.b16 %v1132, %v1123
        %v1421 = vpack.c.b16 %v1133, %v1124
        %v1422 = vpack.c.b16 %v1134, %v1125
        %v1423 = vpack.c.b16 %v1135, %v1126
        %v1424 = vpack.c.b16 %v1136, %v1127
        %v1425 = vpack.c.b16 %v1137, %v1128
        %v1426 = vpack.c.b16 %v1138, %v1129
        %v1427 = vpack.c.b16 %v1148, %v1139
        %v1428 = vpack.c.b16 %v1149, %v1140
        %v1429 = vpack.c.b16 %v1150, %v1141
        %v1430 = vpack.c.b16 %v1151, %v1142
        %v1431 = vpack.c.b16 %v1152, %v1143
        %v1432 = vpack.c.b16 %v1153, %v1144
        %v1433 = vpack.c.b16 %v1154, %v1145
        %v1434 = vpack.c.b16 %v1155, %v1146
        %v1435 = vpack.c.b16 %v1156, %v1147
        %v1436 = vpack.c.b16 %v1166, %v1157
        %v1437 = vpack.c.b16 %v1167, %v1158
        %v1438 = vpack.c.b16 %v1168, %v1159
        %v1439 = vpack.c.b16 %v1169, %v1160
        %v1440 = vpack.c.b16 %v1170, %v1161
        %v1441 = vpack.c.b16 %v1171, %v1162
        %v1442 = vpack.c.b16 %v1172, %v1163
        %v1443 = vpack.c.b16 %v1173, %v1164
        %v1444 = vpack.c.b16 %v1174, %v1165
        %v1445 = vpack.c.b16 %v1184, %v1175
        %v1446 = vpack.c.b16 %v1185, %v1176
        %v1447 = vpack.c.b16 %v1186, %v1177
        %v1448 = vpack.c.b16 %v1187, %v1178
        %v1449 = vpack.c.b16 %v1188, %v1179
        %v1450 = vpack.c.b16 %v1189, %v1180
        %v1451 = vpack.c.b16 %v1190, %v1181
        %v1452 = vpack.c.b16 %v1191, %v1182
        %v1453 = vpack.c.b16 %v1192, %v1183
        %v1454 = vpack.c.b16 %v1202, %v1193
        %v1455 = vpack.c.b16 %v1203, %v1194
        %v1456 = vpack.c.b16 %v1204, %v1195
        %v1457 = vpack.c.b16 %v1205, %v1196
        %v1458 = vpack.c.b16 %v1206, %v1197
        %v1459 = vpack.c.b16 %v1207, %v1198
        %v1460 = vpack.c.b16 %v1208, %v1199
        %v1461 = vpack.c.b16 %v1209, %v1200
        %v1462 = vpack.c.b16 %v1210, %v1201
        %v1463 = vpack.c.b16 %v1220, %v1211
        %v1464 = vpack.c.b16 %v1221, %v1212
        %v1465 = vpack.c.b16 %v1222, %v1213
        %v1466 = vpack.c.b16 %v1223, %v1214
        %v1467 = vpack.c.b16 %v1224, %v1215
        %v1468 = vpack.c.b16 %v1225, %v1216
        %v1469 = vpack.c.b16 %v1226, %v1217
        %v1470 = vpack.c.b16 %v1227, %v1218
        %v1471 = vpack.c.b16 %v1228, %v1219
        %v1472 = vpack.c.b16 %v1238, %v1229
        %v1473 = vpack.c.b16 %v1239, %v1230
        %v1474 = vpack.c.b16 %v1240, %v1231
        %v1475 = vpack.c.b16 %v1241, %v1232
        %v1476 = vpack.c.b16 %v1242, %v1233
        %v1477 = vpack.c.b16 %v1243, %v1234
        %v1478 = vpack.c.b16 %v1244, %v1235
        %v1479 = vpack.c.b16 %v1245, %v1236
        %v1480 = vpack.c.b16 %v1246, %v1237
        %v1481 = vpack.c.b16 %v1256, %v1247
        %v1482 = vpack.c.b16 %v1257, %v1248
        %v1483 = vpack.c.b16 %v1258, %v1249
        %v1484 = vpack.c.b16 %v1259, %v1250
        %v1485 = vpack.c.b16 %v1260, %v1251
        %v1486 = vpack.c.b16 %v1261, %v1252
        %v1487 = vpack.c.b16 %v1262, %v1253
        %v1488 = vpack.c.b16 %v1263, %v1254
        %v1489 = vpack.c.b16 %v1264, %v1255
        %v1490 = vpack.c.b16 %v1274, %v1265
        %v1491 = vpack.c.b16 %v1275, %v1266
        %v1492 = vpack.c.b16 %v1276, %v1267
        %v1493 = vpack.c.b16 %v1277, %v1268
        %v1494 = vpack.c.b16 %v1278, %v1269
        %v1495 = vpack.c.b16 %v1279, %v1270
        %v1496 = vpack.c.b16 %v1280, %v1271
        %v1497 = vpack.c.b16 %v1281, %v1272
        %v1498 = vpack.c.b16 %v1282, %v1273
        %1715 = vmatpush.bf16.msra.mxu0 %v1346
        %1716 = vmatpush.bf16.msra.mxu0 %v1337
        %1717 = vmatpush.bf16.msra.mxu0 %v1328
        %1718 = vmatpush.bf16.msra.mxu0 %v1319
        %1719 = vmatpush.bf16.msra.mxu0 %v1310
        %1720 = vmatpush.bf16.msra.mxu0 %v1301
        %1721 = vmatpush.bf16.msra.mxu0 %v1292
        %1722 = vmatpush.bf16.msra.mxu0 %v1283
        %1723 = vmatmul.bf16.gmra.mxu0 %v347
        %v1724 = vpop.f32.mrf.mxu0
        %v1725 = vadd.f32 0.0, %v1724
        %v1726 = vpop.f32.mrf.mxu0
        %v1727 = vadd.f32 0.0, %v1726
        %1728 = vmatmul.bf16.gmra.mxu0 %v350
        %v1729 = vpop.f32.mrf.mxu0
        %v1730 = vadd.f32 0.0, %v1729
        %v1731 = vpop.f32.mrf.mxu0
        %v1732 = vadd.f32 0.0, %v1731
        %1733 = vmatmul.bf16.gmra.mxu0 %v353
        %v1734 = vpop.f32.mrf.mxu0
        %v1735 = vadd.f32 0.0, %v1734
        %v1736 = vpop.f32.mrf.mxu0
        %v1737 = vadd.f32 0.0, %v1736
        %1738 = vmatmul.bf16.gmra.mxu0 %v356
        %v1739 = vpop.f32.mrf.mxu0
        %v1740 = vadd.f32 0.0, %v1739
        %v1741 = vpop.f32.mrf.mxu0
        %v1742 = vadd.f32 0.0, %v1741
        %1743 = vmatmul.bf16.gmra.mxu0 %v359
        %v1744 = vpop.f32.mrf.mxu0
        %v1745 = vadd.f32 0.0, %v1744
        %v1746 = vpop.f32.mrf.mxu0
        %v1747 = vadd.f32 0.0, %v1746
        %1748 = vmatmul.bf16.gmra.mxu0 %v362
        %v1749 = vpop.f32.mrf.mxu0
        %v1750 = vadd.f32 0.0, %v1749
        %v1751 = vpop.f32.mrf.mxu0
        %v1752 = vadd.f32 0.0, %v1751
        %1753 = vmatmul.bf16.gmra.mxu0 %v365
        %v1754 = vpop.f32.mrf.mxu0
        %v1755 = vadd.f32 0.0, %v1754
        %v1756 = vpop.f32.mrf.mxu0
        %v1757 = vadd.f32 0.0, %v1756
        %1758 = vmatmul.bf16.gmra.mxu0 %v368
        %v1759 = vpop.f32.mrf.mxu0
        %v1760 = vadd.f32 0.0, %v1759
        %v1761 = vpop.f32.mrf.mxu0
        %v1762 = vadd.f32 0.0, %v1761
        %1763 = vdwg.mxu0
        %1764 = vmatpush.bf16.msra.mxu0 %v1418
        %1765 = vmatpush.bf16.msra.mxu0 %v1409
        %1766 = vmatpush.bf16.msra.mxu0 %v1400
        %1767 = vmatpush.bf16.msra.mxu0 %v1391
        %1768 = vmatpush.bf16.msra.mxu0 %v1382
        %1769 = vmatpush.bf16.msra.mxu0 %v1373
        %1770 = vmatpush.bf16.msra.mxu0 %v1364
        %1771 = vmatpush.bf16.msra.mxu0 %v1355
        %1772 = vmatmul.bf16.gmra.mxu0 %v348
        %v1773 = vpop.f32.mrf.mxu0
        %v1774 = vadd.f32 %v1725, %v1773
        %v1775 = vpop.f32.mrf.mxu0
        %v1776 = vadd.f32 %v1727, %v1775
        %1777 = vmatmul.bf16.gmra.mxu0 %v351
        %v1778 = vpop.f32.mrf.mxu0
        %v1779 = vadd.f32 %v1730, %v1778
        %v1780 = vpop.f32.mrf.mxu0
        %v1781 = vadd.f32 %v1732, %v1780
        %1782 = vmatmul.bf16.gmra.mxu0 %v354
        %v1783 = vpop.f32.mrf.mxu0
        %v1784 = vadd.f32 %v1735, %v1783
        %v1785 = vpop.f32.mrf.mxu0
        %v1786 = vadd.f32 %v1737, %v1785
        %1787 = vmatmul.bf16.gmra.mxu0 %v357
        %v1788 = vpop.f32.mrf.mxu0
        %v1789 = vadd.f32 %v1740, %v1788
        %v1790 = vpop.f32.mrf.mxu0
        %v1791 = vadd.f32 %v1742, %v1790
        %1792 = vmatmul.bf16.gmra.mxu0 %v360
        %v1793 = vpop.f32.mrf.mxu0
        %v1794 = vadd.f32 %v1745, %v1793
        %v1795 = vpop.f32.mrf.mxu0
        %v1796 = vadd.f32 %v1747, %v1795
        %1797 = vmatmul.bf16.gmra.mxu0 %v363
        %v1798 = vpop.f32.mrf.mxu0
        %v1799 = vadd.f32 %v1750, %v1798
        %v1800 = vpop.f32.mrf.mxu0
        %v1801 = vadd.f32 %v1752, %v1800
        %1802 = vmatmul.bf16.gmra.mxu0 %v366
        %v1803 = vpop.f32.mrf.mxu0
        %v1804 = vadd.f32 %v1755, %v1803
        %v1805 = vpop.f32.mrf.mxu0
        %v1806 = vadd.f32 %v1757, %v1805
        %1807 = vmatmul.bf16.gmra.mxu0 %v369
        %v1808 = vpop.f32.mrf.mxu0
        %v1809 = vadd.f32 %v1760, %v1808
        %v1810 = vpop.f32.mrf.mxu0
        %v1811 = vadd.f32 %v1762, %v1810
        %1812 = vdwg.mxu0
        %1813 = vmatpush.bf16.msra.mxu0 %v1490
        %1814 = vmatpush.bf16.msra.mxu0 %v1481
        %1815 = vmatpush.bf16.msra.mxu0 %v1472
        %1816 = vmatpush.bf16.msra.mxu0 %v1463
        %1817 = vmatpush.bf16.msra.mxu0 %v1454
        %1818 = vmatpush.bf16.msra.mxu0 %v1445
        %1819 = vmatpush.bf16.msra.mxu0 %v1436
        %1820 = vmatpush.bf16.msra.mxu0 %v1427
        %1821 = vmatmul.bf16.gmra.mxu0 %v349
        %v1822 = vpop.f32.mrf.mxu0
        %v1823 = vadd.f32 %v1774, %v1822
        %v1824 = vpop.f32.mrf.mxu0
        %v1825 = vadd.f32 %v1776, %v1824
        %1826 = vmatmul.bf16.gmra.mxu0 %v352
        %v1827 = vpop.f32.mrf.mxu0
        %v1828 = vadd.f32 %v1779, %v1827
        %v1829 = vpop.f32.mrf.mxu0
        %v1830 = vadd.f32 %v1781, %v1829
        %1831 = vmatmul.bf16.gmra.mxu0 %v355
        %v1832 = vpop.f32.mrf.mxu0
        %v1833 = vadd.f32 %v1784, %v1832
        %v1834 = vpop.f32.mrf.mxu0
        %v1835 = vadd.f32 %v1786, %v1834
        %1836 = vmatmul.bf16.gmra.mxu0 %v358
        %v1837 = vpop.f32.mrf.mxu0
        %v1838 = vadd.f32 %v1789, %v1837
        %v1839 = vpop.f32.mrf.mxu0
        %v1840 = vadd.f32 %v1791, %v1839
        %1841 = vmatmul.bf16.gmra.mxu0 %v361
        %v1842 = vpop.f32.mrf.mxu0
        %v1843 = vadd.f32 %v1794, %v1842
        %v1844 = vpop.f32.mrf.mxu0
        %v1845 = vadd.f32 %v1796, %v1844
        %1846 = vmatmul.bf16.gmra.mxu0 %v364
        %v1847 = vpop.f32.mrf.mxu0
        %v1848 = vadd.f32 %v1799, %v1847
        %v1849 = vpop.f32.mrf.mxu0
        %v1850 = vadd.f32 %v1801, %v1849
        %1851 = vmatmul.bf16.gmra.mxu0 %v367
        %v1852 = vpop.f32.mrf.mxu0
        %v1853 = vadd.f32 %v1804, %v1852
        %v1854 = vpop.f32.mrf.mxu0
        %v1855 = vadd.f32 %v1806, %v1854
        %1856 = vmatmul.bf16.gmra.mxu0 %v370
        %v1857 = vpop.f32.mrf.mxu0
        %v1858 = vadd.f32 %v1809, %v1857
        %v1859 = vpop.f32.mrf.mxu0
        %v1860 = vadd.f32 %v1811, %v1859
        %1861 = vdwg.mxu0
        %1862 = vmatpush.bf16.msra.mxu0 %v1347
        %1863 = vmatpush.bf16.msra.mxu0 %v1338
        %1864 = vmatpush.bf16.msra.mxu0 %v1329
        %1865 = vmatpush.bf16.msra.mxu0 %v1320
        %1866 = vmatpush.bf16.msra.mxu0 %v1311
        %1867 = vmatpush.bf16.msra.mxu0 %v1302
        %1868 = vmatpush.bf16.msra.mxu0 %v1293
        %1869 = vmatpush.bf16.msra.mxu0 %v1284
        %1870 = vmatmul.bf16.gmra.mxu0 %v347
        %v1871 = vpop.f32.mrf.mxu0
        %v1872 = vadd.f32 0.0, %v1871
        %v1873 = vpop.f32.mrf.mxu0
        %v1874 = vadd.f32 0.0, %v1873
        %1875 = vmatmul.bf16.gmra.mxu0 %v350
        %v1876 = vpop.f32.mrf.mxu0
        %v1877 = vadd.f32 0.0, %v1876
        %v1878 = vpop.f32.mrf.mxu0
        %v1879 = vadd.f32 0.0, %v1878
        %1880 = vmatmul.bf16.gmra.mxu0 %v353
        %v1881 = vpop.f32.mrf.mxu0
        %v1882 = vadd.f32 0.0, %v1881
        %v1883 = vpop.f32.mrf.mxu0
        %v1884 = vadd.f32 0.0, %v1883
        %1885 = vmatmul.bf16.gmra.mxu0 %v356
        %v1886 = vpop.f32.mrf.mxu0
        %v1887 = vadd.f32 0.0, %v1886
        %v1888 = vpop.f32.mrf.mxu0
        %v1889 = vadd.f32 0.0, %v1888
        %1890 = vmatmul.bf16.gmra.mxu0 %v359
        %v1891 = vpop.f32.mrf.mxu0
        %v1892 = vadd.f32 0.0, %v1891
        %v1893 = vpop.f32.mrf.mxu0
        %v1894 = vadd.f32 0.0, %v1893
        %1895 = vmatmul.bf16.gmra.mxu0 %v362
        %v1896 = vpop.f32.mrf.mxu0
        %v1897 = vadd.f32 0.0, %v1896
        %v1898 = vpop.f32.mrf.mxu0
        %v1899 = vadd.f32 0.0, %v1898
        %1900 = vmatmul.bf16.gmra.mxu0 %v365
        %v1901 = vpop.f32.mrf.mxu0
        %v1902 = vadd.f32 0.0, %v1901
        %v1903 = vpop.f32.mrf.mxu0
        %v1904 = vadd.f32 0.0, %v1903
        %1905 = vmatmul.bf16.gmra.mxu0 %v368
        %v1906 = vpop.f32.mrf.mxu0
        %v1907 = vadd.f32 0.0, %v1906
        %v1908 = vpop.f32.mrf.mxu0
        %v1909 = vadd.f32 0.0, %v1908
        %1910 = vdwg.mxu0
        %1911 = vmatpush.bf16.msra.mxu0 %v1419
        %1912 = vmatpush.bf16.msra.mxu0 %v1410
        %1913 = vmatpush.bf16.msra.mxu0 %v1401
        %1914 = vmatpush.bf16.msra.mxu0 %v1392
        %1915 = vmatpush.bf16.msra.mxu0 %v1383
        %1916 = vmatpush.bf16.msra.mxu0 %v1374
        %1917 = vmatpush.bf16.msra.mxu0 %v1365
        %1918 = vmatpush.bf16.msra.mxu0 %v1356
        %1919 = vmatmul.bf16.gmra.mxu0 %v348
        %v1920 = vpop.f32.mrf.mxu0
        %v1921 = vadd.f32 %v1872, %v1920
        %v1922 = vpop.f32.mrf.mxu0
        %v1923 = vadd.f32 %v1874, %v1922
        %1924 = vmatmul.bf16.gmra.mxu0 %v351
        %v1925 = vpop.f32.mrf.mxu0
        %v1926 = vadd.f32 %v1877, %v1925
        %v1927 = vpop.f32.mrf.mxu0
        %v1928 = vadd.f32 %v1879, %v1927
        %1929 = vmatmul.bf16.gmra.mxu0 %v354
        %v1930 = vpop.f32.mrf.mxu0
        %v1931 = vadd.f32 %v1882, %v1930
        %v1932 = vpop.f32.mrf.mxu0
        %v1933 = vadd.f32 %v1884, %v1932
        %1934 = vmatmul.bf16.gmra.mxu0 %v357
        %v1935 = vpop.f32.mrf.mxu0
        %v1936 = vadd.f32 %v1887, %v1935
        %v1937 = vpop.f32.mrf.mxu0
        %v1938 = vadd.f32 %v1889, %v1937
        %1939 = vmatmul.bf16.gmra.mxu0 %v360
        %v1940 = vpop.f32.mrf.mxu0
        %v1941 = vadd.f32 %v1892, %v1940
        %v1942 = vpop.f32.mrf.mxu0
        %v1943 = vadd.f32 %v1894, %v1942
        %1944 = vmatmul.bf16.gmra.mxu0 %v363
        %v1945 = vpop.f32.mrf.mxu0
        %v1946 = vadd.f32 %v1897, %v1945
        %v1947 = vpop.f32.mrf.mxu0
        %v1948 = vadd.f32 %v1899, %v1947
        %1949 = vmatmul.bf16.gmra.mxu0 %v366
        %v1950 = vpop.f32.mrf.mxu0
        %v1951 = vadd.f32 %v1902, %v1950
        %v1952 = vpop.f32.mrf.mxu0
        %v1953 = vadd.f32 %v1904, %v1952
        %1954 = vmatmul.bf16.gmra.mxu0 %v369
        %v1955 = vpop.f32.mrf.mxu0
        %v1956 = vadd.f32 %v1907, %v1955
        %v1957 = vpop.f32.mrf.mxu0
        %v1958 = vadd.f32 %v1909, %v1957
        %1959 = vdwg.mxu0
        %1960 = vmatpush.bf16.msra.mxu0 %v1491
        %1961 = vmatpush.bf16.msra.mxu0 %v1482
        %1962 = vmatpush.bf16.msra.mxu0 %v1473
        %1963 = vmatpush.bf16.msra.mxu0 %v1464
        %1964 = vmatpush.bf16.msra.mxu0 %v1455
        %1965 = vmatpush.bf16.msra.mxu0 %v1446
        %1966 = vmatpush.bf16.msra.mxu0 %v1437
        %1967 = vmatpush.bf16.msra.mxu0 %v1428
        %1968 = vmatmul.bf16.gmra.mxu0 %v349
        %v1969 = vpop.f32.mrf.mxu0
        %v1970 = vadd.f32 %v1921, %v1969
        %v1971 = vpop.f32.mrf.mxu0
        %v1972 = vadd.f32 %v1923, %v1971
        %1973 = vmatmul.bf16.gmra.mxu0 %v352
        %v1974 = vpop.f32.mrf.mxu0
        %v1975 = vadd.f32 %v1926, %v1974
        %v1976 = vpop.f32.mrf.mxu0
        %v1977 = vadd.f32 %v1928, %v1976
        %1978 = vmatmul.bf16.gmra.mxu0 %v355
        %v1979 = vpop.f32.mrf.mxu0
        %v1980 = vadd.f32 %v1931, %v1979
        %v1981 = vpop.f32.mrf.mxu0
        %v1982 = vadd.f32 %v1933, %v1981
        %1983 = vmatmul.bf16.gmra.mxu0 %v358
        %v1984 = vpop.f32.mrf.mxu0
        %v1985 = vadd.f32 %v1936, %v1984
        %v1986 = vpop.f32.mrf.mxu0
        %v1987 = vadd.f32 %v1938, %v1986
        %1988 = vmatmul.bf16.gmra.mxu0 %v361
        %v1989 = vpop.f32.mrf.mxu0
        %v1990 = vadd.f32 %v1941, %v1989
        %v1991 = vpop.f32.mrf.mxu0
        %v1992 = vadd.f32 %v1943, %v1991
        %1993 = vmatmul.bf16.gmra.mxu0 %v364
        %v1994 = vpop.f32.mrf.mxu0
        %v1995 = vadd.f32 %v1946, %v1994
        %v1996 = vpop.f32.mrf.mxu0
        %v1997 = vadd.f32 %v1948, %v1996
        %1998 = vmatmul.bf16.gmra.mxu0 %v367
        %v1999 = vpop.f32.mrf.mxu0
        %v2000 = vadd.f32 %v1951, %v1999
        %v2001 = vpop.f32.mrf.mxu0
        %v2002 = vadd.f32 %v1953, %v2001
        %2003 = vmatmul.bf16.gmra.mxu0 %v370
        %v2004 = vpop.f32.mrf.mxu0
        %v2005 = vadd.f32 %v1956, %v2004
        %v2006 = vpop.f32.mrf.mxu0
        %v2007 = vadd.f32 %v1958, %v2006
        %2008 = vdwg.mxu0
        %2009 = vmatpush.bf16.msra.mxu0 %v1348
        %2010 = vmatpush.bf16.msra.mxu0 %v1339
        %2011 = vmatpush.bf16.msra.mxu0 %v1330
        %2012 = vmatpush.bf16.msra.mxu0 %v1321
        %2013 = vmatpush.bf16.msra.mxu0 %v1312
        %2014 = vmatpush.bf16.msra.mxu0 %v1303
        %2015 = vmatpush.bf16.msra.mxu0 %v1294
        %2016 = vmatpush.bf16.msra.mxu0 %v1285
        %2017 = vmatmul.bf16.gmra.mxu0 %v347
        %v2018 = vpop.f32.mrf.mxu0
        %v2019 = vadd.f32 0.0, %v2018
        %v2020 = vpop.f32.mrf.mxu0
        %v2021 = vadd.f32 0.0, %v2020
        %2022 = vmatmul.bf16.gmra.mxu0 %v350
        %v2023 = vpop.f32.mrf.mxu0
        %v2024 = vadd.f32 0.0, %v2023
        %v2025 = vpop.f32.mrf.mxu0
        %v2026 = vadd.f32 0.0, %v2025
        %2027 = vmatmul.bf16.gmra.mxu0 %v353
        %v2028 = vpop.f32.mrf.mxu0
        %v2029 = vadd.f32 0.0, %v2028
        %v2030 = vpop.f32.mrf.mxu0
        %v2031 = vadd.f32 0.0, %v2030
        %2032 = vmatmul.bf16.gmra.mxu0 %v356
        %v2033 = vpop.f32.mrf.mxu0
        %v2034 = vadd.f32 0.0, %v2033
        %v2035 = vpop.f32.mrf.mxu0
        %v2036 = vadd.f32 0.0, %v2035
        %2037 = vmatmul.bf16.gmra.mxu0 %v359
        %v2038 = vpop.f32.mrf.mxu0
        %v2039 = vadd.f32 0.0, %v2038
        %v2040 = vpop.f32.mrf.mxu0
        %v2041 = vadd.f32 0.0, %v2040
        %2042 = vmatmul.bf16.gmra.mxu0 %v362
        %v2043 = vpop.f32.mrf.mxu0
        %v2044 = vadd.f32 0.0, %v2043
        %v2045 = vpop.f32.mrf.mxu0
        %v2046 = vadd.f32 0.0, %v2045
        %2047 = vmatmul.bf16.gmra.mxu0 %v365
        %v2048 = vpop.f32.mrf.mxu0
        %v2049 = vadd.f32 0.0, %v2048
        %v2050 = vpop.f32.mrf.mxu0
        %v2051 = vadd.f32 0.0, %v2050
        %2052 = vmatmul.bf16.gmra.mxu0 %v368
        %v2053 = vpop.f32.mrf.mxu0
        %v2054 = vadd.f32 0.0, %v2053
        %v2055 = vpop.f32.mrf.mxu0
        %v2056 = vadd.f32 0.0, %v2055
        %2057 = vdwg.mxu0
        %2058 = vmatpush.bf16.msra.mxu0 %v1420
        %2059 = vmatpush.bf16.msra.mxu0 %v1411
        %2060 = vmatpush.bf16.msra.mxu0 %v1402
        %2061 = vmatpush.bf16.msra.mxu0 %v1393
        %2062 = vmatpush.bf16.msra.mxu0 %v1384
        %2063 = vmatpush.bf16.msra.mxu0 %v1375
        %2064 = vmatpush.bf16.msra.mxu0 %v1366
        %2065 = vmatpush.bf16.msra.mxu0 %v1357
        %2066 = vmatmul.bf16.gmra.mxu0 %v348
        %v2067 = vpop.f32.mrf.mxu0
        %v2068 = vadd.f32 %v2019, %v2067
        %v2069 = vpop.f32.mrf.mxu0
        %v2070 = vadd.f32 %v2021, %v2069
        %2071 = vmatmul.bf16.gmra.mxu0 %v351
        %v2072 = vpop.f32.mrf.mxu0
        %v2073 = vadd.f32 %v2024, %v2072
        %v2074 = vpop.f32.mrf.mxu0
        %v2075 = vadd.f32 %v2026, %v2074
        %2076 = vmatmul.bf16.gmra.mxu0 %v354
        %v2077 = vpop.f32.mrf.mxu0
        %v2078 = vadd.f32 %v2029, %v2077
        %v2079 = vpop.f32.mrf.mxu0
        %v2080 = vadd.f32 %v2031, %v2079
        %2081 = vmatmul.bf16.gmra.mxu0 %v357
        %v2082 = vpop.f32.mrf.mxu0
        %v2083 = vadd.f32 %v2034, %v2082
        %v2084 = vpop.f32.mrf.mxu0
        %v2085 = vadd.f32 %v2036, %v2084
        %2086 = vmatmul.bf16.gmra.mxu0 %v360
        %v2087 = vpop.f32.mrf.mxu0
        %v2088 = vadd.f32 %v2039, %v2087
        %v2089 = vpop.f32.mrf.mxu0
        %v2090 = vadd.f32 %v2041, %v2089
        %2091 = vmatmul.bf16.gmra.mxu0 %v363
        %v2092 = vpop.f32.mrf.mxu0
        %v2093 = vadd.f32 %v2044, %v2092
        %v2094 = vpop.f32.mrf.mxu0
        %v2095 = vadd.f32 %v2046, %v2094
        %2096 = vmatmul.bf16.gmra.mxu0 %v366
        %v2097 = vpop.f32.mrf.mxu0
        %v2098 = vadd.f32 %v2049, %v2097
        %v2099 = vpop.f32.mrf.mxu0
        %v2100 = vadd.f32 %v2051, %v2099
        %2101 = vmatmul.bf16.gmra.mxu0 %v369
        %v2102 = vpop.f32.mrf.mxu0
        %v2103 = vadd.f32 %v2054, %v2102
        %v2104 = vpop.f32.mrf.mxu0
        %v2105 = vadd.f32 %v2056, %v2104
        %2106 = vdwg.mxu0
        %2107 = vmatpush.bf16.msra.mxu0 %v1492
        %2108 = vmatpush.bf16.msra.mxu0 %v1483
        %2109 = vmatpush.bf16.msra.mxu0 %v1474
        %2110 = vmatpush.bf16.msra.mxu0 %v1465
        %2111 = vmatpush.bf16.msra.mxu0 %v1456
        %2112 = vmatpush.bf16.msra.mxu0 %v1447
        %2113 = vmatpush.bf16.msra.mxu0 %v1438
        %2114 = vmatpush.bf16.msra.mxu0 %v1429
        %2115 = vmatmul.bf16.gmra.mxu0 %v349
        %v2116 = vpop.f32.mrf.mxu0
        %v2117 = vadd.f32 %v2068, %v2116
        %v2118 = vpop.f32.mrf.mxu0
        %v2119 = vadd.f32 %v2070, %v2118
        %2120 = vmatmul.bf16.gmra.mxu0 %v352
        %v2121 = vpop.f32.mrf.mxu0
        %v2122 = vadd.f32 %v2073, %v2121
        %v2123 = vpop.f32.mrf.mxu0
        %v2124 = vadd.f32 %v2075, %v2123
        %2125 = vmatmul.bf16.gmra.mxu0 %v355
        %v2126 = vpop.f32.mrf.mxu0
        %v2127 = vadd.f32 %v2078, %v2126
        %v2128 = vpop.f32.mrf.mxu0
        %v2129 = vadd.f32 %v2080, %v2128
        %2130 = vmatmul.bf16.gmra.mxu0 %v358
        %v2131 = vpop.f32.mrf.mxu0
        %v2132 = vadd.f32 %v2083, %v2131
        %v2133 = vpop.f32.mrf.mxu0
        %v2134 = vadd.f32 %v2085, %v2133
        %2135 = vmatmul.bf16.gmra.mxu0 %v361
        %v2136 = vpop.f32.mrf.mxu0
        %v2137 = vadd.f32 %v2088, %v2136
        %v2138 = vpop.f32.mrf.mxu0
        %v2139 = vadd.f32 %v2090, %v2138
        %2140 = vmatmul.bf16.gmra.mxu0 %v364
        %v2141 = vpop.f32.mrf.mxu0
        %v2142 = vadd.f32 %v2093, %v2141
        %v2143 = vpop.f32.mrf.mxu0
        %v2144 = vadd.f32 %v2095, %v2143
        %2145 = vmatmul.bf16.gmra.mxu0 %v367
        %v2146 = vpop.f32.mrf.mxu0
        %v2147 = vadd.f32 %v2098, %v2146
        %v2148 = vpop.f32.mrf.mxu0
        %v2149 = vadd.f32 %v2100, %v2148
        %2150 = vmatmul.bf16.gmra.mxu0 %v370
        %v2151 = vpop.f32.mrf.mxu0
        %v2152 = vadd.f32 %v2103, %v2151
        %v2153 = vpop.f32.mrf.mxu0
        %v2154 = vadd.f32 %v2105, %v2153
        %2155 = vdwg.mxu0
        %2156 = vmatpush.bf16.msra.mxu0 %v1349
        %2157 = vmatpush.bf16.msra.mxu0 %v1340
        %2158 = vmatpush.bf16.msra.mxu0 %v1331
        %2159 = vmatpush.bf16.msra.mxu0 %v1322
        %2160 = vmatpush.bf16.msra.mxu0 %v1313
        %2161 = vmatpush.bf16.msra.mxu0 %v1304
        %2162 = vmatpush.bf16.msra.mxu0 %v1295
        %2163 = vmatpush.bf16.msra.mxu0 %v1286
        %2164 = vmatmul.bf16.gmra.mxu0 %v347
        %v2165 = vpop.f32.mrf.mxu0
        %v2166 = vadd.f32 0.0, %v2165
        %v2167 = vpop.f32.mrf.mxu0
        %v2168 = vadd.f32 0.0, %v2167
        %2169 = vmatmul.bf16.gmra.mxu0 %v350
        %v2170 = vpop.f32.mrf.mxu0
        %v2171 = vadd.f32 0.0, %v2170
        %v2172 = vpop.f32.mrf.mxu0
        %v2173 = vadd.f32 0.0, %v2172
        %2174 = vmatmul.bf16.gmra.mxu0 %v353
        %v2175 = vpop.f32.mrf.mxu0
        %v2176 = vadd.f32 0.0, %v2175
        %v2177 = vpop.f32.mrf.mxu0
        %v2178 = vadd.f32 0.0, %v2177
        %2179 = vmatmul.bf16.gmra.mxu0 %v356
        %v2180 = vpop.f32.mrf.mxu0
        %v2181 = vadd.f32 0.0, %v2180
        %v2182 = vpop.f32.mrf.mxu0
        %v2183 = vadd.f32 0.0, %v2182
        %2184 = vmatmul.bf16.gmra.mxu0 %v359
        %v2185 = vpop.f32.mrf.mxu0
        %v2186 = vadd.f32 0.0, %v2185
        %v2187 = vpop.f32.mrf.mxu0
        %v2188 = vadd.f32 0.0, %v2187
        %2189 = vmatmul.bf16.gmra.mxu0 %v362
        %v2190 = vpop.f32.mrf.mxu0
        %v2191 = vadd.f32 0.0, %v2190
        %v2192 = vpop.f32.mrf.mxu0
        %v2193 = vadd.f32 0.0, %v2192
        %2194 = vmatmul.bf16.gmra.mxu0 %v365
        %v2195 = vpop.f32.mrf.mxu0
        %v2196 = vadd.f32 0.0, %v2195
        %v2197 = vpop.f32.mrf.mxu0
        %v2198 = vadd.f32 0.0, %v2197
        %2199 = vmatmul.bf16.gmra.mxu0 %v368
        %v2200 = vpop.f32.mrf.mxu0
        %v2201 = vadd.f32 0.0, %v2200
        %v2202 = vpop.f32.mrf.mxu0
        %v2203 = vadd.f32 0.0, %v2202
        %2204 = vdwg.mxu0
        %2205 = vmatpush.bf16.msra.mxu0 %v1421
        %2206 = vmatpush.bf16.msra.mxu0 %v1412
        %2207 = vmatpush.bf16.msra.mxu0 %v1403
        %2208 = vmatpush.bf16.msra.mxu0 %v1394
        %2209 = vmatpush.bf16.msra.mxu0 %v1385
        %2210 = vmatpush.bf16.msra.mxu0 %v1376
        %2211 = vmatpush.bf16.msra.mxu0 %v1367
        %2212 = vmatpush.bf16.msra.mxu0 %v1358
        %2213 = vmatmul.bf16.gmra.mxu0 %v348
        %v2214 = vpop.f32.mrf.mxu0
        %v2215 = vadd.f32 %v2166, %v2214
        %v2216 = vpop.f32.mrf.mxu0
        %v2217 = vadd.f32 %v2168, %v2216
        %2218 = vmatmul.bf16.gmra.mxu0 %v351
        %v2219 = vpop.f32.mrf.mxu0
        %v2220 = vadd.f32 %v2171, %v2219
        %v2221 = vpop.f32.mrf.mxu0
        %v2222 = vadd.f32 %v2173, %v2221
        %2223 = vmatmul.bf16.gmra.mxu0 %v354
        %v2224 = vpop.f32.mrf.mxu0
        %v2225 = vadd.f32 %v2176, %v2224
        %v2226 = vpop.f32.mrf.mxu0
        %v2227 = vadd.f32 %v2178, %v2226
        %2228 = vmatmul.bf16.gmra.mxu0 %v357
        %v2229 = vpop.f32.mrf.mxu0
        %v2230 = vadd.f32 %v2181, %v2229
        %v2231 = vpop.f32.mrf.mxu0
        %v2232 = vadd.f32 %v2183, %v2231
        %2233 = vmatmul.bf16.gmra.mxu0 %v360
        %v2234 = vpop.f32.mrf.mxu0
        %v2235 = vadd.f32 %v2186, %v2234
        %v2236 = vpop.f32.mrf.mxu0
        %v2237 = vadd.f32 %v2188, %v2236
        %2238 = vmatmul.bf16.gmra.mxu0 %v363
        %v2239 = vpop.f32.mrf.mxu0
        %v2240 = vadd.f32 %v2191, %v2239
        %v2241 = vpop.f32.mrf.mxu0
        %v2242 = vadd.f32 %v2193, %v2241
        %2243 = vmatmul.bf16.gmra.mxu0 %v366
        %v2244 = vpop.f32.mrf.mxu0
        %v2245 = vadd.f32 %v2196, %v2244
        %v2246 = vpop.f32.mrf.mxu0
        %v2247 = vadd.f32 %v2198, %v2246
        %2248 = vmatmul.bf16.gmra.mxu0 %v369
        %v2249 = vpop.f32.mrf.mxu0
        %v2250 = vadd.f32 %v2201, %v2249
        %v2251 = vpop.f32.mrf.mxu0
        %v2252 = vadd.f32 %v2203, %v2251
        %2253 = vdwg.mxu0
        %2254 = vmatpush.bf16.msra.mxu0 %v1493
        %2255 = vmatpush.bf16.msra.mxu0 %v1484
        %2256 = vmatpush.bf16.msra.mxu0 %v1475
        %2257 = vmatpush.bf16.msra.mxu0 %v1466
        %2258 = vmatpush.bf16.msra.mxu0 %v1457
        %2259 = vmatpush.bf16.msra.mxu0 %v1448
        %2260 = vmatpush.bf16.msra.mxu0 %v1439
        %2261 = vmatpush.bf16.msra.mxu0 %v1430
        %2262 = vmatmul.bf16.gmra.mxu0 %v349
        %v2263 = vpop.f32.mrf.mxu0
        %v2264 = vadd.f32 %v2215, %v2263
        %v2265 = vpop.f32.mrf.mxu0
        %v2266 = vadd.f32 %v2217, %v2265
        %2267 = vmatmul.bf16.gmra.mxu0 %v352
        %v2268 = vpop.f32.mrf.mxu0
        %v2269 = vadd.f32 %v2220, %v2268
        %v2270 = vpop.f32.mrf.mxu0
        %v2271 = vadd.f32 %v2222, %v2270
        %2272 = vmatmul.bf16.gmra.mxu0 %v355
        %v2273 = vpop.f32.mrf.mxu0
        %v2274 = vadd.f32 %v2225, %v2273
        %v2275 = vpop.f32.mrf.mxu0
        %v2276 = vadd.f32 %v2227, %v2275
        %2277 = vmatmul.bf16.gmra.mxu0 %v358
        %v2278 = vpop.f32.mrf.mxu0
        %v2279 = vadd.f32 %v2230, %v2278
        %v2280 = vpop.f32.mrf.mxu0
        %v2281 = vadd.f32 %v2232, %v2280
        %2282 = vmatmul.bf16.gmra.mxu0 %v361
        %v2283 = vpop.f32.mrf.mxu0
        %v2284 = vadd.f32 %v2235, %v2283
        %v2285 = vpop.f32.mrf.mxu0
        %v2286 = vadd.f32 %v2237, %v2285
        %2287 = vmatmul.bf16.gmra.mxu0 %v364
        %v2288 = vpop.f32.mrf.mxu0
        %v2289 = vadd.f32 %v2240, %v2288
        %v2290 = vpop.f32.mrf.mxu0
        %v2291 = vadd.f32 %v2242, %v2290
        %2292 = vmatmul.bf16.gmra.mxu0 %v367
        %v2293 = vpop.f32.mrf.mxu0
        %v2294 = vadd.f32 %v2245, %v2293
        %v2295 = vpop.f32.mrf.mxu0
        %v2296 = vadd.f32 %v2247, %v2295
        %2297 = vmatmul.bf16.gmra.mxu0 %v370
        %v2298 = vpop.f32.mrf.mxu0
        %v2299 = vadd.f32 %v2250, %v2298
        %v2300 = vpop.f32.mrf.mxu0
        %v2301 = vadd.f32 %v2252, %v2300
        %2302 = vdwg.mxu0
        %2303 = vmatpush.bf16.msra.mxu0 %v1350
        %2304 = vmatpush.bf16.msra.mxu0 %v1341
        %2305 = vmatpush.bf16.msra.mxu0 %v1332
        %2306 = vmatpush.bf16.msra.mxu0 %v1323
        %2307 = vmatpush.bf16.msra.mxu0 %v1314
        %2308 = vmatpush.bf16.msra.mxu0 %v1305
        %2309 = vmatpush.bf16.msra.mxu0 %v1296
        %2310 = vmatpush.bf16.msra.mxu0 %v1287
        %2311 = vmatmul.bf16.gmra.mxu0 %v347
        %v2312 = vpop.f32.mrf.mxu0
        %v2313 = vadd.f32 0.0, %v2312
        %v2314 = vpop.f32.mrf.mxu0
        %v2315 = vadd.f32 0.0, %v2314
        %2316 = vmatmul.bf16.gmra.mxu0 %v350
        %v2317 = vpop.f32.mrf.mxu0
        %v2318 = vadd.f32 0.0, %v2317
        %v2319 = vpop.f32.mrf.mxu0
        %v2320 = vadd.f32 0.0, %v2319
        %2321 = vmatmul.bf16.gmra.mxu0 %v353
        %v2322 = vpop.f32.mrf.mxu0
        %v2323 = vadd.f32 0.0, %v2322
        %v2324 = vpop.f32.mrf.mxu0
        %v2325 = vadd.f32 0.0, %v2324
        %2326 = vmatmul.bf16.gmra.mxu0 %v356
        %v2327 = vpop.f32.mrf.mxu0
        %v2328 = vadd.f32 0.0, %v2327
        %v2329 = vpop.f32.mrf.mxu0
        %v2330 = vadd.f32 0.0, %v2329
        %2331 = vmatmul.bf16.gmra.mxu0 %v359
        %v2332 = vpop.f32.mrf.mxu0
        %v2333 = vadd.f32 0.0, %v2332
        %v2334 = vpop.f32.mrf.mxu0
        %v2335 = vadd.f32 0.0, %v2334
        %2336 = vmatmul.bf16.gmra.mxu0 %v362
        %v2337 = vpop.f32.mrf.mxu0
        %v2338 = vadd.f32 0.0, %v2337
        %v2339 = vpop.f32.mrf.mxu0
        %v2340 = vadd.f32 0.0, %v2339
        %2341 = vmatmul.bf16.gmra.mxu0 %v365
        %v2342 = vpop.f32.mrf.mxu0
        %v2343 = vadd.f32 0.0, %v2342
        %v2344 = vpop.f32.mrf.mxu0
        %v2345 = vadd.f32 0.0, %v2344
        %2346 = vmatmul.bf16.gmra.mxu0 %v368
        %v2347 = vpop.f32.mrf.mxu0
        %v2348 = vadd.f32 0.0, %v2347
        %v2349 = vpop.f32.mrf.mxu0
        %v2350 = vadd.f32 0.0, %v2349
        %2351 = vdwg.mxu0
        %2352 = vmatpush.bf16.msra.mxu0 %v1422
        %2353 = vmatpush.bf16.msra.mxu0 %v1413
        %2354 = vmatpush.bf16.msra.mxu0 %v1404
        %2355 = vmatpush.bf16.msra.mxu0 %v1395
        %2356 = vmatpush.bf16.msra.mxu0 %v1386
        %2357 = vmatpush.bf16.msra.mxu0 %v1377
        %2358 = vmatpush.bf16.msra.mxu0 %v1368
        %2359 = vmatpush.bf16.msra.mxu0 %v1359
        %2360 = vmatmul.bf16.gmra.mxu0 %v348
        %v2361 = vpop.f32.mrf.mxu0
        %v2362 = vadd.f32 %v2313, %v2361
        %v2363 = vpop.f32.mrf.mxu0
        %v2364 = vadd.f32 %v2315, %v2363
        %2365 = vmatmul.bf16.gmra.mxu0 %v351
        %v2366 = vpop.f32.mrf.mxu0
        %v2367 = vadd.f32 %v2318, %v2366
        %v2368 = vpop.f32.mrf.mxu0
        %v2369 = vadd.f32 %v2320, %v2368
        %2370 = vmatmul.bf16.gmra.mxu0 %v354
        %v2371 = vpop.f32.mrf.mxu0
        %v2372 = vadd.f32 %v2323, %v2371
        %v2373 = vpop.f32.mrf.mxu0
        %v2374 = vadd.f32 %v2325, %v2373
        %2375 = vmatmul.bf16.gmra.mxu0 %v357
        %v2376 = vpop.f32.mrf.mxu0
        %v2377 = vadd.f32 %v2328, %v2376
        %v2378 = vpop.f32.mrf.mxu0
        %v2379 = vadd.f32 %v2330, %v2378
        %2380 = vmatmul.bf16.gmra.mxu0 %v360
        %v2381 = vpop.f32.mrf.mxu0
        %v2382 = vadd.f32 %v2333, %v2381
        %v2383 = vpop.f32.mrf.mxu0
        %v2384 = vadd.f32 %v2335, %v2383
        %2385 = vmatmul.bf16.gmra.mxu0 %v363
        %v2386 = vpop.f32.mrf.mxu0
        %v2387 = vadd.f32 %v2338, %v2386
        %v2388 = vpop.f32.mrf.mxu0
        %v2389 = vadd.f32 %v2340, %v2388
        %2390 = vmatmul.bf16.gmra.mxu0 %v366
        %v2391 = vpop.f32.mrf.mxu0
        %v2392 = vadd.f32 %v2343, %v2391
        %v2393 = vpop.f32.mrf.mxu0
        %v2394 = vadd.f32 %v2345, %v2393
        %2395 = vmatmul.bf16.gmra.mxu0 %v369
        %v2396 = vpop.f32.mrf.mxu0
        %v2397 = vadd.f32 %v2348, %v2396
        %v2398 = vpop.f32.mrf.mxu0
        %v2399 = vadd.f32 %v2350, %v2398
        %2400 = vdwg.mxu0
        %2401 = vmatpush.bf16.msra.mxu0 %v1494
        %2402 = vmatpush.bf16.msra.mxu0 %v1485
        %2403 = vmatpush.bf16.msra.mxu0 %v1476
        %2404 = vmatpush.bf16.msra.mxu0 %v1467
        %2405 = vmatpush.bf16.msra.mxu0 %v1458
        %2406 = vmatpush.bf16.msra.mxu0 %v1449
        %2407 = vmatpush.bf16.msra.mxu0 %v1440
        %2408 = vmatpush.bf16.msra.mxu0 %v1431
        %2409 = vmatmul.bf16.gmra.mxu0 %v349
        %v2410 = vpop.f32.mrf.mxu0
        %v2411 = vadd.f32 %v2362, %v2410
        %v2412 = vpop.f32.mrf.mxu0
        %v2413 = vadd.f32 %v2364, %v2412
        %2414 = vmatmul.bf16.gmra.mxu0 %v352
        %v2415 = vpop.f32.mrf.mxu0
        %v2416 = vadd.f32 %v2367, %v2415
        %v2417 = vpop.f32.mrf.mxu0
        %v2418 = vadd.f32 %v2369, %v2417
        %2419 = vmatmul.bf16.gmra.mxu0 %v355
        %v2420 = vpop.f32.mrf.mxu0
        %v2421 = vadd.f32 %v2372, %v2420
        %v2422 = vpop.f32.mrf.mxu0
        %v2423 = vadd.f32 %v2374, %v2422
        %2424 = vmatmul.bf16.gmra.mxu0 %v358
        %v2425 = vpop.f32.mrf.mxu0
        %v2426 = vadd.f32 %v2377, %v2425
        %v2427 = vpop.f32.mrf.mxu0
        %v2428 = vadd.f32 %v2379, %v2427
        %2429 = vmatmul.bf16.gmra.mxu0 %v361
        %v2430 = vpop.f32.mrf.mxu0
        %v2431 = vadd.f32 %v2382, %v2430
        %v2432 = vpop.f32.mrf.mxu0
        %v2433 = vadd.f32 %v2384, %v2432
        %2434 = vmatmul.bf16.gmra.mxu0 %v364
        %v2435 = vpop.f32.mrf.mxu0
        %v2436 = vadd.f32 %v2387, %v2435
        %v2437 = vpop.f32.mrf.mxu0
        %v2438 = vadd.f32 %v2389, %v2437
        %2439 = vmatmul.bf16.gmra.mxu0 %v367
        %v2440 = vpop.f32.mrf.mxu0
        %v2441 = vadd.f32 %v2392, %v2440
        %v2442 = vpop.f32.mrf.mxu0
        %v2443 = vadd.f32 %v2394, %v2442
        %2444 = vmatmul.bf16.gmra.mxu0 %v370
        %v2445 = vpop.f32.mrf.mxu0
        %v2446 = vadd.f32 %v2397, %v2445
        %v2447 = vpop.f32.mrf.mxu0
        %v2448 = vadd.f32 %v2399, %v2447
        %2449 = vdwg.mxu0
        %2450 = vmatpush.bf16.msra.mxu0 %v1351
        %2451 = vmatpush.bf16.msra.mxu0 %v1342
        %2452 = vmatpush.bf16.msra.mxu0 %v1333
        %2453 = vmatpush.bf16.msra.mxu0 %v1324
        %2454 = vmatpush.bf16.msra.mxu0 %v1315
        %2455 = vmatpush.bf16.msra.mxu0 %v1306
        %2456 = vmatpush.bf16.msra.mxu0 %v1297
        %2457 = vmatpush.bf16.msra.mxu0 %v1288
        %2458 = vmatmul.bf16.gmra.mxu0 %v347
        %v2459 = vpop.f32.mrf.mxu0
        %v2460 = vadd.f32 0.0, %v2459
        %v2461 = vpop.f32.mrf.mxu0
        %v2462 = vadd.f32 0.0, %v2461
        %2463 = vmatmul.bf16.gmra.mxu0 %v350
        %v2464 = vpop.f32.mrf.mxu0
        %v2465 = vadd.f32 0.0, %v2464
        %v2466 = vpop.f32.mrf.mxu0
        %v2467 = vadd.f32 0.0, %v2466
        %2468 = vmatmul.bf16.gmra.mxu0 %v353
        %v2469 = vpop.f32.mrf.mxu0
        %v2470 = vadd.f32 0.0, %v2469
        %v2471 = vpop.f32.mrf.mxu0
        %v2472 = vadd.f32 0.0, %v2471
        %2473 = vmatmul.bf16.gmra.mxu0 %v356
        %v2474 = vpop.f32.mrf.mxu0
        %v2475 = vadd.f32 0.0, %v2474
        %v2476 = vpop.f32.mrf.mxu0
        %v2477 = vadd.f32 0.0, %v2476
        %2478 = vmatmul.bf16.gmra.mxu0 %v359
        %v2479 = vpop.f32.mrf.mxu0
        %v2480 = vadd.f32 0.0, %v2479
        %v2481 = vpop.f32.mrf.mxu0
        %v2482 = vadd.f32 0.0, %v2481
        %2483 = vmatmul.bf16.gmra.mxu0 %v362
        %v2484 = vpop.f32.mrf.mxu0
        %v2485 = vadd.f32 0.0, %v2484
        %v2486 = vpop.f32.mrf.mxu0
        %v2487 = vadd.f32 0.0, %v2486
        %2488 = vmatmul.bf16.gmra.mxu0 %v365
        %v2489 = vpop.f32.mrf.mxu0
        %v2490 = vadd.f32 0.0, %v2489
        %v2491 = vpop.f32.mrf.mxu0
        %v2492 = vadd.f32 0.0, %v2491
        %2493 = vmatmul.bf16.gmra.mxu0 %v368
        %v2494 = vpop.f32.mrf.mxu0
        %v2495 = vadd.f32 0.0, %v2494
        %v2496 = vpop.f32.mrf.mxu0
        %v2497 = vadd.f32 0.0, %v2496
        %2498 = vdwg.mxu0
        %2499 = vmatpush.bf16.msra.mxu0 %v1423
        %2500 = vmatpush.bf16.msra.mxu0 %v1414
        %2501 = vmatpush.bf16.msra.mxu0 %v1405
        %2502 = vmatpush.bf16.msra.mxu0 %v1396
        %2503 = vmatpush.bf16.msra.mxu0 %v1387
        %2504 = vmatpush.bf16.msra.mxu0 %v1378
        %2505 = vmatpush.bf16.msra.mxu0 %v1369
        %2506 = vmatpush.bf16.msra.mxu0 %v1360
        %2507 = vmatmul.bf16.gmra.mxu0 %v348
        %v2508 = vpop.f32.mrf.mxu0
        %v2509 = vadd.f32 %v2460, %v2508
        %v2510 = vpop.f32.mrf.mxu0
        %v2511 = vadd.f32 %v2462, %v2510
        %2512 = vmatmul.bf16.gmra.mxu0 %v351
        %v2513 = vpop.f32.mrf.mxu0
        %v2514 = vadd.f32 %v2465, %v2513
        %v2515 = vpop.f32.mrf.mxu0
        %v2516 = vadd.f32 %v2467, %v2515
        %2517 = vmatmul.bf16.gmra.mxu0 %v354
        %v2518 = vpop.f32.mrf.mxu0
        %v2519 = vadd.f32 %v2470, %v2518
        %v2520 = vpop.f32.mrf.mxu0
        %v2521 = vadd.f32 %v2472, %v2520
        %2522 = vmatmul.bf16.gmra.mxu0 %v357
        %v2523 = vpop.f32.mrf.mxu0
        %v2524 = vadd.f32 %v2475, %v2523
        %v2525 = vpop.f32.mrf.mxu0
        %v2526 = vadd.f32 %v2477, %v2525
        %2527 = vmatmul.bf16.gmra.mxu0 %v360
        %v2528 = vpop.f32.mrf.mxu0
        %v2529 = vadd.f32 %v2480, %v2528
        %v2530 = vpop.f32.mrf.mxu0
        %v2531 = vadd.f32 %v2482, %v2530
        %2532 = vmatmul.bf16.gmra.mxu0 %v363
        %v2533 = vpop.f32.mrf.mxu0
        %v2534 = vadd.f32 %v2485, %v2533
        %v2535 = vpop.f32.mrf.mxu0
        %v2536 = vadd.f32 %v2487, %v2535
        %2537 = vmatmul.bf16.gmra.mxu0 %v366
        %v2538 = vpop.f32.mrf.mxu0
        %v2539 = vadd.f32 %v2490, %v2538
        %v2540 = vpop.f32.mrf.mxu0
        %v2541 = vadd.f32 %v2492, %v2540
        %2542 = vmatmul.bf16.gmra.mxu0 %v369
        %v2543 = vpop.f32.mrf.mxu0
        %v2544 = vadd.f32 %v2495, %v2543
        %v2545 = vpop.f32.mrf.mxu0
        %v2546 = vadd.f32 %v2497, %v2545
        %2547 = vdwg.mxu0
        %2548 = vmatpush.bf16.msra.mxu0 %v1495
        %2549 = vmatpush.bf16.msra.mxu0 %v1486
        %2550 = vmatpush.bf16.msra.mxu0 %v1477
        %2551 = vmatpush.bf16.msra.mxu0 %v1468
        %2552 = vmatpush.bf16.msra.mxu0 %v1459
        %2553 = vmatpush.bf16.msra.mxu0 %v1450
        %2554 = vmatpush.bf16.msra.mxu0 %v1441
        %2555 = vmatpush.bf16.msra.mxu0 %v1432
        %2556 = vmatmul.bf16.gmra.mxu0 %v349
        %v2557 = vpop.f32.mrf.mxu0
        %v2558 = vadd.f32 %v2509, %v2557
        %v2559 = vpop.f32.mrf.mxu0
        %v2560 = vadd.f32 %v2511, %v2559
        %2561 = vmatmul.bf16.gmra.mxu0 %v352
        %v2562 = vpop.f32.mrf.mxu0
        %v2563 = vadd.f32 %v2514, %v2562
        %v2564 = vpop.f32.mrf.mxu0
        %v2565 = vadd.f32 %v2516, %v2564
        %2566 = vmatmul.bf16.gmra.mxu0 %v355
        %v2567 = vpop.f32.mrf.mxu0
        %v2568 = vadd.f32 %v2519, %v2567
        %v2569 = vpop.f32.mrf.mxu0
        %v2570 = vadd.f32 %v2521, %v2569
        %2571 = vmatmul.bf16.gmra.mxu0 %v358
        %v2572 = vpop.f32.mrf.mxu0
        %v2573 = vadd.f32 %v2524, %v2572
        %v2574 = vpop.f32.mrf.mxu0
        %v2575 = vadd.f32 %v2526, %v2574
        %2576 = vmatmul.bf16.gmra.mxu0 %v361
        %v2577 = vpop.f32.mrf.mxu0
        %v2578 = vadd.f32 %v2529, %v2577
        %v2579 = vpop.f32.mrf.mxu0
        %v2580 = vadd.f32 %v2531, %v2579
        %2581 = vmatmul.bf16.gmra.mxu0 %v364
        %v2582 = vpop.f32.mrf.mxu0
        %v2583 = vadd.f32 %v2534, %v2582
        %v2584 = vpop.f32.mrf.mxu0
        %v2585 = vadd.f32 %v2536, %v2584
        %2586 = vmatmul.bf16.gmra.mxu0 %v367
        %v2587 = vpop.f32.mrf.mxu0
        %v2588 = vadd.f32 %v2539, %v2587
        %v2589 = vpop.f32.mrf.mxu0
        %v2590 = vadd.f32 %v2541, %v2589
        %2591 = vmatmul.bf16.gmra.mxu0 %v370
        %v2592 = vpop.f32.mrf.mxu0
        %v2593 = vadd.f32 %v2544, %v2592
        %v2594 = vpop.f32.mrf.mxu0
        %v2595 = vadd.f32 %v2546, %v2594
        %2596 = vdwg.mxu0
        %2597 = vmatpush.bf16.msra.mxu0 %v1352
        %2598 = vmatpush.bf16.msra.mxu0 %v1343
        %2599 = vmatpush.bf16.msra.mxu0 %v1334
        %2600 = vmatpush.bf16.msra.mxu0 %v1325
        %2601 = vmatpush.bf16.msra.mxu0 %v1316
        %2602 = vmatpush.bf16.msra.mxu0 %v1307
        %2603 = vmatpush.bf16.msra.mxu0 %v1298
        %2604 = vmatpush.bf16.msra.mxu0 %v1289
        %2605 = vmatmul.bf16.gmra.mxu0 %v347
        %v2606 = vpop.f32.mrf.mxu0
        %v2607 = vadd.f32 0.0, %v2606
        %v2608 = vpop.f32.mrf.mxu0
        %v2609 = vadd.f32 0.0, %v2608
        %2610 = vmatmul.bf16.gmra.mxu0 %v350
        %v2611 = vpop.f32.mrf.mxu0
        %v2612 = vadd.f32 0.0, %v2611
        %v2613 = vpop.f32.mrf.mxu0
        %v2614 = vadd.f32 0.0, %v2613
        %2615 = vmatmul.bf16.gmra.mxu0 %v353
        %v2616 = vpop.f32.mrf.mxu0
        %v2617 = vadd.f32 0.0, %v2616
        %v2618 = vpop.f32.mrf.mxu0
        %v2619 = vadd.f32 0.0, %v2618
        %2620 = vmatmul.bf16.gmra.mxu0 %v356
        %v2621 = vpop.f32.mrf.mxu0
        %v2622 = vadd.f32 0.0, %v2621
        %v2623 = vpop.f32.mrf.mxu0
        %v2624 = vadd.f32 0.0, %v2623
        %2625 = vmatmul.bf16.gmra.mxu0 %v359
        %v2626 = vpop.f32.mrf.mxu0
        %v2627 = vadd.f32 0.0, %v2626
        %v2628 = vpop.f32.mrf.mxu0
        %v2629 = vadd.f32 0.0, %v2628
        %2630 = vmatmul.bf16.gmra.mxu0 %v362
        %v2631 = vpop.f32.mrf.mxu0
        %v2632 = vadd.f32 0.0, %v2631
        %v2633 = vpop.f32.mrf.mxu0
        %v2634 = vadd.f32 0.0, %v2633
        %2635 = vmatmul.bf16.gmra.mxu0 %v365
        %v2636 = vpop.f32.mrf.mxu0
        %v2637 = vadd.f32 0.0, %v2636
        %v2638 = vpop.f32.mrf.mxu0
        %v2639 = vadd.f32 0.0, %v2638
        %2640 = vmatmul.bf16.gmra.mxu0 %v368
        %v2641 = vpop.f32.mrf.mxu0
        %v2642 = vadd.f32 0.0, %v2641
        %v2643 = vpop.f32.mrf.mxu0
        %v2644 = vadd.f32 0.0, %v2643
        %2645 = vdwg.mxu0
        %2646 = vmatpush.bf16.msra.mxu0 %v1424
        %2647 = vmatpush.bf16.msra.mxu0 %v1415
        %2648 = vmatpush.bf16.msra.mxu0 %v1406
        %2649 = vmatpush.bf16.msra.mxu0 %v1397
        %2650 = vmatpush.bf16.msra.mxu0 %v1388
        %2651 = vmatpush.bf16.msra.mxu0 %v1379
        %2652 = vmatpush.bf16.msra.mxu0 %v1370
        %2653 = vmatpush.bf16.msra.mxu0 %v1361
        %2654 = vmatmul.bf16.gmra.mxu0 %v348
        %v2655 = vpop.f32.mrf.mxu0
        %v2656 = vadd.f32 %v2607, %v2655
        %v2657 = vpop.f32.mrf.mxu0
        %v2658 = vadd.f32 %v2609, %v2657
        %2659 = vmatmul.bf16.gmra.mxu0 %v351
        %v2660 = vpop.f32.mrf.mxu0
        %v2661 = vadd.f32 %v2612, %v2660
        %v2662 = vpop.f32.mrf.mxu0
        %v2663 = vadd.f32 %v2614, %v2662
        %2664 = vmatmul.bf16.gmra.mxu0 %v354
        %v2665 = vpop.f32.mrf.mxu0
        %v2666 = vadd.f32 %v2617, %v2665
        %v2667 = vpop.f32.mrf.mxu0
        %v2668 = vadd.f32 %v2619, %v2667
        %2669 = vmatmul.bf16.gmra.mxu0 %v357
        %v2670 = vpop.f32.mrf.mxu0
        %v2671 = vadd.f32 %v2622, %v2670
        %v2672 = vpop.f32.mrf.mxu0
        %v2673 = vadd.f32 %v2624, %v2672
        %2674 = vmatmul.bf16.gmra.mxu0 %v360
        %v2675 = vpop.f32.mrf.mxu0
        %v2676 = vadd.f32 %v2627, %v2675
        %v2677 = vpop.f32.mrf.mxu0
        %v2678 = vadd.f32 %v2629, %v2677
        %2679 = vmatmul.bf16.gmra.mxu0 %v363
        %v2680 = vpop.f32.mrf.mxu0
        %v2681 = vadd.f32 %v2632, %v2680
        %v2682 = vpop.f32.mrf.mxu0
        %v2683 = vadd.f32 %v2634, %v2682
        %2684 = vmatmul.bf16.gmra.mxu0 %v366
        %v2685 = vpop.f32.mrf.mxu0
        %v2686 = vadd.f32 %v2637, %v2685
        %v2687 = vpop.f32.mrf.mxu0
        %v2688 = vadd.f32 %v2639, %v2687
        %2689 = vmatmul.bf16.gmra.mxu0 %v369
        %v2690 = vpop.f32.mrf.mxu0
        %v2691 = vadd.f32 %v2642, %v2690
        %v2692 = vpop.f32.mrf.mxu0
        %v2693 = vadd.f32 %v2644, %v2692
        %2694 = vdwg.mxu0
        %2695 = vmatpush.bf16.msra.mxu0 %v1496
        %2696 = vmatpush.bf16.msra.mxu0 %v1487
        %2697 = vmatpush.bf16.msra.mxu0 %v1478
        %2698 = vmatpush.bf16.msra.mxu0 %v1469
        %2699 = vmatpush.bf16.msra.mxu0 %v1460
        %2700 = vmatpush.bf16.msra.mxu0 %v1451
        %2701 = vmatpush.bf16.msra.mxu0 %v1442
        %2702 = vmatpush.bf16.msra.mxu0 %v1433
        %2703 = vmatmul.bf16.gmra.mxu0 %v349
        %v2704 = vpop.f32.mrf.mxu0
        %v2705 = vadd.f32 %v2656, %v2704
        %v2706 = vpop.f32.mrf.mxu0
        %v2707 = vadd.f32 %v2658, %v2706
        %2708 = vmatmul.bf16.gmra.mxu0 %v352
        %v2709 = vpop.f32.mrf.mxu0
        %v2710 = vadd.f32 %v2661, %v2709
        %v2711 = vpop.f32.mrf.mxu0
        %v2712 = vadd.f32 %v2663, %v2711
        %2713 = vmatmul.bf16.gmra.mxu0 %v355
        %v2714 = vpop.f32.mrf.mxu0
        %v2715 = vadd.f32 %v2666, %v2714
        %v2716 = vpop.f32.mrf.mxu0
        %v2717 = vadd.f32 %v2668, %v2716
        %2718 = vmatmul.bf16.gmra.mxu0 %v358
        %v2719 = vpop.f32.mrf.mxu0
        %v2720 = vadd.f32 %v2671, %v2719
        %v2721 = vpop.f32.mrf.mxu0
        %v2722 = vadd.f32 %v2673, %v2721
        %2723 = vmatmul.bf16.gmra.mxu0 %v361
        %v2724 = vpop.f32.mrf.mxu0
        %v2725 = vadd.f32 %v2676, %v2724
        %v2726 = vpop.f32.mrf.mxu0
        %v2727 = vadd.f32 %v2678, %v2726
        %2728 = vmatmul.bf16.gmra.mxu0 %v364
        %v2729 = vpop.f32.mrf.mxu0
        %v2730 = vadd.f32 %v2681, %v2729
        %v2731 = vpop.f32.mrf.mxu0
        %v2732 = vadd.f32 %v2683, %v2731
        %2733 = vmatmul.bf16.gmra.mxu0 %v367
        %v2734 = vpop.f32.mrf.mxu0
        %v2735 = vadd.f32 %v2686, %v2734
        %v2736 = vpop.f32.mrf.mxu0
        %v2737 = vadd.f32 %v2688, %v2736
        %2738 = vmatmul.bf16.gmra.mxu0 %v370
        %v2739 = vpop.f32.mrf.mxu0
        %v2740 = vadd.f32 %v2691, %v2739
        %v2741 = vpop.f32.mrf.mxu0
        %v2742 = vadd.f32 %v2693, %v2741
        %2743 = vdwg.mxu0
        %2744 = vmatpush.bf16.msra.mxu0 %v1353
        %2745 = vmatpush.bf16.msra.mxu0 %v1344
        %2746 = vmatpush.bf16.msra.mxu0 %v1335
        %2747 = vmatpush.bf16.msra.mxu0 %v1326
        %2748 = vmatpush.bf16.msra.mxu0 %v1317
        %2749 = vmatpush.bf16.msra.mxu0 %v1308
        %2750 = vmatpush.bf16.msra.mxu0 %v1299
        %2751 = vmatpush.bf16.msra.mxu0 %v1290
        %2752 = vmatmul.bf16.gmra.mxu0 %v347
        %v2753 = vpop.f32.mrf.mxu0
        %v2754 = vadd.f32 0.0, %v2753
        %v2755 = vpop.f32.mrf.mxu0
        %v2756 = vadd.f32 0.0, %v2755
        %2757 = vmatmul.bf16.gmra.mxu0 %v350
        %v2758 = vpop.f32.mrf.mxu0
        %v2759 = vadd.f32 0.0, %v2758
        %v2760 = vpop.f32.mrf.mxu0
        %v2761 = vadd.f32 0.0, %v2760
        %2762 = vmatmul.bf16.gmra.mxu0 %v353
        %v2763 = vpop.f32.mrf.mxu0
        %v2764 = vadd.f32 0.0, %v2763
        %v2765 = vpop.f32.mrf.mxu0
        %v2766 = vadd.f32 0.0, %v2765
        %2767 = vmatmul.bf16.gmra.mxu0 %v356
        %v2768 = vpop.f32.mrf.mxu0
        %v2769 = vadd.f32 0.0, %v2768
        %v2770 = vpop.f32.mrf.mxu0
        %v2771 = vadd.f32 0.0, %v2770
        %2772 = vmatmul.bf16.gmra.mxu0 %v359
        %v2773 = vpop.f32.mrf.mxu0
        %v2774 = vadd.f32 0.0, %v2773
        %v2775 = vpop.f32.mrf.mxu0
        %v2776 = vadd.f32 0.0, %v2775
        %2777 = vmatmul.bf16.gmra.mxu0 %v362
        %v2778 = vpop.f32.mrf.mxu0
        %v2779 = vadd.f32 0.0, %v2778
        %v2780 = vpop.f32.mrf.mxu0
        %v2781 = vadd.f32 0.0, %v2780
        %2782 = vmatmul.bf16.gmra.mxu0 %v365
        %v2783 = vpop.f32.mrf.mxu0
        %v2784 = vadd.f32 0.0, %v2783
        %v2785 = vpop.f32.mrf.mxu0
        %v2786 = vadd.f32 0.0, %v2785
        %2787 = vmatmul.bf16.gmra.mxu0 %v368
        %v2788 = vpop.f32.mrf.mxu0
        %v2789 = vadd.f32 0.0, %v2788
        %v2790 = vpop.f32.mrf.mxu0
        %v2791 = vadd.f32 0.0, %v2790
        %2792 = vdwg.mxu0
        %2793 = vmatpush.bf16.msra.mxu0 %v1425
        %2794 = vmatpush.bf16.msra.mxu0 %v1416
        %2795 = vmatpush.bf16.msra.mxu0 %v1407
        %2796 = vmatpush.bf16.msra.mxu0 %v1398
        %2797 = vmatpush.bf16.msra.mxu0 %v1389
        %2798 = vmatpush.bf16.msra.mxu0 %v1380
        %2799 = vmatpush.bf16.msra.mxu0 %v1371
        %2800 = vmatpush.bf16.msra.mxu0 %v1362
        %2801 = vmatmul.bf16.gmra.mxu0 %v348
        %v2802 = vpop.f32.mrf.mxu0
        %v2803 = vadd.f32 %v2754, %v2802
        %v2804 = vpop.f32.mrf.mxu0
        %v2805 = vadd.f32 %v2756, %v2804
        %2806 = vmatmul.bf16.gmra.mxu0 %v351
        %v2807 = vpop.f32.mrf.mxu0
        %v2808 = vadd.f32 %v2759, %v2807
        %v2809 = vpop.f32.mrf.mxu0
        %v2810 = vadd.f32 %v2761, %v2809
        %2811 = vmatmul.bf16.gmra.mxu0 %v354
        %v2812 = vpop.f32.mrf.mxu0
        %v2813 = vadd.f32 %v2764, %v2812
        %v2814 = vpop.f32.mrf.mxu0
        %v2815 = vadd.f32 %v2766, %v2814
        %2816 = vmatmul.bf16.gmra.mxu0 %v357
        %v2817 = vpop.f32.mrf.mxu0
        %v2818 = vadd.f32 %v2769, %v2817
        %v2819 = vpop.f32.mrf.mxu0
        %v2820 = vadd.f32 %v2771, %v2819
        %2821 = vmatmul.bf16.gmra.mxu0 %v360
        %v2822 = vpop.f32.mrf.mxu0
        %v2823 = vadd.f32 %v2774, %v2822
        %v2824 = vpop.f32.mrf.mxu0
        %v2825 = vadd.f32 %v2776, %v2824
        %2826 = vmatmul.bf16.gmra.mxu0 %v363
        %v2827 = vpop.f32.mrf.mxu0
        %v2828 = vadd.f32 %v2779, %v2827
        %v2829 = vpop.f32.mrf.mxu0
        %v2830 = vadd.f32 %v2781, %v2829
        %2831 = vmatmul.bf16.gmra.mxu0 %v366
        %v2832 = vpop.f32.mrf.mxu0
        %v2833 = vadd.f32 %v2784, %v2832
        %v2834 = vpop.f32.mrf.mxu0
        %v2835 = vadd.f32 %v2786, %v2834
        %2836 = vmatmul.bf16.gmra.mxu0 %v369
        %v2837 = vpop.f32.mrf.mxu0
        %v2838 = vadd.f32 %v2789, %v2837
        %v2839 = vpop.f32.mrf.mxu0
        %v2840 = vadd.f32 %v2791, %v2839
        %2841 = vdwg.mxu0
        %2842 = vmatpush.bf16.msra.mxu0 %v1497
        %2843 = vmatpush.bf16.msra.mxu0 %v1488
        %2844 = vmatpush.bf16.msra.mxu0 %v1479
        %2845 = vmatpush.bf16.msra.mxu0 %v1470
        %2846 = vmatpush.bf16.msra.mxu0 %v1461
        %2847 = vmatpush.bf16.msra.mxu0 %v1452
        %2848 = vmatpush.bf16.msra.mxu0 %v1443
        %2849 = vmatpush.bf16.msra.mxu0 %v1434
        %2850 = vmatmul.bf16.gmra.mxu0 %v349
        %v2851 = vpop.f32.mrf.mxu0
        %v2852 = vadd.f32 %v2803, %v2851
        %v2853 = vpop.f32.mrf.mxu0
        %v2854 = vadd.f32 %v2805, %v2853
        %2855 = vmatmul.bf16.gmra.mxu0 %v352
        %v2856 = vpop.f32.mrf.mxu0
        %v2857 = vadd.f32 %v2808, %v2856
        %v2858 = vpop.f32.mrf.mxu0
        %v2859 = vadd.f32 %v2810, %v2858
        %2860 = vmatmul.bf16.gmra.mxu0 %v355
        %v2861 = vpop.f32.mrf.mxu0
        %v2862 = vadd.f32 %v2813, %v2861
        %v2863 = vpop.f32.mrf.mxu0
        %v2864 = vadd.f32 %v2815, %v2863
        %2865 = vmatmul.bf16.gmra.mxu0 %v358
        %v2866 = vpop.f32.mrf.mxu0
        %v2867 = vadd.f32 %v2818, %v2866
        %v2868 = vpop.f32.mrf.mxu0
        %v2869 = vadd.f32 %v2820, %v2868
        %2870 = vmatmul.bf16.gmra.mxu0 %v361
        %v2871 = vpop.f32.mrf.mxu0
        %v2872 = vadd.f32 %v2823, %v2871
        %v2873 = vpop.f32.mrf.mxu0
        %v2874 = vadd.f32 %v2825, %v2873
        %2875 = vmatmul.bf16.gmra.mxu0 %v364
        %v2876 = vpop.f32.mrf.mxu0
        %v2877 = vadd.f32 %v2828, %v2876
        %v2878 = vpop.f32.mrf.mxu0
        %v2879 = vadd.f32 %v2830, %v2878
        %2880 = vmatmul.bf16.gmra.mxu0 %v367
        %v2881 = vpop.f32.mrf.mxu0
        %v2882 = vadd.f32 %v2833, %v2881
        %v2883 = vpop.f32.mrf.mxu0
        %v2884 = vadd.f32 %v2835, %v2883
        %2885 = vmatmul.bf16.gmra.mxu0 %v370
        %v2886 = vpop.f32.mrf.mxu0
        %v2887 = vadd.f32 %v2838, %v2886
        %v2888 = vpop.f32.mrf.mxu0
        %v2889 = vadd.f32 %v2840, %v2888
        %2890 = vdwg.mxu0
        %2891 = vmatpush.bf16.msra.mxu0 %v1354
        %2892 = vmatpush.bf16.msra.mxu0 %v1345
        %2893 = vmatpush.bf16.msra.mxu0 %v1336
        %2894 = vmatpush.bf16.msra.mxu0 %v1327
        %2895 = vmatpush.bf16.msra.mxu0 %v1318
        %2896 = vmatpush.bf16.msra.mxu0 %v1309
        %2897 = vmatpush.bf16.msra.mxu0 %v1300
        %2898 = vmatpush.bf16.msra.mxu0 %v1291
        %2899 = vmatmul.bf16.gmra.mxu0 %v347
        %v2900 = vpop.f32.mrf.mxu0
        %v2901 = vadd.f32 0.0, %v2900
        %v2902 = vpop.f32.mrf.mxu0
        %v2903 = vadd.f32 0.0, %v2902
        %2904 = vmatmul.bf16.gmra.mxu0 %v350
        %v2905 = vpop.f32.mrf.mxu0
        %v2906 = vadd.f32 0.0, %v2905
        %v2907 = vpop.f32.mrf.mxu0
        %v2908 = vadd.f32 0.0, %v2907
        %2909 = vmatmul.bf16.gmra.mxu0 %v353
        %v2910 = vpop.f32.mrf.mxu0
        %v2911 = vadd.f32 0.0, %v2910
        %v2912 = vpop.f32.mrf.mxu0
        %v2913 = vadd.f32 0.0, %v2912
        %2914 = vmatmul.bf16.gmra.mxu0 %v356
        %v2915 = vpop.f32.mrf.mxu0
        %v2916 = vadd.f32 0.0, %v2915
        %v2917 = vpop.f32.mrf.mxu0
        %v2918 = vadd.f32 0.0, %v2917
        %2919 = vmatmul.bf16.gmra.mxu0 %v359
        %v2920 = vpop.f32.mrf.mxu0
        %v2921 = vadd.f32 0.0, %v2920
        %v2922 = vpop.f32.mrf.mxu0
        %v2923 = vadd.f32 0.0, %v2922
        %2924 = vmatmul.bf16.gmra.mxu0 %v362
        %v2925 = vpop.f32.mrf.mxu0
        %v2926 = vadd.f32 0.0, %v2925
        %v2927 = vpop.f32.mrf.mxu0
        %v2928 = vadd.f32 0.0, %v2927
        %2929 = vmatmul.bf16.gmra.mxu0 %v365
        %v2930 = vpop.f32.mrf.mxu0
        %v2931 = vadd.f32 0.0, %v2930
        %v2932 = vpop.f32.mrf.mxu0
        %v2933 = vadd.f32 0.0, %v2932
        %2934 = vmatmul.bf16.gmra.mxu0 %v368
        %v2935 = vpop.f32.mrf.mxu0
        %v2936 = vadd.f32 0.0, %v2935
        %v2937 = vpop.f32.mrf.mxu0
        %v2938 = vadd.f32 0.0, %v2937
        %2939 = vdwg.mxu0
        %2940 = vmatpush.bf16.msra.mxu0 %v1426
        %2941 = vmatpush.bf16.msra.mxu0 %v1417
        %2942 = vmatpush.bf16.msra.mxu0 %v1408
        %2943 = vmatpush.bf16.msra.mxu0 %v1399
        %2944 = vmatpush.bf16.msra.mxu0 %v1390
        %2945 = vmatpush.bf16.msra.mxu0 %v1381
        %2946 = vmatpush.bf16.msra.mxu0 %v1372
        %2947 = vmatpush.bf16.msra.mxu0 %v1363
        %2948 = vmatmul.bf16.gmra.mxu0 %v348
        %v2949 = vpop.f32.mrf.mxu0
        %v2950 = vadd.f32 %v2901, %v2949
        %v2951 = vpop.f32.mrf.mxu0
        %v2952 = vadd.f32 %v2903, %v2951
        %2953 = vmatmul.bf16.gmra.mxu0 %v351
        %v2954 = vpop.f32.mrf.mxu0
        %v2955 = vadd.f32 %v2906, %v2954
        %v2956 = vpop.f32.mrf.mxu0
        %v2957 = vadd.f32 %v2908, %v2956
        %2958 = vmatmul.bf16.gmra.mxu0 %v354
        %v2959 = vpop.f32.mrf.mxu0
        %v2960 = vadd.f32 %v2911, %v2959
        %v2961 = vpop.f32.mrf.mxu0
        %v2962 = vadd.f32 %v2913, %v2961
        %2963 = vmatmul.bf16.gmra.mxu0 %v357
        %v2964 = vpop.f32.mrf.mxu0
        %v2965 = vadd.f32 %v2916, %v2964
        %v2966 = vpop.f32.mrf.mxu0
        %v2967 = vadd.f32 %v2918, %v2966
        %2968 = vmatmul.bf16.gmra.mxu0 %v360
        %v2969 = vpop.f32.mrf.mxu0
        %v2970 = vadd.f32 %v2921, %v2969
        %v2971 = vpop.f32.mrf.mxu0
        %v2972 = vadd.f32 %v2923, %v2971
        %2973 = vmatmul.bf16.gmra.mxu0 %v363
        %v2974 = vpop.f32.mrf.mxu0
        %v2975 = vadd.f32 %v2926, %v2974
        %v2976 = vpop.f32.mrf.mxu0
        %v2977 = vadd.f32 %v2928, %v2976
        %2978 = vmatmul.bf16.gmra.mxu0 %v366
        %v2979 = vpop.f32.mrf.mxu0
        %v2980 = vadd.f32 %v2931, %v2979
        %v2981 = vpop.f32.mrf.mxu0
        %v2982 = vadd.f32 %v2933, %v2981
        %2983 = vmatmul.bf16.gmra.mxu0 %v369
        %v2984 = vpop.f32.mrf.mxu0
        %v2985 = vadd.f32 %v2936, %v2984
        %v2986 = vpop.f32.mrf.mxu0
        %v2987 = vadd.f32 %v2938, %v2986
        %2988 = vdwg.mxu0
        %2989 = vmatpush.bf16.msra.mxu0 %v1498
        %2990 = vmatpush.bf16.msra.mxu0 %v1489
        %2991 = vmatpush.bf16.msra.mxu0 %v1480
        %2992 = vmatpush.bf16.msra.mxu0 %v1471
        %2993 = vmatpush.bf16.msra.mxu0 %v1462
        %2994 = vmatpush.bf16.msra.mxu0 %v1453
        %2995 = vmatpush.bf16.msra.mxu0 %v1444
        %2996 = vmatpush.bf16.msra.mxu0 %v1435
        %2997 = vmatmul.bf16.gmra.mxu0 %v349
        %v2998 = vpop.f32.mrf.mxu0
        %v2999 = vadd.f32 %v2950, %v2998
        %v3000 = vpop.f32.mrf.mxu0
        %v3001 = vadd.f32 %v2952, %v3000
        %3002 = vmatmul.bf16.gmra.mxu0 %v352
        %v3003 = vpop.f32.mrf.mxu0
        %v3004 = vadd.f32 %v2955, %v3003
        %v3005 = vpop.f32.mrf.mxu0
        %v3006 = vadd.f32 %v2957, %v3005
        %3007 = vmatmul.bf16.gmra.mxu0 %v355
        %v3008 = vpop.f32.mrf.mxu0
        %v3009 = vadd.f32 %v2960, %v3008
        %v3010 = vpop.f32.mrf.mxu0
        %v3011 = vadd.f32 %v2962, %v3010
        %3012 = vmatmul.bf16.gmra.mxu0 %v358
        %v3013 = vpop.f32.mrf.mxu0
        %v3014 = vadd.f32 %v2965, %v3013
        %v3015 = vpop.f32.mrf.mxu0
        %v3016 = vadd.f32 %v2967, %v3015
        %3017 = vmatmul.bf16.gmra.mxu0 %v361
        %v3018 = vpop.f32.mrf.mxu0
        %v3019 = vadd.f32 %v2970, %v3018
        %v3020 = vpop.f32.mrf.mxu0
        %v3021 = vadd.f32 %v2972, %v3020
        %3022 = vmatmul.bf16.gmra.mxu0 %v364
        %v3023 = vpop.f32.mrf.mxu0
        %v3024 = vadd.f32 %v2975, %v3023
        %v3025 = vpop.f32.mrf.mxu0
        %v3026 = vadd.f32 %v2977, %v3025
        %3027 = vmatmul.bf16.gmra.mxu0 %v367
        %v3028 = vpop.f32.mrf.mxu0
        %v3029 = vadd.f32 %v2980, %v3028
        %v3030 = vpop.f32.mrf.mxu0
        %v3031 = vadd.f32 %v2982, %v3030
        %3032 = vmatmul.bf16.gmra.mxu0 %v370
        %v3033 = vpop.f32.mrf.mxu0
        %v3034 = vadd.f32 %v2985, %v3033
        %v3035 = vpop.f32.mrf.mxu0
        %v3036 = vadd.f32 %v2987, %v3035
        %3037 = vdwg.mxu0
        %v3038 = vpack.c.bf16 %v1970, %v1823
        %v3039 = vpack.c.bf16 %v2117, %v2117
        %v3040 = vpack.c.bf16 %v1972, %v1825
        %v3041 = vpack.c.bf16 %v2119, %v2119
        %v3042 = vpack.c.bf16 %v1975, %v1828
        %v3043 = vpack.c.bf16 %v2122, %v2122
        %v3044 = vpack.c.bf16 %v1977, %v1830
        %v3045 = vpack.c.bf16 %v2124, %v2124
        %v3046 = vpack.c.bf16 %v1980, %v1833
        %v3047 = vpack.c.bf16 %v2127, %v2127
        %v3048 = vpack.c.bf16 %v1982, %v1835
        %v3049 = vpack.c.bf16 %v2129, %v2129
        %v3050 = vpack.c.bf16 %v1985, %v1838
        %v3051 = vpack.c.bf16 %v2132, %v2132
        %v3052 = vpack.c.bf16 %v1987, %v1840
        %v3053 = vpack.c.bf16 %v2134, %v2134
        %v3054 = vpack.c.bf16 %v1990, %v1843
        %v3055 = vpack.c.bf16 %v2137, %v2137
        %v3056 = vpack.c.bf16 %v1992, %v1845
        %v3057 = vpack.c.bf16 %v2139, %v2139
        %v3058 = vpack.c.bf16 %v1995, %v1848
        %v3059 = vpack.c.bf16 %v2142, %v2142
        %v3060 = vpack.c.bf16 %v1997, %v1850
        %v3061 = vpack.c.bf16 %v2144, %v2144
        %v3062 = vpack.c.bf16 %v2000, %v1853
        %v3063 = vpack.c.bf16 %v2147, %v2147
        %v3064 = vpack.c.bf16 %v2002, %v1855
        %v3065 = vpack.c.bf16 %v2149, %v2149
        %v3066 = vpack.c.bf16 %v2005, %v1858
        %v3067 = vpack.c.bf16 %v2152, %v2152
        %v3068 = vpack.c.bf16 %v2007, %v1860
        %v3069 = vpack.c.bf16 %v2154, %v2154
        %v3070 = vpack.c.bf16 %v2411, %v2264
        %v3071 = vpack.c.bf16 %v2558, %v2558
        %v3072 = vpack.c.bf16 %v2413, %v2266
        %v3073 = vpack.c.bf16 %v2560, %v2560
        %v3074 = vpack.c.bf16 %v2416, %v2269
        %v3075 = vpack.c.bf16 %v2563, %v2563
        %v3076 = vpack.c.bf16 %v2418, %v2271
        %v3077 = vpack.c.bf16 %v2565, %v2565
        %v3078 = vpack.c.bf16 %v2421, %v2274
        %v3079 = vpack.c.bf16 %v2568, %v2568
        %v3080 = vpack.c.bf16 %v2423, %v2276
        %v3081 = vpack.c.bf16 %v2570, %v2570
        %v3082 = vpack.c.bf16 %v2426, %v2279
        %v3083 = vpack.c.bf16 %v2573, %v2573
        %v3084 = vpack.c.bf16 %v2428, %v2281
        %v3085 = vpack.c.bf16 %v2575, %v2575
        %v3086 = vpack.c.bf16 %v2431, %v2284
        %v3087 = vpack.c.bf16 %v2578, %v2578
        %v3088 = vpack.c.bf16 %v2433, %v2286
        %v3089 = vpack.c.bf16 %v2580, %v2580
        %v3090 = vpack.c.bf16 %v2436, %v2289
        %v3091 = vpack.c.bf16 %v2583, %v2583
        %v3092 = vpack.c.bf16 %v2438, %v2291
        %v3093 = vpack.c.bf16 %v2585, %v2585
        %v3094 = vpack.c.bf16 %v2441, %v2294
        %v3095 = vpack.c.bf16 %v2588, %v2588
        %v3096 = vpack.c.bf16 %v2443, %v2296
        %v3097 = vpack.c.bf16 %v2590, %v2590
        %v3098 = vpack.c.bf16 %v2446, %v2299
        %v3099 = vpack.c.bf16 %v2593, %v2593
        %v3100 = vpack.c.bf16 %v2448, %v2301
        %v3101 = vpack.c.bf16 %v2595, %v2595
        %v3102 = vpack.c.bf16 %v2852, %v2705
        %v3103 = vpack.c.bf16 %v2999, %v2999
        %v3104 = vpack.c.bf16 %v2854, %v2707
        %v3105 = vpack.c.bf16 %v3001, %v3001
        %v3106 = vpack.c.bf16 %v2857, %v2710
        %v3107 = vpack.c.bf16 %v3004, %v3004
        %v3108 = vpack.c.bf16 %v2859, %v2712
        %v3109 = vpack.c.bf16 %v3006, %v3006
        %v3110 = vpack.c.bf16 %v2862, %v2715
        %v3111 = vpack.c.bf16 %v3009, %v3009
        %v3112 = vpack.c.bf16 %v2864, %v2717
        %v3113 = vpack.c.bf16 %v3011, %v3011
        %v3114 = vpack.c.bf16 %v2867, %v2720
        %v3115 = vpack.c.bf16 %v3014, %v3014
        %v3116 = vpack.c.bf16 %v2869, %v2722
        %v3117 = vpack.c.bf16 %v3016, %v3016
        %v3118 = vpack.c.bf16 %v2872, %v2725
        %v3119 = vpack.c.bf16 %v3019, %v3019
        %v3120 = vpack.c.bf16 %v2874, %v2727
        %v3121 = vpack.c.bf16 %v3021, %v3021
        %v3122 = vpack.c.bf16 %v2877, %v2730
        %v3123 = vpack.c.bf16 %v3024, %v3024
        %v3124 = vpack.c.bf16 %v2879, %v2732
        %v3125 = vpack.c.bf16 %v3026, %v3026
        %v3126 = vpack.c.bf16 %v2882, %v2735
        %v3127 = vpack.c.bf16 %v3029, %v3029
        %v3128 = vpack.c.bf16 %v2884, %v2737
        %v3129 = vpack.c.bf16 %v3031, %v3031
        %v3130 = vpack.c.bf16 %v2887, %v2740
        %v3131 = vpack.c.bf16 %v3034, %v3034
        %v3132 = vpack.c.bf16 %v2889, %v2742
        %v3133 = vpack.c.bf16 %v3036, %v3036
        %v3134 = vld [vmem:[#allocation5] sm:$0xff]
        %v3135 = vld [vmem:[#allocation5 + $0x8] sm:$0xff]
        %v3136 = vld [vmem:[#allocation5 + $0x10] sm:$0xff]
        %v3137 = vld [vmem:[#allocation5 + $0x18] sm:$0xff]
        %v3142 = vunpack.c.l.b16 %v3038
        %v3143 = vunpack.c.l.b16 %v3040
        %v3144 = vunpack.c.l.b16 %v3042
        %v3145 = vunpack.c.l.b16 %v3044
        %v3146 = vpack.c.b16 %v3143, %v3142
        %v3147 = vpack.c.b16 %v3145, %v3144
        %v3152 = vunpack.c.l.b16 %v3070
        %v3153 = vunpack.c.l.b16 %v3072
        %v3154 = vunpack.c.l.b16 %v3074
        %v3155 = vunpack.c.l.b16 %v3076
        %v3156 = vpack.c.b16 %v3153, %v3152
        %v3157 = vpack.c.b16 %v3155, %v3154
        %vm3158 = vcmask 523264
        %v3160 = vsel %vm3158, %v3146, 0
        %v3163 = vsel %vm3158, %v3147, 0
        %v3166 = vsel %vm3158, %v3156, 0
        %v3169 = vsel %vm3158, %v3157, 0
        %3171 = vmatpush.bf16.xpose.msra.mxu0 0
        %3172 = vmatpush.bf16.xpose.msra.mxu0 0
        %3173 = vmatpush.bf16.xpose.msra.mxu0 0
        %3174 = vmatpush.bf16.xpose.msra.mxu0 0
        %3175 = vmatpush.bf16.xpose.msra.mxu0 0
        %3176 = vmatpush.bf16.xpose.msra.mxu0 0
        %3177 = vmatpush.bf16.xpose.msra.mxu0 %v3169
        %3178 = vmatpush.bf16.xpose.msra.mxu0 %v3166
        %3179 = vmatmul.bf16.gmra.mxu0 %v3160
        %v3180 = vpop.f32.mrf.mxu0
        %v3181 = vadd.f32 %v3134, %v3180
        %v3182 = vpop.f32.mrf.mxu0
        %v3183 = vadd.f32 %v3135, %v3182
        %3184 = vmatmul.bf16.gmra.mxu0 %v3163
        %v3185 = vpop.f32.mrf.mxu0
        %v3186 = vadd.f32 %v3136, %v3185
        %v3187 = vpop.f32.mrf.mxu0
        %v3188 = vadd.f32 %v3137, %v3187
        %3189 = vdwg.mxu0
        %v3194 = vunpack.c.l.b16 %v3046
        %v3195 = vunpack.c.l.b16 %v3048
        %v3196 = vunpack.c.l.b16 %v3050
        %v3197 = vunpack.c.l.b16 %v3052
        %v3198 = vpack.c.b16 %v3195, %v3194
        %v3199 = vpack.c.b16 %v3197, %v3196
        %v3204 = vunpack.c.l.b16 %v3078
        %v3205 = vunpack.c.l.b16 %v3080
        %v3206 = vunpack.c.l.b16 %v3082
        %v3207 = vunpack.c.l.b16 %v3084
        %v3208 = vpack.c.b16 %v3205, %v3204
        %v3209 = vpack.c.b16 %v3207, %v3206
        %v3211 = vsel %vm3158, %v3198, 0
        %v3214 = vsel %vm3158, %v3199, 0
        %v3217 = vsel %vm3158, %v3208, 0
        %v3220 = vsel %vm3158, %v3209, 0
        %3222 = vmatpush.bf16.xpose.msra.mxu0 0
        %3223 = vmatpush.bf16.xpose.msra.mxu0 0
        %3224 = vmatpush.bf16.xpose.msra.mxu0 0
        %3225 = vmatpush.bf16.xpose.msra.mxu0 0
        %3226 = vmatpush.bf16.xpose.msra.mxu0 0
        %3227 = vmatpush.bf16.xpose.msra.mxu0 0
        %3228 = vmatpush.bf16.xpose.msra.mxu0 %v3220
        %3229 = vmatpush.bf16.xpose.msra.mxu0 %v3217
        %3230 = vmatmul.bf16.gmra.mxu0 %v3211
        %v3231 = vpop.f32.mrf.mxu0
        %v3232 = vadd.f32 %v3134, %v3231
        %v3233 = vpop.f32.mrf.mxu0
        %v3234 = vadd.f32 %v3135, %v3233
        %3235 = vmatmul.bf16.gmra.mxu0 %v3214
        %v3236 = vpop.f32.mrf.mxu0
        %v3237 = vadd.f32 %v3136, %v3236
        %v3238 = vpop.f32.mrf.mxu0
        %v3239 = vadd.f32 %v3137, %v3238
        %3240 = vdwg.mxu0
        %v3245 = vunpack.c.l.b16 %v3054
        %v3246 = vunpack.c.l.b16 %v3056
        %v3247 = vunpack.c.l.b16 %v3058
        %v3248 = vunpack.c.l.b16 %v3060
        %v3249 = vpack.c.b16 %v3246, %v3245
        %v3250 = vpack.c.b16 %v3248, %v3247
        %v3255 = vunpack.c.l.b16 %v3086
        %v3256 = vunpack.c.l.b16 %v3088
        %v3257 = vunpack.c.l.b16 %v3090
        %v3258 = vunpack.c.l.b16 %v3092
        %v3259 = vpack.c.b16 %v3256, %v3255
        %v3260 = vpack.c.b16 %v3258, %v3257
        %v3262 = vsel %vm3158, %v3249, 0
        %v3265 = vsel %vm3158, %v3250, 0
        %v3268 = vsel %vm3158, %v3259, 0
        %v3271 = vsel %vm3158, %v3260, 0
        %3273 = vmatpush.bf16.xpose.msra.mxu0 0
        %3274 = vmatpush.bf16.xpose.msra.mxu0 0
        %3275 = vmatpush.bf16.xpose.msra.mxu0 0
        %3276 = vmatpush.bf16.xpose.msra.mxu0 0
        %3277 = vmatpush.bf16.xpose.msra.mxu0 0
        %3278 = vmatpush.bf16.xpose.msra.mxu0 0
        %3279 = vmatpush.bf16.xpose.msra.mxu0 %v3271
        %3280 = vmatpush.bf16.xpose.msra.mxu0 %v3268
        %3281 = vmatmul.bf16.gmra.mxu0 %v3262
        %v3282 = vpop.f32.mrf.mxu0
        %v3283 = vadd.f32 %v3134, %v3282
        %v3284 = vpop.f32.mrf.mxu0
        %v3285 = vadd.f32 %v3135, %v3284
        %3286 = vmatmul.bf16.gmra.mxu0 %v3265
        %v3287 = vpop.f32.mrf.mxu0
        %v3288 = vadd.f32 %v3136, %v3287
        %v3289 = vpop.f32.mrf.mxu0
        %v3290 = vadd.f32 %v3137, %v3289
        %3291 = vdwg.mxu0
        %v3296 = vunpack.c.l.b16 %v3062
        %v3297 = vunpack.c.l.b16 %v3064
        %v3298 = vunpack.c.l.b16 %v3066
        %v3299 = vunpack.c.l.b16 %v3068
        %v3300 = vpack.c.b16 %v3297, %v3296
        %v3301 = vpack.c.b16 %v3299, %v3298
        %v3306 = vunpack.c.l.b16 %v3094
        %v3307 = vunpack.c.l.b16 %v3096
        %v3308 = vunpack.c.l.b16 %v3098
        %v3309 = vunpack.c.l.b16 %v3100
        %v3310 = vpack.c.b16 %v3307, %v3306
        %v3311 = vpack.c.b16 %v3309, %v3308
        %v3313 = vsel %vm3158, %v3300, 0
        %v3316 = vsel %vm3158, %v3301, 0
        %v3319 = vsel %vm3158, %v3310, 0
        %v3322 = vsel %vm3158, %v3311, 0
        %3324 = vmatpush.bf16.xpose.msra.mxu0 0
        %3325 = vmatpush.bf16.xpose.msra.mxu0 0
        %3326 = vmatpush.bf16.xpose.msra.mxu0 0
        %3327 = vmatpush.bf16.xpose.msra.mxu0 0
        %3328 = vmatpush.bf16.xpose.msra.mxu0 0
        %3329 = vmatpush.bf16.xpose.msra.mxu0 0
        %3330 = vmatpush.bf16.xpose.msra.mxu0 %v3322
        %3331 = vmatpush.bf16.xpose.msra.mxu0 %v3319
        %3332 = vmatmul.bf16.gmra.mxu0 %v3313
        %v3333 = vpop.f32.mrf.mxu0
        %v3334 = vadd.f32 %v3134, %v3333
        %v3335 = vpop.f32.mrf.mxu0
        %v3336 = vadd.f32 %v3135, %v3335
        %3337 = vmatmul.bf16.gmra.mxu0 %v3316
        %v3338 = vpop.f32.mrf.mxu0
        %v3339 = vadd.f32 %v3136, %v3338
        %v3340 = vpop.f32.mrf.mxu0
        %v3341 = vadd.f32 %v3137, %v3340
        %3342 = vdwg.mxu0
        %vm3343 = vcmask 261120
        %v3344 = vsel %vm3343, %v3181, -inf
        %3345 = vmax.xlane.f32.xlu0 %v3344
        %v3346 = vpop.xlane.xlu0 %3345
        %v3347 = vsel %vm3343, %v3183, -inf
        %3348 = vmax.xlane.f32.xlu0 %v3347
        %v3349 = vpop.xlane.xlu0 %3348
        %v3350 = vsel %vm3343, %v3186, -inf
        %3351 = vmax.xlane.f32.xlu0 %v3350
        %v3352 = vpop.xlane.xlu0 %3351
        %v3353 = vsel %vm3343, %v3188, -inf
        %3354 = vmax.xlane.f32.xlu0 %v3353
        %v3355 = vpop.xlane.xlu0 %3354
        %v3356 = vsel %vm3343, %v3232, -inf
        %3357 = vmax.xlane.f32.xlu0 %v3356
        %v3358 = vpop.xlane.xlu0 %3357
        %v3359 = vsel %vm3343, %v3234, -inf
        %3360 = vmax.xlane.f32.xlu0 %v3359
        %v3361 = vpop.xlane.xlu0 %3360
        %v3362 = vsel %vm3343, %v3237, -inf
        %3363 = vmax.xlane.f32.xlu0 %v3362
        %v3364 = vpop.xlane.xlu0 %3363
        %v3365 = vsel %vm3343, %v3239, -inf
        %3366 = vmax.xlane.f32.xlu0 %v3365
        %v3367 = vpop.xlane.xlu0 %3366
        %v3368 = vsel %vm3343, %v3283, -inf
        %3369 = vmax.xlane.f32.xlu0 %v3368
        %v3370 = vpop.xlane.xlu0 %3369
        %v3371 = vsel %vm3343, %v3285, -inf
        %3372 = vmax.xlane.f32.xlu0 %v3371
        %v3373 = vpop.xlane.xlu0 %3372
        %v3374 = vsel %vm3343, %v3288, -inf
        %3375 = vmax.xlane.f32.xlu0 %v3374
        %v3376 = vpop.xlane.xlu0 %3375
        %v3377 = vsel %vm3343, %v3290, -inf
        %3378 = vmax.xlane.f32.xlu0 %v3377
        %v3379 = vpop.xlane.xlu0 %3378
        %v3380 = vsel %vm3343, %v3334, -inf
        %3381 = vmax.xlane.f32.xlu0 %v3380
        %v3382 = vpop.xlane.xlu0 %3381
        %v3383 = vsel %vm3343, %v3336, -inf
        %3384 = vmax.xlane.f32.xlu0 %v3383
        %v3385 = vpop.xlane.xlu0 %3384
        %v3386 = vsel %vm3343, %v3339, -inf
        %3387 = vmax.xlane.f32.xlu0 %v3386
        %v3388 = vpop.xlane.xlu0 %3387
        %v3389 = vsel %vm3343, %v3341, -inf
        %3390 = vmax.xlane.f32.xlu0 %v3389
        %v3391 = vpop.xlane.xlu0 %3390
        %v3392 = vsub.f32 %v3181, %v3346
        %v3393 = vsub.f32 %v3183, %v3349
        %v3394 = vsub.f32 %v3186, %v3352
        %v3395 = vsub.f32 %v3188, %v3355
        %v3396 = vsub.f32 %v3232, %v3358
        %v3397 = vsub.f32 %v3234, %v3361
        %v3398 = vsub.f32 %v3237, %v3364
        %v3399 = vsub.f32 %v3239, %v3367
        %v3400 = vsub.f32 %v3283, %v3370
        %v3401 = vsub.f32 %v3285, %v3373
        %v3402 = vsub.f32 %v3288, %v3376
        %v3403 = vsub.f32 %v3290, %v3379
        %v3404 = vsub.f32 %v3334, %v3382
        %v3405 = vsub.f32 %v3336, %v3385
        %v3406 = vsub.f32 %v3339, %v3388
        %v3407 = vsub.f32 %v3341, %v3391
        %v3408 = vmul.f32 %v3392, 1.442695
        %v3409 = vpow.pop %v3408
        %v3410 = vmul.f32 %v3393, 1.442695
        %v3411 = vpow.pop %v3410
        %v3412 = vmul.f32 %v3394, 1.442695
        %v3413 = vpow.pop %v3412
        %v3414 = vmul.f32 %v3395, 1.442695
        %v3415 = vpow.pop %v3414
        %v3416 = vmul.f32 %v3396, 1.442695
        %v3417 = vpow.pop %v3416
        %v3418 = vmul.f32 %v3397, 1.442695
        %v3419 = vpow.pop %v3418
        %v3420 = vmul.f32 %v3398, 1.442695
        %v3421 = vpow.pop %v3420
        %v3422 = vmul.f32 %v3399, 1.442695
        %v3423 = vpow.pop %v3422
        %v3424 = vmul.f32 %v3400, 1.442695
        %v3425 = vpow.pop %v3424
        %v3426 = vmul.f32 %v3401, 1.442695
        %v3427 = vpow.pop %v3426
        %v3428 = vmul.f32 %v3402, 1.442695
        %v3429 = vpow.pop %v3428
        %v3430 = vmul.f32 %v3403, 1.442695
        %v3431 = vpow.pop %v3430
        %v3432 = vmul.f32 %v3404, 1.442695
        %v3433 = vpow.pop %v3432
        %v3434 = vmul.f32 %v3405, 1.442695
        %v3435 = vpow.pop %v3434
        %v3436 = vmul.f32 %v3406, 1.442695
        %v3437 = vpow.pop %v3436
        %v3438 = vmul.f32 %v3407, 1.442695
        %v3439 = vpow.pop %v3438
        %v3440 = vsel %vm3343, %v3409, 0.0
        %3441 = vadd.xlane.f32.xlu0 %v3440
        %v3442 = vpop.xlane.xlu0 %3441
        %v3443 = vsel %vm3343, %v3411, 0.0
        %3444 = vadd.xlane.f32.xlu0 %v3443
        %v3445 = vpop.xlane.xlu0 %3444
        %v3446 = vsel %vm3343, %v3413, 0.0
        %3447 = vadd.xlane.f32.xlu0 %v3446
        %v3448 = vpop.xlane.xlu0 %3447
        %v3449 = vsel %vm3343, %v3415, 0.0
        %3450 = vadd.xlane.f32.xlu0 %v3449
        %v3451 = vpop.xlane.xlu0 %3450
        %v3452 = vsel %vm3343, %v3417, 0.0
        %3453 = vadd.xlane.f32.xlu0 %v3452
        %v3454 = vpop.xlane.xlu0 %3453
        %v3455 = vsel %vm3343, %v3419, 0.0
        %3456 = vadd.xlane.f32.xlu0 %v3455
        %v3457 = vpop.xlane.xlu0 %3456
        %v3458 = vsel %vm3343, %v3421, 0.0
        %3459 = vadd.xlane.f32.xlu0 %v3458
        %v3460 = vpop.xlane.xlu0 %3459
        %v3461 = vsel %vm3343, %v3423, 0.0
        %3462 = vadd.xlane.f32.xlu0 %v3461
        %v3463 = vpop.xlane.xlu0 %3462
        %v3464 = vsel %vm3343, %v3425, 0.0
        %3465 = vadd.xlane.f32.xlu0 %v3464
        %v3466 = vpop.xlane.xlu0 %3465
        %v3467 = vsel %vm3343, %v3427, 0.0
        %3468 = vadd.xlane.f32.xlu0 %v3467
        %v3469 = vpop.xlane.xlu0 %3468
        %v3470 = vsel %vm3343, %v3429, 0.0
        %3471 = vadd.xlane.f32.xlu0 %v3470
        %v3472 = vpop.xlane.xlu0 %3471
        %v3473 = vsel %vm3343, %v3431, 0.0
        %3474 = vadd.xlane.f32.xlu0 %v3473
        %v3475 = vpop.xlane.xlu0 %3474
        %v3476 = vsel %vm3343, %v3433, 0.0
        %3477 = vadd.xlane.f32.xlu0 %v3476
        %v3478 = vpop.xlane.xlu0 %3477
        %v3479 = vsel %vm3343, %v3435, 0.0
        %3480 = vadd.xlane.f32.xlu0 %v3479
        %v3481 = vpop.xlane.xlu0 %3480
        %v3482 = vsel %vm3343, %v3437, 0.0
        %3483 = vadd.xlane.f32.xlu0 %v3482
        %v3484 = vpop.xlane.xlu0 %3483
        %v3485 = vsel %vm3343, %v3439, 0.0
        %3486 = vadd.xlane.f32.xlu0 %v3485
        %v3487 = vpop.xlane.xlu0 %3486
        %v3488 = vrcp.pop %v3442
        %v3489 = vrcp.pop %v3445
        %v3490 = vrcp.pop %v3448
        %v3491 = vrcp.pop %v3451
        %v3492 = vrcp.pop %v3454
        %v3493 = vrcp.pop %v3457
        %v3494 = vrcp.pop %v3460
        %v3495 = vrcp.pop %v3463
        %v3496 = vrcp.pop %v3466
        %v3497 = vrcp.pop %v3469
        %v3498 = vrcp.pop %v3472
        %v3499 = vrcp.pop %v3475
        %v3500 = vrcp.pop %v3478
        %v3501 = vrcp.pop %v3481
        %v3502 = vrcp.pop %v3484
        %v3503 = vrcp.pop %v3487
        %v3504 = vmul.f32 %v3409, %v3488
        %v3505 = vmul.f32 %v3411, %v3489
        %v3506 = vmul.f32 %v3413, %v3490
        %v3507 = vmul.f32 %v3415, %v3491
        %v3508 = vmul.f32 %v3417, %v3492
        %v3509 = vmul.f32 %v3419, %v3493
        %v3510 = vmul.f32 %v3421, %v3494
        %v3511 = vmul.f32 %v3423, %v3495
        %v3512 = vmul.f32 %v3425, %v3496
        %v3513 = vmul.f32 %v3427, %v3497
        %v3514 = vmul.f32 %v3429, %v3498
        %v3515 = vmul.f32 %v3431, %v3499
        %v3516 = vmul.f32 %v3433, %v3500
        %v3517 = vmul.f32 %v3435, %v3501
        %v3518 = vmul.f32 %v3437, %v3502
        %v3519 = vmul.f32 %v3439, %v3503
        %v3520 = vpack.c.bf16 %v3504, %v3504
        %v3521 = vpack.c.bf16 %v3505, %v3505
        %v3522 = vpack.c.bf16 %v3506, %v3506
        %v3523 = vpack.c.bf16 %v3507, %v3507
        %v3524 = vpack.c.bf16 %v3508, %v3508
        %v3525 = vpack.c.bf16 %v3509, %v3509
        %v3526 = vpack.c.bf16 %v3510, %v3510
        %v3527 = vpack.c.bf16 %v3511, %v3511
        %v3528 = vpack.c.bf16 %v3512, %v3512
        %v3529 = vpack.c.bf16 %v3513, %v3513
        %v3530 = vpack.c.bf16 %v3514, %v3514
        %v3531 = vpack.c.bf16 %v3515, %v3515
        %v3532 = vpack.c.bf16 %v3516, %v3516
        %v3533 = vpack.c.bf16 %v3517, %v3517
        %v3534 = vpack.c.bf16 %v3518, %v3518
        %v3535 = vpack.c.bf16 %v3519, %v3519
        %v3540 = vunpack.c.l.b16 %v3520
        %v3541 = vunpack.c.l.b16 %v3521
        %v3542 = vunpack.c.l.b16 %v3522
        %v3543 = vunpack.c.l.b16 %v3523
        %v3544 = vpack.c.b16 %v3541, %v3540
        %v3545 = vpack.c.b16 %v3543, %v3542
        %v3550 = vunpack.c.l.b16 %v3102
        %v3551 = vunpack.c.l.b16 %v3104
        %v3552 = vunpack.c.l.b16 %v3106
        %v3553 = vunpack.c.l.b16 %v3108
        %v3554 = vpack.c.b16 %v3551, %v3550
        %v3555 = vpack.c.b16 %v3553, %v3552
        %v3559 = vsel %vm3343, %v3544, 0
        %v3562 = vsel %vm3343, %v3545, 0
        %3564 = vmatpush.bf16.msra.mxu0 0
        %3565 = vmatpush.bf16.msra.mxu0 0
        %3566 = vmatpush.bf16.msra.mxu0 0
        %3567 = vmatpush.bf16.msra.mxu0 0
        %3568 = vmatpush.bf16.msra.mxu0 0
        %3569 = vmatpush.bf16.msra.mxu0 0
        %3570 = vmatpush.bf16.msra.mxu0 %v3555
        %3571 = vmatpush.bf16.msra.mxu0 %v3554
        %3572 = vmatmul.bf16.gmra.mxu0 %v3559
        %v3573 = vpop.f32.mrf.mxu0
        %v3574 = vadd.f32 0.0, %v3573
        %v3575 = vpop.f32.mrf.mxu0
        %v3576 = vadd.f32 0.0, %v3575
        %3577 = vmatmul.bf16.gmra.mxu0 %v3562
        %v3578 = vpop.f32.mrf.mxu0
        %v3579 = vadd.f32 0.0, %v3578
        %v3580 = vpop.f32.mrf.mxu0
        %v3581 = vadd.f32 0.0, %v3580
        %3582 = vdwg.mxu0
        %v3587 = vunpack.c.l.b16 %v3524
        %v3588 = vunpack.c.l.b16 %v3525
        %v3589 = vunpack.c.l.b16 %v3526
        %v3590 = vunpack.c.l.b16 %v3527
        %v3591 = vpack.c.b16 %v3588, %v3587
        %v3592 = vpack.c.b16 %v3590, %v3589
        %v3597 = vunpack.c.l.b16 %v3110
        %v3598 = vunpack.c.l.b16 %v3112
        %v3599 = vunpack.c.l.b16 %v3114
        %v3600 = vunpack.c.l.b16 %v3116
        %v3601 = vpack.c.b16 %v3598, %v3597
        %v3602 = vpack.c.b16 %v3600, %v3599
        %v3606 = vsel %vm3343, %v3591, 0
        %v3609 = vsel %vm3343, %v3592, 0
        %3611 = vmatpush.bf16.msra.mxu0 0
        %3612 = vmatpush.bf16.msra.mxu0 0
        %3613 = vmatpush.bf16.msra.mxu0 0
        %3614 = vmatpush.bf16.msra.mxu0 0
        %3615 = vmatpush.bf16.msra.mxu0 0
        %3616 = vmatpush.bf16.msra.mxu0 0
        %3617 = vmatpush.bf16.msra.mxu0 %v3602
        %3618 = vmatpush.bf16.msra.mxu0 %v3601
        %3619 = vmatmul.bf16.gmra.mxu0 %v3606
        %v3620 = vpop.f32.mrf.mxu0
        %v3621 = vadd.f32 0.0, %v3620
        %v3622 = vpop.f32.mrf.mxu0
        %v3623 = vadd.f32 0.0, %v3622
        %3624 = vmatmul.bf16.gmra.mxu0 %v3609
        %v3625 = vpop.f32.mrf.mxu0
        %v3626 = vadd.f32 0.0, %v3625
        %v3627 = vpop.f32.mrf.mxu0
        %v3628 = vadd.f32 0.0, %v3627
        %3629 = vdwg.mxu0
        %v3634 = vunpack.c.l.b16 %v3528
        %v3635 = vunpack.c.l.b16 %v3529
        %v3636 = vunpack.c.l.b16 %v3530
        %v3637 = vunpack.c.l.b16 %v3531
        %v3638 = vpack.c.b16 %v3635, %v3634
        %v3639 = vpack.c.b16 %v3637, %v3636
        %v3644 = vunpack.c.l.b16 %v3118
        %v3645 = vunpack.c.l.b16 %v3120
        %v3646 = vunpack.c.l.b16 %v3122
        %v3647 = vunpack.c.l.b16 %v3124
        %v3648 = vpack.c.b16 %v3645, %v3644
        %v3649 = vpack.c.b16 %v3647, %v3646
        %v3653 = vsel %vm3343, %v3638, 0
        %v3656 = vsel %vm3343, %v3639, 0
        %3658 = vmatpush.bf16.msra.mxu0 0
        %3659 = vmatpush.bf16.msra.mxu0 0
        %3660 = vmatpush.bf16.msra.mxu0 0
        %3661 = vmatpush.bf16.msra.mxu0 0
        %3662 = vmatpush.bf16.msra.mxu0 0
        %3663 = vmatpush.bf16.msra.mxu0 0
        %3664 = vmatpush.bf16.msra.mxu0 %v3649
        %3665 = vmatpush.bf16.msra.mxu0 %v3648
        %3666 = vmatmul.bf16.gmra.mxu0 %v3653
        %v3667 = vpop.f32.mrf.mxu0
        %v3668 = vadd.f32 0.0, %v3667
        %v3669 = vpop.f32.mrf.mxu0
        %v3670 = vadd.f32 0.0, %v3669
        %3671 = vmatmul.bf16.gmra.mxu0 %v3656
        %v3672 = vpop.f32.mrf.mxu0
        %v3673 = vadd.f32 0.0, %v3672
        %v3674 = vpop.f32.mrf.mxu0
        %v3675 = vadd.f32 0.0, %v3674
        %3676 = vdwg.mxu0
        %v3681 = vunpack.c.l.b16 %v3532
        %v3682 = vunpack.c.l.b16 %v3533
        %v3683 = vunpack.c.l.b16 %v3534
        %v3684 = vunpack.c.l.b16 %v3535
        %v3685 = vpack.c.b16 %v3682, %v3681
        %v3686 = vpack.c.b16 %v3684, %v3683
        %v3691 = vunpack.c.l.b16 %v3126
        %v3692 = vunpack.c.l.b16 %v3128
        %v3693 = vunpack.c.l.b16 %v3130
        %v3694 = vunpack.c.l.b16 %v3132
        %v3695 = vpack.c.b16 %v3692, %v3691
        %v3696 = vpack.c.b16 %v3694, %v3693
        %v3700 = vsel %vm3343, %v3685, 0
        %v3703 = vsel %vm3343, %v3686, 0
        %3705 = vmatpush.bf16.msra.mxu0 0
        %3706 = vmatpush.bf16.msra.mxu0 0
        %3707 = vmatpush.bf16.msra.mxu0 0
        %3708 = vmatpush.bf16.msra.mxu0 0
        %3709 = vmatpush.bf16.msra.mxu0 0
        %3710 = vmatpush.bf16.msra.mxu0 0
        %3711 = vmatpush.bf16.msra.mxu0 %v3696
        %3712 = vmatpush.bf16.msra.mxu0 %v3695
        %3713 = vmatmul.bf16.gmra.mxu0 %v3700
        %v3714 = vpop.f32.mrf.mxu0
        %v3715 = vadd.f32 0.0, %v3714
        %v3716 = vpop.f32.mrf.mxu0
        %v3717 = vadd.f32 0.0, %v3716
        %3718 = vmatmul.bf16.gmra.mxu0 %v3703
        %v3719 = vpop.f32.mrf.mxu0
        %v3720 = vadd.f32 0.0, %v3719
        %v3721 = vpop.f32.mrf.mxu0
        %v3722 = vadd.f32 0.0, %v3721
        %3723 = vdwg.mxu0
        %v3724 = vpack.c.bf16 %v3576, %v3574
        %v3725 = vpack.c.bf16 %v3581, %v3579
        %v3726 = vpack.c.bf16 %v3623, %v3621
        %v3727 = vpack.c.bf16 %v3628, %v3626
        %v3728 = vpack.c.bf16 %v3670, %v3668
        %v3729 = vpack.c.bf16 %v3675, %v3673
        %v3730 = vpack.c.bf16 %v3717, %v3715
        %v3731 = vpack.c.bf16 %v3722, %v3720
        %v3732 = vld [vmem:[#allocation8] sm:$0xff]
        %v3733 = vld [vmem:[#allocation8 + $0x8] sm:$0xf]
        %v3734 = vld [vmem:[#allocation8 + $0xc] sm:$0xff]
        %v3735 = vld [vmem:[#allocation8 + $0x14] sm:$0xf]
        %v3736 = vld [vmem:[#allocation8 + $0x18] sm:$0xff]
        %v3737 = vld [vmem:[#allocation8 + $0x20] sm:$0xf]
        %v3738 = vld [vmem:[#allocation8 + $0x24] sm:$0xff]
        %v3739 = vld [vmem:[#allocation8 + $0x2c] sm:$0xf]
        %v3740 = vld [vmem:[#allocation8 + $0x30] sm:$0xff]
        %v3741 = vld [vmem:[#allocation8 + $0x38] sm:$0xf]
        %v3742 = vld [vmem:[#allocation8 + $0x3c] sm:$0xff]
        %v3743 = vld [vmem:[#allocation8 + $0x44] sm:$0xf]
        %v3744 = vld [vmem:[#allocation8 + $0x48] sm:$0xff]
        %v3745 = vld [vmem:[#allocation8 + $0x50] sm:$0xf]
        %v3746 = vld [vmem:[#allocation8 + $0x54] sm:$0xff]
        %v3747 = vld [vmem:[#allocation8 + $0x5c] sm:$0xf]
        %3748 = vrot.lane.b32.xlu0 %v3146, 64
        %v3749 = vpop.permute.xlu0 %3748
        %3750 = vrot.lane.b32.xlu0 %v3147, 64
        %v3751 = vpop.permute.xlu0 %3750
        %3752 = vrot.lane.b32.xlu0 %v3156, 64
        %v3753 = vpop.permute.xlu0 %3752
        %3754 = vrot.lane.b32.xlu0 %v3157, 64
        %v3755 = vpop.permute.xlu0 %3754
        %v3757 = vsel %vm3158, %v3749, 0
        %v3760 = vsel %vm3158, %v3751, 0
        %v3763 = vsel %vm3158, %v3753, 0
        %v3766 = vsel %vm3158, %v3755, 0
        %3768 = vmatpush.bf16.xpose.msra.mxu0 0
        %3769 = vmatpush.bf16.xpose.msra.mxu0 0
        %3770 = vmatpush.bf16.xpose.msra.mxu0 0
        %3771 = vmatpush.bf16.xpose.msra.mxu0 0
        %3772 = vmatpush.bf16.xpose.msra.mxu0 0
        %3773 = vmatpush.bf16.xpose.msra.mxu0 0
        %3774 = vmatpush.bf16.xpose.msra.mxu0 %v3766
        %3775 = vmatpush.bf16.xpose.msra.mxu0 %v3763
        %3776 = vmatmul.bf16.gmra.mxu0 %v3757
        %v3777 = vpop.f32.mrf.mxu0
        %v3778 = vadd.f32 %v3134, %v3777
        %v3779 = vpop.f32.mrf.mxu0
        %v3780 = vadd.f32 %v3135, %v3779
        %3781 = vmatmul.bf16.gmra.mxu0 %v3760
        %v3782 = vpop.f32.mrf.mxu0
        %v3783 = vadd.f32 %v3136, %v3782
        %v3784 = vpop.f32.mrf.mxu0
        %v3785 = vadd.f32 %v3137, %v3784
        %3786 = vdwg.mxu0
        %3787 = vrot.lane.b32.xlu0 %v3198, 64
        %v3788 = vpop.permute.xlu0 %3787
        %3789 = vrot.lane.b32.xlu0 %v3199, 64
        %v3790 = vpop.permute.xlu0 %3789
        %3791 = vrot.lane.b32.xlu0 %v3208, 64
        %v3792 = vpop.permute.xlu0 %3791
        %3793 = vrot.lane.b32.xlu0 %v3209, 64
        %v3794 = vpop.permute.xlu0 %3793
        %v3796 = vsel %vm3158, %v3788, 0
        %v3799 = vsel %vm3158, %v3790, 0
        %v3802 = vsel %vm3158, %v3792, 0
        %v3805 = vsel %vm3158, %v3794, 0
        %3807 = vmatpush.bf16.xpose.msra.mxu0 0
        %3808 = vmatpush.bf16.xpose.msra.mxu0 0
        %3809 = vmatpush.bf16.xpose.msra.mxu0 0
        %3810 = vmatpush.bf16.xpose.msra.mxu0 0
        %3811 = vmatpush.bf16.xpose.msra.mxu0 0
        %3812 = vmatpush.bf16.xpose.msra.mxu0 0
        %3813 = vmatpush.bf16.xpose.msra.mxu0 %v3805
        %3814 = vmatpush.bf16.xpose.msra.mxu0 %v3802
        %3815 = vmatmul.bf16.gmra.mxu0 %v3796
        %v3816 = vpop.f32.mrf.mxu0
        %v3817 = vadd.f32 %v3134, %v3816
        %v3818 = vpop.f32.mrf.mxu0
        %v3819 = vadd.f32 %v3135, %v3818
        %3820 = vmatmul.bf16.gmra.mxu0 %v3799
        %v3821 = vpop.f32.mrf.mxu0
        %v3822 = vadd.f32 %v3136, %v3821
        %v3823 = vpop.f32.mrf.mxu0
        %v3824 = vadd.f32 %v3137, %v3823
        %3825 = vdwg.mxu0
        %3826 = vrot.lane.b32.xlu0 %v3249, 64
        %v3827 = vpop.permute.xlu0 %3826
        %3828 = vrot.lane.b32.xlu0 %v3250, 64
        %v3829 = vpop.permute.xlu0 %3828
        %3830 = vrot.lane.b32.xlu0 %v3259, 64
        %v3831 = vpop.permute.xlu0 %3830
        %3832 = vrot.lane.b32.xlu0 %v3260, 64
        %v3833 = vpop.permute.xlu0 %3832
        %v3835 = vsel %vm3158, %v3827, 0
        %v3838 = vsel %vm3158, %v3829, 0
        %v3841 = vsel %vm3158, %v3831, 0
        %v3844 = vsel %vm3158, %v3833, 0
        %3846 = vmatpush.bf16.xpose.msra.mxu0 0
        %3847 = vmatpush.bf16.xpose.msra.mxu0 0
        %3848 = vmatpush.bf16.xpose.msra.mxu0 0
        %3849 = vmatpush.bf16.xpose.msra.mxu0 0
        %3850 = vmatpush.bf16.xpose.msra.mxu0 0
        %3851 = vmatpush.bf16.xpose.msra.mxu0 0
        %3852 = vmatpush.bf16.xpose.msra.mxu0 %v3844
        %3853 = vmatpush.bf16.xpose.msra.mxu0 %v3841
        %3854 = vmatmul.bf16.gmra.mxu0 %v3835
        %v3855 = vpop.f32.mrf.mxu0
        %v3856 = vadd.f32 %v3134, %v3855
        %v3857 = vpop.f32.mrf.mxu0
        %v3858 = vadd.f32 %v3135, %v3857
        %3859 = vmatmul.bf16.gmra.mxu0 %v3838
        %v3860 = vpop.f32.mrf.mxu0
        %v3861 = vadd.f32 %v3136, %v3860
        %v3862 = vpop.f32.mrf.mxu0
        %v3863 = vadd.f32 %v3137, %v3862
        %3864 = vdwg.mxu0
        %3865 = vrot.lane.b32.xlu0 %v3300, 64
        %v3866 = vpop.permute.xlu0 %3865
        %3867 = vrot.lane.b32.xlu0 %v3301, 64
        %v3868 = vpop.permute.xlu0 %3867
        %3869 = vrot.lane.b32.xlu0 %v3310, 64
        %v3870 = vpop.permute.xlu0 %3869
        %3871 = vrot.lane.b32.xlu0 %v3311, 64
        %v3872 = vpop.permute.xlu0 %3871
        %v3874 = vsel %vm3158, %v3866, 0
        %v3877 = vsel %vm3158, %v3868, 0
        %v3880 = vsel %vm3158, %v3870, 0
        %v3883 = vsel %vm3158, %v3872, 0
        %3885 = vmatpush.bf16.xpose.msra.mxu0 0
        %3886 = vmatpush.bf16.xpose.msra.mxu0 0
        %3887 = vmatpush.bf16.xpose.msra.mxu0 0
        %3888 = vmatpush.bf16.xpose.msra.mxu0 0
        %3889 = vmatpush.bf16.xpose.msra.mxu0 0
        %3890 = vmatpush.bf16.xpose.msra.mxu0 0
        %3891 = vmatpush.bf16.xpose.msra.mxu0 %v3883
        %3892 = vmatpush.bf16.xpose.msra.mxu0 %v3880
        %3893 = vmatmul.bf16.gmra.mxu0 %v3874
        %v3894 = vpop.f32.mrf.mxu0
        %v3895 = vadd.f32 %v3134, %v3894
        %v3896 = vpop.f32.mrf.mxu0
        %v3897 = vadd.f32 %v3135, %v3896
        %3898 = vmatmul.bf16.gmra.mxu0 %v3877
        %v3899 = vpop.f32.mrf.mxu0
        %v3900 = vadd.f32 %v3136, %v3899
        %v3901 = vpop.f32.mrf.mxu0
        %v3902 = vadd.f32 %v3137, %v3901
        %3903 = vdwg.mxu0
        %v3904 = vsel %vm3343, %v3778, -inf
        %3905 = vmax.xlane.f32.xlu0 %v3904
        %v3906 = vpop.xlane.xlu0 %3905
        %v3907 = vsel %vm3343, %v3780, -inf
        %3908 = vmax.xlane.f32.xlu0 %v3907
        %v3909 = vpop.xlane.xlu0 %3908
        %v3910 = vsel %vm3343, %v3783, -inf
        %3911 = vmax.xlane.f32.xlu0 %v3910
        %v3912 = vpop.xlane.xlu0 %3911
        %v3913 = vsel %vm3343, %v3785, -inf
        %3914 = vmax.xlane.f32.xlu0 %v3913
        %v3915 = vpop.xlane.xlu0 %3914
        %v3916 = vsel %vm3343, %v3817, -inf
        %3917 = vmax.xlane.f32.xlu0 %v3916
        %v3918 = vpop.xlane.xlu0 %3917
        %v3919 = vsel %vm3343, %v3819, -inf
        %3920 = vmax.xlane.f32.xlu0 %v3919
        %v3921 = vpop.xlane.xlu0 %3920
        %v3922 = vsel %vm3343, %v3822, -inf
        %3923 = vmax.xlane.f32.xlu0 %v3922
        %v3924 = vpop.xlane.xlu0 %3923
        %v3925 = vsel %vm3343, %v3824, -inf
        %3926 = vmax.xlane.f32.xlu0 %v3925
        %v3927 = vpop.xlane.xlu0 %3926
        %v3928 = vsel %vm3343, %v3856, -inf
        %3929 = vmax.xlane.f32.xlu0 %v3928
        %v3930 = vpop.xlane.xlu0 %3929
        %v3931 = vsel %vm3343, %v3858, -inf
        %3932 = vmax.xlane.f32.xlu0 %v3931
        %v3933 = vpop.xlane.xlu0 %3932
        %v3934 = vsel %vm3343, %v3861, -inf
        %3935 = vmax.xlane.f32.xlu0 %v3934
        %v3936 = vpop.xlane.xlu0 %3935
        %v3937 = vsel %vm3343, %v3863, -inf
        %3938 = vmax.xlane.f32.xlu0 %v3937
        %v3939 = vpop.xlane.xlu0 %3938
        %v3940 = vsel %vm3343, %v3895, -inf
        %3941 = vmax.xlane.f32.xlu0 %v3940
        %v3942 = vpop.xlane.xlu0 %3941
        %v3943 = vsel %vm3343, %v3897, -inf
        %3944 = vmax.xlane.f32.xlu0 %v3943
        %v3945 = vpop.xlane.xlu0 %3944
        %v3946 = vsel %vm3343, %v3900, -inf
        %3947 = vmax.xlane.f32.xlu0 %v3946
        %v3948 = vpop.xlane.xlu0 %3947
        %v3949 = vsel %vm3343, %v3902, -inf
        %3950 = vmax.xlane.f32.xlu0 %v3949
        %v3951 = vpop.xlane.xlu0 %3950
        %v3952 = vsub.f32 %v3778, %v3906
        %v3953 = vsub.f32 %v3780, %v3909
        %v3954 = vsub.f32 %v3783, %v3912
        %v3955 = vsub.f32 %v3785, %v3915
        %v3956 = vsub.f32 %v3817, %v3918
        %v3957 = vsub.f32 %v3819, %v3921
        %v3958 = vsub.f32 %v3822, %v3924
        %v3959 = vsub.f32 %v3824, %v3927
        %v3960 = vsub.f32 %v3856, %v3930
        %v3961 = vsub.f32 %v3858, %v3933
        %v3962 = vsub.f32 %v3861, %v3936
        %v3963 = vsub.f32 %v3863, %v3939
        %v3964 = vsub.f32 %v3895, %v3942
        %v3965 = vsub.f32 %v3897, %v3945
        %v3966 = vsub.f32 %v3900, %v3948
        %v3967 = vsub.f32 %v3902, %v3951
        %v3968 = vmul.f32 %v3952, 1.442695
        %v3969 = vpow.pop %v3968
        %v3970 = vmul.f32 %v3953, 1.442695
        %v3971 = vpow.pop %v3970
        %v3972 = vmul.f32 %v3954, 1.442695
        %v3973 = vpow.pop %v3972
        %v3974 = vmul.f32 %v3955, 1.442695
        %v3975 = vpow.pop %v3974
        %v3976 = vmul.f32 %v3956, 1.442695
        %v3977 = vpow.pop %v3976
        %v3978 = vmul.f32 %v3957, 1.442695
        %v3979 = vpow.pop %v3978
        %v3980 = vmul.f32 %v3958, 1.442695
        %v3981 = vpow.pop %v3980
        %v3982 = vmul.f32 %v3959, 1.442695
        %v3983 = vpow.pop %v3982
        %v3984 = vmul.f32 %v3960, 1.442695
        %v3985 = vpow.pop %v3984
        %v3986 = vmul.f32 %v3961, 1.442695
        %v3987 = vpow.pop %v3986
        %v3988 = vmul.f32 %v3962, 1.442695
        %v3989 = vpow.pop %v3988
        %v3990 = vmul.f32 %v3963, 1.442695
        %v3991 = vpow.pop %v3990
        %v3992 = vmul.f32 %v3964, 1.442695
        %v3993 = vpow.pop %v3992
        %v3994 = vmul.f32 %v3965, 1.442695
        %v3995 = vpow.pop %v3994
        %v3996 = vmul.f32 %v3966, 1.442695
        %v3997 = vpow.pop %v3996
        %v3998 = vmul.f32 %v3967, 1.442695
        %v3999 = vpow.pop %v3998
        %v4000 = vsel %vm3343, %v3969, 0.0
        %4001 = vadd.xlane.f32.xlu0 %v4000
        %v4002 = vpop.xlane.xlu0 %4001
        %v4003 = vsel %vm3343, %v3971, 0.0
        %4004 = vadd.xlane.f32.xlu0 %v4003
        %v4005 = vpop.xlane.xlu0 %4004
        %v4006 = vsel %vm3343, %v3973, 0.0
        %4007 = vadd.xlane.f32.xlu0 %v4006
        %v4008 = vpop.xlane.xlu0 %4007
        %v4009 = vsel %vm3343, %v3975, 0.0
        %4010 = vadd.xlane.f32.xlu0 %v4009
        %v4011 = vpop.xlane.xlu0 %4010
        %v4012 = vsel %vm3343, %v3977, 0.0
        %4013 = vadd.xlane.f32.xlu0 %v4012
        %v4014 = vpop.xlane.xlu0 %4013
        %v4015 = vsel %vm3343, %v3979, 0.0
        %4016 = vadd.xlane.f32.xlu0 %v4015
        %v4017 = vpop.xlane.xlu0 %4016
        %v4018 = vsel %vm3343, %v3981, 0.0
        %4019 = vadd.xlane.f32.xlu0 %v4018
        %v4020 = vpop.xlane.xlu0 %4019
        %v4021 = vsel %vm3343, %v3983, 0.0
        %4022 = vadd.xlane.f32.xlu0 %v4021
        %v4023 = vpop.xlane.xlu0 %4022
        %v4024 = vsel %vm3343, %v3985, 0.0
        %4025 = vadd.xlane.f32.xlu0 %v4024
        %v4026 = vpop.xlane.xlu0 %4025
        %v4027 = vsel %vm3343, %v3987, 0.0
        %4028 = vadd.xlane.f32.xlu0 %v4027
        %v4029 = vpop.xlane.xlu0 %4028
        %v4030 = vsel %vm3343, %v3989, 0.0
        %4031 = vadd.xlane.f32.xlu0 %v4030
        %v4032 = vpop.xlane.xlu0 %4031
        %v4033 = vsel %vm3343, %v3991, 0.0
        %4034 = vadd.xlane.f32.xlu0 %v4033
        %v4035 = vpop.xlane.xlu0 %4034
        %v4036 = vsel %vm3343, %v3993, 0.0
        %4037 = vadd.xlane.f32.xlu0 %v4036
        %v4038 = vpop.xlane.xlu0 %4037
        %v4039 = vsel %vm3343, %v3995, 0.0
        %4040 = vadd.xlane.f32.xlu0 %v4039
        %v4041 = vpop.xlane.xlu0 %4040
        %v4042 = vsel %vm3343, %v3997, 0.0
        %4043 = vadd.xlane.f32.xlu0 %v4042
        %v4044 = vpop.xlane.xlu0 %4043
        %v4045 = vsel %vm3343, %v3999, 0.0
        %4046 = vadd.xlane.f32.xlu0 %v4045
        %v4047 = vpop.xlane.xlu0 %4046
        %v4048 = vrcp.pop %v4002
        %v4049 = vrcp.pop %v4005
        %v4050 = vrcp.pop %v4008
        %v4051 = vrcp.pop %v4011
        %v4052 = vrcp.pop %v4014
        %v4053 = vrcp.pop %v4017
        %v4054 = vrcp.pop %v4020
        %v4055 = vrcp.pop %v4023
        %v4056 = vrcp.pop %v4026
        %v4057 = vrcp.pop %v4029
        %v4058 = vrcp.pop %v4032
        %v4059 = vrcp.pop %v4035
        %v4060 = vrcp.pop %v4038
        %v4061 = vrcp.pop %v4041
        %v4062 = vrcp.pop %v4044
        %v4063 = vrcp.pop %v4047
        %v4064 = vmul.f32 %v3969, %v4048
        %v4065 = vmul.f32 %v3971, %v4049
        %v4066 = vmul.f32 %v3973, %v4050
        %v4067 = vmul.f32 %v3975, %v4051
        %v4068 = vmul.f32 %v3977, %v4052
        %v4069 = vmul.f32 %v3979, %v4053
        %v4070 = vmul.f32 %v3981, %v4054
        %v4071 = vmul.f32 %v3983, %v4055
        %v4072 = vmul.f32 %v3985, %v4056
        %v4073 = vmul.f32 %v3987, %v4057
        %v4074 = vmul.f32 %v3989, %v4058
        %v4075 = vmul.f32 %v3991, %v4059
        %v4076 = vmul.f32 %v3993, %v4060
        %v4077 = vmul.f32 %v3995, %v4061
        %v4078 = vmul.f32 %v3997, %v4062
        %v4079 = vmul.f32 %v3999, %v4063
        %v4080 = vpack.c.bf16 %v4064, %v4064
        %v4081 = vpack.c.bf16 %v4065, %v4065
        %v4082 = vpack.c.bf16 %v4066, %v4066
        %v4083 = vpack.c.bf16 %v4067, %v4067
        %v4084 = vpack.c.bf16 %v4068, %v4068
        %v4085 = vpack.c.bf16 %v4069, %v4069
        %v4086 = vpack.c.bf16 %v4070, %v4070
        %v4087 = vpack.c.bf16 %v4071, %v4071
        %v4088 = vpack.c.bf16 %v4072, %v4072
        %v4089 = vpack.c.bf16 %v4073, %v4073
        %v4090 = vpack.c.bf16 %v4074, %v4074
        %v4091 = vpack.c.bf16 %v4075, %v4075
        %v4092 = vpack.c.bf16 %v4076, %v4076
        %v4093 = vpack.c.bf16 %v4077, %v4077
        %v4094 = vpack.c.bf16 %v4078, %v4078
        %v4095 = vpack.c.bf16 %v4079, %v4079
        %v4100 = vunpack.c.l.b16 %v4080
        %v4101 = vunpack.c.l.b16 %v4081
        %v4102 = vunpack.c.l.b16 %v4082
        %v4103 = vunpack.c.l.b16 %v4083
        %v4104 = vpack.c.b16 %v4101, %v4100
        %v4105 = vpack.c.b16 %v4103, %v4102
        %4106 = vrot.lane.b32.xlu0 %v3554, 64
        %v4107 = vpop.permute.xlu0 %4106
        %4108 = vrot.lane.b32.xlu0 %v3555, 64
        %v4109 = vpop.permute.xlu0 %4108
        %v4113 = vsel %vm3343, %v4104, 0
        %v4116 = vsel %vm3343, %v4105, 0
        %4118 = vmatpush.bf16.msra.mxu0 0
        %4119 = vmatpush.bf16.msra.mxu0 0
        %4120 = vmatpush.bf16.msra.mxu0 0
        %4121 = vmatpush.bf16.msra.mxu0 0
        %4122 = vmatpush.bf16.msra.mxu0 0
        %4123 = vmatpush.bf16.msra.mxu0 0
        %4124 = vmatpush.bf16.msra.mxu0 %v4109
        %4125 = vmatpush.bf16.msra.mxu0 %v4107
        %4126 = vmatmul.bf16.gmra.mxu0 %v4113
        %v4127 = vpop.f32.mrf.mxu0
        %v4128 = vadd.f32 0.0, %v4127
        %v4129 = vpop.f32.mrf.mxu0
        %v4130 = vadd.f32 0.0, %v4129
        %4131 = vmatmul.bf16.gmra.mxu0 %v4116
        %v4132 = vpop.f32.mrf.mxu0
        %v4133 = vadd.f32 0.0, %v4132
        %v4134 = vpop.f32.mrf.mxu0
        %v4135 = vadd.f32 0.0, %v4134
        %4136 = vdwg.mxu0
        %v4141 = vunpack.c.l.b16 %v4084
        %v4142 = vunpack.c.l.b16 %v4085
        %v4143 = vunpack.c.l.b16 %v4086
        %v4144 = vunpack.c.l.b16 %v4087
        %v4145 = vpack.c.b16 %v4142, %v4141
        %v4146 = vpack.c.b16 %v4144, %v4143
        %4147 = vrot.lane.b32.xlu0 %v3601, 64
        %v4148 = vpop.permute.xlu0 %4147
        %4149 = vrot.lane.b32.xlu0 %v3602, 64
        %v4150 = vpop.permute.xlu0 %4149
        %v4154 = vsel %vm3343, %v4145, 0
        %v4157 = vsel %vm3343, %v4146, 0
        %4159 = vmatpush.bf16.msra.mxu0 0
        %4160 = vmatpush.bf16.msra.mxu0 0
        %4161 = vmatpush.bf16.msra.mxu0 0
        %4162 = vmatpush.bf16.msra.mxu0 0
        %4163 = vmatpush.bf16.msra.mxu0 0
        %4164 = vmatpush.bf16.msra.mxu0 0
        %4165 = vmatpush.bf16.msra.mxu0 %v4150
        %4166 = vmatpush.bf16.msra.mxu0 %v4148
        %4167 = vmatmul.bf16.gmra.mxu0 %v4154
        %v4168 = vpop.f32.mrf.mxu0
        %v4169 = vadd.f32 0.0, %v4168
        %v4170 = vpop.f32.mrf.mxu0
        %v4171 = vadd.f32 0.0, %v4170
        %4172 = vmatmul.bf16.gmra.mxu0 %v4157
        %v4173 = vpop.f32.mrf.mxu0
        %v4174 = vadd.f32 0.0, %v4173
        %v4175 = vpop.f32.mrf.mxu0
        %v4176 = vadd.f32 0.0, %v4175
        %4177 = vdwg.mxu0
        %v4182 = vunpack.c.l.b16 %v4088
        %v4183 = vunpack.c.l.b16 %v4089
        %v4184 = vunpack.c.l.b16 %v4090
        %v4185 = vunpack.c.l.b16 %v4091
        %v4186 = vpack.c.b16 %v4183, %v4182
        %v4187 = vpack.c.b16 %v4185, %v4184
        %4188 = vrot.lane.b32.xlu0 %v3648, 64
        %v4189 = vpop.permute.xlu0 %4188
        %4190 = vrot.lane.b32.xlu0 %v3649, 64
        %v4191 = vpop.permute.xlu0 %4190
        %v4195 = vsel %vm3343, %v4186, 0
        %v4198 = vsel %vm3343, %v4187, 0
        %4200 = vmatpush.bf16.msra.mxu0 0
        %4201 = vmatpush.bf16.msra.mxu0 0
        %4202 = vmatpush.bf16.msra.mxu0 0
        %4203 = vmatpush.bf16.msra.mxu0 0
        %4204 = vmatpush.bf16.msra.mxu0 0
        %4205 = vmatpush.bf16.msra.mxu0 0
        %4206 = vmatpush.bf16.msra.mxu0 %v4191
        %4207 = vmatpush.bf16.msra.mxu0 %v4189
        %4208 = vmatmul.bf16.gmra.mxu0 %v4195
        %v4209 = vpop.f32.mrf.mxu0
        %v4210 = vadd.f32 0.0, %v4209
        %v4211 = vpop.f32.mrf.mxu0
        %v4212 = vadd.f32 0.0, %v4211
        %4213 = vmatmul.bf16.gmra.mxu0 %v4198
        %v4214 = vpop.f32.mrf.mxu0
        %v4215 = vadd.f32 0.0, %v4214
        %v4216 = vpop.f32.mrf.mxu0
        %v4217 = vadd.f32 0.0, %v4216
        %4218 = vdwg.mxu0
        %v4223 = vunpack.c.l.b16 %v4092
        %v4224 = vunpack.c.l.b16 %v4093
        %v4225 = vunpack.c.l.b16 %v4094
        %v4226 = vunpack.c.l.b16 %v4095
        %v4227 = vpack.c.b16 %v4224, %v4223
        %v4228 = vpack.c.b16 %v4226, %v4225
        %4229 = vrot.lane.b32.xlu0 %v3695, 64
        %v4230 = vpop.permute.xlu0 %4229
        %4231 = vrot.lane.b32.xlu0 %v3696, 64
        %v4232 = vpop.permute.xlu0 %4231
        %v4236 = vsel %vm3343, %v4227, 0
        %v4239 = vsel %vm3343, %v4228, 0
        %4241 = vmatpush.bf16.msra.mxu0 0
        %4242 = vmatpush.bf16.msra.mxu0 0
        %4243 = vmatpush.bf16.msra.mxu0 0
        %4244 = vmatpush.bf16.msra.mxu0 0
        %4245 = vmatpush.bf16.msra.mxu0 0
        %4246 = vmatpush.bf16.msra.mxu0 0
        %4247 = vmatpush.bf16.msra.mxu0 %v4232
        %4248 = vmatpush.bf16.msra.mxu0 %v4230
        %4249 = vmatmul.bf16.gmra.mxu0 %v4236
        %v4250 = vpop.f32.mrf.mxu0
        %v4251 = vadd.f32 0.0, %v4250
        %v4252 = vpop.f32.mrf.mxu0
        %v4253 = vadd.f32 0.0, %v4252
        %4254 = vmatmul.bf16.gmra.mxu0 %v4239
        %v4255 = vpop.f32.mrf.mxu0
        %v4256 = vadd.f32 0.0, %v4255
        %v4257 = vpop.f32.mrf.mxu0
        %v4258 = vadd.f32 0.0, %v4257
        %4259 = vdwg.mxu0
        %v4260 = vpack.c.bf16 %v4130, %v4128
        %v4261 = vpack.c.bf16 %v4135, %v4133
        %v4262 = vpack.c.bf16 %v4171, %v4169
        %v4263 = vpack.c.bf16 %v4176, %v4174
        %v4264 = vpack.c.bf16 %v4212, %v4210
        %v4265 = vpack.c.bf16 %v4217, %v4215
        %v4266 = vpack.c.bf16 %v4253, %v4251
        %v4267 = vpack.c.bf16 %v4258, %v4256
        %v4268 = vld [vmem:[#allocation8 + $0x60] sm:$0xff]
        %v4269 = vld [vmem:[#allocation8 + $0x68] sm:$0xf]
        %v4270 = vld [vmem:[#allocation8 + $0x6c] sm:$0xff]
        %v4271 = vld [vmem:[#allocation8 + $0x74] sm:$0xf]
        %v4272 = vld [vmem:[#allocation8 + $0x78] sm:$0xff]
        %v4273 = vld [vmem:[#allocation8 + $0x80] sm:$0xf]
        %v4274 = vld [vmem:[#allocation8 + $0x84] sm:$0xff]
        %v4275 = vld [vmem:[#allocation8 + $0x8c] sm:$0xf]
        %v4276 = vld [vmem:[#allocation8 + $0x90] sm:$0xff]
        %v4277 = vld [vmem:[#allocation8 + $0x98] sm:$0xf]
        %v4278 = vld [vmem:[#allocation8 + $0x9c] sm:$0xff]
        %v4279 = vld [vmem:[#allocation8 + $0xa4] sm:$0xf]
        %v4280 = vld [vmem:[#allocation8 + $0xa8] sm:$0xff]
        %v4281 = vld [vmem:[#allocation8 + $0xb0] sm:$0xf]
        %v4282 = vld [vmem:[#allocation8 + $0xb4] sm:$0xff]
        %v4283 = vld [vmem:[#allocation8 + $0xbc] sm:$0xf]
        %v4300 = vunpack.c.l.b16 %v4268
        %v4301 = vunpack.c.h.b16 %v4268
        %v4302 = vunpack.c.l.b16 %v4269
        %v4303 = vunpack.c.l.b16 %v4270
        %v4304 = vunpack.c.h.b16 %v4270
        %v4305 = vunpack.c.l.b16 %v4271
        %v4306 = vunpack.c.l.b16 %v4272
        %v4307 = vunpack.c.h.b16 %v4272
        %v4308 = vunpack.c.l.b16 %v4273
        %v4309 = vunpack.c.l.b16 %v4274
        %v4310 = vunpack.c.h.b16 %v4274
        %v4311 = vunpack.c.l.b16 %v4275
        %v4312 = vunpack.c.l.b16 %v4276
        %v4313 = vunpack.c.h.b16 %v4276
        %v4314 = vunpack.c.l.b16 %v4277
        %v4315 = vunpack.c.l.b16 %v4278
        %v4316 = vunpack.c.h.b16 %v4278
        %v4317 = vunpack.c.l.b16 %v4279
        %v4318 = vunpack.c.l.b16 %v4280
        %v4319 = vunpack.c.h.b16 %v4280
        %v4320 = vunpack.c.l.b16 %v4281
        %v4321 = vunpack.c.l.b16 %v4282
        %v4322 = vunpack.c.h.b16 %v4282
        %v4323 = vunpack.c.l.b16 %v4283
        %v4324 = vpack.c.b16 %v4303, %v4300
        %v4325 = vpack.c.b16 %v4304, %v4301
        %v4326 = vpack.c.b16 %v4305, %v4302
        %v4327 = vpack.c.b16 %v4309, %v4306
        %v4328 = vpack.c.b16 %v4310, %v4307
        %v4329 = vpack.c.b16 %v4311, %v4308
        %v4330 = vpack.c.b16 %v4315, %v4312
        %v4331 = vpack.c.b16 %v4316, %v4313
        %v4332 = vpack.c.b16 %v4317, %v4314
        %v4333 = vpack.c.b16 %v4321, %v4318
        %v4334 = vpack.c.b16 %v4322, %v4319
        %v4335 = vpack.c.b16 %v4323, %v4320
        %v4349 = vsel %vm3158, %v4260, 0
        %v4352 = vsel %vm3158, %v4261, 0
        %v4355 = vsel %vm3158, %v4262, 0
        %v4358 = vsel %vm3158, %v4263, 0
        %v4361 = vsel %vm3158, %v4264, 0
        %v4364 = vsel %vm3158, %v4265, 0
        %v4367 = vsel %vm3158, %v4266, 0
        %v4370 = vsel %vm3158, %v4267, 0
        %4372 = vmatpush.bf16.msra.mxu0 0
        %4373 = vmatpush.bf16.msra.mxu0 0
        %4374 = vmatpush.bf16.msra.mxu0 0
        %4375 = vmatpush.bf16.msra.mxu0 0
        %4376 = vmatpush.bf16.msra.mxu0 %v4333
        %4377 = vmatpush.bf16.msra.mxu0 %v4330
        %4378 = vmatpush.bf16.msra.mxu0 %v4327
        %4379 = vmatpush.bf16.msra.mxu0 %v4324
        %4380 = vmatmul.bf16.gmra.mxu0 %v4349
        %v4381 = vpop.f32.mrf.mxu0
        %v4382 = vadd.f32 0.0, %v4381
        %v4383 = vpop.f32.mrf.mxu0
        %v4384 = vadd.f32 0.0, %v4383
        %4385 = vmatmul.bf16.gmra.mxu0 %v4352
        %v4386 = vpop.f32.mrf.mxu0
        %v4387 = vadd.f32 0.0, %v4386
        %v4388 = vpop.f32.mrf.mxu0
        %v4389 = vadd.f32 0.0, %v4388
        %4390 = vmatmul.bf16.gmra.mxu0 %v4355
        %v4391 = vpop.f32.mrf.mxu0
        %v4392 = vadd.f32 0.0, %v4391
        %v4393 = vpop.f32.mrf.mxu0
        %v4394 = vadd.f32 0.0, %v4393
        %4395 = vmatmul.bf16.gmra.mxu0 %v4358
        %v4396 = vpop.f32.mrf.mxu0
        %v4397 = vadd.f32 0.0, %v4396
        %v4398 = vpop.f32.mrf.mxu0
        %v4399 = vadd.f32 0.0, %v4398
        %4400 = vmatmul.bf16.gmra.mxu0 %v4361
        %v4401 = vpop.f32.mrf.mxu0
        %v4402 = vadd.f32 0.0, %v4401
        %v4403 = vpop.f32.mrf.mxu0
        %v4404 = vadd.f32 0.0, %v4403
        %4405 = vmatmul.bf16.gmra.mxu0 %v4364
        %v4406 = vpop.f32.mrf.mxu0
        %v4407 = vadd.f32 0.0, %v4406
        %v4408 = vpop.f32.mrf.mxu0
        %v4409 = vadd.f32 0.0, %v4408
        %4410 = vmatmul.bf16.gmra.mxu0 %v4367
        %v4411 = vpop.f32.mrf.mxu0
        %v4412 = vadd.f32 0.0, %v4411
        %v4413 = vpop.f32.mrf.mxu0
        %v4414 = vadd.f32 0.0, %v4413
        %4415 = vmatmul.bf16.gmra.mxu0 %v4370
        %v4416 = vpop.f32.mrf.mxu0
        %v4417 = vadd.f32 0.0, %v4416
        %v4418 = vpop.f32.mrf.mxu0
        %v4419 = vadd.f32 0.0, %v4418
        %4420 = vdwg.mxu0
        %4421 = vmatpush.bf16.msra.mxu0 0
        %4422 = vmatpush.bf16.msra.mxu0 0
        %4423 = vmatpush.bf16.msra.mxu0 0
        %4424 = vmatpush.bf16.msra.mxu0 0
        %4425 = vmatpush.bf16.msra.mxu0 %v4334
        %4426 = vmatpush.bf16.msra.mxu0 %v4331
        %4427 = vmatpush.bf16.msra.mxu0 %v4328
        %4428 = vmatpush.bf16.msra.mxu0 %v4325
        %4429 = vmatmul.bf16.gmra.mxu0 %v4349
        %v4430 = vpop.f32.mrf.mxu0
        %v4431 = vadd.f32 0.0, %v4430
        %v4432 = vpop.f32.mrf.mxu0
        %v4433 = vadd.f32 0.0, %v4432
        %4434 = vmatmul.bf16.gmra.mxu0 %v4352
        %v4435 = vpop.f32.mrf.mxu0
        %v4436 = vadd.f32 0.0, %v4435
        %v4437 = vpop.f32.mrf.mxu0
        %v4438 = vadd.f32 0.0, %v4437
        %4439 = vmatmul.bf16.gmra.mxu0 %v4355
        %v4440 = vpop.f32.mrf.mxu0
        %v4441 = vadd.f32 0.0, %v4440
        %v4442 = vpop.f32.mrf.mxu0
        %v4443 = vadd.f32 0.0, %v4442
        %4444 = vmatmul.bf16.gmra.mxu0 %v4358
        %v4445 = vpop.f32.mrf.mxu0
        %v4446 = vadd.f32 0.0, %v4445
        %v4447 = vpop.f32.mrf.mxu0
        %v4448 = vadd.f32 0.0, %v4447
        %4449 = vmatmul.bf16.gmra.mxu0 %v4361
        %v4450 = vpop.f32.mrf.mxu0
        %v4451 = vadd.f32 0.0, %v4450
        %v4452 = vpop.f32.mrf.mxu0
        %v4453 = vadd.f32 0.0, %v4452
        %4454 = vmatmul.bf16.gmra.mxu0 %v4364
        %v4455 = vpop.f32.mrf.mxu0
        %v4456 = vadd.f32 0.0, %v4455
        %v4457 = vpop.f32.mrf.mxu0
        %v4458 = vadd.f32 0.0, %v4457
        %4459 = vmatmul.bf16.gmra.mxu0 %v4367
        %v4460 = vpop.f32.mrf.mxu0
        %v4461 = vadd.f32 0.0, %v4460
        %v4462 = vpop.f32.mrf.mxu0
        %v4463 = vadd.f32 0.0, %v4462
        %4464 = vmatmul.bf16.gmra.mxu0 %v4370
        %v4465 = vpop.f32.mrf.mxu0
        %v4466 = vadd.f32 0.0, %v4465
        %v4467 = vpop.f32.mrf.mxu0
        %v4468 = vadd.f32 0.0, %v4467
        %4469 = vdwg.mxu0
        %4470 = vmatpush.bf16.msra.mxu0 0
        %4471 = vmatpush.bf16.msra.mxu0 0
        %4472 = vmatpush.bf16.msra.mxu0 0
        %4473 = vmatpush.bf16.msra.mxu0 0
        %4474 = vmatpush.bf16.msra.mxu0 %v4335
        %4475 = vmatpush.bf16.msra.mxu0 %v4332
        %4476 = vmatpush.bf16.msra.mxu0 %v4329
        %4477 = vmatpush.bf16.msra.mxu0 %v4326
        %4478 = vmatmul.bf16.gmra.mxu0 %v4349
        %v4479 = vpop.f32.mrf.mxu0
        %v4480 = vadd.f32 0.0, %v4479
        %v4481 = vpop.f32.mrf.mxu0
        %v4482 = vadd.f32 0.0, %v4481
        %4483 = vmatmul.bf16.gmra.mxu0 %v4352
        %v4484 = vpop.f32.mrf.mxu0
        %v4485 = vadd.f32 0.0, %v4484
        %v4486 = vpop.f32.mrf.mxu0
        %v4487 = vadd.f32 0.0, %v4486
        %4488 = vmatmul.bf16.gmra.mxu0 %v4355
        %v4489 = vpop.f32.mrf.mxu0
        %v4490 = vadd.f32 0.0, %v4489
        %v4491 = vpop.f32.mrf.mxu0
        %v4492 = vadd.f32 0.0, %v4491
        %4493 = vmatmul.bf16.gmra.mxu0 %v4358
        %v4494 = vpop.f32.mrf.mxu0
        %v4495 = vadd.f32 0.0, %v4494
        %v4496 = vpop.f32.mrf.mxu0
        %v4497 = vadd.f32 0.0, %v4496
        %4498 = vmatmul.bf16.gmra.mxu0 %v4361
        %v4499 = vpop.f32.mrf.mxu0
        %v4500 = vadd.f32 0.0, %v4499
        %v4501 = vpop.f32.mrf.mxu0
        %v4502 = vadd.f32 0.0, %v4501
        %4503 = vmatmul.bf16.gmra.mxu0 %v4364
        %v4504 = vpop.f32.mrf.mxu0
        %v4505 = vadd.f32 0.0, %v4504
        %v4506 = vpop.f32.mrf.mxu0
        %v4507 = vadd.f32 0.0, %v4506
        %4508 = vmatmul.bf16.gmra.mxu0 %v4367
        %v4509 = vpop.f32.mrf.mxu0
        %v4510 = vadd.f32 0.0, %v4509
        %v4511 = vpop.f32.mrf.mxu0
        %v4512 = vadd.f32 0.0, %v4511
        %4513 = vmatmul.bf16.gmra.mxu0 %v4370
        %v4514 = vpop.f32.mrf.mxu0
        %v4515 = vadd.f32 0.0, %v4514
        %v4516 = vpop.f32.mrf.mxu0
        %v4517 = vadd.f32 0.0, %v4516
        %4518 = vdwg.mxu0
        %v4535 = vunpack.c.l.b16 %v3732
        %v4536 = vunpack.c.h.b16 %v3732
        %v4537 = vunpack.c.l.b16 %v3733
        %v4538 = vunpack.c.l.b16 %v3734
        %v4539 = vunpack.c.h.b16 %v3734
        %v4540 = vunpack.c.l.b16 %v3735
        %v4541 = vunpack.c.l.b16 %v3736
        %v4542 = vunpack.c.h.b16 %v3736
        %v4543 = vunpack.c.l.b16 %v3737
        %v4544 = vunpack.c.l.b16 %v3738
        %v4545 = vunpack.c.h.b16 %v3738
        %v4546 = vunpack.c.l.b16 %v3739
        %v4547 = vunpack.c.l.b16 %v3740
        %v4548 = vunpack.c.h.b16 %v3740
        %v4549 = vunpack.c.l.b16 %v3741
        %v4550 = vunpack.c.l.b16 %v3742
        %v4551 = vunpack.c.h.b16 %v3742
        %v4552 = vunpack.c.l.b16 %v3743
        %v4553 = vunpack.c.l.b16 %v3744
        %v4554 = vunpack.c.h.b16 %v3744
        %v4555 = vunpack.c.l.b16 %v3745
        %v4556 = vunpack.c.l.b16 %v3746
        %v4557 = vunpack.c.h.b16 %v3746
        %v4558 = vunpack.c.l.b16 %v3747
        %v4559 = vpack.c.b16 %v4538, %v4535
        %v4560 = vpack.c.b16 %v4539, %v4536
        %v4561 = vpack.c.b16 %v4540, %v4537
        %v4562 = vpack.c.b16 %v4544, %v4541
        %v4563 = vpack.c.b16 %v4545, %v4542
        %v4564 = vpack.c.b16 %v4546, %v4543
        %v4565 = vpack.c.b16 %v4550, %v4547
        %v4566 = vpack.c.b16 %v4551, %v4548
        %v4567 = vpack.c.b16 %v4552, %v4549
        %v4568 = vpack.c.b16 %v4556, %v4553
        %v4569 = vpack.c.b16 %v4557, %v4554
        %v4570 = vpack.c.b16 %v4558, %v4555
        %v4584 = vsel %vm3158, %v3724, 0
        %v4587 = vsel %vm3158, %v3725, 0
        %v4590 = vsel %vm3158, %v3726, 0
        %v4593 = vsel %vm3158, %v3727, 0
        %v4596 = vsel %vm3158, %v3728, 0
        %v4599 = vsel %vm3158, %v3729, 0
        %v4602 = vsel %vm3158, %v3730, 0
        %v4605 = vsel %vm3158, %v3731, 0
        %4607 = vmatpush.bf16.msra.mxu0 0
        %4608 = vmatpush.bf16.msra.mxu0 0
        %4609 = vmatpush.bf16.msra.mxu0 0
        %4610 = vmatpush.bf16.msra.mxu0 0
        %4611 = vmatpush.bf16.msra.mxu0 %v4568
        %4612 = vmatpush.bf16.msra.mxu0 %v4565
        %4613 = vmatpush.bf16.msra.mxu0 %v4562
        %4614 = vmatpush.bf16.msra.mxu0 %v4559
        %4615 = vmatmul.bf16.gmra.mxu0 %v4584
        %v4616 = vpop.f32.mrf.mxu0
        %v4617 = vadd.f32 %v4382, %v4616
        %v4618 = vpop.f32.mrf.mxu0
        %v4619 = vadd.f32 %v4384, %v4618
        %4620 = vmatmul.bf16.gmra.mxu0 %v4587
        %v4621 = vpop.f32.mrf.mxu0
        %v4622 = vadd.f32 %v4387, %v4621
        %v4623 = vpop.f32.mrf.mxu0
        %v4624 = vadd.f32 %v4389, %v4623
        %4625 = vmatmul.bf16.gmra.mxu0 %v4590
        %v4626 = vpop.f32.mrf.mxu0
        %v4627 = vadd.f32 %v4392, %v4626
        %v4628 = vpop.f32.mrf.mxu0
        %v4629 = vadd.f32 %v4394, %v4628
        %4630 = vmatmul.bf16.gmra.mxu0 %v4593
        %v4631 = vpop.f32.mrf.mxu0
        %v4632 = vadd.f32 %v4397, %v4631
        %v4633 = vpop.f32.mrf.mxu0
        %v4634 = vadd.f32 %v4399, %v4633
        %4635 = vmatmul.bf16.gmra.mxu0 %v4596
        %v4636 = vpop.f32.mrf.mxu0
        %v4637 = vadd.f32 %v4402, %v4636
        %v4638 = vpop.f32.mrf.mxu0
        %v4639 = vadd.f32 %v4404, %v4638
        %4640 = vmatmul.bf16.gmra.mxu0 %v4599
        %v4641 = vpop.f32.mrf.mxu0
        %v4642 = vadd.f32 %v4407, %v4641
        %v4643 = vpop.f32.mrf.mxu0
        %v4644 = vadd.f32 %v4409, %v4643
        %4645 = vmatmul.bf16.gmra.mxu0 %v4602
        %v4646 = vpop.f32.mrf.mxu0
        %v4647 = vadd.f32 %v4412, %v4646
        %v4648 = vpop.f32.mrf.mxu0
        %v4649 = vadd.f32 %v4414, %v4648
        %4650 = vmatmul.bf16.gmra.mxu0 %v4605
        %v4651 = vpop.f32.mrf.mxu0
        %v4652 = vadd.f32 %v4417, %v4651
        %v4653 = vpop.f32.mrf.mxu0
        %v4654 = vadd.f32 %v4419, %v4653
        %4655 = vdwg.mxu0
        %4656 = vmatpush.bf16.msra.mxu0 0
        %4657 = vmatpush.bf16.msra.mxu0 0
        %4658 = vmatpush.bf16.msra.mxu0 0
        %4659 = vmatpush.bf16.msra.mxu0 0
        %4660 = vmatpush.bf16.msra.mxu0 %v4569
        %4661 = vmatpush.bf16.msra.mxu0 %v4566
        %4662 = vmatpush.bf16.msra.mxu0 %v4563
        %4663 = vmatpush.bf16.msra.mxu0 %v4560
        %4664 = vmatmul.bf16.gmra.mxu0 %v4584
        %v4665 = vpop.f32.mrf.mxu0
        %v4666 = vadd.f32 %v4431, %v4665
        %v4667 = vpop.f32.mrf.mxu0
        %v4668 = vadd.f32 %v4433, %v4667
        %4669 = vmatmul.bf16.gmra.mxu0 %v4587
        %v4670 = vpop.f32.mrf.mxu0
        %v4671 = vadd.f32 %v4436, %v4670
        %v4672 = vpop.f32.mrf.mxu0
        %v4673 = vadd.f32 %v4438, %v4672
        %4674 = vmatmul.bf16.gmra.mxu0 %v4590
        %v4675 = vpop.f32.mrf.mxu0
        %v4676 = vadd.f32 %v4441, %v4675
        %v4677 = vpop.f32.mrf.mxu0
        %v4678 = vadd.f32 %v4443, %v4677
        %4679 = vmatmul.bf16.gmra.mxu0 %v4593
        %v4680 = vpop.f32.mrf.mxu0
        %v4681 = vadd.f32 %v4446, %v4680
        %v4682 = vpop.f32.mrf.mxu0
        %v4683 = vadd.f32 %v4448, %v4682
        %4684 = vmatmul.bf16.gmra.mxu0 %v4596
        %v4685 = vpop.f32.mrf.mxu0
        %v4686 = vadd.f32 %v4451, %v4685
        %v4687 = vpop.f32.mrf.mxu0
        %v4688 = vadd.f32 %v4453, %v4687
        %4689 = vmatmul.bf16.gmra.mxu0 %v4599
        %v4690 = vpop.f32.mrf.mxu0
        %v4691 = vadd.f32 %v4456, %v4690
        %v4692 = vpop.f32.mrf.mxu0
        %v4693 = vadd.f32 %v4458, %v4692
        %4694 = vmatmul.bf16.gmra.mxu0 %v4602
        %v4695 = vpop.f32.mrf.mxu0
        %v4696 = vadd.f32 %v4461, %v4695
        %v4697 = vpop.f32.mrf.mxu0
        %v4698 = vadd.f32 %v4463, %v4697
        %4699 = vmatmul.bf16.gmra.mxu0 %v4605
        %v4700 = vpop.f32.mrf.mxu0
        %v4701 = vadd.f32 %v4466, %v4700
        %v4702 = vpop.f32.mrf.mxu0
        %v4703 = vadd.f32 %v4468, %v4702
        %4704 = vdwg.mxu0
        %4705 = vmatpush.bf16.msra.mxu0 0
        %4706 = vmatpush.bf16.msra.mxu0 0
        %4707 = vmatpush.bf16.msra.mxu0 0
        %4708 = vmatpush.bf16.msra.mxu0 0
        %4709 = vmatpush.bf16.msra.mxu0 %v4570
        %4710 = vmatpush.bf16.msra.mxu0 %v4567
        %4711 = vmatpush.bf16.msra.mxu0 %v4564
        %4712 = vmatpush.bf16.msra.mxu0 %v4561
        %4713 = vmatmul.bf16.gmra.mxu0 %v4584
        %v4714 = vpop.f32.mrf.mxu0
        %v4715 = vadd.f32 %v4480, %v4714
        %v4716 = vpop.f32.mrf.mxu0
        %v4717 = vadd.f32 %v4482, %v4716
        %4718 = vmatmul.bf16.gmra.mxu0 %v4587
        %v4719 = vpop.f32.mrf.mxu0
        %v4720 = vadd.f32 %v4485, %v4719
        %v4721 = vpop.f32.mrf.mxu0
        %v4722 = vadd.f32 %v4487, %v4721
        %4723 = vmatmul.bf16.gmra.mxu0 %v4590
        %v4724 = vpop.f32.mrf.mxu0
        %v4725 = vadd.f32 %v4490, %v4724
        %v4726 = vpop.f32.mrf.mxu0
        %v4727 = vadd.f32 %v4492, %v4726
        %4728 = vmatmul.bf16.gmra.mxu0 %v4593
        %v4729 = vpop.f32.mrf.mxu0
        %v4730 = vadd.f32 %v4495, %v4729
        %v4731 = vpop.f32.mrf.mxu0
        %v4732 = vadd.f32 %v4497, %v4731
        %4733 = vmatmul.bf16.gmra.mxu0 %v4596
        %v4734 = vpop.f32.mrf.mxu0
        %v4735 = vadd.f32 %v4500, %v4734
        %v4736 = vpop.f32.mrf.mxu0
        %v4737 = vadd.f32 %v4502, %v4736
        %4738 = vmatmul.bf16.gmra.mxu0 %v4599
        %v4739 = vpop.f32.mrf.mxu0
        %v4740 = vadd.f32 %v4505, %v4739
        %v4741 = vpop.f32.mrf.mxu0
        %v4742 = vadd.f32 %v4507, %v4741
        %4743 = vmatmul.bf16.gmra.mxu0 %v4602
        %v4744 = vpop.f32.mrf.mxu0
        %v4745 = vadd.f32 %v4510, %v4744
        %v4746 = vpop.f32.mrf.mxu0
        %v4747 = vadd.f32 %v4512, %v4746
        %4748 = vmatmul.bf16.gmra.mxu0 %v4605
        %v4749 = vpop.f32.mrf.mxu0
        %v4750 = vadd.f32 %v4515, %v4749
        %v4751 = vpop.f32.mrf.mxu0
        %v4752 = vadd.f32 %v4517, %v4751
        %4753 = vdwg.mxu0
        %v4754 = vrot.slane %v3038, 4
        %v4755 = vrot.slane %v3040, 4
        %v4756 = vrot.slane %v3042, 4
        %v4757 = vrot.slane %v3044, 4
        %v4758 = vrot.slane %v3070, 4
        %v4759 = vrot.slane %v3072, 4
        %v4760 = vrot.slane %v3074, 4
        %v4761 = vrot.slane %v3076, 4
        %v4762 = vunpack.c.l.b16 %v4754
        %v4763 = vunpack.c.l.b16 %v4755
        %v4764 = vunpack.c.l.b16 %v4756
        %v4765 = vunpack.c.l.b16 %v4757
        %v4766 = vpack.c.b16 %v4763, %v4762
        %v4767 = vpack.c.b16 %v4765, %v4764
        %v4768 = vunpack.c.l.b16 %v4758
        %v4769 = vunpack.c.l.b16 %v4759
        %v4770 = vunpack.c.l.b16 %v4760
        %v4771 = vunpack.c.l.b16 %v4761
        %v4772 = vpack.c.b16 %v4769, %v4768
        %v4773 = vpack.c.b16 %v4771, %v4770
        %v4775 = vsel %vm3158, %v4766, 0
        %v4778 = vsel %vm3158, %v4767, 0
        %v4781 = vsel %vm3158, %v4772, 0
        %v4784 = vsel %vm3158, %v4773, 0
        %4786 = vmatpush.bf16.xpose.msra.mxu0 0
        %4787 = vmatpush.bf16.xpose.msra.mxu0 0
        %4788 = vmatpush.bf16.xpose.msra.mxu0 0
        %4789 = vmatpush.bf16.xpose.msra.mxu0 0
        %4790 = vmatpush.bf16.xpose.msra.mxu0 0
        %4791 = vmatpush.bf16.xpose.msra.mxu0 0
        %4792 = vmatpush.bf16.xpose.msra.mxu0 %v4784
        %4793 = vmatpush.bf16.xpose.msra.mxu0 %v4781
        %4794 = vmatmul.bf16.gmra.mxu0 %v4775
        %v4795 = vpop.f32.mrf.mxu0
        %v4796 = vadd.f32 %v3134, %v4795
        %v4797 = vpop.f32.mrf.mxu0
        %v4798 = vadd.f32 %v3135, %v4797
        %4799 = vmatmul.bf16.gmra.mxu0 %v4778
        %v4800 = vpop.f32.mrf.mxu0
        %v4801 = vadd.f32 %v3136, %v4800
        %v4802 = vpop.f32.mrf.mxu0
        %v4803 = vadd.f32 %v3137, %v4802
        %4804 = vdwg.mxu0
        %v4805 = vrot.slane %v3046, 4
        %v4806 = vrot.slane %v3048, 4
        %v4807 = vrot.slane %v3050, 4
        %v4808 = vrot.slane %v3052, 4
        %v4809 = vrot.slane %v3078, 4
        %v4810 = vrot.slane %v3080, 4
        %v4811 = vrot.slane %v3082, 4
        %v4812 = vrot.slane %v3084, 4
        %v4813 = vunpack.c.l.b16 %v4805
        %v4814 = vunpack.c.l.b16 %v4806
        %v4815 = vunpack.c.l.b16 %v4807
        %v4816 = vunpack.c.l.b16 %v4808
        %v4817 = vpack.c.b16 %v4814, %v4813
        %v4818 = vpack.c.b16 %v4816, %v4815
        %v4819 = vunpack.c.l.b16 %v4809
        %v4820 = vunpack.c.l.b16 %v4810
        %v4821 = vunpack.c.l.b16 %v4811
        %v4822 = vunpack.c.l.b16 %v4812
        %v4823 = vpack.c.b16 %v4820, %v4819
        %v4824 = vpack.c.b16 %v4822, %v4821
        %v4826 = vsel %vm3158, %v4817, 0
        %v4829 = vsel %vm3158, %v4818, 0
        %v4832 = vsel %vm3158, %v4823, 0
        %v4835 = vsel %vm3158, %v4824, 0
        %4837 = vmatpush.bf16.xpose.msra.mxu0 0
        %4838 = vmatpush.bf16.xpose.msra.mxu0 0
        %4839 = vmatpush.bf16.xpose.msra.mxu0 0
        %4840 = vmatpush.bf16.xpose.msra.mxu0 0
        %4841 = vmatpush.bf16.xpose.msra.mxu0 0
        %4842 = vmatpush.bf16.xpose.msra.mxu0 0
        %4843 = vmatpush.bf16.xpose.msra.mxu0 %v4835
        %4844 = vmatpush.bf16.xpose.msra.mxu0 %v4832
        %4845 = vmatmul.bf16.gmra.mxu0 %v4826
        %v4846 = vpop.f32.mrf.mxu0
        %v4847 = vadd.f32 %v3134, %v4846
        %v4848 = vpop.f32.mrf.mxu0
        %v4849 = vadd.f32 %v3135, %v4848
        %4850 = vmatmul.bf16.gmra.mxu0 %v4829
        %v4851 = vpop.f32.mrf.mxu0
        %v4852 = vadd.f32 %v3136, %v4851
        %v4853 = vpop.f32.mrf.mxu0
        %v4854 = vadd.f32 %v3137, %v4853
        %4855 = vdwg.mxu0
        %v4856 = vrot.slane %v3054, 4
        %v4857 = vrot.slane %v3056, 4
        %v4858 = vrot.slane %v3058, 4
        %v4859 = vrot.slane %v3060, 4
        %v4860 = vrot.slane %v3086, 4
        %v4861 = vrot.slane %v3088, 4
        %v4862 = vrot.slane %v3090, 4
        %v4863 = vrot.slane %v3092, 4
        %v4864 = vunpack.c.l.b16 %v4856
        %v4865 = vunpack.c.l.b16 %v4857
        %v4866 = vunpack.c.l.b16 %v4858
        %v4867 = vunpack.c.l.b16 %v4859
        %v4868 = vpack.c.b16 %v4865, %v4864
        %v4869 = vpack.c.b16 %v4867, %v4866
        %v4870 = vunpack.c.l.b16 %v4860
        %v4871 = vunpack.c.l.b16 %v4861
        %v4872 = vunpack.c.l.b16 %v4862
        %v4873 = vunpack.c.l.b16 %v4863
        %v4874 = vpack.c.b16 %v4871, %v4870
        %v4875 = vpack.c.b16 %v4873, %v4872
        %v4877 = vsel %vm3158, %v4868, 0
        %v4880 = vsel %vm3158, %v4869, 0
        %v4883 = vsel %vm3158, %v4874, 0
        %v4886 = vsel %vm3158, %v4875, 0
        %4888 = vmatpush.bf16.xpose.msra.mxu0 0
        %4889 = vmatpush.bf16.xpose.msra.mxu0 0
        %4890 = vmatpush.bf16.xpose.msra.mxu0 0
        %4891 = vmatpush.bf16.xpose.msra.mxu0 0
        %4892 = vmatpush.bf16.xpose.msra.mxu0 0
        %4893 = vmatpush.bf16.xpose.msra.mxu0 0
        %4894 = vmatpush.bf16.xpose.msra.mxu0 %v4886
        %4895 = vmatpush.bf16.xpose.msra.mxu0 %v4883
        %4896 = vmatmul.bf16.gmra.mxu0 %v4877
        %v4897 = vpop.f32.mrf.mxu0
        %v4898 = vadd.f32 %v3134, %v4897
        %v4899 = vpop.f32.mrf.mxu0
        %v4900 = vadd.f32 %v3135, %v4899
        %4901 = vmatmul.bf16.gmra.mxu0 %v4880
        %v4902 = vpop.f32.mrf.mxu0
        %v4903 = vadd.f32 %v3136, %v4902
        %v4904 = vpop.f32.mrf.mxu0
        %v4905 = vadd.f32 %v3137, %v4904
        %4906 = vdwg.mxu0
        %v4907 = vrot.slane %v3062, 4
        %v4908 = vrot.slane %v3064, 4
        %v4909 = vrot.slane %v3066, 4
        %v4910 = vrot.slane %v3068, 4
        %v4911 = vrot.slane %v3094, 4
        %v4912 = vrot.slane %v3096, 4
        %v4913 = vrot.slane %v3098, 4
        %v4914 = vrot.slane %v3100, 4
        %v4915 = vunpack.c.l.b16 %v4907
        %v4916 = vunpack.c.l.b16 %v4908
        %v4917 = vunpack.c.l.b16 %v4909
        %v4918 = vunpack.c.l.b16 %v4910
        %v4919 = vpack.c.b16 %v4916, %v4915
        %v4920 = vpack.c.b16 %v4918, %v4917
        %v4921 = vunpack.c.l.b16 %v4911
        %v4922 = vunpack.c.l.b16 %v4912
        %v4923 = vunpack.c.l.b16 %v4913
        %v4924 = vunpack.c.l.b16 %v4914
        %v4925 = vpack.c.b16 %v4922, %v4921
        %v4926 = vpack.c.b16 %v4924, %v4923
        %v4928 = vsel %vm3158, %v4919, 0
        %v4931 = vsel %vm3158, %v4920, 0
        %v4934 = vsel %vm3158, %v4925, 0
        %v4937 = vsel %vm3158, %v4926, 0
        %4939 = vmatpush.bf16.xpose.msra.mxu0 0
        %4940 = vmatpush.bf16.xpose.msra.mxu0 0
        %4941 = vmatpush.bf16.xpose.msra.mxu0 0
        %4942 = vmatpush.bf16.xpose.msra.mxu0 0
        %4943 = vmatpush.bf16.xpose.msra.mxu0 0
        %4944 = vmatpush.bf16.xpose.msra.mxu0 0
        %4945 = vmatpush.bf16.xpose.msra.mxu0 %v4937
        %4946 = vmatpush.bf16.xpose.msra.mxu0 %v4934
        %4947 = vmatmul.bf16.gmra.mxu0 %v4928
        %v4948 = vpop.f32.mrf.mxu0
        %v4949 = vadd.f32 %v3134, %v4948
        %v4950 = vpop.f32.mrf.mxu0
        %v4951 = vadd.f32 %v3135, %v4950
        %4952 = vmatmul.bf16.gmra.mxu0 %v4931
        %v4953 = vpop.f32.mrf.mxu0
        %v4954 = vadd.f32 %v3136, %v4953
        %v4955 = vpop.f32.mrf.mxu0
        %v4956 = vadd.f32 %v3137, %v4955
        %4957 = vdwg.mxu0
        %v4958 = vsel %vm3343, %v4796, -inf
        %4959 = vmax.xlane.f32.xlu0 %v4958
        %v4960 = vpop.xlane.xlu0 %4959
        %v4961 = vsel %vm3343, %v4798, -inf
        %4962 = vmax.xlane.f32.xlu0 %v4961
        %v4963 = vpop.xlane.xlu0 %4962
        %v4964 = vsel %vm3343, %v4801, -inf
        %4965 = vmax.xlane.f32.xlu0 %v4964
        %v4966 = vpop.xlane.xlu0 %4965
        %v4967 = vsel %vm3343, %v4803, -inf
        %4968 = vmax.xlane.f32.xlu0 %v4967
        %v4969 = vpop.xlane.xlu0 %4968
        %v4970 = vsel %vm3343, %v4847, -inf
        %4971 = vmax.xlane.f32.xlu0 %v4970
        %v4972 = vpop.xlane.xlu0 %4971
        %v4973 = vsel %vm3343, %v4849, -inf
        %4974 = vmax.xlane.f32.xlu0 %v4973
        %v4975 = vpop.xlane.xlu0 %4974
        %v4976 = vsel %vm3343, %v4852, -inf
        %4977 = vmax.xlane.f32.xlu0 %v4976
        %v4978 = vpop.xlane.xlu0 %4977
        %v4979 = vsel %vm3343, %v4854, -inf
        %4980 = vmax.xlane.f32.xlu0 %v4979
        %v4981 = vpop.xlane.xlu0 %4980
        %v4982 = vsel %vm3343, %v4898, -inf
        %4983 = vmax.xlane.f32.xlu0 %v4982
        %v4984 = vpop.xlane.xlu0 %4983
        %v4985 = vsel %vm3343, %v4900, -inf
        %4986 = vmax.xlane.f32.xlu0 %v4985
        %v4987 = vpop.xlane.xlu0 %4986
        %v4988 = vsel %vm3343, %v4903, -inf
        %4989 = vmax.xlane.f32.xlu0 %v4988
        %v4990 = vpop.xlane.xlu0 %4989
        %v4991 = vsel %vm3343, %v4905, -inf
        %4992 = vmax.xlane.f32.xlu0 %v4991
        %v4993 = vpop.xlane.xlu0 %4992
        %v4994 = vsel %vm3343, %v4949, -inf
        %4995 = vmax.xlane.f32.xlu0 %v4994
        %v4996 = vpop.xlane.xlu0 %4995
        %v4997 = vsel %vm3343, %v4951, -inf
        %4998 = vmax.xlane.f32.xlu0 %v4997
        %v4999 = vpop.xlane.xlu0 %4998
        %v5000 = vsel %vm3343, %v4954, -inf
        %5001 = vmax.xlane.f32.xlu0 %v5000
        %v5002 = vpop.xlane.xlu0 %5001
        %v5003 = vsel %vm3343, %v4956, -inf
        %5004 = vmax.xlane.f32.xlu0 %v5003
        %v5005 = vpop.xlane.xlu0 %5004
        %v5006 = vsub.f32 %v4796, %v4960
        %v5007 = vsub.f32 %v4798, %v4963
        %v5008 = vsub.f32 %v4801, %v4966
        %v5009 = vsub.f32 %v4803, %v4969
        %v5010 = vsub.f32 %v4847, %v4972
        %v5011 = vsub.f32 %v4849, %v4975
        %v5012 = vsub.f32 %v4852, %v4978
        %v5013 = vsub.f32 %v4854, %v4981
        %v5014 = vsub.f32 %v4898, %v4984
        %v5015 = vsub.f32 %v4900, %v4987
        %v5016 = vsub.f32 %v4903, %v4990
        %v5017 = vsub.f32 %v4905, %v4993
        %v5018 = vsub.f32 %v4949, %v4996
        %v5019 = vsub.f32 %v4951, %v4999
        %v5020 = vsub.f32 %v4954, %v5002
        %v5021 = vsub.f32 %v4956, %v5005
        %v5022 = vmul.f32 %v5006, 1.442695
        %v5023 = vpow.pop %v5022
        %v5024 = vmul.f32 %v5007, 1.442695
        %v5025 = vpow.pop %v5024
        %v5026 = vmul.f32 %v5008, 1.442695
        %v5027 = vpow.pop %v5026
        %v5028 = vmul.f32 %v5009, 1.442695
        %v5029 = vpow.pop %v5028
        %v5030 = vmul.f32 %v5010, 1.442695
        %v5031 = vpow.pop %v5030
        %v5032 = vmul.f32 %v5011, 1.442695
        %v5033 = vpow.pop %v5032
        %v5034 = vmul.f32 %v5012, 1.442695
        %v5035 = vpow.pop %v5034
        %v5036 = vmul.f32 %v5013, 1.442695
        %v5037 = vpow.pop %v5036
        %v5038 = vmul.f32 %v5014, 1.442695
        %v5039 = vpow.pop %v5038
        %v5040 = vmul.f32 %v5015, 1.442695
        %v5041 = vpow.pop %v5040
        %v5042 = vmul.f32 %v5016, 1.442695
        %v5043 = vpow.pop %v5042
        %v5044 = vmul.f32 %v5017, 1.442695
        %v5045 = vpow.pop %v5044
        %v5046 = vmul.f32 %v5018, 1.442695
        %v5047 = vpow.pop %v5046
        %v5048 = vmul.f32 %v5019, 1.442695
        %v5049 = vpow.pop %v5048
        %v5050 = vmul.f32 %v5020, 1.442695
        %v5051 = vpow.pop %v5050
        %v5052 = vmul.f32 %v5021, 1.442695
        %v5053 = vpow.pop %v5052
        %v5054 = vsel %vm3343, %v5023, 0.0
        %5055 = vadd.xlane.f32.xlu0 %v5054
        %v5056 = vpop.xlane.xlu0 %5055
        %v5057 = vsel %vm3343, %v5025, 0.0
        %5058 = vadd.xlane.f32.xlu0 %v5057
        %v5059 = vpop.xlane.xlu0 %5058
        %v5060 = vsel %vm3343, %v5027, 0.0
        %5061 = vadd.xlane.f32.xlu0 %v5060
        %v5062 = vpop.xlane.xlu0 %5061
        %v5063 = vsel %vm3343, %v5029, 0.0
        %5064 = vadd.xlane.f32.xlu0 %v5063
        %v5065 = vpop.xlane.xlu0 %5064
        %v5066 = vsel %vm3343, %v5031, 0.0
        %5067 = vadd.xlane.f32.xlu0 %v5066
        %v5068 = vpop.xlane.xlu0 %5067
        %v5069 = vsel %vm3343, %v5033, 0.0
        %5070 = vadd.xlane.f32.xlu0 %v5069
        %v5071 = vpop.xlane.xlu0 %5070
        %v5072 = vsel %vm3343, %v5035, 0.0
        %5073 = vadd.xlane.f32.xlu0 %v5072
        %v5074 = vpop.xlane.xlu0 %5073
        %v5075 = vsel %vm3343, %v5037, 0.0
        %5076 = vadd.xlane.f32.xlu0 %v5075
        %v5077 = vpop.xlane.xlu0 %5076
        %v5078 = vsel %vm3343, %v5039, 0.0
        %5079 = vadd.xlane.f32.xlu0 %v5078
        %v5080 = vpop.xlane.xlu0 %5079
        %v5081 = vsel %vm3343, %v5041, 0.0
        %5082 = vadd.xlane.f32.xlu0 %v5081
        %v5083 = vpop.xlane.xlu0 %5082
        %v5084 = vsel %vm3343, %v5043, 0.0
        %5085 = vadd.xlane.f32.xlu0 %v5084
        %v5086 = vpop.xlane.xlu0 %5085
        %v5087 = vsel %vm3343, %v5045, 0.0
        %5088 = vadd.xlane.f32.xlu0 %v5087
        %v5089 = vpop.xlane.xlu0 %5088
        %v5090 = vsel %vm3343, %v5047, 0.0
        %5091 = vadd.xlane.f32.xlu0 %v5090
        %v5092 = vpop.xlane.xlu0 %5091
        %v5093 = vsel %vm3343, %v5049, 0.0
        %5094 = vadd.xlane.f32.xlu0 %v5093
        %v5095 = vpop.xlane.xlu0 %5094
        %v5096 = vsel %vm3343, %v5051, 0.0
        %5097 = vadd.xlane.f32.xlu0 %v5096
        %v5098 = vpop.xlane.xlu0 %5097
        %v5099 = vsel %vm3343, %v5053, 0.0
        %5100 = vadd.xlane.f32.xlu0 %v5099
        %v5101 = vpop.xlane.xlu0 %5100
        %v5102 = vrcp.pop %v5056
        %v5103 = vrcp.pop %v5059
        %v5104 = vrcp.pop %v5062
        %v5105 = vrcp.pop %v5065
        %v5106 = vrcp.pop %v5068
        %v5107 = vrcp.pop %v5071
        %v5108 = vrcp.pop %v5074
        %v5109 = vrcp.pop %v5077
        %v5110 = vrcp.pop %v5080
        %v5111 = vrcp.pop %v5083
        %v5112 = vrcp.pop %v5086
        %v5113 = vrcp.pop %v5089
        %v5114 = vrcp.pop %v5092
        %v5115 = vrcp.pop %v5095
        %v5116 = vrcp.pop %v5098
        %v5117 = vrcp.pop %v5101
        %v5118 = vmul.f32 %v5023, %v5102
        %v5119 = vmul.f32 %v5025, %v5103
        %v5120 = vmul.f32 %v5027, %v5104
        %v5121 = vmul.f32 %v5029, %v5105
        %v5122 = vmul.f32 %v5031, %v5106
        %v5123 = vmul.f32 %v5033, %v5107
        %v5124 = vmul.f32 %v5035, %v5108
        %v5125 = vmul.f32 %v5037, %v5109
        %v5126 = vmul.f32 %v5039, %v5110
        %v5127 = vmul.f32 %v5041, %v5111
        %v5128 = vmul.f32 %v5043, %v5112
        %v5129 = vmul.f32 %v5045, %v5113
        %v5130 = vmul.f32 %v5047, %v5114
        %v5131 = vmul.f32 %v5049, %v5115
        %v5132 = vmul.f32 %v5051, %v5116
        %v5133 = vmul.f32 %v5053, %v5117
        %v5134 = vpack.c.bf16 %v5118, %v5118
        %v5135 = vpack.c.bf16 %v5119, %v5119
        %v5136 = vpack.c.bf16 %v5120, %v5120
        %v5137 = vpack.c.bf16 %v5121, %v5121
        %v5138 = vpack.c.bf16 %v5122, %v5122
        %v5139 = vpack.c.bf16 %v5123, %v5123
        %v5140 = vpack.c.bf16 %v5124, %v5124
        %v5141 = vpack.c.bf16 %v5125, %v5125
        %v5142 = vpack.c.bf16 %v5126, %v5126
        %v5143 = vpack.c.bf16 %v5127, %v5127
        %v5144 = vpack.c.bf16 %v5128, %v5128
        %v5145 = vpack.c.bf16 %v5129, %v5129
        %v5146 = vpack.c.bf16 %v5130, %v5130
        %v5147 = vpack.c.bf16 %v5131, %v5131
        %v5148 = vpack.c.bf16 %v5132, %v5132
        %v5149 = vpack.c.bf16 %v5133, %v5133
        %v5150 = vrot.slane %v3102, 4
        %v5151 = vrot.slane %v3104, 4
        %v5152 = vrot.slane %v3106, 4
        %v5153 = vrot.slane %v3108, 4
        %v5158 = vunpack.c.l.b16 %v5134
        %v5159 = vunpack.c.l.b16 %v5135
        %v5160 = vunpack.c.l.b16 %v5136
        %v5161 = vunpack.c.l.b16 %v5137
        %v5162 = vpack.c.b16 %v5159, %v5158
        %v5163 = vpack.c.b16 %v5161, %v5160
        %v5164 = vunpack.c.l.b16 %v5150
        %v5165 = vunpack.c.l.b16 %v5151
        %v5166 = vunpack.c.l.b16 %v5152
        %v5167 = vunpack.c.l.b16 %v5153
        %v5168 = vpack.c.b16 %v5165, %v5164
        %v5169 = vpack.c.b16 %v5167, %v5166
        %v5173 = vsel %vm3343, %v5162, 0
        %v5176 = vsel %vm3343, %v5163, 0
        %5178 = vmatpush.bf16.msra.mxu0 0
        %5179 = vmatpush.bf16.msra.mxu0 0
        %5180 = vmatpush.bf16.msra.mxu0 0
        %5181 = vmatpush.bf16.msra.mxu0 0
        %5182 = vmatpush.bf16.msra.mxu0 0
        %5183 = vmatpush.bf16.msra.mxu0 0
        %5184 = vmatpush.bf16.msra.mxu0 %v5169
        %5185 = vmatpush.bf16.msra.mxu0 %v5168
        %5186 = vmatmul.bf16.gmra.mxu0 %v5173
        %v5187 = vpop.f32.mrf.mxu0
        %v5188 = vadd.f32 0.0, %v5187
        %v5189 = vpop.f32.mrf.mxu0
        %v5190 = vadd.f32 0.0, %v5189
        %5191 = vmatmul.bf16.gmra.mxu0 %v5176
        %v5192 = vpop.f32.mrf.mxu0
        %v5193 = vadd.f32 0.0, %v5192
        %v5194 = vpop.f32.mrf.mxu0
        %v5195 = vadd.f32 0.0, %v5194
        %5196 = vdwg.mxu0
        %v5197 = vrot.slane %v3110, 4
        %v5198 = vrot.slane %v3112, 4
        %v5199 = vrot.slane %v3114, 4
        %v5200 = vrot.slane %v3116, 4
        %v5205 = vunpack.c.l.b16 %v5138
        %v5206 = vunpack.c.l.b16 %v5139
        %v5207 = vunpack.c.l.b16 %v5140
        %v5208 = vunpack.c.l.b16 %v5141
        %v5209 = vpack.c.b16 %v5206, %v5205
        %v5210 = vpack.c.b16 %v5208, %v5207
        %v5211 = vunpack.c.l.b16 %v5197
        %v5212 = vunpack.c.l.b16 %v5198
        %v5213 = vunpack.c.l.b16 %v5199
        %v5214 = vunpack.c.l.b16 %v5200
        %v5215 = vpack.c.b16 %v5212, %v5211
        %v5216 = vpack.c.b16 %v5214, %v5213
        %v5220 = vsel %vm3343, %v5209, 0
        %v5223 = vsel %vm3343, %v5210, 0
        %5225 = vmatpush.bf16.msra.mxu0 0
        %5226 = vmatpush.bf16.msra.mxu0 0
        %5227 = vmatpush.bf16.msra.mxu0 0
        %5228 = vmatpush.bf16.msra.mxu0 0
        %5229 = vmatpush.bf16.msra.mxu0 0
        %5230 = vmatpush.bf16.msra.mxu0 0
        %5231 = vmatpush.bf16.msra.mxu0 %v5216
        %5232 = vmatpush.bf16.msra.mxu0 %v5215
        %5233 = vmatmul.bf16.gmra.mxu0 %v5220
        %v5234 = vpop.f32.mrf.mxu0
        %v5235 = vadd.f32 0.0, %v5234
        %v5236 = vpop.f32.mrf.mxu0
        %v5237 = vadd.f32 0.0, %v5236
        %5238 = vmatmul.bf16.gmra.mxu0 %v5223
        %v5239 = vpop.f32.mrf.mxu0
        %v5240 = vadd.f32 0.0, %v5239
        %v5241 = vpop.f32.mrf.mxu0
        %v5242 = vadd.f32 0.0, %v5241
        %5243 = vdwg.mxu0
        %v5244 = vrot.slane %v3118, 4
        %v5245 = vrot.slane %v3120, 4
        %v5246 = vrot.slane %v3122, 4
        %v5247 = vrot.slane %v3124, 4
        %v5252 = vunpack.c.l.b16 %v5142
        %v5253 = vunpack.c.l.b16 %v5143
        %v5254 = vunpack.c.l.b16 %v5144
        %v5255 = vunpack.c.l.b16 %v5145
        %v5256 = vpack.c.b16 %v5253, %v5252
        %v5257 = vpack.c.b16 %v5255, %v5254
        %v5258 = vunpack.c.l.b16 %v5244
        %v5259 = vunpack.c.l.b16 %v5245
        %v5260 = vunpack.c.l.b16 %v5246
        %v5261 = vunpack.c.l.b16 %v5247
        %v5262 = vpack.c.b16 %v5259, %v5258
        %v5263 = vpack.c.b16 %v5261, %v5260
        %v5267 = vsel %vm3343, %v5256, 0
        %v5270 = vsel %vm3343, %v5257, 0
        %5272 = vmatpush.bf16.msra.mxu0 0
        %5273 = vmatpush.bf16.msra.mxu0 0
        %5274 = vmatpush.bf16.msra.mxu0 0
        %5275 = vmatpush.bf16.msra.mxu0 0
        %5276 = vmatpush.bf16.msra.mxu0 0
        %5277 = vmatpush.bf16.msra.mxu0 0
        %5278 = vmatpush.bf16.msra.mxu0 %v5263
        %5279 = vmatpush.bf16.msra.mxu0 %v5262
        %5280 = vmatmul.bf16.gmra.mxu0 %v5267
        %v5281 = vpop.f32.mrf.mxu0
        %v5282 = vadd.f32 0.0, %v5281
        %v5283 = vpop.f32.mrf.mxu0
        %v5284 = vadd.f32 0.0, %v5283
        %5285 = vmatmul.bf16.gmra.mxu0 %v5270
        %v5286 = vpop.f32.mrf.mxu0
        %v5287 = vadd.f32 0.0, %v5286
        %v5288 = vpop.f32.mrf.mxu0
        %v5289 = vadd.f32 0.0, %v5288
        %5290 = vdwg.mxu0
        %v5291 = vrot.slane %v3126, 4
        %v5292 = vrot.slane %v3128, 4
        %v5293 = vrot.slane %v3130, 4
        %v5294 = vrot.slane %v3132, 4
        %v5299 = vunpack.c.l.b16 %v5146
        %v5300 = vunpack.c.l.b16 %v5147
        %v5301 = vunpack.c.l.b16 %v5148
        %v5302 = vunpack.c.l.b16 %v5149
        %v5303 = vpack.c.b16 %v5300, %v5299
        %v5304 = vpack.c.b16 %v5302, %v5301
        %v5305 = vunpack.c.l.b16 %v5291
        %v5306 = vunpack.c.l.b16 %v5292
        %v5307 = vunpack.c.l.b16 %v5293
        %v5308 = vunpack.c.l.b16 %v5294
        %v5309 = vpack.c.b16 %v5306, %v5305
        %v5310 = vpack.c.b16 %v5308, %v5307
        %v5314 = vsel %vm3343, %v5303, 0
        %v5317 = vsel %vm3343, %v5304, 0
        %5319 = vmatpush.bf16.msra.mxu0 0
        %5320 = vmatpush.bf16.msra.mxu0 0
        %5321 = vmatpush.bf16.msra.mxu0 0
        %5322 = vmatpush.bf16.msra.mxu0 0
        %5323 = vmatpush.bf16.msra.mxu0 0
        %5324 = vmatpush.bf16.msra.mxu0 0
        %5325 = vmatpush.bf16.msra.mxu0 %v5310
        %5326 = vmatpush.bf16.msra.mxu0 %v5309
        %5327 = vmatmul.bf16.gmra.mxu0 %v5314
        %v5328 = vpop.f32.mrf.mxu0
        %v5329 = vadd.f32 0.0, %v5328
        %v5330 = vpop.f32.mrf.mxu0
        %v5331 = vadd.f32 0.0, %v5330
        %5332 = vmatmul.bf16.gmra.mxu0 %v5317
        %v5333 = vpop.f32.mrf.mxu0
        %v5334 = vadd.f32 0.0, %v5333
        %v5335 = vpop.f32.mrf.mxu0
        %v5336 = vadd.f32 0.0, %v5335
        %5337 = vdwg.mxu0
        %v5338 = vpack.c.bf16 %v5190, %v5188
        %v5339 = vpack.c.bf16 %v5195, %v5193
        %v5340 = vpack.c.bf16 %v5237, %v5235
        %v5341 = vpack.c.bf16 %v5242, %v5240
        %v5342 = vpack.c.bf16 %v5284, %v5282
        %v5343 = vpack.c.bf16 %v5289, %v5287
        %v5344 = vpack.c.bf16 %v5331, %v5329
        %v5345 = vpack.c.bf16 %v5336, %v5334
        %v5346 = vld [vmem:[#allocation8 + $0xc0] sm:$0xff]
        %v5347 = vld [vmem:[#allocation8 + $0xc8] sm:$0xf]
        %v5348 = vld [vmem:[#allocation8 + $0xcc] sm:$0xff]
        %v5349 = vld [vmem:[#allocation8 + $0xd4] sm:$0xf]
        %v5350 = vld [vmem:[#allocation8 + $0xd8] sm:$0xff]
        %v5351 = vld [vmem:[#allocation8 + $0xe0] sm:$0xf]
        %v5352 = vld [vmem:[#allocation8 + $0xe4] sm:$0xff]
        %v5353 = vld [vmem:[#allocation8 + $0xec] sm:$0xf]
        %v5354 = vld [vmem:[#allocation8 + $0xf0] sm:$0xff]
        %v5355 = vld [vmem:[#allocation8 + $0xf8] sm:$0xf]
        %v5356 = vld [vmem:[#allocation8 + $0xfc] sm:$0xff]
        %v5357 = vld [vmem:[#allocation8 + $0x104] sm:$0xf]
        %v5358 = vld [vmem:[#allocation8 + $0x108] sm:$0xff]
        %v5359 = vld [vmem:[#allocation8 + $0x110] sm:$0xf]
        %v5360 = vld [vmem:[#allocation8 + $0x114] sm:$0xff]
        %v5361 = vld [vmem:[#allocation8 + $0x11c] sm:$0xf]
        %v5378 = vunpack.c.l.b16 %v5346
        %v5379 = vunpack.c.h.b16 %v5346
        %v5380 = vunpack.c.l.b16 %v5347
        %v5381 = vunpack.c.l.b16 %v5348
        %v5382 = vunpack.c.h.b16 %v5348
        %v5383 = vunpack.c.l.b16 %v5349
        %v5384 = vunpack.c.l.b16 %v5350
        %v5385 = vunpack.c.h.b16 %v5350
        %v5386 = vunpack.c.l.b16 %v5351
        %v5387 = vunpack.c.l.b16 %v5352
        %v5388 = vunpack.c.h.b16 %v5352
        %v5389 = vunpack.c.l.b16 %v5353
        %v5390 = vunpack.c.l.b16 %v5354
        %v5391 = vunpack.c.h.b16 %v5354
        %v5392 = vunpack.c.l.b16 %v5355
        %v5393 = vunpack.c.l.b16 %v5356
        %v5394 = vunpack.c.h.b16 %v5356
        %v5395 = vunpack.c.l.b16 %v5357
        %v5396 = vunpack.c.l.b16 %v5358
        %v5397 = vunpack.c.h.b16 %v5358
        %v5398 = vunpack.c.l.b16 %v5359
        %v5399 = vunpack.c.l.b16 %v5360
        %v5400 = vunpack.c.h.b16 %v5360
        %v5401 = vunpack.c.l.b16 %v5361
        %v5402 = vpack.c.b16 %v5381, %v5378
        %v5403 = vpack.c.b16 %v5382, %v5379
        %v5404 = vpack.c.b16 %v5383, %v5380
        %v5405 = vpack.c.b16 %v5387, %v5384
        %v5406 = vpack.c.b16 %v5388, %v5385
        %v5407 = vpack.c.b16 %v5389, %v5386
        %v5408 = vpack.c.b16 %v5393, %v5390
        %v5409 = vpack.c.b16 %v5394, %v5391
        %v5410 = vpack.c.b16 %v5395, %v5392
        %v5411 = vpack.c.b16 %v5399, %v5396
        %v5412 = vpack.c.b16 %v5400, %v5397
        %v5413 = vpack.c.b16 %v5401, %v5398
        %v5427 = vsel %vm3158, %v5338, 0
        %v5430 = vsel %vm3158, %v5339, 0
        %v5433 = vsel %vm3158, %v5340, 0
        %v5436 = vsel %vm3158, %v5341, 0
        %v5439 = vsel %vm3158, %v5342, 0
        %v5442 = vsel %vm3158, %v5343, 0
        %v5445 = vsel %vm3158, %v5344, 0
        %v5448 = vsel %vm3158, %v5345, 0
        %5450 = vmatpush.bf16.msra.mxu0 0
        %5451 = vmatpush.bf16.msra.mxu0 0
        %5452 = vmatpush.bf16.msra.mxu0 0
        %5453 = vmatpush.bf16.msra.mxu0 0
        %5454 = vmatpush.bf16.msra.mxu0 %v5411
        %5455 = vmatpush.bf16.msra.mxu0 %v5408
        %5456 = vmatpush.bf16.msra.mxu0 %v5405
        %5457 = vmatpush.bf16.msra.mxu0 %v5402
        %5458 = vmatmul.bf16.gmra.mxu0 %v5427
        %v5459 = vpop.f32.mrf.mxu0
        %v5460 = vadd.f32 0.0, %v5459
        %v5461 = vpop.f32.mrf.mxu0
        %v5462 = vadd.f32 0.0, %v5461
        %5463 = vmatmul.bf16.gmra.mxu0 %v5430
        %v5464 = vpop.f32.mrf.mxu0
        %v5465 = vadd.f32 0.0, %v5464
        %v5466 = vpop.f32.mrf.mxu0
        %v5467 = vadd.f32 0.0, %v5466
        %5468 = vmatmul.bf16.gmra.mxu0 %v5433
        %v5469 = vpop.f32.mrf.mxu0
        %v5470 = vadd.f32 0.0, %v5469
        %v5471 = vpop.f32.mrf.mxu0
        %v5472 = vadd.f32 0.0, %v5471
        %5473 = vmatmul.bf16.gmra.mxu0 %v5436
        %v5474 = vpop.f32.mrf.mxu0
        %v5475 = vadd.f32 0.0, %v5474
        %v5476 = vpop.f32.mrf.mxu0
        %v5477 = vadd.f32 0.0, %v5476
        %5478 = vmatmul.bf16.gmra.mxu0 %v5439
        %v5479 = vpop.f32.mrf.mxu0
        %v5480 = vadd.f32 0.0, %v5479
        %v5481 = vpop.f32.mrf.mxu0
        %v5482 = vadd.f32 0.0, %v5481
        %5483 = vmatmul.bf16.gmra.mxu0 %v5442
        %v5484 = vpop.f32.mrf.mxu0
        %v5485 = vadd.f32 0.0, %v5484
        %v5486 = vpop.f32.mrf.mxu0
        %v5487 = vadd.f32 0.0, %v5486
        %5488 = vmatmul.bf16.gmra.mxu0 %v5445
        %v5489 = vpop.f32.mrf.mxu0
        %v5490 = vadd.f32 0.0, %v5489
        %v5491 = vpop.f32.mrf.mxu0
        %v5492 = vadd.f32 0.0, %v5491
        %5493 = vmatmul.bf16.gmra.mxu0 %v5448
        %v5494 = vpop.f32.mrf.mxu0
        %v5495 = vadd.f32 0.0, %v5494
        %v5496 = vpop.f32.mrf.mxu0
        %v5497 = vadd.f32 0.0, %v5496
        %5498 = vdwg.mxu0
        %5499 = vmatpush.bf16.msra.mxu0 0
        %5500 = vmatpush.bf16.msra.mxu0 0
        %5501 = vmatpush.bf16.msra.mxu0 0
        %5502 = vmatpush.bf16.msra.mxu0 0
        %5503 = vmatpush.bf16.msra.mxu0 %v5412
        %5504 = vmatpush.bf16.msra.mxu0 %v5409
        %5505 = vmatpush.bf16.msra.mxu0 %v5406
        %5506 = vmatpush.bf16.msra.mxu0 %v5403
        %5507 = vmatmul.bf16.gmra.mxu0 %v5427
        %v5508 = vpop.f32.mrf.mxu0
        %v5509 = vadd.f32 0.0, %v5508
        %v5510 = vpop.f32.mrf.mxu0
        %v5511 = vadd.f32 0.0, %v5510
        %5512 = vmatmul.bf16.gmra.mxu0 %v5430
        %v5513 = vpop.f32.mrf.mxu0
        %v5514 = vadd.f32 0.0, %v5513
        %v5515 = vpop.f32.mrf.mxu0
        %v5516 = vadd.f32 0.0, %v5515
        %5517 = vmatmul.bf16.gmra.mxu0 %v5433
        %v5518 = vpop.f32.mrf.mxu0
        %v5519 = vadd.f32 0.0, %v5518
        %v5520 = vpop.f32.mrf.mxu0
        %v5521 = vadd.f32 0.0, %v5520
        %5522 = vmatmul.bf16.gmra.mxu0 %v5436
        %v5523 = vpop.f32.mrf.mxu0
        %v5524 = vadd.f32 0.0, %v5523
        %v5525 = vpop.f32.mrf.mxu0
        %v5526 = vadd.f32 0.0, %v5525
        %5527 = vmatmul.bf16.gmra.mxu0 %v5439
        %v5528 = vpop.f32.mrf.mxu0
        %v5529 = vadd.f32 0.0, %v5528
        %v5530 = vpop.f32.mrf.mxu0
        %v5531 = vadd.f32 0.0, %v5530
        %5532 = vmatmul.bf16.gmra.mxu0 %v5442
        %v5533 = vpop.f32.mrf.mxu0
        %v5534 = vadd.f32 0.0, %v5533
        %v5535 = vpop.f32.mrf.mxu0
        %v5536 = vadd.f32 0.0, %v5535
        %5537 = vmatmul.bf16.gmra.mxu0 %v5445
        %v5538 = vpop.f32.mrf.mxu0
        %v5539 = vadd.f32 0.0, %v5538
        %v5540 = vpop.f32.mrf.mxu0
        %v5541 = vadd.f32 0.0, %v5540
        %5542 = vmatmul.bf16.gmra.mxu0 %v5448
        %v5543 = vpop.f32.mrf.mxu0
        %v5544 = vadd.f32 0.0, %v5543
        %v5545 = vpop.f32.mrf.mxu0
        %v5546 = vadd.f32 0.0, %v5545
        %5547 = vdwg.mxu0
        %5548 = vmatpush.bf16.msra.mxu0 0
        %5549 = vmatpush.bf16.msra.mxu0 0
        %5550 = vmatpush.bf16.msra.mxu0 0
        %5551 = vmatpush.bf16.msra.mxu0 0
        %5552 = vmatpush.bf16.msra.mxu0 %v5413
        %5553 = vmatpush.bf16.msra.mxu0 %v5410
        %5554 = vmatpush.bf16.msra.mxu0 %v5407
        %5555 = vmatpush.bf16.msra.mxu0 %v5404
        %5556 = vmatmul.bf16.gmra.mxu0 %v5427
        %v5557 = vpop.f32.mrf.mxu0
        %v5558 = vadd.f32 0.0, %v5557
        %v5559 = vpop.f32.mrf.mxu0
        %v5560 = vadd.f32 0.0, %v5559
        %5561 = vmatmul.bf16.gmra.mxu0 %v5430
        %v5562 = vpop.f32.mrf.mxu0
        %v5563 = vadd.f32 0.0, %v5562
        %v5564 = vpop.f32.mrf.mxu0
        %v5565 = vadd.f32 0.0, %v5564
        %5566 = vmatmul.bf16.gmra.mxu0 %v5433
        %v5567 = vpop.f32.mrf.mxu0
        %v5568 = vadd.f32 0.0, %v5567
        %v5569 = vpop.f32.mrf.mxu0
        %v5570 = vadd.f32 0.0, %v5569
        %5571 = vmatmul.bf16.gmra.mxu0 %v5436
        %v5572 = vpop.f32.mrf.mxu0
        %v5573 = vadd.f32 0.0, %v5572
        %v5574 = vpop.f32.mrf.mxu0
        %v5575 = vadd.f32 0.0, %v5574
        %5576 = vmatmul.bf16.gmra.mxu0 %v5439
        %v5577 = vpop.f32.mrf.mxu0
        %v5578 = vadd.f32 0.0, %v5577
        %v5579 = vpop.f32.mrf.mxu0
        %v5580 = vadd.f32 0.0, %v5579
        %5581 = vmatmul.bf16.gmra.mxu0 %v5442
        %v5582 = vpop.f32.mrf.mxu0
        %v5583 = vadd.f32 0.0, %v5582
        %v5584 = vpop.f32.mrf.mxu0
        %v5585 = vadd.f32 0.0, %v5584
        %5586 = vmatmul.bf16.gmra.mxu0 %v5445
        %v5587 = vpop.f32.mrf.mxu0
        %v5588 = vadd.f32 0.0, %v5587
        %v5589 = vpop.f32.mrf.mxu0
        %v5590 = vadd.f32 0.0, %v5589
        %5591 = vmatmul.bf16.gmra.mxu0 %v5448
        %v5592 = vpop.f32.mrf.mxu0
        %v5593 = vadd.f32 0.0, %v5592
        %v5594 = vpop.f32.mrf.mxu0
        %v5595 = vadd.f32 0.0, %v5594
        %5596 = vdwg.mxu0
        %v5597 = vadd.f32 %v4617, %v5460
        %v5598 = vadd.f32 %v4666, %v5509
        %v5599 = vadd.f32 %v4715, %v5558
        %v5600 = vadd.f32 %v4619, %v5462
        %v5601 = vadd.f32 %v4668, %v5511
        %v5602 = vadd.f32 %v4717, %v5560
        %v5603 = vadd.f32 %v4622, %v5465
        %v5604 = vadd.f32 %v4671, %v5514
        %v5605 = vadd.f32 %v4720, %v5563
        %v5606 = vadd.f32 %v4624, %v5467
        %v5607 = vadd.f32 %v4673, %v5516
        %v5608 = vadd.f32 %v4722, %v5565
        %v5609 = vadd.f32 %v4627, %v5470
        %v5610 = vadd.f32 %v4676, %v5519
        %v5611 = vadd.f32 %v4725, %v5568
        %v5612 = vadd.f32 %v4629, %v5472
        %v5613 = vadd.f32 %v4678, %v5521
        %v5614 = vadd.f32 %v4727, %v5570
        %v5615 = vadd.f32 %v4632, %v5475
        %v5616 = vadd.f32 %v4681, %v5524
        %v5617 = vadd.f32 %v4730, %v5573
        %v5618 = vadd.f32 %v4634, %v5477
        %v5619 = vadd.f32 %v4683, %v5526
        %v5620 = vadd.f32 %v4732, %v5575
        %v5621 = vadd.f32 %v4637, %v5480
        %v5622 = vadd.f32 %v4686, %v5529
        %v5623 = vadd.f32 %v4735, %v5578
        %v5624 = vadd.f32 %v4639, %v5482
        %v5625 = vadd.f32 %v4688, %v5531
        %v5626 = vadd.f32 %v4737, %v5580
        %v5627 = vadd.f32 %v4642, %v5485
        %v5628 = vadd.f32 %v4691, %v5534
        %v5629 = vadd.f32 %v4740, %v5583
        %v5630 = vadd.f32 %v4644, %v5487
        %v5631 = vadd.f32 %v4693, %v5536
        %v5632 = vadd.f32 %v4742, %v5585
        %v5633 = vadd.f32 %v4647, %v5490
        %v5634 = vadd.f32 %v4696, %v5539
        %v5635 = vadd.f32 %v4745, %v5588
        %v5636 = vadd.f32 %v4649, %v5492
        %v5637 = vadd.f32 %v4698, %v5541
        %v5638 = vadd.f32 %v4747, %v5590
        %v5639 = vadd.f32 %v4652, %v5495
        %v5640 = vadd.f32 %v4701, %v5544
        %v5641 = vadd.f32 %v4750, %v5593
        %v5642 = vadd.f32 %v4654, %v5497
        %v5643 = vadd.f32 %v4703, %v5546
        %v5644 = vadd.f32 %v4752, %v5595
        %5645 = vrot.lane.b32.xlu0 %v3038, 64
        %v5646 = vpop.permute.xlu0 %5645
        %5647 = vrot.lane.b32.xlu0 %v3040, 64
        %v5648 = vpop.permute.xlu0 %5647
        %5649 = vrot.lane.b32.xlu0 %v3042, 64
        %v5650 = vpop.permute.xlu0 %5649
        %5651 = vrot.lane.b32.xlu0 %v3044, 64
        %v5652 = vpop.permute.xlu0 %5651
        %v5653 = vrot.slane %v5646, 4
        %v5654 = vrot.slane %v5648, 4
        %v5655 = vrot.slane %v5650, 4
        %v5656 = vrot.slane %v5652, 4
        %5657 = vrot.lane.b32.xlu0 %v3070, 64
        %v5658 = vpop.permute.xlu0 %5657
        %5659 = vrot.lane.b32.xlu0 %v3072, 64
        %v5660 = vpop.permute.xlu0 %5659
        %5661 = vrot.lane.b32.xlu0 %v3074, 64
        %v5662 = vpop.permute.xlu0 %5661
        %5663 = vrot.lane.b32.xlu0 %v3076, 64
        %v5664 = vpop.permute.xlu0 %5663
        %v5665 = vrot.slane %v5658, 4
        %v5666 = vrot.slane %v5660, 4
        %v5667 = vrot.slane %v5662, 4
        %v5668 = vrot.slane %v5664, 4
        %v5669 = vunpack.c.l.b16 %v5653
        %v5670 = vunpack.c.l.b16 %v5654
        %v5671 = vunpack.c.l.b16 %v5655
        %v5672 = vunpack.c.l.b16 %v5656
        %v5673 = vpack.c.b16 %v5670, %v5669
        %v5674 = vpack.c.b16 %v5672, %v5671
        %v5675 = vunpack.c.l.b16 %v5665
        %v5676 = vunpack.c.l.b16 %v5666
        %v5677 = vunpack.c.l.b16 %v5667
        %v5678 = vunpack.c.l.b16 %v5668
        %v5679 = vpack.c.b16 %v5676, %v5675
        %v5680 = vpack.c.b16 %v5678, %v5677
        %v5682 = vsel %vm3158, %v5673, 0
        %v5685 = vsel %vm3158, %v5674, 0
        %v5688 = vsel %vm3158, %v5679, 0
        %v5691 = vsel %vm3158, %v5680, 0
        %5693 = vmatpush.bf16.xpose.msra.mxu0 0
        %5694 = vmatpush.bf16.xpose.msra.mxu0 0
        %5695 = vmatpush.bf16.xpose.msra.mxu0 0
        %5696 = vmatpush.bf16.xpose.msra.mxu0 0
        %5697 = vmatpush.bf16.xpose.msra.mxu0 0
        %5698 = vmatpush.bf16.xpose.msra.mxu0 0
        %5699 = vmatpush.bf16.xpose.msra.mxu0 %v5691
        %5700 = vmatpush.bf16.xpose.msra.mxu0 %v5688
        %5701 = vmatmul.bf16.gmra.mxu0 %v5682
        %v5702 = vpop.f32.mrf.mxu0
        %v5703 = vadd.f32 %v3134, %v5702
        %v5704 = vpop.f32.mrf.mxu0
        %v5705 = vadd.f32 %v3135, %v5704
        %5706 = vmatmul.bf16.gmra.mxu0 %v5685
        %v5707 = vpop.f32.mrf.mxu0
        %v5708 = vadd.f32 %v3136, %v5707
        %v5709 = vpop.f32.mrf.mxu0
        %v5710 = vadd.f32 %v3137, %v5709
        %5711 = vdwg.mxu0
        %5712 = vrot.lane.b32.xlu0 %v3046, 64
        %v5713 = vpop.permute.xlu0 %5712
        %5714 = vrot.lane.b32.xlu0 %v3048, 64
        %v5715 = vpop.permute.xlu0 %5714
        %5716 = vrot.lane.b32.xlu0 %v3050, 64
        %v5717 = vpop.permute.xlu0 %5716
        %5718 = vrot.lane.b32.xlu0 %v3052, 64
        %v5719 = vpop.permute.xlu0 %5718
        %v5720 = vrot.slane %v5713, 4
        %v5721 = vrot.slane %v5715, 4
        %v5722 = vrot.slane %v5717, 4
        %v5723 = vrot.slane %v5719, 4
        %5724 = vrot.lane.b32.xlu0 %v3078, 64
        %v5725 = vpop.permute.xlu0 %5724
        %5726 = vrot.lane.b32.xlu0 %v3080, 64
        %v5727 = vpop.permute.xlu0 %5726
        %5728 = vrot.lane.b32.xlu0 %v3082, 64
        %v5729 = vpop.permute.xlu0 %5728
        %5730 = vrot.lane.b32.xlu0 %v3084, 64
        %v5731 = vpop.permute.xlu0 %5730
        %v5732 = vrot.slane %v5725, 4
        %v5733 = vrot.slane %v5727, 4
        %v5734 = vrot.slane %v5729, 4
        %v5735 = vrot.slane %v5731, 4
        %v5736 = vunpack.c.l.b16 %v5720
        %v5737 = vunpack.c.l.b16 %v5721
        %v5738 = vunpack.c.l.b16 %v5722
        %v5739 = vunpack.c.l.b16 %v5723
        %v5740 = vpack.c.b16 %v5737, %v5736
        %v5741 = vpack.c.b16 %v5739, %v5738
        %v5742 = vunpack.c.l.b16 %v5732
        %v5743 = vunpack.c.l.b16 %v5733
        %v5744 = vunpack.c.l.b16 %v5734
        %v5745 = vunpack.c.l.b16 %v5735
        %v5746 = vpack.c.b16 %v5743, %v5742
        %v5747 = vpack.c.b16 %v5745, %v5744
        %v5749 = vsel %vm3158, %v5740, 0
        %v5752 = vsel %vm3158, %v5741, 0
        %v5755 = vsel %vm3158, %v5746, 0
        %v5758 = vsel %vm3158, %v5747, 0
        %5760 = vmatpush.bf16.xpose.msra.mxu0 0
        %5761 = vmatpush.bf16.xpose.msra.mxu0 0
        %5762 = vmatpush.bf16.xpose.msra.mxu0 0
        %5763 = vmatpush.bf16.xpose.msra.mxu0 0
        %5764 = vmatpush.bf16.xpose.msra.mxu0 0
        %5765 = vmatpush.bf16.xpose.msra.mxu0 0
        %5766 = vmatpush.bf16.xpose.msra.mxu0 %v5758
        %5767 = vmatpush.bf16.xpose.msra.mxu0 %v5755
        %5768 = vmatmul.bf16.gmra.mxu0 %v5749
        %v5769 = vpop.f32.mrf.mxu0
        %v5770 = vadd.f32 %v3134, %v5769
        %v5771 = vpop.f32.mrf.mxu0
        %v5772 = vadd.f32 %v3135, %v5771
        %5773 = vmatmul.bf16.gmra.mxu0 %v5752
        %v5774 = vpop.f32.mrf.mxu0
        %v5775 = vadd.f32 %v3136, %v5774
        %v5776 = vpop.f32.mrf.mxu0
        %v5777 = vadd.f32 %v3137, %v5776
        %5778 = vdwg.mxu0
        %5779 = vrot.lane.b32.xlu0 %v3054, 64
        %v5780 = vpop.permute.xlu0 %5779
        %5781 = vrot.lane.b32.xlu0 %v3056, 64
        %v5782 = vpop.permute.xlu0 %5781
        %5783 = vrot.lane.b32.xlu0 %v3058, 64
        %v5784 = vpop.permute.xlu0 %5783
        %5785 = vrot.lane.b32.xlu0 %v3060, 64
        %v5786 = vpop.permute.xlu0 %5785
        %v5787 = vrot.slane %v5780, 4
        %v5788 = vrot.slane %v5782, 4
        %v5789 = vrot.slane %v5784, 4
        %v5790 = vrot.slane %v5786, 4
        %5791 = vrot.lane.b32.xlu0 %v3086, 64
        %v5792 = vpop.permute.xlu0 %5791
        %5793 = vrot.lane.b32.xlu0 %v3088, 64
        %v5794 = vpop.permute.xlu0 %5793
        %5795 = vrot.lane.b32.xlu0 %v3090, 64
        %v5796 = vpop.permute.xlu0 %5795
        %5797 = vrot.lane.b32.xlu0 %v3092, 64
        %v5798 = vpop.permute.xlu0 %5797
        %v5799 = vrot.slane %v5792, 4
        %v5800 = vrot.slane %v5794, 4
        %v5801 = vrot.slane %v5796, 4
        %v5802 = vrot.slane %v5798, 4
        %v5803 = vunpack.c.l.b16 %v5787
        %v5804 = vunpack.c.l.b16 %v5788
        %v5805 = vunpack.c.l.b16 %v5789
        %v5806 = vunpack.c.l.b16 %v5790
        %v5807 = vpack.c.b16 %v5804, %v5803
        %v5808 = vpack.c.b16 %v5806, %v5805
        %v5809 = vunpack.c.l.b16 %v5799
        %v5810 = vunpack.c.l.b16 %v5800
        %v5811 = vunpack.c.l.b16 %v5801
        %v5812 = vunpack.c.l.b16 %v5802
        %v5813 = vpack.c.b16 %v5810, %v5809
        %v5814 = vpack.c.b16 %v5812, %v5811
        %v5816 = vsel %vm3158, %v5807, 0
        %v5819 = vsel %vm3158, %v5808, 0
        %v5822 = vsel %vm3158, %v5813, 0
        %v5825 = vsel %vm3158, %v5814, 0
        %5827 = vmatpush.bf16.xpose.msra.mxu0 0
        %5828 = vmatpush.bf16.xpose.msra.mxu0 0
        %5829 = vmatpush.bf16.xpose.msra.mxu0 0
        %5830 = vmatpush.bf16.xpose.msra.mxu0 0
        %5831 = vmatpush.bf16.xpose.msra.mxu0 0
        %5832 = vmatpush.bf16.xpose.msra.mxu0 0
        %5833 = vmatpush.bf16.xpose.msra.mxu0 %v5825
        %5834 = vmatpush.bf16.xpose.msra.mxu0 %v5822
        %5835 = vmatmul.bf16.gmra.mxu0 %v5816
        %v5836 = vpop.f32.mrf.mxu0
        %v5837 = vadd.f32 %v3134, %v5836
        %v5838 = vpop.f32.mrf.mxu0
        %v5839 = vadd.f32 %v3135, %v5838
        %5840 = vmatmul.bf16.gmra.mxu0 %v5819
        %v5841 = vpop.f32.mrf.mxu0
        %v5842 = vadd.f32 %v3136, %v5841
        %v5843 = vpop.f32.mrf.mxu0
        %v5844 = vadd.f32 %v3137, %v5843
        %5845 = vdwg.mxu0
        %5846 = vrot.lane.b32.xlu0 %v3062, 64
        %v5847 = vpop.permute.xlu0 %5846
        %5848 = vrot.lane.b32.xlu0 %v3064, 64
        %v5849 = vpop.permute.xlu0 %5848
        %5850 = vrot.lane.b32.xlu0 %v3066, 64
        %v5851 = vpop.permute.xlu0 %5850
        %5852 = vrot.lane.b32.xlu0 %v3068, 64
        %v5853 = vpop.permute.xlu0 %5852
        %v5854 = vrot.slane %v5847, 4
        %v5855 = vrot.slane %v5849, 4
        %v5856 = vrot.slane %v5851, 4
        %v5857 = vrot.slane %v5853, 4
        %5858 = vrot.lane.b32.xlu0 %v3094, 64
        %v5859 = vpop.permute.xlu0 %5858
        %5860 = vrot.lane.b32.xlu0 %v3096, 64
        %v5861 = vpop.permute.xlu0 %5860
        %5862 = vrot.lane.b32.xlu0 %v3098, 64
        %v5863 = vpop.permute.xlu0 %5862
        %5864 = vrot.lane.b32.xlu0 %v3100, 64
        %v5865 = vpop.permute.xlu0 %5864
        %v5866 = vrot.slane %v5859, 4
        %v5867 = vrot.slane %v5861, 4
        %v5868 = vrot.slane %v5863, 4
        %v5869 = vrot.slane %v5865, 4
        %v5870 = vunpack.c.l.b16 %v5854
        %v5871 = vunpack.c.l.b16 %v5855
        %v5872 = vunpack.c.l.b16 %v5856
        %v5873 = vunpack.c.l.b16 %v5857
        %v5874 = vpack.c.b16 %v5871, %v5870
        %v5875 = vpack.c.b16 %v5873, %v5872
        %v5876 = vunpack.c.l.b16 %v5866
        %v5877 = vunpack.c.l.b16 %v5867
        %v5878 = vunpack.c.l.b16 %v5868
        %v5879 = vunpack.c.l.b16 %v5869
        %v5880 = vpack.c.b16 %v5877, %v5876
        %v5881 = vpack.c.b16 %v5879, %v5878
        %v5883 = vsel %vm3158, %v5874, 0
        %v5886 = vsel %vm3158, %v5875, 0
        %v5889 = vsel %vm3158, %v5880, 0
        %v5892 = vsel %vm3158, %v5881, 0
        %5894 = vmatpush.bf16.xpose.msra.mxu0 0
        %5895 = vmatpush.bf16.xpose.msra.mxu0 0
        %5896 = vmatpush.bf16.xpose.msra.mxu0 0
        %5897 = vmatpush.bf16.xpose.msra.mxu0 0
        %5898 = vmatpush.bf16.xpose.msra.mxu0 0
        %5899 = vmatpush.bf16.xpose.msra.mxu0 0
        %5900 = vmatpush.bf16.xpose.msra.mxu0 %v5892
        %5901 = vmatpush.bf16.xpose.msra.mxu0 %v5889
        %5902 = vmatmul.bf16.gmra.mxu0 %v5883
        %v5903 = vpop.f32.mrf.mxu0
        %v5904 = vadd.f32 %v3134, %v5903
        %v5905 = vpop.f32.mrf.mxu0
        %v5906 = vadd.f32 %v3135, %v5905
        %5907 = vmatmul.bf16.gmra.mxu0 %v5886
        %v5908 = vpop.f32.mrf.mxu0
        %v5909 = vadd.f32 %v3136, %v5908
        %v5910 = vpop.f32.mrf.mxu0
        %v5911 = vadd.f32 %v3137, %v5910
        %5912 = vdwg.mxu0
        %v5913 = vsel %vm3343, %v5703, -inf
        %5914 = vmax.xlane.f32.xlu0 %v5913
        %v5915 = vpop.xlane.xlu0 %5914
        %v5916 = vsel %vm3343, %v5705, -inf
        %5917 = vmax.xlane.f32.xlu0 %v5916
        %v5918 = vpop.xlane.xlu0 %5917
        %v5919 = vsel %vm3343, %v5708, -inf
        %5920 = vmax.xlane.f32.xlu0 %v5919
        %v5921 = vpop.xlane.xlu0 %5920
        %v5922 = vsel %vm3343, %v5710, -inf
        %5923 = vmax.xlane.f32.xlu0 %v5922
        %v5924 = vpop.xlane.xlu0 %5923
        %v5925 = vsel %vm3343, %v5770, -inf
        %5926 = vmax.xlane.f32.xlu0 %v5925
        %v5927 = vpop.xlane.xlu0 %5926
        %v5928 = vsel %vm3343, %v5772, -inf
        %5929 = vmax.xlane.f32.xlu0 %v5928
        %v5930 = vpop.xlane.xlu0 %5929
        %v5931 = vsel %vm3343, %v5775, -inf
        %5932 = vmax.xlane.f32.xlu0 %v5931
        %v5933 = vpop.xlane.xlu0 %5932
        %v5934 = vsel %vm3343, %v5777, -inf
        %5935 = vmax.xlane.f32.xlu0 %v5934
        %v5936 = vpop.xlane.xlu0 %5935
        %v5937 = vsel %vm3343, %v5837, -inf
        %5938 = vmax.xlane.f32.xlu0 %v5937
        %v5939 = vpop.xlane.xlu0 %5938
        %v5940 = vsel %vm3343, %v5839, -inf
        %5941 = vmax.xlane.f32.xlu0 %v5940
        %v5942 = vpop.xlane.xlu0 %5941
        %v5943 = vsel %vm3343, %v5842, -inf
        %5944 = vmax.xlane.f32.xlu0 %v5943
        %v5945 = vpop.xlane.xlu0 %5944
        %v5946 = vsel %vm3343, %v5844, -inf
        %5947 = vmax.xlane.f32.xlu0 %v5946
        %v5948 = vpop.xlane.xlu0 %5947
        %v5949 = vsel %vm3343, %v5904, -inf
        %5950 = vmax.xlane.f32.xlu0 %v5949
        %v5951 = vpop.xlane.xlu0 %5950
        %v5952 = vsel %vm3343, %v5906, -inf
        %5953 = vmax.xlane.f32.xlu0 %v5952
        %v5954 = vpop.xlane.xlu0 %5953
        %v5955 = vsel %vm3343, %v5909, -inf
        %5956 = vmax.xlane.f32.xlu0 %v5955
        %v5957 = vpop.xlane.xlu0 %5956
        %v5958 = vsel %vm3343, %v5911, -inf
        %5959 = vmax.xlane.f32.xlu0 %v5958
        %v5960 = vpop.xlane.xlu0 %5959
        %v5961 = vsub.f32 %v5703, %v5915
        %v5962 = vsub.f32 %v5705, %v5918
        %v5963 = vsub.f32 %v5708, %v5921
        %v5964 = vsub.f32 %v5710, %v5924
        %v5965 = vsub.f32 %v5770, %v5927
        %v5966 = vsub.f32 %v5772, %v5930
        %v5967 = vsub.f32 %v5775, %v5933
        %v5968 = vsub.f32 %v5777, %v5936
        %v5969 = vsub.f32 %v5837, %v5939
        %v5970 = vsub.f32 %v5839, %v5942
        %v5971 = vsub.f32 %v5842, %v5945
        %v5972 = vsub.f32 %v5844, %v5948
        %v5973 = vsub.f32 %v5904, %v5951
        %v5974 = vsub.f32 %v5906, %v5954
        %v5975 = vsub.f32 %v5909, %v5957
        %v5976 = vsub.f32 %v5911, %v5960
        %v5977 = vmul.f32 %v5961, 1.442695
        %v5978 = vpow.pop %v5977
        %v5979 = vmul.f32 %v5962, 1.442695
        %v5980 = vpow.pop %v5979
        %v5981 = vmul.f32 %v5963, 1.442695
        %v5982 = vpow.pop %v5981
        %v5983 = vmul.f32 %v5964, 1.442695
        %v5984 = vpow.pop %v5983
        %v5985 = vmul.f32 %v5965, 1.442695
        %v5986 = vpow.pop %v5985
        %v5987 = vmul.f32 %v5966, 1.442695
        %v5988 = vpow.pop %v5987
        %v5989 = vmul.f32 %v5967, 1.442695
        %v5990 = vpow.pop %v5989
        %v5991 = vmul.f32 %v5968, 1.442695
        %v5992 = vpow.pop %v5991
        %v5993 = vmul.f32 %v5969, 1.442695
        %v5994 = vpow.pop %v5993
        %v5995 = vmul.f32 %v5970, 1.442695
        %v5996 = vpow.pop %v5995
        %v5997 = vmul.f32 %v5971, 1.442695
        %v5998 = vpow.pop %v5997
        %v5999 = vmul.f32 %v5972, 1.442695
        %v6000 = vpow.pop %v5999
        %v6001 = vmul.f32 %v5973, 1.442695
        %v6002 = vpow.pop %v6001
        %v6003 = vmul.f32 %v5974, 1.442695
        %v6004 = vpow.pop %v6003
        %v6005 = vmul.f32 %v5975, 1.442695
        %v6006 = vpow.pop %v6005
        %v6007 = vmul.f32 %v5976, 1.442695
        %v6008 = vpow.pop %v6007
        %v6009 = vsel %vm3343, %v5978, 0.0
        %6010 = vadd.xlane.f32.xlu0 %v6009
        %v6011 = vpop.xlane.xlu0 %6010
        %v6012 = vsel %vm3343, %v5980, 0.0
        %6013 = vadd.xlane.f32.xlu0 %v6012
        %v6014 = vpop.xlane.xlu0 %6013
        %v6015 = vsel %vm3343, %v5982, 0.0
        %6016 = vadd.xlane.f32.xlu0 %v6015
        %v6017 = vpop.xlane.xlu0 %6016
        %v6018 = vsel %vm3343, %v5984, 0.0
        %6019 = vadd.xlane.f32.xlu0 %v6018
        %v6020 = vpop.xlane.xlu0 %6019
        %v6021 = vsel %vm3343, %v5986, 0.0
        %6022 = vadd.xlane.f32.xlu0 %v6021
        %v6023 = vpop.xlane.xlu0 %6022
        %v6024 = vsel %vm3343, %v5988, 0.0
        %6025 = vadd.xlane.f32.xlu0 %v6024
        %v6026 = vpop.xlane.xlu0 %6025
        %v6027 = vsel %vm3343, %v5990, 0.0
        %6028 = vadd.xlane.f32.xlu0 %v6027
        %v6029 = vpop.xlane.xlu0 %6028
        %v6030 = vsel %vm3343, %v5992, 0.0
        %6031 = vadd.xlane.f32.xlu0 %v6030
        %v6032 = vpop.xlane.xlu0 %6031
        %v6033 = vsel %vm3343, %v5994, 0.0
        %6034 = vadd.xlane.f32.xlu0 %v6033
        %v6035 = vpop.xlane.xlu0 %6034
        %v6036 = vsel %vm3343, %v5996, 0.0
        %6037 = vadd.xlane.f32.xlu0 %v6036
        %v6038 = vpop.xlane.xlu0 %6037
        %v6039 = vsel %vm3343, %v5998, 0.0
        %6040 = vadd.xlane.f32.xlu0 %v6039
        %v6041 = vpop.xlane.xlu0 %6040
        %v6042 = vsel %vm3343, %v6000, 0.0
        %6043 = vadd.xlane.f32.xlu0 %v6042
        %v6044 = vpop.xlane.xlu0 %6043
        %v6045 = vsel %vm3343, %v6002, 0.0
        %6046 = vadd.xlane.f32.xlu0 %v6045
        %v6047 = vpop.xlane.xlu0 %6046
        %v6048 = vsel %vm3343, %v6004, 0.0
        %6049 = vadd.xlane.f32.xlu0 %v6048
        %v6050 = vpop.xlane.xlu0 %6049
        %v6051 = vsel %vm3343, %v6006, 0.0
        %6052 = vadd.xlane.f32.xlu0 %v6051
        %v6053 = vpop.xlane.xlu0 %6052
        %v6054 = vsel %vm3343, %v6008, 0.0
        %6055 = vadd.xlane.f32.xlu0 %v6054
        %v6056 = vpop.xlane.xlu0 %6055
        %v6057 = vrcp.pop %v6011
        %v6058 = vrcp.pop %v6014
        %v6059 = vrcp.pop %v6017
        %v6060 = vrcp.pop %v6020
        %v6061 = vrcp.pop %v6023
        %v6062 = vrcp.pop %v6026
        %v6063 = vrcp.pop %v6029
        %v6064 = vrcp.pop %v6032
        %v6065 = vrcp.pop %v6035
        %v6066 = vrcp.pop %v6038
        %v6067 = vrcp.pop %v6041
        %v6068 = vrcp.pop %v6044
        %v6069 = vrcp.pop %v6047
        %v6070 = vrcp.pop %v6050
        %v6071 = vrcp.pop %v6053
        %v6072 = vrcp.pop %v6056
        %v6073 = vmul.f32 %v5978, %v6057
        %v6074 = vmul.f32 %v5980, %v6058
        %v6075 = vmul.f32 %v5982, %v6059
        %v6076 = vmul.f32 %v5984, %v6060
        %v6077 = vmul.f32 %v5986, %v6061
        %v6078 = vmul.f32 %v5988, %v6062
        %v6079 = vmul.f32 %v5990, %v6063
        %v6080 = vmul.f32 %v5992, %v6064
        %v6081 = vmul.f32 %v5994, %v6065
        %v6082 = vmul.f32 %v5996, %v6066
        %v6083 = vmul.f32 %v5998, %v6067
        %v6084 = vmul.f32 %v6000, %v6068
        %v6085 = vmul.f32 %v6002, %v6069
        %v6086 = vmul.f32 %v6004, %v6070
        %v6087 = vmul.f32 %v6006, %v6071
        %v6088 = vmul.f32 %v6008, %v6072
        %v6089 = vpack.c.bf16 %v6073, %v6073
        %v6090 = vpack.c.bf16 %v6074, %v6074
        %v6091 = vpack.c.bf16 %v6075, %v6075
        %v6092 = vpack.c.bf16 %v6076, %v6076
        %v6093 = vpack.c.bf16 %v6077, %v6077
        %v6094 = vpack.c.bf16 %v6078, %v6078
        %v6095 = vpack.c.bf16 %v6079, %v6079
        %v6096 = vpack.c.bf16 %v6080, %v6080
        %v6097 = vpack.c.bf16 %v6081, %v6081
        %v6098 = vpack.c.bf16 %v6082, %v6082
        %v6099 = vpack.c.bf16 %v6083, %v6083
        %v6100 = vpack.c.bf16 %v6084, %v6084
        %v6101 = vpack.c.bf16 %v6085, %v6085
        %v6102 = vpack.c.bf16 %v6086, %v6086
        %v6103 = vpack.c.bf16 %v6087, %v6087
        %v6104 = vpack.c.bf16 %v6088, %v6088
        %6105 = vrot.lane.b32.xlu0 %v3102, 64
        %v6106 = vpop.permute.xlu0 %6105
        %6107 = vrot.lane.b32.xlu0 %v3104, 64
        %v6108 = vpop.permute.xlu0 %6107
        %6109 = vrot.lane.b32.xlu0 %v3106, 64
        %v6110 = vpop.permute.xlu0 %6109
        %6111 = vrot.lane.b32.xlu0 %v3108, 64
        %v6112 = vpop.permute.xlu0 %6111
        %v6113 = vrot.slane %v6106, 4
        %v6114 = vrot.slane %v6108, 4
        %v6115 = vrot.slane %v6110, 4
        %v6116 = vrot.slane %v6112, 4
        %v6121 = vunpack.c.l.b16 %v6089
        %v6122 = vunpack.c.l.b16 %v6090
        %v6123 = vunpack.c.l.b16 %v6091
        %v6124 = vunpack.c.l.b16 %v6092
        %v6125 = vpack.c.b16 %v6122, %v6121
        %v6126 = vpack.c.b16 %v6124, %v6123
        %v6127 = vunpack.c.l.b16 %v6113
        %v6128 = vunpack.c.l.b16 %v6114
        %v6129 = vunpack.c.l.b16 %v6115
        %v6130 = vunpack.c.l.b16 %v6116
        %v6131 = vpack.c.b16 %v6128, %v6127
        %v6132 = vpack.c.b16 %v6130, %v6129
        %v6136 = vsel %vm3343, %v6125, 0
        %v6139 = vsel %vm3343, %v6126, 0
        %6141 = vmatpush.bf16.msra.mxu0 0
        %6142 = vmatpush.bf16.msra.mxu0 0
        %6143 = vmatpush.bf16.msra.mxu0 0
        %6144 = vmatpush.bf16.msra.mxu0 0
        %6145 = vmatpush.bf16.msra.mxu0 0
        %6146 = vmatpush.bf16.msra.mxu0 0
        %6147 = vmatpush.bf16.msra.mxu0 %v6132
        %6148 = vmatpush.bf16.msra.mxu0 %v6131
        %6149 = vmatmul.bf16.gmra.mxu0 %v6136
        %v6150 = vpop.f32.mrf.mxu0
        %v6151 = vadd.f32 0.0, %v6150
        %v6152 = vpop.f32.mrf.mxu0
        %v6153 = vadd.f32 0.0, %v6152
        %6154 = vmatmul.bf16.gmra.mxu0 %v6139
        %v6155 = vpop.f32.mrf.mxu0
        %v6156 = vadd.f32 0.0, %v6155
        %v6157 = vpop.f32.mrf.mxu0
        %v6158 = vadd.f32 0.0, %v6157
        %6159 = vdwg.mxu0
        %6160 = vrot.lane.b32.xlu0 %v3110, 64
        %v6161 = vpop.permute.xlu0 %6160
        %6162 = vrot.lane.b32.xlu0 %v3112, 64
        %v6163 = vpop.permute.xlu0 %6162
        %6164 = vrot.lane.b32.xlu0 %v3114, 64
        %v6165 = vpop.permute.xlu0 %6164
        %6166 = vrot.lane.b32.xlu0 %v3116, 64
        %v6167 = vpop.permute.xlu0 %6166
        %v6168 = vrot.slane %v6161, 4
        %v6169 = vrot.slane %v6163, 4
        %v6170 = vrot.slane %v6165, 4
        %v6171 = vrot.slane %v6167, 4
        %v6176 = vunpack.c.l.b16 %v6093
        %v6177 = vunpack.c.l.b16 %v6094
        %v6178 = vunpack.c.l.b16 %v6095
        %v6179 = vunpack.c.l.b16 %v6096
        %v6180 = vpack.c.b16 %v6177, %v6176
        %v6181 = vpack.c.b16 %v6179, %v6178
        %v6182 = vunpack.c.l.b16 %v6168
        %v6183 = vunpack.c.l.b16 %v6169
        %v6184 = vunpack.c.l.b16 %v6170
        %v6185 = vunpack.c.l.b16 %v6171
        %v6186 = vpack.c.b16 %v6183, %v6182
        %v6187 = vpack.c.b16 %v6185, %v6184
        %v6191 = vsel %vm3343, %v6180, 0
        %v6194 = vsel %vm3343, %v6181, 0
        %6196 = vmatpush.bf16.msra.mxu0 0
        %6197 = vmatpush.bf16.msra.mxu0 0
        %6198 = vmatpush.bf16.msra.mxu0 0
        %6199 = vmatpush.bf16.msra.mxu0 0
        %6200 = vmatpush.bf16.msra.mxu0 0
        %6201 = vmatpush.bf16.msra.mxu0 0
        %6202 = vmatpush.bf16.msra.mxu0 %v6187
        %6203 = vmatpush.bf16.msra.mxu0 %v6186
        %6204 = vmatmul.bf16.gmra.mxu0 %v6191
        %v6205 = vpop.f32.mrf.mxu0
        %v6206 = vadd.f32 0.0, %v6205
        %v6207 = vpop.f32.mrf.mxu0
        %v6208 = vadd.f32 0.0, %v6207
        %6209 = vmatmul.bf16.gmra.mxu0 %v6194
        %v6210 = vpop.f32.mrf.mxu0
        %v6211 = vadd.f32 0.0, %v6210
        %v6212 = vpop.f32.mrf.mxu0
        %v6213 = vadd.f32 0.0, %v6212
        %6214 = vdwg.mxu0
        %6215 = vrot.lane.b32.xlu0 %v3118, 64
        %v6216 = vpop.permute.xlu0 %6215
        %6217 = vrot.lane.b32.xlu0 %v3120, 64
        %v6218 = vpop.permute.xlu0 %6217
        %6219 = vrot.lane.b32.xlu0 %v3122, 64
        %v6220 = vpop.permute.xlu0 %6219
        %6221 = vrot.lane.b32.xlu0 %v3124, 64
        %v6222 = vpop.permute.xlu0 %6221
        %v6223 = vrot.slane %v6216, 4
        %v6224 = vrot.slane %v6218, 4
        %v6225 = vrot.slane %v6220, 4
        %v6226 = vrot.slane %v6222, 4
        %v6231 = vunpack.c.l.b16 %v6097
        %v6232 = vunpack.c.l.b16 %v6098
        %v6233 = vunpack.c.l.b16 %v6099
        %v6234 = vunpack.c.l.b16 %v6100
        %v6235 = vpack.c.b16 %v6232, %v6231
        %v6236 = vpack.c.b16 %v6234, %v6233
        %v6237 = vunpack.c.l.b16 %v6223
        %v6238 = vunpack.c.l.b16 %v6224
        %v6239 = vunpack.c.l.b16 %v6225
        %v6240 = vunpack.c.l.b16 %v6226
        %v6241 = vpack.c.b16 %v6238, %v6237
        %v6242 = vpack.c.b16 %v6240, %v6239
        %v6246 = vsel %vm3343, %v6235, 0
        %v6249 = vsel %vm3343, %v6236, 0
        %6251 = vmatpush.bf16.msra.mxu0 0
        %6252 = vmatpush.bf16.msra.mxu0 0
        %6253 = vmatpush.bf16.msra.mxu0 0
        %6254 = vmatpush.bf16.msra.mxu0 0
        %6255 = vmatpush.bf16.msra.mxu0 0
        %6256 = vmatpush.bf16.msra.mxu0 0
        %6257 = vmatpush.bf16.msra.mxu0 %v6242
        %6258 = vmatpush.bf16.msra.mxu0 %v6241
        %6259 = vmatmul.bf16.gmra.mxu0 %v6246
        %v6260 = vpop.f32.mrf.mxu0
        %v6261 = vadd.f32 0.0, %v6260
        %v6262 = vpop.f32.mrf.mxu0
        %v6263 = vadd.f32 0.0, %v6262
        %6264 = vmatmul.bf16.gmra.mxu0 %v6249
        %v6265 = vpop.f32.mrf.mxu0
        %v6266 = vadd.f32 0.0, %v6265
        %v6267 = vpop.f32.mrf.mxu0
        %v6268 = vadd.f32 0.0, %v6267
        %6269 = vdwg.mxu0
        %6270 = vrot.lane.b32.xlu0 %v3126, 64
        %v6271 = vpop.permute.xlu0 %6270
        %6272 = vrot.lane.b32.xlu0 %v3128, 64
        %v6273 = vpop.permute.xlu0 %6272
        %6274 = vrot.lane.b32.xlu0 %v3130, 64
        %v6275 = vpop.permute.xlu0 %6274
        %6276 = vrot.lane.b32.xlu0 %v3132, 64
        %v6277 = vpop.permute.xlu0 %6276
        %v6278 = vrot.slane %v6271, 4
        %v6279 = vrot.slane %v6273, 4
        %v6280 = vrot.slane %v6275, 4
        %v6281 = vrot.slane %v6277, 4
        %v6286 = vunpack.c.l.b16 %v6101
        %v6287 = vunpack.c.l.b16 %v6102
        %v6288 = vunpack.c.l.b16 %v6103
        %v6289 = vunpack.c.l.b16 %v6104
        %v6290 = vpack.c.b16 %v6287, %v6286
        %v6291 = vpack.c.b16 %v6289, %v6288
        %v6292 = vunpack.c.l.b16 %v6278
        %v6293 = vunpack.c.l.b16 %v6279
        %v6294 = vunpack.c.l.b16 %v6280
        %v6295 = vunpack.c.l.b16 %v6281
        %v6296 = vpack.c.b16 %v6293, %v6292
        %v6297 = vpack.c.b16 %v6295, %v6294
        %v6301 = vsel %vm3343, %v6290, 0
        %v6304 = vsel %vm3343, %v6291, 0
        %6306 = vmatpush.bf16.msra.mxu0 0
        %6307 = vmatpush.bf16.msra.mxu0 0
        %6308 = vmatpush.bf16.msra.mxu0 0
        %6309 = vmatpush.bf16.msra.mxu0 0
        %6310 = vmatpush.bf16.msra.mxu0 0
        %6311 = vmatpush.bf16.msra.mxu0 0
        %6312 = vmatpush.bf16.msra.mxu0 %v6297
        %6313 = vmatpush.bf16.msra.mxu0 %v6296
        %6314 = vmatmul.bf16.gmra.mxu0 %v6301
        %v6315 = vpop.f32.mrf.mxu0
        %v6316 = vadd.f32 0.0, %v6315
        %v6317 = vpop.f32.mrf.mxu0
        %v6318 = vadd.f32 0.0, %v6317
        %6319 = vmatmul.bf16.gmra.mxu0 %v6304
        %v6320 = vpop.f32.mrf.mxu0
        %v6321 = vadd.f32 0.0, %v6320
        %v6322 = vpop.f32.mrf.mxu0
        %v6323 = vadd.f32 0.0, %v6322
        %6324 = vdwg.mxu0
        %v6325 = vpack.c.bf16 %v6153, %v6151
        %v6326 = vpack.c.bf16 %v6158, %v6156
        %v6327 = vpack.c.bf16 %v6208, %v6206
        %v6328 = vpack.c.bf16 %v6213, %v6211
        %v6329 = vpack.c.bf16 %v6263, %v6261
        %v6330 = vpack.c.bf16 %v6268, %v6266
        %v6331 = vpack.c.bf16 %v6318, %v6316
        %v6332 = vpack.c.bf16 %v6323, %v6321
        %v6333 = vld [vmem:[#allocation8 + $0x120] sm:$0xff]
        %v6334 = vld [vmem:[#allocation8 + $0x128] sm:$0xf]
        %v6335 = vld [vmem:[#allocation8 + $0x12c] sm:$0xff]
        %v6336 = vld [vmem:[#allocation8 + $0x134] sm:$0xf]
        %v6337 = vld [vmem:[#allocation8 + $0x138] sm:$0xff]
        %v6338 = vld [vmem:[#allocation8 + $0x140] sm:$0xf]
        %v6339 = vld [vmem:[#allocation8 + $0x144] sm:$0xff]
        %v6340 = vld [vmem:[#allocation8 + $0x14c] sm:$0xf]
        %v6341 = vld [vmem:[#allocation8 + $0x150] sm:$0xff]
        %v6342 = vld [vmem:[#allocation8 + $0x158] sm:$0xf]
        %v6343 = vld [vmem:[#allocation8 + $0x15c] sm:$0xff]
        %v6344 = vld [vmem:[#allocation8 + $0x164] sm:$0xf]
        %v6345 = vld [vmem:[#allocation8 + $0x168] sm:$0xff]
        %v6346 = vld [vmem:[#allocation8 + $0x170] sm:$0xf]
        %v6347 = vld [vmem:[#allocation8 + $0x174] sm:$0xff]
        %v6348 = vld [vmem:[#allocation8 + $0x17c] sm:$0xf]
        %v6365 = vunpack.c.l.b16 %v6333
        %v6366 = vunpack.c.h.b16 %v6333
        %v6367 = vunpack.c.l.b16 %v6334
        %v6368 = vunpack.c.l.b16 %v6335
        %v6369 = vunpack.c.h.b16 %v6335
        %v6370 = vunpack.c.l.b16 %v6336
        %v6371 = vunpack.c.l.b16 %v6337
        %v6372 = vunpack.c.h.b16 %v6337
        %v6373 = vunpack.c.l.b16 %v6338
        %v6374 = vunpack.c.l.b16 %v6339
        %v6375 = vunpack.c.h.b16 %v6339
        %v6376 = vunpack.c.l.b16 %v6340
        %v6377 = vunpack.c.l.b16 %v6341
        %v6378 = vunpack.c.h.b16 %v6341
        %v6379 = vunpack.c.l.b16 %v6342
        %v6380 = vunpack.c.l.b16 %v6343
        %v6381 = vunpack.c.h.b16 %v6343
        %v6382 = vunpack.c.l.b16 %v6344
        %v6383 = vunpack.c.l.b16 %v6345
        %v6384 = vunpack.c.h.b16 %v6345
        %v6385 = vunpack.c.l.b16 %v6346
        %v6386 = vunpack.c.l.b16 %v6347
        %v6387 = vunpack.c.h.b16 %v6347
        %v6388 = vunpack.c.l.b16 %v6348
        %v6389 = vpack.c.b16 %v6368, %v6365
        %v6390 = vpack.c.b16 %v6369, %v6366
        %v6391 = vpack.c.b16 %v6370, %v6367
        %v6392 = vpack.c.b16 %v6374, %v6371
        %v6393 = vpack.c.b16 %v6375, %v6372
        %v6394 = vpack.c.b16 %v6376, %v6373
        %v6395 = vpack.c.b16 %v6380, %v6377
        %v6396 = vpack.c.b16 %v6381, %v6378
        %v6397 = vpack.c.b16 %v6382, %v6379
        %v6398 = vpack.c.b16 %v6386, %v6383
        %v6399 = vpack.c.b16 %v6387, %v6384
        %v6400 = vpack.c.b16 %v6388, %v6385
        %v6414 = vsel %vm3158, %v6325, 0
        %v6417 = vsel %vm3158, %v6326, 0
        %v6420 = vsel %vm3158, %v6327, 0
        %v6423 = vsel %vm3158, %v6328, 0
        %v6426 = vsel %vm3158, %v6329, 0
        %v6429 = vsel %vm3158, %v6330, 0
        %v6432 = vsel %vm3158, %v6331, 0
        %v6435 = vsel %vm3158, %v6332, 0
        %6437 = vmatpush.bf16.msra.mxu0 0
        %6438 = vmatpush.bf16.msra.mxu0 0
        %6439 = vmatpush.bf16.msra.mxu0 0
        %6440 = vmatpush.bf16.msra.mxu0 0
        %6441 = vmatpush.bf16.msra.mxu0 %v6398
        %6442 = vmatpush.bf16.msra.mxu0 %v6395
        %6443 = vmatpush.bf16.msra.mxu0 %v6392
        %6444 = vmatpush.bf16.msra.mxu0 %v6389
        %6445 = vmatmul.bf16.gmra.mxu0 %v6414
        %v6446 = vpop.f32.mrf.mxu0
        %v6447 = vadd.f32 0.0, %v6446
        %v6448 = vpop.f32.mrf.mxu0
        %v6449 = vadd.f32 0.0, %v6448
        %6450 = vmatmul.bf16.gmra.mxu0 %v6417
        %v6451 = vpop.f32.mrf.mxu0
        %v6452 = vadd.f32 0.0, %v6451
        %v6453 = vpop.f32.mrf.mxu0
        %v6454 = vadd.f32 0.0, %v6453
        %6455 = vmatmul.bf16.gmra.mxu0 %v6420
        %v6456 = vpop.f32.mrf.mxu0
        %v6457 = vadd.f32 0.0, %v6456
        %v6458 = vpop.f32.mrf.mxu0
        %v6459 = vadd.f32 0.0, %v6458
        %6460 = vmatmul.bf16.gmra.mxu0 %v6423
        %v6461 = vpop.f32.mrf.mxu0
        %v6462 = vadd.f32 0.0, %v6461
        %v6463 = vpop.f32.mrf.mxu0
        %v6464 = vadd.f32 0.0, %v6463
        %6465 = vmatmul.bf16.gmra.mxu0 %v6426
        %v6466 = vpop.f32.mrf.mxu0
        %v6467 = vadd.f32 0.0, %v6466
        %v6468 = vpop.f32.mrf.mxu0
        %v6469 = vadd.f32 0.0, %v6468
        %6470 = vmatmul.bf16.gmra.mxu0 %v6429
        %v6471 = vpop.f32.mrf.mxu0
        %v6472 = vadd.f32 0.0, %v6471
        %v6473 = vpop.f32.mrf.mxu0
        %v6474 = vadd.f32 0.0, %v6473
        %6475 = vmatmul.bf16.gmra.mxu0 %v6432
        %v6476 = vpop.f32.mrf.mxu0
        %v6477 = vadd.f32 0.0, %v6476
        %v6478 = vpop.f32.mrf.mxu0
        %v6479 = vadd.f32 0.0, %v6478
        %6480 = vmatmul.bf16.gmra.mxu0 %v6435
        %v6481 = vpop.f32.mrf.mxu0
        %v6482 = vadd.f32 0.0, %v6481
        %v6483 = vpop.f32.mrf.mxu0
        %v6484 = vadd.f32 0.0, %v6483
        %6485 = vdwg.mxu0
        %6486 = vmatpush.bf16.msra.mxu0 0
        %6487 = vmatpush.bf16.msra.mxu0 0
        %6488 = vmatpush.bf16.msra.mxu0 0
        %6489 = vmatpush.bf16.msra.mxu0 0
        %6490 = vmatpush.bf16.msra.mxu0 %v6399
        %6491 = vmatpush.bf16.msra.mxu0 %v6396
        %6492 = vmatpush.bf16.msra.mxu0 %v6393
        %6493 = vmatpush.bf16.msra.mxu0 %v6390
        %6494 = vmatmul.bf16.gmra.mxu0 %v6414
        %v6495 = vpop.f32.mrf.mxu0
        %v6496 = vadd.f32 0.0, %v6495
        %v6497 = vpop.f32.mrf.mxu0
        %v6498 = vadd.f32 0.0, %v6497
        %6499 = vmatmul.bf16.gmra.mxu0 %v6417
        %v6500 = vpop.f32.mrf.mxu0
        %v6501 = vadd.f32 0.0, %v6500
        %v6502 = vpop.f32.mrf.mxu0
        %v6503 = vadd.f32 0.0, %v6502
        %6504 = vmatmul.bf16.gmra.mxu0 %v6420
        %v6505 = vpop.f32.mrf.mxu0
        %v6506 = vadd.f32 0.0, %v6505
        %v6507 = vpop.f32.mrf.mxu0
        %v6508 = vadd.f32 0.0, %v6507
        %6509 = vmatmul.bf16.gmra.mxu0 %v6423
        %v6510 = vpop.f32.mrf.mxu0
        %v6511 = vadd.f32 0.0, %v6510
        %v6512 = vpop.f32.mrf.mxu0
        %v6513 = vadd.f32 0.0, %v6512
        %6514 = vmatmul.bf16.gmra.mxu0 %v6426
        %v6515 = vpop.f32.mrf.mxu0
        %v6516 = vadd.f32 0.0, %v6515
        %v6517 = vpop.f32.mrf.mxu0
        %v6518 = vadd.f32 0.0, %v6517
        %6519 = vmatmul.bf16.gmra.mxu0 %v6429
        %v6520 = vpop.f32.mrf.mxu0
        %v6521 = vadd.f32 0.0, %v6520
        %v6522 = vpop.f32.mrf.mxu0
        %v6523 = vadd.f32 0.0, %v6522
        %6524 = vmatmul.bf16.gmra.mxu0 %v6432
        %v6525 = vpop.f32.mrf.mxu0
        %v6526 = vadd.f32 0.0, %v6525
        %v6527 = vpop.f32.mrf.mxu0
        %v6528 = vadd.f32 0.0, %v6527
        %6529 = vmatmul.bf16.gmra.mxu0 %v6435
        %v6530 = vpop.f32.mrf.mxu0
        %v6531 = vadd.f32 0.0, %v6530
        %v6532 = vpop.f32.mrf.mxu0
        %v6533 = vadd.f32 0.0, %v6532
        %6534 = vdwg.mxu0
        %6535 = vmatpush.bf16.msra.mxu0 0
        %6536 = vmatpush.bf16.msra.mxu0 0
        %6537 = vmatpush.bf16.msra.mxu0 0
        %6538 = vmatpush.bf16.msra.mxu0 0
        %6539 = vmatpush.bf16.msra.mxu0 %v6400
        %6540 = vmatpush.bf16.msra.mxu0 %v6397
        %6541 = vmatpush.bf16.msra.mxu0 %v6394
        %6542 = vmatpush.bf16.msra.mxu0 %v6391
        %6543 = vmatmul.bf16.gmra.mxu0 %v6414
        %v6544 = vpop.f32.mrf.mxu0
        %v6545 = vadd.f32 0.0, %v6544
        %v6546 = vpop.f32.mrf.mxu0
        %v6547 = vadd.f32 0.0, %v6546
        %6548 = vmatmul.bf16.gmra.mxu0 %v6417
        %v6549 = vpop.f32.mrf.mxu0
        %v6550 = vadd.f32 0.0, %v6549
        %v6551 = vpop.f32.mrf.mxu0
        %v6552 = vadd.f32 0.0, %v6551
        %6553 = vmatmul.bf16.gmra.mxu0 %v6420
        %v6554 = vpop.f32.mrf.mxu0
        %v6555 = vadd.f32 0.0, %v6554
        %v6556 = vpop.f32.mrf.mxu0
        %v6557 = vadd.f32 0.0, %v6556
        %6558 = vmatmul.bf16.gmra.mxu0 %v6423
        %v6559 = vpop.f32.mrf.mxu0
        %v6560 = vadd.f32 0.0, %v6559
        %v6561 = vpop.f32.mrf.mxu0
        %v6562 = vadd.f32 0.0, %v6561
        %6563 = vmatmul.bf16.gmra.mxu0 %v6426
        %v6564 = vpop.f32.mrf.mxu0
        %v6565 = vadd.f32 0.0, %v6564
        %v6566 = vpop.f32.mrf.mxu0
        %v6567 = vadd.f32 0.0, %v6566
        %6568 = vmatmul.bf16.gmra.mxu0 %v6429
        %v6569 = vpop.f32.mrf.mxu0
        %v6570 = vadd.f32 0.0, %v6569
        %v6571 = vpop.f32.mrf.mxu0
        %v6572 = vadd.f32 0.0, %v6571
        %6573 = vmatmul.bf16.gmra.mxu0 %v6432
        %v6574 = vpop.f32.mrf.mxu0
        %v6575 = vadd.f32 0.0, %v6574
        %v6576 = vpop.f32.mrf.mxu0
        %v6577 = vadd.f32 0.0, %v6576
        %6578 = vmatmul.bf16.gmra.mxu0 %v6435
        %v6579 = vpop.f32.mrf.mxu0
        %v6580 = vadd.f32 0.0, %v6579
        %v6581 = vpop.f32.mrf.mxu0
        %v6582 = vadd.f32 0.0, %v6581
        %6583 = vdwg.mxu0
        %v6584 = vadd.f32 %v5597, %v6447
        %v6585 = vadd.f32 %v5598, %v6496
        %v6586 = vadd.f32 %v5599, %v6545
        %v6587 = vadd.f32 %v5600, %v6449
        %v6588 = vadd.f32 %v5601, %v6498
        %v6589 = vadd.f32 %v5602, %v6547
        %v6590 = vadd.f32 %v5603, %v6452
        %v6591 = vadd.f32 %v5604, %v6501
        %v6592 = vadd.f32 %v5605, %v6550
        %v6593 = vadd.f32 %v5606, %v6454
        %v6594 = vadd.f32 %v5607, %v6503
        %v6595 = vadd.f32 %v5608, %v6552
        %v6596 = vadd.f32 %v5609, %v6457
        %v6597 = vadd.f32 %v5610, %v6506
        %v6598 = vadd.f32 %v5611, %v6555
        %v6599 = vadd.f32 %v5612, %v6459
        %v6600 = vadd.f32 %v5613, %v6508
        %v6601 = vadd.f32 %v5614, %v6557
        %v6602 = vadd.f32 %v5615, %v6462
        %v6603 = vadd.f32 %v5616, %v6511
        %v6604 = vadd.f32 %v5617, %v6560
        %v6605 = vadd.f32 %v5618, %v6464
        %v6606 = vadd.f32 %v5619, %v6513
        %v6607 = vadd.f32 %v5620, %v6562
        %v6608 = vadd.f32 %v5621, %v6467
        %v6609 = vadd.f32 %v5622, %v6516
        %v6610 = vadd.f32 %v5623, %v6565
        %v6611 = vadd.f32 %v5624, %v6469
        %v6612 = vadd.f32 %v5625, %v6518
        %v6613 = vadd.f32 %v5626, %v6567
        %v6614 = vadd.f32 %v5627, %v6472
        %v6615 = vadd.f32 %v5628, %v6521
        %v6616 = vadd.f32 %v5629, %v6570
        %v6617 = vadd.f32 %v5630, %v6474
        %v6618 = vadd.f32 %v5631, %v6523
        %v6619 = vadd.f32 %v5632, %v6572
        %v6620 = vadd.f32 %v5633, %v6477
        %v6621 = vadd.f32 %v5634, %v6526
        %v6622 = vadd.f32 %v5635, %v6575
        %v6623 = vadd.f32 %v5636, %v6479
        %v6624 = vadd.f32 %v5637, %v6528
        %v6625 = vadd.f32 %v5638, %v6577
        %v6626 = vadd.f32 %v5639, %v6482
        %v6627 = vadd.f32 %v5640, %v6531
        %v6628 = vadd.f32 %v5641, %v6580
        %v6629 = vadd.f32 %v5642, %v6484
        %v6630 = vadd.f32 %v5643, %v6533
        %v6631 = vadd.f32 %v5644, %v6582
        %v6636 = vunpack.c.l.b16 %v3039
        %v6637 = vunpack.c.l.b16 %v3041
        %v6638 = vunpack.c.l.b16 %v3043
        %v6639 = vunpack.c.l.b16 %v3045
        %v6640 = vpack.c.b16 %v6637, %v6636
        %v6641 = vpack.c.b16 %v6639, %v6638
        %v6646 = vunpack.c.l.b16 %v3071
        %v6647 = vunpack.c.l.b16 %v3073
        %v6648 = vunpack.c.l.b16 %v3075
        %v6649 = vunpack.c.l.b16 %v3077
        %v6650 = vpack.c.b16 %v6647, %v6646
        %v6651 = vpack.c.b16 %v6649, %v6648
        %v6653 = vsel %vm3158, %v6640, 0
        %v6656 = vsel %vm3158, %v6641, 0
        %v6659 = vsel %vm3158, %v6650, 0
        %v6662 = vsel %vm3158, %v6651, 0
        %6664 = vmatpush.bf16.xpose.msra.mxu0 0
        %6665 = vmatpush.bf16.xpose.msra.mxu0 0
        %6666 = vmatpush.bf16.xpose.msra.mxu0 0
        %6667 = vmatpush.bf16.xpose.msra.mxu0 0
        %6668 = vmatpush.bf16.xpose.msra.mxu0 0
        %6669 = vmatpush.bf16.xpose.msra.mxu0 0
        %6670 = vmatpush.bf16.xpose.msra.mxu0 %v6662
        %6671 = vmatpush.bf16.xpose.msra.mxu0 %v6659
        %6672 = vmatmul.bf16.gmra.mxu0 %v6653
        %v6673 = vpop.f32.mrf.mxu0
        %v6674 = vadd.f32 %v3134, %v6673
        %v6675 = vpop.f32.mrf.mxu0
        %v6676 = vadd.f32 %v3135, %v6675
        %6677 = vmatmul.bf16.gmra.mxu0 %v6656
        %v6678 = vpop.f32.mrf.mxu0
        %v6679 = vadd.f32 %v3136, %v6678
        %v6680 = vpop.f32.mrf.mxu0
        %v6681 = vadd.f32 %v3137, %v6680
        %6682 = vdwg.mxu0
        %v6687 = vunpack.c.l.b16 %v3047
        %v6688 = vunpack.c.l.b16 %v3049
        %v6689 = vunpack.c.l.b16 %v3051
        %v6690 = vunpack.c.l.b16 %v3053
        %v6691 = vpack.c.b16 %v6688, %v6687
        %v6692 = vpack.c.b16 %v6690, %v6689
        %v6697 = vunpack.c.l.b16 %v3079
        %v6698 = vunpack.c.l.b16 %v3081
        %v6699 = vunpack.c.l.b16 %v3083
        %v6700 = vunpack.c.l.b16 %v3085
        %v6701 = vpack.c.b16 %v6698, %v6697
        %v6702 = vpack.c.b16 %v6700, %v6699
        %v6704 = vsel %vm3158, %v6691, 0
        %v6707 = vsel %vm3158, %v6692, 0
        %v6710 = vsel %vm3158, %v6701, 0
        %v6713 = vsel %vm3158, %v6702, 0
        %6715 = vmatpush.bf16.xpose.msra.mxu0 0
        %6716 = vmatpush.bf16.xpose.msra.mxu0 0
        %6717 = vmatpush.bf16.xpose.msra.mxu0 0
        %6718 = vmatpush.bf16.xpose.msra.mxu0 0
        %6719 = vmatpush.bf16.xpose.msra.mxu0 0
        %6720 = vmatpush.bf16.xpose.msra.mxu0 0
        %6721 = vmatpush.bf16.xpose.msra.mxu0 %v6713
        %6722 = vmatpush.bf16.xpose.msra.mxu0 %v6710
        %6723 = vmatmul.bf16.gmra.mxu0 %v6704
        %v6724 = vpop.f32.mrf.mxu0
        %v6725 = vadd.f32 %v3134, %v6724
        %v6726 = vpop.f32.mrf.mxu0
        %v6727 = vadd.f32 %v3135, %v6726
        %6728 = vmatmul.bf16.gmra.mxu0 %v6707
        %v6729 = vpop.f32.mrf.mxu0
        %v6730 = vadd.f32 %v3136, %v6729
        %v6731 = vpop.f32.mrf.mxu0
        %v6732 = vadd.f32 %v3137, %v6731
        %6733 = vdwg.mxu0
        %v6738 = vunpack.c.l.b16 %v3055
        %v6739 = vunpack.c.l.b16 %v3057
        %v6740 = vunpack.c.l.b16 %v3059
        %v6741 = vunpack.c.l.b16 %v3061
        %v6742 = vpack.c.b16 %v6739, %v6738
        %v6743 = vpack.c.b16 %v6741, %v6740
        %v6748 = vunpack.c.l.b16 %v3087
        %v6749 = vunpack.c.l.b16 %v3089
        %v6750 = vunpack.c.l.b16 %v3091
        %v6751 = vunpack.c.l.b16 %v3093
        %v6752 = vpack.c.b16 %v6749, %v6748
        %v6753 = vpack.c.b16 %v6751, %v6750
        %v6755 = vsel %vm3158, %v6742, 0
        %v6758 = vsel %vm3158, %v6743, 0
        %v6761 = vsel %vm3158, %v6752, 0
        %v6764 = vsel %vm3158, %v6753, 0
        %6766 = vmatpush.bf16.xpose.msra.mxu0 0
        %6767 = vmatpush.bf16.xpose.msra.mxu0 0
        %6768 = vmatpush.bf16.xpose.msra.mxu0 0
        %6769 = vmatpush.bf16.xpose.msra.mxu0 0
        %6770 = vmatpush.bf16.xpose.msra.mxu0 0
        %6771 = vmatpush.bf16.xpose.msra.mxu0 0
        %6772 = vmatpush.bf16.xpose.msra.mxu0 %v6764
        %6773 = vmatpush.bf16.xpose.msra.mxu0 %v6761
        %6774 = vmatmul.bf16.gmra.mxu0 %v6755
        %v6775 = vpop.f32.mrf.mxu0
        %v6776 = vadd.f32 %v3134, %v6775
        %v6777 = vpop.f32.mrf.mxu0
        %v6778 = vadd.f32 %v3135, %v6777
        %6779 = vmatmul.bf16.gmra.mxu0 %v6758
        %v6780 = vpop.f32.mrf.mxu0
        %v6781 = vadd.f32 %v3136, %v6780
        %v6782 = vpop.f32.mrf.mxu0
        %v6783 = vadd.f32 %v3137, %v6782
        %6784 = vdwg.mxu0
        %v6789 = vunpack.c.l.b16 %v3063
        %v6790 = vunpack.c.l.b16 %v3065
        %v6791 = vunpack.c.l.b16 %v3067
        %v6792 = vunpack.c.l.b16 %v3069
        %v6793 = vpack.c.b16 %v6790, %v6789
        %v6794 = vpack.c.b16 %v6792, %v6791
        %v6799 = vunpack.c.l.b16 %v3095
        %v6800 = vunpack.c.l.b16 %v3097
        %v6801 = vunpack.c.l.b16 %v3099
        %v6802 = vunpack.c.l.b16 %v3101
        %v6803 = vpack.c.b16 %v6800, %v6799
        %v6804 = vpack.c.b16 %v6802, %v6801
        %v6806 = vsel %vm3158, %v6793, 0
        %v6809 = vsel %vm3158, %v6794, 0
        %v6812 = vsel %vm3158, %v6803, 0
        %v6815 = vsel %vm3158, %v6804, 0
        %6817 = vmatpush.bf16.xpose.msra.mxu0 0
        %6818 = vmatpush.bf16.xpose.msra.mxu0 0
        %6819 = vmatpush.bf16.xpose.msra.mxu0 0
        %6820 = vmatpush.bf16.xpose.msra.mxu0 0
        %6821 = vmatpush.bf16.xpose.msra.mxu0 0
        %6822 = vmatpush.bf16.xpose.msra.mxu0 0
        %6823 = vmatpush.bf16.xpose.msra.mxu0 %v6815
        %6824 = vmatpush.bf16.xpose.msra.mxu0 %v6812
        %6825 = vmatmul.bf16.gmra.mxu0 %v6806
        %v6826 = vpop.f32.mrf.mxu0
        %v6827 = vadd.f32 %v3134, %v6826
        %v6828 = vpop.f32.mrf.mxu0
        %v6829 = vadd.f32 %v3135, %v6828
        %6830 = vmatmul.bf16.gmra.mxu0 %v6809
        %v6831 = vpop.f32.mrf.mxu0
        %v6832 = vadd.f32 %v3136, %v6831
        %v6833 = vpop.f32.mrf.mxu0
        %v6834 = vadd.f32 %v3137, %v6833
        %6835 = vdwg.mxu0
        %v6836 = vsel %vm3343, %v6674, -inf
        %6837 = vmax.xlane.f32.xlu0 %v6836
        %v6838 = vpop.xlane.xlu0 %6837
        %v6839 = vsel %vm3343, %v6676, -inf
        %6840 = vmax.xlane.f32.xlu0 %v6839
        %v6841 = vpop.xlane.xlu0 %6840
        %v6842 = vsel %vm3343, %v6679, -inf
        %6843 = vmax.xlane.f32.xlu0 %v6842
        %v6844 = vpop.xlane.xlu0 %6843
        %v6845 = vsel %vm3343, %v6681, -inf
        %6846 = vmax.xlane.f32.xlu0 %v6845
        %v6847 = vpop.xlane.xlu0 %6846
        %v6848 = vsel %vm3343, %v6725, -inf
        %6849 = vmax.xlane.f32.xlu0 %v6848
        %v6850 = vpop.xlane.xlu0 %6849
        %v6851 = vsel %vm3343, %v6727, -inf
        %6852 = vmax.xlane.f32.xlu0 %v6851
        %v6853 = vpop.xlane.xlu0 %6852
        %v6854 = vsel %vm3343, %v6730, -inf
        %6855 = vmax.xlane.f32.xlu0 %v6854
        %v6856 = vpop.xlane.xlu0 %6855
        %v6857 = vsel %vm3343, %v6732, -inf
        %6858 = vmax.xlane.f32.xlu0 %v6857
        %v6859 = vpop.xlane.xlu0 %6858
        %v6860 = vsel %vm3343, %v6776, -inf
        %6861 = vmax.xlane.f32.xlu0 %v6860
        %v6862 = vpop.xlane.xlu0 %6861
        %v6863 = vsel %vm3343, %v6778, -inf
        %6864 = vmax.xlane.f32.xlu0 %v6863
        %v6865 = vpop.xlane.xlu0 %6864
        %v6866 = vsel %vm3343, %v6781, -inf
        %6867 = vmax.xlane.f32.xlu0 %v6866
        %v6868 = vpop.xlane.xlu0 %6867
        %v6869 = vsel %vm3343, %v6783, -inf
        %6870 = vmax.xlane.f32.xlu0 %v6869
        %v6871 = vpop.xlane.xlu0 %6870
        %v6872 = vsel %vm3343, %v6827, -inf
        %6873 = vmax.xlane.f32.xlu0 %v6872
        %v6874 = vpop.xlane.xlu0 %6873
        %v6875 = vsel %vm3343, %v6829, -inf
        %6876 = vmax.xlane.f32.xlu0 %v6875
        %v6877 = vpop.xlane.xlu0 %6876
        %v6878 = vsel %vm3343, %v6832, -inf
        %6879 = vmax.xlane.f32.xlu0 %v6878
        %v6880 = vpop.xlane.xlu0 %6879
        %v6881 = vsel %vm3343, %v6834, -inf
        %6882 = vmax.xlane.f32.xlu0 %v6881
        %v6883 = vpop.xlane.xlu0 %6882
        %v6884 = vsub.f32 %v6674, %v6838
        %v6885 = vsub.f32 %v6676, %v6841
        %v6886 = vsub.f32 %v6679, %v6844
        %v6887 = vsub.f32 %v6681, %v6847
        %v6888 = vsub.f32 %v6725, %v6850
        %v6889 = vsub.f32 %v6727, %v6853
        %v6890 = vsub.f32 %v6730, %v6856
        %v6891 = vsub.f32 %v6732, %v6859
        %v6892 = vsub.f32 %v6776, %v6862
        %v6893 = vsub.f32 %v6778, %v6865
        %v6894 = vsub.f32 %v6781, %v6868
        %v6895 = vsub.f32 %v6783, %v6871
        %v6896 = vsub.f32 %v6827, %v6874
        %v6897 = vsub.f32 %v6829, %v6877
        %v6898 = vsub.f32 %v6832, %v6880
        %v6899 = vsub.f32 %v6834, %v6883
        %v6900 = vmul.f32 %v6884, 1.442695
        %v6901 = vpow.pop %v6900
        %v6902 = vmul.f32 %v6885, 1.442695
        %v6903 = vpow.pop %v6902
        %v6904 = vmul.f32 %v6886, 1.442695
        %v6905 = vpow.pop %v6904
        %v6906 = vmul.f32 %v6887, 1.442695
        %v6907 = vpow.pop %v6906
        %v6908 = vmul.f32 %v6888, 1.442695
        %v6909 = vpow.pop %v6908
        %v6910 = vmul.f32 %v6889, 1.442695
        %v6911 = vpow.pop %v6910
        %v6912 = vmul.f32 %v6890, 1.442695
        %v6913 = vpow.pop %v6912
        %v6914 = vmul.f32 %v6891, 1.442695
        %v6915 = vpow.pop %v6914
        %v6916 = vmul.f32 %v6892, 1.442695
        %v6917 = vpow.pop %v6916
        %v6918 = vmul.f32 %v6893, 1.442695
        %v6919 = vpow.pop %v6918
        %v6920 = vmul.f32 %v6894, 1.442695
        %v6921 = vpow.pop %v6920
        %v6922 = vmul.f32 %v6895, 1.442695
        %v6923 = vpow.pop %v6922
        %v6924 = vmul.f32 %v6896, 1.442695
        %v6925 = vpow.pop %v6924
        %v6926 = vmul.f32 %v6897, 1.442695
        %v6927 = vpow.pop %v6926
        %v6928 = vmul.f32 %v6898, 1.442695
        %v6929 = vpow.pop %v6928
        %v6930 = vmul.f32 %v6899, 1.442695
        %v6931 = vpow.pop %v6930
        %v6932 = vsel %vm3343, %v6901, 0.0
        %6933 = vadd.xlane.f32.xlu0 %v6932
        %v6934 = vpop.xlane.xlu0 %6933
        %v6935 = vsel %vm3343, %v6903, 0.0
        %6936 = vadd.xlane.f32.xlu0 %v6935
        %v6937 = vpop.xlane.xlu0 %6936
        %v6938 = vsel %vm3343, %v6905, 0.0
        %6939 = vadd.xlane.f32.xlu0 %v6938
        %v6940 = vpop.xlane.xlu0 %6939
        %v6941 = vsel %vm3343, %v6907, 0.0
        %6942 = vadd.xlane.f32.xlu0 %v6941
        %v6943 = vpop.xlane.xlu0 %6942
        %v6944 = vsel %vm3343, %v6909, 0.0
        %6945 = vadd.xlane.f32.xlu0 %v6944
        %v6946 = vpop.xlane.xlu0 %6945
        %v6947 = vsel %vm3343, %v6911, 0.0
        %6948 = vadd.xlane.f32.xlu0 %v6947
        %v6949 = vpop.xlane.xlu0 %6948
        %v6950 = vsel %vm3343, %v6913, 0.0
        %6951 = vadd.xlane.f32.xlu0 %v6950
        %v6952 = vpop.xlane.xlu0 %6951
        %v6953 = vsel %vm3343, %v6915, 0.0
        %6954 = vadd.xlane.f32.xlu0 %v6953
        %v6955 = vpop.xlane.xlu0 %6954
        %v6956 = vsel %vm3343, %v6917, 0.0
        %6957 = vadd.xlane.f32.xlu0 %v6956
        %v6958 = vpop.xlane.xlu0 %6957
        %v6959 = vsel %vm3343, %v6919, 0.0
        %6960 = vadd.xlane.f32.xlu0 %v6959
        %v6961 = vpop.xlane.xlu0 %6960
        %v6962 = vsel %vm3343, %v6921, 0.0
        %6963 = vadd.xlane.f32.xlu0 %v6962
        %v6964 = vpop.xlane.xlu0 %6963
        %v6965 = vsel %vm3343, %v6923, 0.0
        %6966 = vadd.xlane.f32.xlu0 %v6965
        %v6967 = vpop.xlane.xlu0 %6966
        %v6968 = vsel %vm3343, %v6925, 0.0
        %6969 = vadd.xlane.f32.xlu0 %v6968
        %v6970 = vpop.xlane.xlu0 %6969
        %v6971 = vsel %vm3343, %v6927, 0.0
        %6972 = vadd.xlane.f32.xlu0 %v6971
        %v6973 = vpop.xlane.xlu0 %6972
        %v6974 = vsel %vm3343, %v6929, 0.0
        %6975 = vadd.xlane.f32.xlu0 %v6974
        %v6976 = vpop.xlane.xlu0 %6975
        %v6977 = vsel %vm3343, %v6931, 0.0
        %6978 = vadd.xlane.f32.xlu0 %v6977
        %v6979 = vpop.xlane.xlu0 %6978
        %v6980 = vrcp.pop %v6934
        %v6981 = vrcp.pop %v6937
        %v6982 = vrcp.pop %v6940
        %v6983 = vrcp.pop %v6943
        %v6984 = vrcp.pop %v6946
        %v6985 = vrcp.pop %v6949
        %v6986 = vrcp.pop %v6952
        %v6987 = vrcp.pop %v6955
        %v6988 = vrcp.pop %v6958
        %v6989 = vrcp.pop %v6961
        %v6990 = vrcp.pop %v6964
        %v6991 = vrcp.pop %v6967
        %v6992 = vrcp.pop %v6970
        %v6993 = vrcp.pop %v6973
        %v6994 = vrcp.pop %v6976
        %v6995 = vrcp.pop %v6979
        %v6996 = vmul.f32 %v6901, %v6980
        %v6997 = vmul.f32 %v6903, %v6981
        %v6998 = vmul.f32 %v6905, %v6982
        %v6999 = vmul.f32 %v6907, %v6983
        %v7000 = vmul.f32 %v6909, %v6984
        %v7001 = vmul.f32 %v6911, %v6985
        %v7002 = vmul.f32 %v6913, %v6986
        %v7003 = vmul.f32 %v6915, %v6987
        %v7004 = vmul.f32 %v6917, %v6988
        %v7005 = vmul.f32 %v6919, %v6989
        %v7006 = vmul.f32 %v6921, %v6990
        %v7007 = vmul.f32 %v6923, %v6991
        %v7008 = vmul.f32 %v6925, %v6992
        %v7009 = vmul.f32 %v6927, %v6993
        %v7010 = vmul.f32 %v6929, %v6994
        %v7011 = vmul.f32 %v6931, %v6995
        %v7012 = vpack.c.bf16 %v6996, %v6996
        %v7013 = vpack.c.bf16 %v6997, %v6997
        %v7014 = vpack.c.bf16 %v6998, %v6998
        %v7015 = vpack.c.bf16 %v6999, %v6999
        %v7016 = vpack.c.bf16 %v7000, %v7000
        %v7017 = vpack.c.bf16 %v7001, %v7001
        %v7018 = vpack.c.bf16 %v7002, %v7002
        %v7019 = vpack.c.bf16 %v7003, %v7003
        %v7020 = vpack.c.bf16 %v7004, %v7004
        %v7021 = vpack.c.bf16 %v7005, %v7005
        %v7022 = vpack.c.bf16 %v7006, %v7006
        %v7023 = vpack.c.bf16 %v7007, %v7007
        %v7024 = vpack.c.bf16 %v7008, %v7008
        %v7025 = vpack.c.bf16 %v7009, %v7009
        %v7026 = vpack.c.bf16 %v7010, %v7010
        %v7027 = vpack.c.bf16 %v7011, %v7011
        %v7032 = vunpack.c.l.b16 %v7012
        %v7033 = vunpack.c.l.b16 %v7013
        %v7034 = vunpack.c.l.b16 %v7014
        %v7035 = vunpack.c.l.b16 %v7015
        %v7036 = vpack.c.b16 %v7033, %v7032
        %v7037 = vpack.c.b16 %v7035, %v7034
        %v7042 = vunpack.c.l.b16 %v3103
        %v7043 = vunpack.c.l.b16 %v3105
        %v7044 = vunpack.c.l.b16 %v3107
        %v7045 = vunpack.c.l.b16 %v3109
        %v7046 = vpack.c.b16 %v7043, %v7042
        %v7047 = vpack.c.b16 %v7045, %v7044
        %v7051 = vsel %vm3343, %v7036, 0
        %v7054 = vsel %vm3343, %v7037, 0
        %7056 = vmatpush.bf16.msra.mxu0 0
        %7057 = vmatpush.bf16.msra.mxu0 0
        %7058 = vmatpush.bf16.msra.mxu0 0
        %7059 = vmatpush.bf16.msra.mxu0 0
        %7060 = vmatpush.bf16.msra.mxu0 0
        %7061 = vmatpush.bf16.msra.mxu0 0
        %7062 = vmatpush.bf16.msra.mxu0 %v7047
        %7063 = vmatpush.bf16.msra.mxu0 %v7046
        %7064 = vmatmul.bf16.gmra.mxu0 %v7051
        %v7065 = vpop.f32.mrf.mxu0
        %v7066 = vadd.f32 0.0, %v7065
        %v7067 = vpop.f32.mrf.mxu0
        %v7068 = vadd.f32 0.0, %v7067
        %7069 = vmatmul.bf16.gmra.mxu0 %v7054
        %v7070 = vpop.f32.mrf.mxu0
        %v7071 = vadd.f32 0.0, %v7070
        %v7072 = vpop.f32.mrf.mxu0
        %v7073 = vadd.f32 0.0, %v7072
        %7074 = vdwg.mxu0
        %v7079 = vunpack.c.l.b16 %v7016
        %v7080 = vunpack.c.l.b16 %v7017
        %v7081 = vunpack.c.l.b16 %v7018
        %v7082 = vunpack.c.l.b16 %v7019
        %v7083 = vpack.c.b16 %v7080, %v7079
        %v7084 = vpack.c.b16 %v7082, %v7081
        %v7089 = vunpack.c.l.b16 %v3111
        %v7090 = vunpack.c.l.b16 %v3113
        %v7091 = vunpack.c.l.b16 %v3115
        %v7092 = vunpack.c.l.b16 %v3117
        %v7093 = vpack.c.b16 %v7090, %v7089
        %v7094 = vpack.c.b16 %v7092, %v7091
        %v7098 = vsel %vm3343, %v7083, 0
        %v7101 = vsel %vm3343, %v7084, 0
        %7103 = vmatpush.bf16.msra.mxu0 0
        %7104 = vmatpush.bf16.msra.mxu0 0
        %7105 = vmatpush.bf16.msra.mxu0 0
        %7106 = vmatpush.bf16.msra.mxu0 0
        %7107 = vmatpush.bf16.msra.mxu0 0
        %7108 = vmatpush.bf16.msra.mxu0 0
        %7109 = vmatpush.bf16.msra.mxu0 %v7094
        %7110 = vmatpush.bf16.msra.mxu0 %v7093
        %7111 = vmatmul.bf16.gmra.mxu0 %v7098
        %v7112 = vpop.f32.mrf.mxu0
        %v7113 = vadd.f32 0.0, %v7112
        %v7114 = vpop.f32.mrf.mxu0
        %v7115 = vadd.f32 0.0, %v7114
        %7116 = vmatmul.bf16.gmra.mxu0 %v7101
        %v7117 = vpop.f32.mrf.mxu0
        %v7118 = vadd.f32 0.0, %v7117
        %v7119 = vpop.f32.mrf.mxu0
        %v7120 = vadd.f32 0.0, %v7119
        %7121 = vdwg.mxu0
        %v7126 = vunpack.c.l.b16 %v7020
        %v7127 = vunpack.c.l.b16 %v7021
        %v7128 = vunpack.c.l.b16 %v7022
        %v7129 = vunpack.c.l.b16 %v7023
        %v7130 = vpack.c.b16 %v7127, %v7126
        %v7131 = vpack.c.b16 %v7129, %v7128
        %v7136 = vunpack.c.l.b16 %v3119
        %v7137 = vunpack.c.l.b16 %v3121
        %v7138 = vunpack.c.l.b16 %v3123
        %v7139 = vunpack.c.l.b16 %v3125
        %v7140 = vpack.c.b16 %v7137, %v7136
        %v7141 = vpack.c.b16 %v7139, %v7138
        %v7145 = vsel %vm3343, %v7130, 0
        %v7148 = vsel %vm3343, %v7131, 0
        %7150 = vmatpush.bf16.msra.mxu0 0
        %7151 = vmatpush.bf16.msra.mxu0 0
        %7152 = vmatpush.bf16.msra.mxu0 0
        %7153 = vmatpush.bf16.msra.mxu0 0
        %7154 = vmatpush.bf16.msra.mxu0 0
        %7155 = vmatpush.bf16.msra.mxu0 0
        %7156 = vmatpush.bf16.msra.mxu0 %v7141
        %7157 = vmatpush.bf16.msra.mxu0 %v7140
        %7158 = vmatmul.bf16.gmra.mxu0 %v7145
        %v7159 = vpop.f32.mrf.mxu0
        %v7160 = vadd.f32 0.0, %v7159
        %v7161 = vpop.f32.mrf.mxu0
        %v7162 = vadd.f32 0.0, %v7161
        %7163 = vmatmul.bf16.gmra.mxu0 %v7148
        %v7164 = vpop.f32.mrf.mxu0
        %v7165 = vadd.f32 0.0, %v7164
        %v7166 = vpop.f32.mrf.mxu0
        %v7167 = vadd.f32 0.0, %v7166
        %7168 = vdwg.mxu0
        %v7173 = vunpack.c.l.b16 %v7024
        %v7174 = vunpack.c.l.b16 %v7025
        %v7175 = vunpack.c.l.b16 %v7026
        %v7176 = vunpack.c.l.b16 %v7027
        %v7177 = vpack.c.b16 %v7174, %v7173
        %v7178 = vpack.c.b16 %v7176, %v7175
        %v7183 = vunpack.c.l.b16 %v3127
        %v7184 = vunpack.c.l.b16 %v3129
        %v7185 = vunpack.c.l.b16 %v3131
        %v7186 = vunpack.c.l.b16 %v3133
        %v7187 = vpack.c.b16 %v7184, %v7183
        %v7188 = vpack.c.b16 %v7186, %v7185
        %v7192 = vsel %vm3343, %v7177, 0
        %v7195 = vsel %vm3343, %v7178, 0
        %7197 = vmatpush.bf16.msra.mxu0 0
        %7198 = vmatpush.bf16.msra.mxu0 0
        %7199 = vmatpush.bf16.msra.mxu0 0
        %7200 = vmatpush.bf16.msra.mxu0 0
        %7201 = vmatpush.bf16.msra.mxu0 0
        %7202 = vmatpush.bf16.msra.mxu0 0
        %7203 = vmatpush.bf16.msra.mxu0 %v7188
        %7204 = vmatpush.bf16.msra.mxu0 %v7187
        %7205 = vmatmul.bf16.gmra.mxu0 %v7192
        %v7206 = vpop.f32.mrf.mxu0
        %v7207 = vadd.f32 0.0, %v7206
        %v7208 = vpop.f32.mrf.mxu0
        %v7209 = vadd.f32 0.0, %v7208
        %7210 = vmatmul.bf16.gmra.mxu0 %v7195
        %v7211 = vpop.f32.mrf.mxu0
        %v7212 = vadd.f32 0.0, %v7211
        %v7213 = vpop.f32.mrf.mxu0
        %v7214 = vadd.f32 0.0, %v7213
        %7215 = vdwg.mxu0
        %v7216 = vpack.c.bf16 %v7068, %v7066
        %v7217 = vpack.c.bf16 %v7073, %v7071
        %v7218 = vpack.c.bf16 %v7115, %v7113
        %v7219 = vpack.c.bf16 %v7120, %v7118
        %v7220 = vpack.c.bf16 %v7162, %v7160
        %v7221 = vpack.c.bf16 %v7167, %v7165
        %v7222 = vpack.c.bf16 %v7209, %v7207
        %v7223 = vpack.c.bf16 %v7214, %v7212
        %v7224 = vld [vmem:[#allocation8 + $0x180] sm:$0xff]
        %v7225 = vld [vmem:[#allocation8 + $0x188] sm:$0xf]
        %v7226 = vld [vmem:[#allocation8 + $0x18c] sm:$0xff]
        %v7227 = vld [vmem:[#allocation8 + $0x194] sm:$0xf]
        %v7228 = vld [vmem:[#allocation8 + $0x198] sm:$0xff]
        %v7229 = vld [vmem:[#allocation8 + $0x1a0] sm:$0xf]
        %v7230 = vld [vmem:[#allocation8 + $0x1a4] sm:$0xff]
        %v7231 = vld [vmem:[#allocation8 + $0x1ac] sm:$0xf]
        %v7232 = vld [vmem:[#allocation8 + $0x1b0] sm:$0xff]
        %v7233 = vld [vmem:[#allocation8 + $0x1b8] sm:$0xf]
        %v7234 = vld [vmem:[#allocation8 + $0x1bc] sm:$0xff]
        %v7235 = vld [vmem:[#allocation8 + $0x1c4] sm:$0xf]
        %v7236 = vld [vmem:[#allocation8 + $0x1c8] sm:$0xff]
        %v7237 = vld [vmem:[#allocation8 + $0x1d0] sm:$0xf]
        %v7238 = vld [vmem:[#allocation8 + $0x1d4] sm:$0xff]
        %v7239 = vld [vmem:[#allocation8 + $0x1dc] sm:$0xf]
        %v7256 = vunpack.c.l.b16 %v7224
        %v7257 = vunpack.c.h.b16 %v7224
        %v7258 = vunpack.c.l.b16 %v7225
        %v7259 = vunpack.c.l.b16 %v7226
        %v7260 = vunpack.c.h.b16 %v7226
        %v7261 = vunpack.c.l.b16 %v7227
        %v7262 = vunpack.c.l.b16 %v7228
        %v7263 = vunpack.c.h.b16 %v7228
        %v7264 = vunpack.c.l.b16 %v7229
        %v7265 = vunpack.c.l.b16 %v7230
        %v7266 = vunpack.c.h.b16 %v7230
        %v7267 = vunpack.c.l.b16 %v7231
        %v7268 = vunpack.c.l.b16 %v7232
        %v7269 = vunpack.c.h.b16 %v7232
        %v7270 = vunpack.c.l.b16 %v7233
        %v7271 = vunpack.c.l.b16 %v7234
        %v7272 = vunpack.c.h.b16 %v7234
        %v7273 = vunpack.c.l.b16 %v7235
        %v7274 = vunpack.c.l.b16 %v7236
        %v7275 = vunpack.c.h.b16 %v7236
        %v7276 = vunpack.c.l.b16 %v7237
        %v7277 = vunpack.c.l.b16 %v7238
        %v7278 = vunpack.c.h.b16 %v7238
        %v7279 = vunpack.c.l.b16 %v7239
        %v7280 = vpack.c.b16 %v7259, %v7256
        %v7281 = vpack.c.b16 %v7260, %v7257
        %v7282 = vpack.c.b16 %v7261, %v7258
        %v7283 = vpack.c.b16 %v7265, %v7262
        %v7284 = vpack.c.b16 %v7266, %v7263
        %v7285 = vpack.c.b16 %v7267, %v7264
        %v7286 = vpack.c.b16 %v7271, %v7268
        %v7287 = vpack.c.b16 %v7272, %v7269
        %v7288 = vpack.c.b16 %v7273, %v7270
        %v7289 = vpack.c.b16 %v7277, %v7274
        %v7290 = vpack.c.b16 %v7278, %v7275
        %v7291 = vpack.c.b16 %v7279, %v7276
        %v7305 = vsel %vm3158, %v7216, 0
        %v7308 = vsel %vm3158, %v7217, 0
        %v7311 = vsel %vm3158, %v7218, 0
        %v7314 = vsel %vm3158, %v7219, 0
        %v7317 = vsel %vm3158, %v7220, 0
        %v7320 = vsel %vm3158, %v7221, 0
        %v7323 = vsel %vm3158, %v7222, 0
        %v7326 = vsel %vm3158, %v7223, 0
        %7328 = vmatpush.bf16.msra.mxu0 0
        %7329 = vmatpush.bf16.msra.mxu0 0
        %7330 = vmatpush.bf16.msra.mxu0 0
        %7331 = vmatpush.bf16.msra.mxu0 0
        %7332 = vmatpush.bf16.msra.mxu0 %v7289
        %7333 = vmatpush.bf16.msra.mxu0 %v7286
        %7334 = vmatpush.bf16.msra.mxu0 %v7283
        %7335 = vmatpush.bf16.msra.mxu0 %v7280
        %7336 = vmatmul.bf16.gmra.mxu0 %v7305
        %v7337 = vpop.f32.mrf.mxu0
        %v7338 = vadd.f32 0.0, %v7337
        %v7339 = vpop.f32.mrf.mxu0
        %v7340 = vadd.f32 0.0, %v7339
        %7341 = vmatmul.bf16.gmra.mxu0 %v7308
        %v7342 = vpop.f32.mrf.mxu0
        %v7343 = vadd.f32 0.0, %v7342
        %v7344 = vpop.f32.mrf.mxu0
        %v7345 = vadd.f32 0.0, %v7344
        %7346 = vmatmul.bf16.gmra.mxu0 %v7311
        %v7347 = vpop.f32.mrf.mxu0
        %v7348 = vadd.f32 0.0, %v7347
        %v7349 = vpop.f32.mrf.mxu0
        %v7350 = vadd.f32 0.0, %v7349
        %7351 = vmatmul.bf16.gmra.mxu0 %v7314
        %v7352 = vpop.f32.mrf.mxu0
        %v7353 = vadd.f32 0.0, %v7352
        %v7354 = vpop.f32.mrf.mxu0
        %v7355 = vadd.f32 0.0, %v7354
        %7356 = vmatmul.bf16.gmra.mxu0 %v7317
        %v7357 = vpop.f32.mrf.mxu0
        %v7358 = vadd.f32 0.0, %v7357
        %v7359 = vpop.f32.mrf.mxu0
        %v7360 = vadd.f32 0.0, %v7359
        %7361 = vmatmul.bf16.gmra.mxu0 %v7320
        %v7362 = vpop.f32.mrf.mxu0
        %v7363 = vadd.f32 0.0, %v7362
        %v7364 = vpop.f32.mrf.mxu0
        %v7365 = vadd.f32 0.0, %v7364
        %7366 = vmatmul.bf16.gmra.mxu0 %v7323
        %v7367 = vpop.f32.mrf.mxu0
        %v7368 = vadd.f32 0.0, %v7367
        %v7369 = vpop.f32.mrf.mxu0
        %v7370 = vadd.f32 0.0, %v7369
        %7371 = vmatmul.bf16.gmra.mxu0 %v7326
        %v7372 = vpop.f32.mrf.mxu0
        %v7373 = vadd.f32 0.0, %v7372
        %v7374 = vpop.f32.mrf.mxu0
        %v7375 = vadd.f32 0.0, %v7374
        %7376 = vdwg.mxu0
        %7377 = vmatpush.bf16.msra.mxu0 0
        %7378 = vmatpush.bf16.msra.mxu0 0
        %7379 = vmatpush.bf16.msra.mxu0 0
        %7380 = vmatpush.bf16.msra.mxu0 0
        %7381 = vmatpush.bf16.msra.mxu0 %v7290
        %7382 = vmatpush.bf16.msra.mxu0 %v7287
        %7383 = vmatpush.bf16.msra.mxu0 %v7284
        %7384 = vmatpush.bf16.msra.mxu0 %v7281
        %7385 = vmatmul.bf16.gmra.mxu0 %v7305
        %v7386 = vpop.f32.mrf.mxu0
        %v7387 = vadd.f32 0.0, %v7386
        %v7388 = vpop.f32.mrf.mxu0
        %v7389 = vadd.f32 0.0, %v7388
        %7390 = vmatmul.bf16.gmra.mxu0 %v7308
        %v7391 = vpop.f32.mrf.mxu0
        %v7392 = vadd.f32 0.0, %v7391
        %v7393 = vpop.f32.mrf.mxu0
        %v7394 = vadd.f32 0.0, %v7393
        %7395 = vmatmul.bf16.gmra.mxu0 %v7311
        %v7396 = vpop.f32.mrf.mxu0
        %v7397 = vadd.f32 0.0, %v7396
        %v7398 = vpop.f32.mrf.mxu0
        %v7399 = vadd.f32 0.0, %v7398
        %7400 = vmatmul.bf16.gmra.mxu0 %v7314
        %v7401 = vpop.f32.mrf.mxu0
        %v7402 = vadd.f32 0.0, %v7401
        %v7403 = vpop.f32.mrf.mxu0
        %v7404 = vadd.f32 0.0, %v7403
        %7405 = vmatmul.bf16.gmra.mxu0 %v7317
        %v7406 = vpop.f32.mrf.mxu0
        %v7407 = vadd.f32 0.0, %v7406
        %v7408 = vpop.f32.mrf.mxu0
        %v7409 = vadd.f32 0.0, %v7408
        %7410 = vmatmul.bf16.gmra.mxu0 %v7320
        %v7411 = vpop.f32.mrf.mxu0
        %v7412 = vadd.f32 0.0, %v7411
        %v7413 = vpop.f32.mrf.mxu0
        %v7414 = vadd.f32 0.0, %v7413
        %7415 = vmatmul.bf16.gmra.mxu0 %v7323
        %v7416 = vpop.f32.mrf.mxu0
        %v7417 = vadd.f32 0.0, %v7416
        %v7418 = vpop.f32.mrf.mxu0
        %v7419 = vadd.f32 0.0, %v7418
        %7420 = vmatmul.bf16.gmra.mxu0 %v7326
        %v7421 = vpop.f32.mrf.mxu0
        %v7422 = vadd.f32 0.0, %v7421
        %v7423 = vpop.f32.mrf.mxu0
        %v7424 = vadd.f32 0.0, %v7423
        %7425 = vdwg.mxu0
        %7426 = vmatpush.bf16.msra.mxu0 0
        %7427 = vmatpush.bf16.msra.mxu0 0
        %7428 = vmatpush.bf16.msra.mxu0 0
        %7429 = vmatpush.bf16.msra.mxu0 0
        %7430 = vmatpush.bf16.msra.mxu0 %v7291
        %7431 = vmatpush.bf16.msra.mxu0 %v7288
        %7432 = vmatpush.bf16.msra.mxu0 %v7285
        %7433 = vmatpush.bf16.msra.mxu0 %v7282
        %7434 = vmatmul.bf16.gmra.mxu0 %v7305
        %v7435 = vpop.f32.mrf.mxu0
        %v7436 = vadd.f32 0.0, %v7435
        %v7437 = vpop.f32.mrf.mxu0
        %v7438 = vadd.f32 0.0, %v7437
        %7439 = vmatmul.bf16.gmra.mxu0 %v7308
        %v7440 = vpop.f32.mrf.mxu0
        %v7441 = vadd.f32 0.0, %v7440
        %v7442 = vpop.f32.mrf.mxu0
        %v7443 = vadd.f32 0.0, %v7442
        %7444 = vmatmul.bf16.gmra.mxu0 %v7311
        %v7445 = vpop.f32.mrf.mxu0
        %v7446 = vadd.f32 0.0, %v7445
        %v7447 = vpop.f32.mrf.mxu0
        %v7448 = vadd.f32 0.0, %v7447
        %7449 = vmatmul.bf16.gmra.mxu0 %v7314
        %v7450 = vpop.f32.mrf.mxu0
        %v7451 = vadd.f32 0.0, %v7450
        %v7452 = vpop.f32.mrf.mxu0
        %v7453 = vadd.f32 0.0, %v7452
        %7454 = vmatmul.bf16.gmra.mxu0 %v7317
        %v7455 = vpop.f32.mrf.mxu0
        %v7456 = vadd.f32 0.0, %v7455
        %v7457 = vpop.f32.mrf.mxu0
        %v7458 = vadd.f32 0.0, %v7457
        %7459 = vmatmul.bf16.gmra.mxu0 %v7320
        %v7460 = vpop.f32.mrf.mxu0
        %v7461 = vadd.f32 0.0, %v7460
        %v7462 = vpop.f32.mrf.mxu0
        %v7463 = vadd.f32 0.0, %v7462
        %7464 = vmatmul.bf16.gmra.mxu0 %v7323
        %v7465 = vpop.f32.mrf.mxu0
        %v7466 = vadd.f32 0.0, %v7465
        %v7467 = vpop.f32.mrf.mxu0
        %v7468 = vadd.f32 0.0, %v7467
        %7469 = vmatmul.bf16.gmra.mxu0 %v7326
        %v7470 = vpop.f32.mrf.mxu0
        %v7471 = vadd.f32 0.0, %v7470
        %v7472 = vpop.f32.mrf.mxu0
        %v7473 = vadd.f32 0.0, %v7472
        %7474 = vdwg.mxu0
        %v7475 = vadd.f32 %v6584, %v7338
        %v7476 = vadd.f32 %v6585, %v7387
        %v7477 = vadd.f32 %v6586, %v7436
        %v7478 = vadd.f32 %v6587, %v7340
        %v7479 = vadd.f32 %v6588, %v7389
        %v7480 = vadd.f32 %v6589, %v7438
        %v7481 = vadd.f32 %v6590, %v7343
        %v7482 = vadd.f32 %v6591, %v7392
        %v7483 = vadd.f32 %v6592, %v7441
        %v7484 = vadd.f32 %v6593, %v7345
        %v7485 = vadd.f32 %v6594, %v7394
        %v7486 = vadd.f32 %v6595, %v7443
        %v7487 = vadd.f32 %v6596, %v7348
        %v7488 = vadd.f32 %v6597, %v7397
        %v7489 = vadd.f32 %v6598, %v7446
        %v7490 = vadd.f32 %v6599, %v7350
        %v7491 = vadd.f32 %v6600, %v7399
        %v7492 = vadd.f32 %v6601, %v7448
        %v7493 = vadd.f32 %v6602, %v7353
        %v7494 = vadd.f32 %v6603, %v7402
        %v7495 = vadd.f32 %v6604, %v7451
        %v7496 = vadd.f32 %v6605, %v7355
        %v7497 = vadd.f32 %v6606, %v7404
        %v7498 = vadd.f32 %v6607, %v7453
        %v7499 = vadd.f32 %v6608, %v7358
        %v7500 = vadd.f32 %v6609, %v7407
        %v7501 = vadd.f32 %v6610, %v7456
        %v7502 = vadd.f32 %v6611, %v7360
        %v7503 = vadd.f32 %v6612, %v7409
        %v7504 = vadd.f32 %v6613, %v7458
        %v7505 = vadd.f32 %v6614, %v7363
        %v7506 = vadd.f32 %v6615, %v7412
        %v7507 = vadd.f32 %v6616, %v7461
        %v7508 = vadd.f32 %v6617, %v7365
        %v7509 = vadd.f32 %v6618, %v7414
        %v7510 = vadd.f32 %v6619, %v7463
        %v7511 = vadd.f32 %v6620, %v7368
        %v7512 = vadd.f32 %v6621, %v7417
        %v7513 = vadd.f32 %v6622, %v7466
        %v7514 = vadd.f32 %v6623, %v7370
        %v7515 = vadd.f32 %v6624, %v7419
        %v7516 = vadd.f32 %v6625, %v7468
        %v7517 = vadd.f32 %v6626, %v7373
        %v7518 = vadd.f32 %v6627, %v7422
        %v7519 = vadd.f32 %v6628, %v7471
        %v7520 = vadd.f32 %v6629, %v7375
        %v7521 = vadd.f32 %v6630, %v7424
        %v7522 = vadd.f32 %v6631, %v7473
        %7523 = vrot.lane.b32.xlu0 %v6640, 64
        %v7524 = vpop.permute.xlu0 %7523
        %7525 = vrot.lane.b32.xlu0 %v6641, 64
        %v7526 = vpop.permute.xlu0 %7525
        %7527 = vrot.lane.b32.xlu0 %v6650, 64
        %v7528 = vpop.permute.xlu0 %7527
        %7529 = vrot.lane.b32.xlu0 %v6651, 64
        %v7530 = vpop.permute.xlu0 %7529
        %v7532 = vsel %vm3158, %v7524, 0
        %v7535 = vsel %vm3158, %v7526, 0
        %v7538 = vsel %vm3158, %v7528, 0
        %v7541 = vsel %vm3158, %v7530, 0
        %7543 = vmatpush.bf16.xpose.msra.mxu0 0
        %7544 = vmatpush.bf16.xpose.msra.mxu0 0
        %7545 = vmatpush.bf16.xpose.msra.mxu0 0
        %7546 = vmatpush.bf16.xpose.msra.mxu0 0
        %7547 = vmatpush.bf16.xpose.msra.mxu0 0
        %7548 = vmatpush.bf16.xpose.msra.mxu0 0
        %7549 = vmatpush.bf16.xpose.msra.mxu0 %v7541
        %7550 = vmatpush.bf16.xpose.msra.mxu0 %v7538
        %7551 = vmatmul.bf16.gmra.mxu0 %v7532
        %v7552 = vpop.f32.mrf.mxu0
        %v7553 = vadd.f32 %v3134, %v7552
        %v7554 = vpop.f32.mrf.mxu0
        %v7555 = vadd.f32 %v3135, %v7554
        %7556 = vmatmul.bf16.gmra.mxu0 %v7535
        %v7557 = vpop.f32.mrf.mxu0
        %v7558 = vadd.f32 %v3136, %v7557
        %v7559 = vpop.f32.mrf.mxu0
        %v7560 = vadd.f32 %v3137, %v7559
        %7561 = vdwg.mxu0
        %7562 = vrot.lane.b32.xlu0 %v6691, 64
        %v7563 = vpop.permute.xlu0 %7562
        %7564 = vrot.lane.b32.xlu0 %v6692, 64
        %v7565 = vpop.permute.xlu0 %7564
        %7566 = vrot.lane.b32.xlu0 %v6701, 64
        %v7567 = vpop.permute.xlu0 %7566
        %7568 = vrot.lane.b32.xlu0 %v6702, 64
        %v7569 = vpop.permute.xlu0 %7568
        %v7571 = vsel %vm3158, %v7563, 0
        %v7574 = vsel %vm3158, %v7565, 0
        %v7577 = vsel %vm3158, %v7567, 0
        %v7580 = vsel %vm3158, %v7569, 0
        %7582 = vmatpush.bf16.xpose.msra.mxu0 0
        %7583 = vmatpush.bf16.xpose.msra.mxu0 0
        %7584 = vmatpush.bf16.xpose.msra.mxu0 0
        %7585 = vmatpush.bf16.xpose.msra.mxu0 0
        %7586 = vmatpush.bf16.xpose.msra.mxu0 0
        %7587 = vmatpush.bf16.xpose.msra.mxu0 0
        %7588 = vmatpush.bf16.xpose.msra.mxu0 %v7580
        %7589 = vmatpush.bf16.xpose.msra.mxu0 %v7577
        %7590 = vmatmul.bf16.gmra.mxu0 %v7571
        %v7591 = vpop.f32.mrf.mxu0
        %v7592 = vadd.f32 %v3134, %v7591
        %v7593 = vpop.f32.mrf.mxu0
        %v7594 = vadd.f32 %v3135, %v7593
        %7595 = vmatmul.bf16.gmra.mxu0 %v7574
        %v7596 = vpop.f32.mrf.mxu0
        %v7597 = vadd.f32 %v3136, %v7596
        %v7598 = vpop.f32.mrf.mxu0
        %v7599 = vadd.f32 %v3137, %v7598
        %7600 = vdwg.mxu0
        %7601 = vrot.lane.b32.xlu0 %v6742, 64
        %v7602 = vpop.permute.xlu0 %7601
        %7603 = vrot.lane.b32.xlu0 %v6743, 64
        %v7604 = vpop.permute.xlu0 %7603
        %7605 = vrot.lane.b32.xlu0 %v6752, 64
        %v7606 = vpop.permute.xlu0 %7605
        %7607 = vrot.lane.b32.xlu0 %v6753, 64
        %v7608 = vpop.permute.xlu0 %7607
        %v7610 = vsel %vm3158, %v7602, 0
        %v7613 = vsel %vm3158, %v7604, 0
        %v7616 = vsel %vm3158, %v7606, 0
        %v7619 = vsel %vm3158, %v7608, 0
        %7621 = vmatpush.bf16.xpose.msra.mxu0 0
        %7622 = vmatpush.bf16.xpose.msra.mxu0 0
        %7623 = vmatpush.bf16.xpose.msra.mxu0 0
        %7624 = vmatpush.bf16.xpose.msra.mxu0 0
        %7625 = vmatpush.bf16.xpose.msra.mxu0 0
        %7626 = vmatpush.bf16.xpose.msra.mxu0 0
        %7627 = vmatpush.bf16.xpose.msra.mxu0 %v7619
        %7628 = vmatpush.bf16.xpose.msra.mxu0 %v7616
        %7629 = vmatmul.bf16.gmra.mxu0 %v7610
        %v7630 = vpop.f32.mrf.mxu0
        %v7631 = vadd.f32 %v3134, %v7630
        %v7632 = vpop.f32.mrf.mxu0
        %v7633 = vadd.f32 %v3135, %v7632
        %7634 = vmatmul.bf16.gmra.mxu0 %v7613
        %v7635 = vpop.f32.mrf.mxu0
        %v7636 = vadd.f32 %v3136, %v7635
        %v7637 = vpop.f32.mrf.mxu0
        %v7638 = vadd.f32 %v3137, %v7637
        %7639 = vdwg.mxu0
        %7640 = vrot.lane.b32.xlu0 %v6793, 64
        %v7641 = vpop.permute.xlu0 %7640
        %7642 = vrot.lane.b32.xlu0 %v6794, 64
        %v7643 = vpop.permute.xlu0 %7642
        %7644 = vrot.lane.b32.xlu0 %v6803, 64
        %v7645 = vpop.permute.xlu0 %7644
        %7646 = vrot.lane.b32.xlu0 %v6804, 64
        %v7647 = vpop.permute.xlu0 %7646
        %v7649 = vsel %vm3158, %v7641, 0
        %v7652 = vsel %vm3158, %v7643, 0
        %v7655 = vsel %vm3158, %v7645, 0
        %v7658 = vsel %vm3158, %v7647, 0
        %7660 = vmatpush.bf16.xpose.msra.mxu0 0
        %7661 = vmatpush.bf16.xpose.msra.mxu0 0
        %7662 = vmatpush.bf16.xpose.msra.mxu0 0
        %7663 = vmatpush.bf16.xpose.msra.mxu0 0
        %7664 = vmatpush.bf16.xpose.msra.mxu0 0
        %7665 = vmatpush.bf16.xpose.msra.mxu0 0
        %7666 = vmatpush.bf16.xpose.msra.mxu0 %v7658
        %7667 = vmatpush.bf16.xpose.msra.mxu0 %v7655
        %7668 = vmatmul.bf16.gmra.mxu0 %v7649
        %v7669 = vpop.f32.mrf.mxu0
        %v7670 = vadd.f32 %v3134, %v7669
        %v7671 = vpop.f32.mrf.mxu0
        %v7672 = vadd.f32 %v3135, %v7671
        %7673 = vmatmul.bf16.gmra.mxu0 %v7652
        %v7674 = vpop.f32.mrf.mxu0
        %v7675 = vadd.f32 %v3136, %v7674
        %v7676 = vpop.f32.mrf.mxu0
        %v7677 = vadd.f32 %v3137, %v7676
        %7678 = vdwg.mxu0
        %v7679 = vsel %vm3343, %v7553, -inf
        %7680 = vmax.xlane.f32.xlu0 %v7679
        %v7681 = vpop.xlane.xlu0 %7680
        %v7682 = vsel %vm3343, %v7555, -inf
        %7683 = vmax.xlane.f32.xlu0 %v7682
        %v7684 = vpop.xlane.xlu0 %7683
        %v7685 = vsel %vm3343, %v7558, -inf
        %7686 = vmax.xlane.f32.xlu0 %v7685
        %v7687 = vpop.xlane.xlu0 %7686
        %v7688 = vsel %vm3343, %v7560, -inf
        %7689 = vmax.xlane.f32.xlu0 %v7688
        %v7690 = vpop.xlane.xlu0 %7689
        %v7691 = vsel %vm3343, %v7592, -inf
        %7692 = vmax.xlane.f32.xlu0 %v7691
        %v7693 = vpop.xlane.xlu0 %7692
        %v7694 = vsel %vm3343, %v7594, -inf
        %7695 = vmax.xlane.f32.xlu0 %v7694
        %v7696 = vpop.xlane.xlu0 %7695
        %v7697 = vsel %vm3343, %v7597, -inf
        %7698 = vmax.xlane.f32.xlu0 %v7697
        %v7699 = vpop.xlane.xlu0 %7698
        %v7700 = vsel %vm3343, %v7599, -inf
        %7701 = vmax.xlane.f32.xlu0 %v7700
        %v7702 = vpop.xlane.xlu0 %7701
        %v7703 = vsel %vm3343, %v7631, -inf
        %7704 = vmax.xlane.f32.xlu0 %v7703
        %v7705 = vpop.xlane.xlu0 %7704
        %v7706 = vsel %vm3343, %v7633, -inf
        %7707 = vmax.xlane.f32.xlu0 %v7706
        %v7708 = vpop.xlane.xlu0 %7707
        %v7709 = vsel %vm3343, %v7636, -inf
        %7710 = vmax.xlane.f32.xlu0 %v7709
        %v7711 = vpop.xlane.xlu0 %7710
        %v7712 = vsel %vm3343, %v7638, -inf
        %7713 = vmax.xlane.f32.xlu0 %v7712
        %v7714 = vpop.xlane.xlu0 %7713
        %v7715 = vsel %vm3343, %v7670, -inf
        %7716 = vmax.xlane.f32.xlu0 %v7715
        %v7717 = vpop.xlane.xlu0 %7716
        %v7718 = vsel %vm3343, %v7672, -inf
        %7719 = vmax.xlane.f32.xlu0 %v7718
        %v7720 = vpop.xlane.xlu0 %7719
        %v7721 = vsel %vm3343, %v7675, -inf
        %7722 = vmax.xlane.f32.xlu0 %v7721
        %v7723 = vpop.xlane.xlu0 %7722
        %v7724 = vsel %vm3343, %v7677, -inf
        %7725 = vmax.xlane.f32.xlu0 %v7724
        %v7726 = vpop.xlane.xlu0 %7725
        %v7727 = vsub.f32 %v7553, %v7681
        %v7728 = vsub.f32 %v7555, %v7684
        %v7729 = vsub.f32 %v7558, %v7687
        %v7730 = vsub.f32 %v7560, %v7690
        %v7731 = vsub.f32 %v7592, %v7693
        %v7732 = vsub.f32 %v7594, %v7696
        %v7733 = vsub.f32 %v7597, %v7699
        %v7734 = vsub.f32 %v7599, %v7702
        %v7735 = vsub.f32 %v7631, %v7705
        %v7736 = vsub.f32 %v7633, %v7708
        %v7737 = vsub.f32 %v7636, %v7711
        %v7738 = vsub.f32 %v7638, %v7714
        %v7739 = vsub.f32 %v7670, %v7717
        %v7740 = vsub.f32 %v7672, %v7720
        %v7741 = vsub.f32 %v7675, %v7723
        %v7742 = vsub.f32 %v7677, %v7726
        %v7743 = vmul.f32 %v7727, 1.442695
        %v7744 = vpow.pop %v7743
        %v7745 = vmul.f32 %v7728, 1.442695
        %v7746 = vpow.pop %v7745
        %v7747 = vmul.f32 %v7729, 1.442695
        %v7748 = vpow.pop %v7747
        %v7749 = vmul.f32 %v7730, 1.442695
        %v7750 = vpow.pop %v7749
        %v7751 = vmul.f32 %v7731, 1.442695
        %v7752 = vpow.pop %v7751
        %v7753 = vmul.f32 %v7732, 1.442695
        %v7754 = vpow.pop %v7753
        %v7755 = vmul.f32 %v7733, 1.442695
        %v7756 = vpow.pop %v7755
        %v7757 = vmul.f32 %v7734, 1.442695
        %v7758 = vpow.pop %v7757
        %v7759 = vmul.f32 %v7735, 1.442695
        %v7760 = vpow.pop %v7759
        %v7761 = vmul.f32 %v7736, 1.442695
        %v7762 = vpow.pop %v7761
        %v7763 = vmul.f32 %v7737, 1.442695
        %v7764 = vpow.pop %v7763
        %v7765 = vmul.f32 %v7738, 1.442695
        %v7766 = vpow.pop %v7765
        %v7767 = vmul.f32 %v7739, 1.442695
        %v7768 = vpow.pop %v7767
        %v7769 = vmul.f32 %v7740, 1.442695
        %v7770 = vpow.pop %v7769
        %v7771 = vmul.f32 %v7741, 1.442695
        %v7772 = vpow.pop %v7771
        %v7773 = vmul.f32 %v7742, 1.442695
        %v7774 = vpow.pop %v7773
        %v7775 = vsel %vm3343, %v7744, 0.0
        %7776 = vadd.xlane.f32.xlu0 %v7775
        %v7777 = vpop.xlane.xlu0 %7776
        %v7778 = vsel %vm3343, %v7746, 0.0
        %7779 = vadd.xlane.f32.xlu0 %v7778
        %v7780 = vpop.xlane.xlu0 %7779
        %v7781 = vsel %vm3343, %v7748, 0.0
        %7782 = vadd.xlane.f32.xlu0 %v7781
        %v7783 = vpop.xlane.xlu0 %7782
        %v7784 = vsel %vm3343, %v7750, 0.0
        %7785 = vadd.xlane.f32.xlu0 %v7784
        %v7786 = vpop.xlane.xlu0 %7785
        %v7787 = vsel %vm3343, %v7752, 0.0
        %7788 = vadd.xlane.f32.xlu0 %v7787
        %v7789 = vpop.xlane.xlu0 %7788
        %v7790 = vsel %vm3343, %v7754, 0.0
        %7791 = vadd.xlane.f32.xlu0 %v7790
        %v7792 = vpop.xlane.xlu0 %7791
        %v7793 = vsel %vm3343, %v7756, 0.0
        %7794 = vadd.xlane.f32.xlu0 %v7793
        %v7795 = vpop.xlane.xlu0 %7794
        %v7796 = vsel %vm3343, %v7758, 0.0
        %7797 = vadd.xlane.f32.xlu0 %v7796
        %v7798 = vpop.xlane.xlu0 %7797
        %v7799 = vsel %vm3343, %v7760, 0.0
        %7800 = vadd.xlane.f32.xlu0 %v7799
        %v7801 = vpop.xlane.xlu0 %7800
        %v7802 = vsel %vm3343, %v7762, 0.0
        %7803 = vadd.xlane.f32.xlu0 %v7802
        %v7804 = vpop.xlane.xlu0 %7803
        %v7805 = vsel %vm3343, %v7764, 0.0
        %7806 = vadd.xlane.f32.xlu0 %v7805
        %v7807 = vpop.xlane.xlu0 %7806
        %v7808 = vsel %vm3343, %v7766, 0.0
        %7809 = vadd.xlane.f32.xlu0 %v7808
        %v7810 = vpop.xlane.xlu0 %7809
        %v7811 = vsel %vm3343, %v7768, 0.0
        %7812 = vadd.xlane.f32.xlu0 %v7811
        %v7813 = vpop.xlane.xlu0 %7812
        %v7814 = vsel %vm3343, %v7770, 0.0
        %7815 = vadd.xlane.f32.xlu0 %v7814
        %v7816 = vpop.xlane.xlu0 %7815
        %v7817 = vsel %vm3343, %v7772, 0.0
        %7818 = vadd.xlane.f32.xlu0 %v7817
        %v7819 = vpop.xlane.xlu0 %7818
        %v7820 = vsel %vm3343, %v7774, 0.0
        %7821 = vadd.xlane.f32.xlu0 %v7820
        %v7822 = vpop.xlane.xlu0 %7821
        %v7823 = vrcp.pop %v7777
        %v7824 = vrcp.pop %v7780
        %v7825 = vrcp.pop %v7783
        %v7826 = vrcp.pop %v7786
        %v7827 = vrcp.pop %v7789
        %v7828 = vrcp.pop %v7792
        %v7829 = vrcp.pop %v7795
        %v7830 = vrcp.pop %v7798
        %v7831 = vrcp.pop %v7801
        %v7832 = vrcp.pop %v7804
        %v7833 = vrcp.pop %v7807
        %v7834 = vrcp.pop %v7810
        %v7835 = vrcp.pop %v7813
        %v7836 = vrcp.pop %v7816
        %v7837 = vrcp.pop %v7819
        %v7838 = vrcp.pop %v7822
        %v7839 = vmul.f32 %v7744, %v7823
        %v7840 = vmul.f32 %v7746, %v7824
        %v7841 = vmul.f32 %v7748, %v7825
        %v7842 = vmul.f32 %v7750, %v7826
        %v7843 = vmul.f32 %v7752, %v7827
        %v7844 = vmul.f32 %v7754, %v7828
        %v7845 = vmul.f32 %v7756, %v7829
        %v7846 = vmul.f32 %v7758, %v7830
        %v7847 = vmul.f32 %v7760, %v7831
        %v7848 = vmul.f32 %v7762, %v7832
        %v7849 = vmul.f32 %v7764, %v7833
        %v7850 = vmul.f32 %v7766, %v7834
        %v7851 = vmul.f32 %v7768, %v7835
        %v7852 = vmul.f32 %v7770, %v7836
        %v7853 = vmul.f32 %v7772, %v7837
        %v7854 = vmul.f32 %v7774, %v7838
        %v7855 = vpack.c.bf16 %v7839, %v7839
        %v7856 = vpack.c.bf16 %v7840, %v7840
        %v7857 = vpack.c.bf16 %v7841, %v7841
        %v7858 = vpack.c.bf16 %v7842, %v7842
        %v7859 = vpack.c.bf16 %v7843, %v7843
        %v7860 = vpack.c.bf16 %v7844, %v7844
        %v7861 = vpack.c.bf16 %v7845, %v7845
        %v7862 = vpack.c.bf16 %v7846, %v7846
        %v7863 = vpack.c.bf16 %v7847, %v7847
        %v7864 = vpack.c.bf16 %v7848, %v7848
        %v7865 = vpack.c.bf16 %v7849, %v7849
        %v7866 = vpack.c.bf16 %v7850, %v7850
        %v7867 = vpack.c.bf16 %v7851, %v7851
        %v7868 = vpack.c.bf16 %v7852, %v7852
        %v7869 = vpack.c.bf16 %v7853, %v7853
        %v7870 = vpack.c.bf16 %v7854, %v7854
        %v7875 = vunpack.c.l.b16 %v7855
        %v7876 = vunpack.c.l.b16 %v7856
        %v7877 = vunpack.c.l.b16 %v7857
        %v7878 = vunpack.c.l.b16 %v7858
        %v7879 = vpack.c.b16 %v7876, %v7875
        %v7880 = vpack.c.b16 %v7878, %v7877
        %7881 = vrot.lane.b32.xlu0 %v7046, 64
        %v7882 = vpop.permute.xlu0 %7881
        %7883 = vrot.lane.b32.xlu0 %v7047, 64
        %v7884 = vpop.permute.xlu0 %7883
        %v7888 = vsel %vm3343, %v7879, 0
        %v7891 = vsel %vm3343, %v7880, 0
        %7893 = vmatpush.bf16.msra.mxu0 0
        %7894 = vmatpush.bf16.msra.mxu0 0
        %7895 = vmatpush.bf16.msra.mxu0 0
        %7896 = vmatpush.bf16.msra.mxu0 0
        %7897 = vmatpush.bf16.msra.mxu0 0
        %7898 = vmatpush.bf16.msra.mxu0 0
        %7899 = vmatpush.bf16.msra.mxu0 %v7884
        %7900 = vmatpush.bf16.msra.mxu0 %v7882
        %7901 = vmatmul.bf16.gmra.mxu0 %v7888
        %v7902 = vpop.f32.mrf.mxu0
        %v7903 = vadd.f32 0.0, %v7902
        %v7904 = vpop.f32.mrf.mxu0
        %v7905 = vadd.f32 0.0, %v7904
        %7906 = vmatmul.bf16.gmra.mxu0 %v7891
        %v7907 = vpop.f32.mrf.mxu0
        %v7908 = vadd.f32 0.0, %v7907
        %v7909 = vpop.f32.mrf.mxu0
        %v7910 = vadd.f32 0.0, %v7909
        %7911 = vdwg.mxu0
        %v7916 = vunpack.c.l.b16 %v7859
        %v7917 = vunpack.c.l.b16 %v7860
        %v7918 = vunpack.c.l.b16 %v7861
        %v7919 = vunpack.c.l.b16 %v7862
        %v7920 = vpack.c.b16 %v7917, %v7916
        %v7921 = vpack.c.b16 %v7919, %v7918
        %7922 = vrot.lane.b32.xlu0 %v7093, 64
        %v7923 = vpop.permute.xlu0 %7922
        %7924 = vrot.lane.b32.xlu0 %v7094, 64
        %v7925 = vpop.permute.xlu0 %7924
        %v7929 = vsel %vm3343, %v7920, 0
        %v7932 = vsel %vm3343, %v7921, 0
        %7934 = vmatpush.bf16.msra.mxu0 0
        %7935 = vmatpush.bf16.msra.mxu0 0
        %7936 = vmatpush.bf16.msra.mxu0 0
        %7937 = vmatpush.bf16.msra.mxu0 0
        %7938 = vmatpush.bf16.msra.mxu0 0
        %7939 = vmatpush.bf16.msra.mxu0 0
        %7940 = vmatpush.bf16.msra.mxu0 %v7925
        %7941 = vmatpush.bf16.msra.mxu0 %v7923
        %7942 = vmatmul.bf16.gmra.mxu0 %v7929
        %v7943 = vpop.f32.mrf.mxu0
        %v7944 = vadd.f32 0.0, %v7943
        %v7945 = vpop.f32.mrf.mxu0
        %v7946 = vadd.f32 0.0, %v7945
        %7947 = vmatmul.bf16.gmra.mxu0 %v7932
        %v7948 = vpop.f32.mrf.mxu0
        %v7949 = vadd.f32 0.0, %v7948
        %v7950 = vpop.f32.mrf.mxu0
        %v7951 = vadd.f32 0.0, %v7950
        %7952 = vdwg.mxu0
        %v7957 = vunpack.c.l.b16 %v7863
        %v7958 = vunpack.c.l.b16 %v7864
        %v7959 = vunpack.c.l.b16 %v7865
        %v7960 = vunpack.c.l.b16 %v7866
        %v7961 = vpack.c.b16 %v7958, %v7957
        %v7962 = vpack.c.b16 %v7960, %v7959
        %7963 = vrot.lane.b32.xlu0 %v7140, 64
        %v7964 = vpop.permute.xlu0 %7963
        %7965 = vrot.lane.b32.xlu0 %v7141, 64
        %v7966 = vpop.permute.xlu0 %7965
        %v7970 = vsel %vm3343, %v7961, 0
        %v7973 = vsel %vm3343, %v7962, 0
        %7975 = vmatpush.bf16.msra.mxu0 0
        %7976 = vmatpush.bf16.msra.mxu0 0
        %7977 = vmatpush.bf16.msra.mxu0 0
        %7978 = vmatpush.bf16.msra.mxu0 0
        %7979 = vmatpush.bf16.msra.mxu0 0
        %7980 = vmatpush.bf16.msra.mxu0 0
        %7981 = vmatpush.bf16.msra.mxu0 %v7966
        %7982 = vmatpush.bf16.msra.mxu0 %v7964
        %7983 = vmatmul.bf16.gmra.mxu0 %v7970
        %v7984 = vpop.f32.mrf.mxu0
        %v7985 = vadd.f32 0.0, %v7984
        %v7986 = vpop.f32.mrf.mxu0
        %v7987 = vadd.f32 0.0, %v7986
        %7988 = vmatmul.bf16.gmra.mxu0 %v7973
        %v7989 = vpop.f32.mrf.mxu0
        %v7990 = vadd.f32 0.0, %v7989
        %v7991 = vpop.f32.mrf.mxu0
        %v7992 = vadd.f32 0.0, %v7991
        %7993 = vdwg.mxu0
        %v7998 = vunpack.c.l.b16 %v7867
        %v7999 = vunpack.c.l.b16 %v7868
        %v8000 = vunpack.c.l.b16 %v7869
        %v8001 = vunpack.c.l.b16 %v7870
        %v8002 = vpack.c.b16 %v7999, %v7998
        %v8003 = vpack.c.b16 %v8001, %v8000
        %8004 = vrot.lane.b32.xlu0 %v7187, 64
        %v8005 = vpop.permute.xlu0 %8004
        %8006 = vrot.lane.b32.xlu0 %v7188, 64
        %v8007 = vpop.permute.xlu0 %8006
        %v8011 = vsel %vm3343, %v8002, 0
        %v8014 = vsel %vm3343, %v8003, 0
        %8016 = vmatpush.bf16.msra.mxu0 0
        %8017 = vmatpush.bf16.msra.mxu0 0
        %8018 = vmatpush.bf16.msra.mxu0 0
        %8019 = vmatpush.bf16.msra.mxu0 0
        %8020 = vmatpush.bf16.msra.mxu0 0
        %8021 = vmatpush.bf16.msra.mxu0 0
        %8022 = vmatpush.bf16.msra.mxu0 %v8007
        %8023 = vmatpush.bf16.msra.mxu0 %v8005
        %8024 = vmatmul.bf16.gmra.mxu0 %v8011
        %v8025 = vpop.f32.mrf.mxu0
        %v8026 = vadd.f32 0.0, %v8025
        %v8027 = vpop.f32.mrf.mxu0
        %v8028 = vadd.f32 0.0, %v8027
        %8029 = vmatmul.bf16.gmra.mxu0 %v8014
        %v8030 = vpop.f32.mrf.mxu0
        %v8031 = vadd.f32 0.0, %v8030
        %v8032 = vpop.f32.mrf.mxu0
        %v8033 = vadd.f32 0.0, %v8032
        %8034 = vdwg.mxu0
        %v8035 = vpack.c.bf16 %v7905, %v7903
        %v8036 = vpack.c.bf16 %v7910, %v7908
        %v8037 = vpack.c.bf16 %v7946, %v7944
        %v8038 = vpack.c.bf16 %v7951, %v7949
        %v8039 = vpack.c.bf16 %v7987, %v7985
        %v8040 = vpack.c.bf16 %v7992, %v7990
        %v8041 = vpack.c.bf16 %v8028, %v8026
        %v8042 = vpack.c.bf16 %v8033, %v8031
        %v8043 = vld [vmem:[#allocation8 + $0x1e0] sm:$0xff]
        %v8044 = vld [vmem:[#allocation8 + $0x1e8] sm:$0xf]
        %v8045 = vld [vmem:[#allocation8 + $0x1ec] sm:$0xff]
        %v8046 = vld [vmem:[#allocation8 + $0x1f4] sm:$0xf]
        %v8047 = vld [vmem:[#allocation8 + $0x1f8] sm:$0xff]
        %v8048 = vld [vmem:[#allocation8 + $0x200] sm:$0xf]
        %v8049 = vld [vmem:[#allocation8 + $0x204] sm:$0xff]
        %v8050 = vld [vmem:[#allocation8 + $0x20c] sm:$0xf]
        %v8051 = vld [vmem:[#allocation8 + $0x210] sm:$0xff]
        %v8052 = vld [vmem:[#allocation8 + $0x218] sm:$0xf]
        %v8053 = vld [vmem:[#allocation8 + $0x21c] sm:$0xff]
        %v8054 = vld [vmem:[#allocation8 + $0x224] sm:$0xf]
        %v8055 = vld [vmem:[#allocation8 + $0x228] sm:$0xff]
        %v8056 = vld [vmem:[#allocation8 + $0x230] sm:$0xf]
        %v8057 = vld [vmem:[#allocation8 + $0x234] sm:$0xff]
        %v8058 = vld [vmem:[#allocation8 + $0x23c] sm:$0xf]
        %v8075 = vunpack.c.l.b16 %v8043
        %v8076 = vunpack.c.h.b16 %v8043
        %v8077 = vunpack.c.l.b16 %v8044
        %v8078 = vunpack.c.l.b16 %v8045
        %v8079 = vunpack.c.h.b16 %v8045
        %v8080 = vunpack.c.l.b16 %v8046
        %v8081 = vunpack.c.l.b16 %v8047
        %v8082 = vunpack.c.h.b16 %v8047
        %v8083 = vunpack.c.l.b16 %v8048
        %v8084 = vunpack.c.l.b16 %v8049
        %v8085 = vunpack.c.h.b16 %v8049
        %v8086 = vunpack.c.l.b16 %v8050
        %v8087 = vunpack.c.l.b16 %v8051
        %v8088 = vunpack.c.h.b16 %v8051
        %v8089 = vunpack.c.l.b16 %v8052
        %v8090 = vunpack.c.l.b16 %v8053
        %v8091 = vunpack.c.h.b16 %v8053
        %v8092 = vunpack.c.l.b16 %v8054
        %v8093 = vunpack.c.l.b16 %v8055
        %v8094 = vunpack.c.h.b16 %v8055
        %v8095 = vunpack.c.l.b16 %v8056
        %v8096 = vunpack.c.l.b16 %v8057
        %v8097 = vunpack.c.h.b16 %v8057
        %v8098 = vunpack.c.l.b16 %v8058
        %v8099 = vpack.c.b16 %v8078, %v8075
        %v8100 = vpack.c.b16 %v8079, %v8076
        %v8101 = vpack.c.b16 %v8080, %v8077
        %v8102 = vpack.c.b16 %v8084, %v8081
        %v8103 = vpack.c.b16 %v8085, %v8082
        %v8104 = vpack.c.b16 %v8086, %v8083
        %v8105 = vpack.c.b16 %v8090, %v8087
        %v8106 = vpack.c.b16 %v8091, %v8088
        %v8107 = vpack.c.b16 %v8092, %v8089
        %v8108 = vpack.c.b16 %v8096, %v8093
        %v8109 = vpack.c.b16 %v8097, %v8094
        %v8110 = vpack.c.b16 %v8098, %v8095
        %v8124 = vsel %vm3158, %v8035, 0
        %v8127 = vsel %vm3158, %v8036, 0
        %v8130 = vsel %vm3158, %v8037, 0
        %v8133 = vsel %vm3158, %v8038, 0
        %v8136 = vsel %vm3158, %v8039, 0
        %v8139 = vsel %vm3158, %v8040, 0
        %v8142 = vsel %vm3158, %v8041, 0
        %v8145 = vsel %vm3158, %v8042, 0
        %8147 = vmatpush.bf16.msra.mxu0 0
        %8148 = vmatpush.bf16.msra.mxu0 0
        %8149 = vmatpush.bf16.msra.mxu0 0
        %8150 = vmatpush.bf16.msra.mxu0 0
        %8151 = vmatpush.bf16.msra.mxu0 %v8108
        %8152 = vmatpush.bf16.msra.mxu0 %v8105
        %8153 = vmatpush.bf16.msra.mxu0 %v8102
        %8154 = vmatpush.bf16.msra.mxu0 %v8099
        %8155 = vmatmul.bf16.gmra.mxu0 %v8124
        %v8156 = vpop.f32.mrf.mxu0
        %v8157 = vadd.f32 0.0, %v8156
        %v8158 = vpop.f32.mrf.mxu0
        %v8159 = vadd.f32 0.0, %v8158
        %8160 = vmatmul.bf16.gmra.mxu0 %v8127
        %v8161 = vpop.f32.mrf.mxu0
        %v8162 = vadd.f32 0.0, %v8161
        %v8163 = vpop.f32.mrf.mxu0
        %v8164 = vadd.f32 0.0, %v8163
        %8165 = vmatmul.bf16.gmra.mxu0 %v8130
        %v8166 = vpop.f32.mrf.mxu0
        %v8167 = vadd.f32 0.0, %v8166
        %v8168 = vpop.f32.mrf.mxu0
        %v8169 = vadd.f32 0.0, %v8168
        %8170 = vmatmul.bf16.gmra.mxu0 %v8133
        %v8171 = vpop.f32.mrf.mxu0
        %v8172 = vadd.f32 0.0, %v8171
        %v8173 = vpop.f32.mrf.mxu0
        %v8174 = vadd.f32 0.0, %v8173
        %8175 = vmatmul.bf16.gmra.mxu0 %v8136
        %v8176 = vpop.f32.mrf.mxu0
        %v8177 = vadd.f32 0.0, %v8176
        %v8178 = vpop.f32.mrf.mxu0
        %v8179 = vadd.f32 0.0, %v8178
        %8180 = vmatmul.bf16.gmra.mxu0 %v8139
        %v8181 = vpop.f32.mrf.mxu0
        %v8182 = vadd.f32 0.0, %v8181
        %v8183 = vpop.f32.mrf.mxu0
        %v8184 = vadd.f32 0.0, %v8183
        %8185 = vmatmul.bf16.gmra.mxu0 %v8142
        %v8186 = vpop.f32.mrf.mxu0
        %v8187 = vadd.f32 0.0, %v8186
        %v8188 = vpop.f32.mrf.mxu0
        %v8189 = vadd.f32 0.0, %v8188
        %8190 = vmatmul.bf16.gmra.mxu0 %v8145
        %v8191 = vpop.f32.mrf.mxu0
        %v8192 = vadd.f32 0.0, %v8191
        %v8193 = vpop.f32.mrf.mxu0
        %v8194 = vadd.f32 0.0, %v8193
        %8195 = vdwg.mxu0
        %8196 = vmatpush.bf16.msra.mxu0 0
        %8197 = vmatpush.bf16.msra.mxu0 0
        %8198 = vmatpush.bf16.msra.mxu0 0
        %8199 = vmatpush.bf16.msra.mxu0 0
        %8200 = vmatpush.bf16.msra.mxu0 %v8109
        %8201 = vmatpush.bf16.msra.mxu0 %v8106
        %8202 = vmatpush.bf16.msra.mxu0 %v8103
        %8203 = vmatpush.bf16.msra.mxu0 %v8100
        %8204 = vmatmul.bf16.gmra.mxu0 %v8124
        %v8205 = vpop.f32.mrf.mxu0
        %v8206 = vadd.f32 0.0, %v8205
        %v8207 = vpop.f32.mrf.mxu0
        %v8208 = vadd.f32 0.0, %v8207
        %8209 = vmatmul.bf16.gmra.mxu0 %v8127
        %v8210 = vpop.f32.mrf.mxu0
        %v8211 = vadd.f32 0.0, %v8210
        %v8212 = vpop.f32.mrf.mxu0
        %v8213 = vadd.f32 0.0, %v8212
        %8214 = vmatmul.bf16.gmra.mxu0 %v8130
        %v8215 = vpop.f32.mrf.mxu0
        %v8216 = vadd.f32 0.0, %v8215
        %v8217 = vpop.f32.mrf.mxu0
        %v8218 = vadd.f32 0.0, %v8217
        %8219 = vmatmul.bf16.gmra.mxu0 %v8133
        %v8220 = vpop.f32.mrf.mxu0
        %v8221 = vadd.f32 0.0, %v8220
        %v8222 = vpop.f32.mrf.mxu0
        %v8223 = vadd.f32 0.0, %v8222
        %8224 = vmatmul.bf16.gmra.mxu0 %v8136
        %v8225 = vpop.f32.mrf.mxu0
        %v8226 = vadd.f32 0.0, %v8225
        %v8227 = vpop.f32.mrf.mxu0
        %v8228 = vadd.f32 0.0, %v8227
        %8229 = vmatmul.bf16.gmra.mxu0 %v8139
        %v8230 = vpop.f32.mrf.mxu0
        %v8231 = vadd.f32 0.0, %v8230
        %v8232 = vpop.f32.mrf.mxu0
        %v8233 = vadd.f32 0.0, %v8232
        %8234 = vmatmul.bf16.gmra.mxu0 %v8142
        %v8235 = vpop.f32.mrf.mxu0
        %v8236 = vadd.f32 0.0, %v8235
        %v8237 = vpop.f32.mrf.mxu0
        %v8238 = vadd.f32 0.0, %v8237
        %8239 = vmatmul.bf16.gmra.mxu0 %v8145
        %v8240 = vpop.f32.mrf.mxu0
        %v8241 = vadd.f32 0.0, %v8240
        %v8242 = vpop.f32.mrf.mxu0
        %v8243 = vadd.f32 0.0, %v8242
        %8244 = vdwg.mxu0
        %8245 = vmatpush.bf16.msra.mxu0 0
        %8246 = vmatpush.bf16.msra.mxu0 0
        %8247 = vmatpush.bf16.msra.mxu0 0
        %8248 = vmatpush.bf16.msra.mxu0 0
        %8249 = vmatpush.bf16.msra.mxu0 %v8110
        %8250 = vmatpush.bf16.msra.mxu0 %v8107
        %8251 = vmatpush.bf16.msra.mxu0 %v8104
        %8252 = vmatpush.bf16.msra.mxu0 %v8101
        %8253 = vmatmul.bf16.gmra.mxu0 %v8124
        %v8254 = vpop.f32.mrf.mxu0
        %v8255 = vadd.f32 0.0, %v8254
        %v8256 = vpop.f32.mrf.mxu0
        %v8257 = vadd.f32 0.0, %v8256
        %8258 = vmatmul.bf16.gmra.mxu0 %v8127
        %v8259 = vpop.f32.mrf.mxu0
        %v8260 = vadd.f32 0.0, %v8259
        %v8261 = vpop.f32.mrf.mxu0
        %v8262 = vadd.f32 0.0, %v8261
        %8263 = vmatmul.bf16.gmra.mxu0 %v8130
        %v8264 = vpop.f32.mrf.mxu0
        %v8265 = vadd.f32 0.0, %v8264
        %v8266 = vpop.f32.mrf.mxu0
        %v8267 = vadd.f32 0.0, %v8266
        %8268 = vmatmul.bf16.gmra.mxu0 %v8133
        %v8269 = vpop.f32.mrf.mxu0
        %v8270 = vadd.f32 0.0, %v8269
        %v8271 = vpop.f32.mrf.mxu0
        %v8272 = vadd.f32 0.0, %v8271
        %8273 = vmatmul.bf16.gmra.mxu0 %v8136
        %v8274 = vpop.f32.mrf.mxu0
        %v8275 = vadd.f32 0.0, %v8274
        %v8276 = vpop.f32.mrf.mxu0
        %v8277 = vadd.f32 0.0, %v8276
        %8278 = vmatmul.bf16.gmra.mxu0 %v8139
        %v8279 = vpop.f32.mrf.mxu0
        %v8280 = vadd.f32 0.0, %v8279
        %v8281 = vpop.f32.mrf.mxu0
        %v8282 = vadd.f32 0.0, %v8281
        %8283 = vmatmul.bf16.gmra.mxu0 %v8142
        %v8284 = vpop.f32.mrf.mxu0
        %v8285 = vadd.f32 0.0, %v8284
        %v8286 = vpop.f32.mrf.mxu0
        %v8287 = vadd.f32 0.0, %v8286
        %8288 = vmatmul.bf16.gmra.mxu0 %v8145
        %v8289 = vpop.f32.mrf.mxu0
        %v8290 = vadd.f32 0.0, %v8289
        %v8291 = vpop.f32.mrf.mxu0
        %v8292 = vadd.f32 0.0, %v8291
        %8293 = vdwg.mxu0
        %v8294 = vadd.f32 %v7475, %v8157
        %v8295 = vadd.f32 %v7476, %v8206
        %v8296 = vadd.f32 %v7477, %v8255
        %v8297 = vadd.f32 %v7478, %v8159
        %v8298 = vadd.f32 %v7479, %v8208
        %v8299 = vadd.f32 %v7480, %v8257
        %v8300 = vadd.f32 %v7481, %v8162
        %v8301 = vadd.f32 %v7482, %v8211
        %v8302 = vadd.f32 %v7483, %v8260
        %v8303 = vadd.f32 %v7484, %v8164
        %v8304 = vadd.f32 %v7485, %v8213
        %v8305 = vadd.f32 %v7486, %v8262
        %v8306 = vadd.f32 %v7487, %v8167
        %v8307 = vadd.f32 %v7488, %v8216
        %v8308 = vadd.f32 %v7489, %v8265
        %v8309 = vadd.f32 %v7490, %v8169
        %v8310 = vadd.f32 %v7491, %v8218
        %v8311 = vadd.f32 %v7492, %v8267
        %v8312 = vadd.f32 %v7493, %v8172
        %v8313 = vadd.f32 %v7494, %v8221
        %v8314 = vadd.f32 %v7495, %v8270
        %v8315 = vadd.f32 %v7496, %v8174
        %v8316 = vadd.f32 %v7497, %v8223
        %v8317 = vadd.f32 %v7498, %v8272
        %v8318 = vadd.f32 %v7499, %v8177
        %v8319 = vadd.f32 %v7500, %v8226
        %v8320 = vadd.f32 %v7501, %v8275
        %v8321 = vadd.f32 %v7502, %v8179
        %v8322 = vadd.f32 %v7503, %v8228
        %v8323 = vadd.f32 %v7504, %v8277
        %v8324 = vadd.f32 %v7505, %v8182
        %v8325 = vadd.f32 %v7506, %v8231
        %v8326 = vadd.f32 %v7507, %v8280
        %v8327 = vadd.f32 %v7508, %v8184
        %v8328 = vadd.f32 %v7509, %v8233
        %v8329 = vadd.f32 %v7510, %v8282
        %v8330 = vadd.f32 %v7511, %v8187
        %v8331 = vadd.f32 %v7512, %v8236
        %v8332 = vadd.f32 %v7513, %v8285
        %v8333 = vadd.f32 %v7514, %v8189
        %v8334 = vadd.f32 %v7515, %v8238
        %v8335 = vadd.f32 %v7516, %v8287
        %v8336 = vadd.f32 %v7517, %v8192
        %v8337 = vadd.f32 %v7518, %v8241
        %v8338 = vadd.f32 %v7519, %v8290
        %v8339 = vadd.f32 %v7520, %v8194
        %v8340 = vadd.f32 %v7521, %v8243
        %v8341 = vadd.f32 %v7522, %v8292
        %v8342 = vld [vmem:[%s4] sm:$0x7]
        %v8344 = vperm.slane %v8342, 0
        %v8345 = vperm.slane %v8342, 1
        %v8346 = vperm.slane %v8342, 2
        %v8350 = vadd.f32 %v8294, %v8344
        %v8351 = vadd.f32 %v8295, %v8345
        %v8352 = vadd.f32 %v8296, %v8346
        %v8353 = vadd.f32 %v8297, %v8344
        %v8354 = vadd.f32 %v8298, %v8345
        %v8355 = vadd.f32 %v8299, %v8346
        %v8356 = vadd.f32 %v8300, %v8344
        %v8357 = vadd.f32 %v8301, %v8345
        %v8358 = vadd.f32 %v8302, %v8346
        %v8359 = vadd.f32 %v8303, %v8344
        %v8360 = vadd.f32 %v8304, %v8345
        %v8361 = vadd.f32 %v8305, %v8346
        %v8362 = vadd.f32 %v8306, %v8344
        %v8363 = vadd.f32 %v8307, %v8345
        %v8364 = vadd.f32 %v8308, %v8346
        %v8365 = vadd.f32 %v8309, %v8344
        %v8366 = vadd.f32 %v8310, %v8345
        %v8367 = vadd.f32 %v8311, %v8346
        %v8368 = vadd.f32 %v8312, %v8344
        %v8369 = vadd.f32 %v8313, %v8345
        %v8370 = vadd.f32 %v8314, %v8346
        %v8371 = vadd.f32 %v8315, %v8344
        %v8372 = vadd.f32 %v8316, %v8345
        %v8373 = vadd.f32 %v8317, %v8346
        %v8374 = vadd.f32 %v8318, %v8344
        %v8375 = vadd.f32 %v8319, %v8345
        %v8376 = vadd.f32 %v8320, %v8346
        %v8377 = vadd.f32 %v8321, %v8344
        %v8378 = vadd.f32 %v8322, %v8345
        %v8379 = vadd.f32 %v8323, %v8346
        %v8380 = vadd.f32 %v8324, %v8344
        %v8381 = vadd.f32 %v8325, %v8345
        %v8382 = vadd.f32 %v8326, %v8346
        %v8383 = vadd.f32 %v8327, %v8344
        %v8384 = vadd.f32 %v8328, %v8345
        %v8385 = vadd.f32 %v8329, %v8346
        %v8386 = vadd.f32 %v8330, %v8344
        %v8387 = vadd.f32 %v8331, %v8345
        %v8388 = vadd.f32 %v8332, %v8346
        %v8389 = vadd.f32 %v8333, %v8344
        %v8390 = vadd.f32 %v8334, %v8345
        %v8391 = vadd.f32 %v8335, %v8346
        %v8392 = vadd.f32 %v8336, %v8344
        %v8393 = vadd.f32 %v8337, %v8345
        %v8394 = vadd.f32 %v8338, %v8346
        %v8395 = vadd.f32 %v8339, %v8344
        %v8396 = vadd.f32 %v8340, %v8345
        %v8397 = vadd.f32 %v8341, %v8346
        %8398 = vst [vmem:[%s295] sm:$0xff] %v8350
        %8399 = vst [vmem:[%s295 + $0x8] sm:$0xff] %v8351
        %8400 = vst [vmem:[%s295 + $0x10] sm:$0xff] %v8352
        %8401 = vst [vmem:[%s295 + $0x18] sm:$0xff] %v8353
        %8402 = vst [vmem:[%s295 + $0x20] sm:$0xff] %v8354
        %8403 = vst [vmem:[%s295 + $0x28] sm:$0xff] %v8355
        %8404 = vst [vmem:[%s295 + $0x30] sm:$0xff] %v8356
        %8405 = vst [vmem:[%s295 + $0x38] sm:$0xff] %v8357
        %8406 = vst [vmem:[%s295 + $0x40] sm:$0xff] %v8358
        %8407 = vst [vmem:[%s295 + $0x48] sm:$0xff] %v8359
        %8408 = vst [vmem:[%s295 + $0x50] sm:$0xff] %v8360
        %8409 = vst [vmem:[%s295 + $0x58] sm:$0xff] %v8361
        %8410 = vst [vmem:[%s295 + $0x60] sm:$0xff] %v8362
        %8411 = vst [vmem:[%s295 + $0x68] sm:$0xff] %v8363
        %8412 = vst [vmem:[%s295 + $0x70] sm:$0xff] %v8364
        %8413 = vst [vmem:[%s295 + $0x78] sm:$0xff] %v8365
        %8414 = vst [vmem:[%s295 + $0x80] sm:$0xff] %v8366
        %8415 = vst [vmem:[%s295 + $0x88] sm:$0xff] %v8367
        %8416 = vst [vmem:[%s295 + $0x90] sm:$0xff] %v8368
        %8417 = vst [vmem:[%s295 + $0x98] sm:$0xff] %v8369
        %8418 = vst [vmem:[%s295 + $0xa0] sm:$0xff] %v8370
        %8419 = vst [vmem:[%s295 + $0xa8] sm:$0xff] %v8371
        %8420 = vst [vmem:[%s295 + $0xb0] sm:$0xff] %v8372
        %8421 = vst [vmem:[%s295 + $0xb8] sm:$0xff] %v8373
        %8422 = vst [vmem:[%s295 + $0xc0] sm:$0xff] %v8374
        %8423 = vst [vmem:[%s295 + $0xc8] sm:$0xff] %v8375
        %8424 = vst [vmem:[%s295 + $0xd0] sm:$0xff] %v8376
        %8425 = vst [vmem:[%s295 + $0xd8] sm:$0xff] %v8377
        %8426 = vst [vmem:[%s295 + $0xe0] sm:$0xff] %v8378
        %8427 = vst [vmem:[%s295 + $0xe8] sm:$0xff] %v8379
        %8428 = vst [vmem:[%s295 + $0xf0] sm:$0xff] %v8380
        %8429 = vst [vmem:[%s295 + $0xf8] sm:$0xff] %v8381
        %8430 = vst [vmem:[%s295 + $0x100] sm:$0xff] %v8382
        %8431 = vst [vmem:[%s295 + $0x108] sm:$0xff] %v8383
        %8432 = vst [vmem:[%s295 + $0x110] sm:$0xff] %v8384
        %8433 = vst [vmem:[%s295 + $0x118] sm:$0xff] %v8385
        %8434 = vst [vmem:[%s295 + $0x120] sm:$0xff] %v8386
        %8435 = vst [vmem:[%s295 + $0x128] sm:$0xff] %v8387
        %8436 = vst [vmem:[%s295 + $0x130] sm:$0xff] %v8388
        %8437 = vst [vmem:[%s295 + $0x138] sm:$0xff] %v8389
        %8438 = vst [vmem:[%s295 + $0x140] sm:$0xff] %v8390
        %8439 = vst [vmem:[%s295 + $0x148] sm:$0xff] %v8391
        %8440 = vst [vmem:[%s295 + $0x150] sm:$0xff] %v8392
        %8441 = vst [vmem:[%s295 + $0x158] sm:$0xff] %v8393
        %8442 = vst [vmem:[%s295 + $0x160] sm:$0xff] %v8394
        %8443 = vst [vmem:[%s295 + $0x168] sm:$0xff] %v8395
        %8444 = vst [vmem:[%s295 + $0x170] sm:$0xff] %v8396
        %8445 = vst [vmem:[%s295 + $0x178] sm:$0xff] %v8397
        %s8446 = sand.u32 %s142, 1
        %s8447 = scalar_lea.sflag [#allocation4], %s8446
        %s8448 = sand.u32 %s142, 1
        %s8449 = smul.addr %s8448, 384
        %s8450 = scalar_lea.vmem [#allocation10], %s8449
        // Predicated region
        $region57: #{tpu_custom_call.1} parent=39 // pred_check
          %p8451 = pneg %p152
        $region58: #{tpu_custom_call.1} parent=39 // pred_check_branch
          %8453 = sbr.rel (%p8451) target = $region60
        $region59: #{tpu_custom_call.1} parent=39 // pred_region
          %s8454 = smul.u32 4, %s24
          %8456 = vsyncadd %s8447, 0
          %s8457 = smul.addr %s8454, 12
          %s8458 = smul.addr %s8457, 8
          %s8459 = scalar_lea.hbm %s5, %s8458
          %s8460 = sshll.u32 %s8450, 4
          %s8461 = int_to_ptr.vmem [resolvable:$true] %s8460
          %s8462 = sshll.u32 %s8459, 4
          %s8463 = int_to_ptr.hbm [resolvable:$true] %s8462
          %8468 = dma.vmem_to_hbm [thread:$0]  %s8461, 6144, %s8463, %s8447, 384, 384, 24
        $region60: #{tpu_custom_call.1} parent=39 // pred_fallthru
          _
      $region40: #{tpu_custom_call.1} parent=5 // pred_fallthru
        _
      %p8469 = scmp.le.s32.totalorder 2, %s19
      // Predicated region
      $region61: #{tpu_custom_call.1} parent=5 // pred_check
        %p8470 = pneg %p8469
      $region62: #{tpu_custom_call.1} parent=5 // pred_check_branch
        %8472 = sbr.rel (%p8470) target = $region64
      $region63: #{tpu_custom_call.1} parent=5 // pred_region
        %s8473 = ssub.s32 %s19, 2
        // Predicated region
        $region65: #{tpu_custom_call.1} parent=63 // pred_check
          %p8474 = pneg %p158
        $region66: #{tpu_custom_call.1} parent=63 // pred_check_branch
          %8476 = sbr.rel (%p8474) target = $region68
        $region67: #{tpu_custom_call.1} parent=63 // pred_region
          %s8477 = sand.u32 %s143, 1
          %s8478 = scalar_lea.sflag [#allocation4], %s8477
          %s8479 = sand.u32 %s143, 1
          %s8480 = smul.addr %s8479, 384
          %s8481 = scalar_lea.vmem [#allocation10], %s8480
          %8483 = dma.done %s8478, 6144
        $region68: #{tpu_custom_call.1} parent=63 // pred_fallthru
          _
      $region64: #{tpu_custom_call.1} parent=5 // pred_fallthru
        _
    $region6: #{tpu_custom_call.1} parent=1 // loop_footer
      %s23 = sadd.s32 1, %s19
    $region7: #{tpu_custom_call.1} parent=1 // loop_footer_branch
      %18 = sbr.rel target = $region3
    $region8: #{tpu_custom_call.1} parent=1 // loop_exit
      _
    %8484 = vsyncpa [#allocation3], 1
    %s8485 = scalar_lea.sflag [#allocation3], 1
    %8486 = vsyncpa %s8485, 1
    %8487 = vsyncpa [#allocation6], 1
    %8488 = vsyncpa [#allocation9], 1
    %8489 = vsyncpa [#allocation4], 1
    %s8490 = scalar_lea.sflag [#allocation4], 1
    %8491 = vsyncpa %s8490, 1

</llo_original>
